<compile_context>
chip_gen: v6e
topology: v6e:2x2x1
jax: 0.10.0
libtpu: 0.0.40
codegen_flags: <defaults>
</compile_context>

<pallas_src>
import functools

import jax
import jax.numpy as jnp
from jax import lax
from jax.experimental import pallas as pl
from jax.experimental.pallas import tpu as pltpu


# ----------------------------------------------------------------------------------
# Fused MoE Pallas kernel
# ----------------------------------------------------------------------------------
def moe_kernel(x_ref, w1c_ref, b1c_ref, w2c_ref, o_ref, *, num_experts, expert_dim):
    """One token tile of the fused mixture-of-experts forward.

    x_ref   : (tile, E)            bf16   token activations
    w1c_ref : (E, K*H + Kpad)      bf16   [stacked expert W1 | gate W (zero-padded)]
    b1c_ref : (1, K*H + Kpad)      f32    [stacked expert b1 | gate b (zero-padded)]
    w2c_ref : (K*H + Kpad, E)      bf16   [stacked expert W2 ; expert b2 rows (padded)]
    o_ref   : (tile, E)            f32    gated MoE output
    """
    K, H = num_experts, expert_dim
    KH = K * H

    x = x_ref[...]                                                    # (tt, E)

    # --- fused first matmul: all expert hidden layers + gate logits in one MXU pass
    z = jnp.dot(x, w1c_ref[...], preferred_element_type=jnp.float32) + b1c_ref[...]
    tt, wfull = z.shape
    kpad = wfull - KH

    # --- gate softmax over the trailing (lane-aligned) block; the real logits live in
    #     the first K lanes, the padded lanes are exactly zero and get masked out.
    tail = z[:, KH:]                                                  # (tt, Kpad)
    lane = lax.broadcasted_iota(jnp.int32, (tt, kpad), 1)
    valid = lane < K
    logits = jnp.where(valid, tail, -1e30)
    m = jnp.max(logits, axis=-1, keepdims=True)
    e = jnp.where(valid, jnp.exp(logits - m), 0.0)
    gate_padded = e * pl.reciprocal(jnp.sum(e, axis=-1, keepdims=True), approx=True)
    gate = gate_padded[:, :K]                                         # (tt, K)

    # --- expert hidden activations: ReLU then gate-scale via reshape-broadcast
    #     (no per-expert slice + concatenate copies; H is a multiple of 128).
    h = jnp.maximum(z[:, :KH], 0.0).reshape(tt, K, H)
    h = (h * gate[:, :, None]).reshape(tt, KH)                        # (tt, K*H) f32

    # --- ONE fused W2 matmul.  The appended gate lanes multiply the b2 rows packed at
    #     the bottom of w2c, so the gate-weighted expert bias rides the same MXU
    #     accumulation (no separate contraction-K matmul / extra f32 add).
    h_full = jnp.concatenate([h, gate_padded], axis=1).astype(w2c_ref.dtype)
    o_ref[...] = jnp.dot(h_full, w2c_ref[...],
                         preferred_element_type=jnp.float32).astype(o_ref.dtype)


# ----------------------------------------------------------------------------------
# One-time weight-slab packing (hoisted out of the jitted forward)
# ----------------------------------------------------------------------------------
def pack_moe_params(p, compute_dtype=jnp.bfloat16):
    """Pack raw MoE params into the fused slabs the kernel consumes (done once)."""
    wg, bg = p["wg"], p["bg"]                              # (E, K), (1, K)
    w1, b1, w2, b2 = p["w1"], p["b1"], p["w2"], p["b2"]    # (K,E,H),(K,1,H),(K,H,E),(K,1,E)
    K, E, H = w1.shape
    KH = K * H
    Kpad = ((K + 127) // 128) * 128                        # keep fused width lane-aligned

    w1s = jnp.transpose(w1, (1, 0, 2)).reshape(E, KH)                 # (E, K*H)
    wgp = jnp.pad(wg, ((0, 0), (0, Kpad - K)))                        # (E, Kpad)
    w1c = jnp.concatenate([w1s, wgp], axis=1).astype(compute_dtype)   # (E, KH+Kpad)

    b1s = b1.reshape(1, KH)
    bgp = jnp.pad(bg, ((0, 0), (0, Kpad - K)))
    b1c = jnp.concatenate([b1s, bgp], axis=1).astype(jnp.float32)     # (1, KH+Kpad)

    b2p = jnp.pad(b2.reshape(K, E), ((0, Kpad - K), (0, 0)))          # (Kpad, E)
    w2c = jnp.concatenate([w2.reshape(KH, E), b2p], axis=0).astype(compute_dtype)

    return {"w1c": w1c, "b1c": b1c, "w2c": w2c}


def pack_transformer_params(params, compute_dtype=jnp.bfloat16):
    """Replace each layer's raw MoE params with pre-packed kernel slabs."""
    out = dict(params)
    out["layers"] = [
        {**{k: v for k, v in lp.items() if k != "moe"},
         "moe_packed": pack_moe_params(lp["moe"], compute_dtype)}
        for lp in params["layers"]
    ]
    return out


# ----------------------------------------------------------------------------------
# MoE forward: Pallas call wrapper
# ----------------------------------------------------------------------------------
def moe_forward(x, packed, *, num_experts, expert_dim, token_tile=128):
    """x: (B, S, E) f32; packed: slabs from pack_moe_params. Returns (B, S, E) f32."""
    B, S, E = x.shape
    K, H = num_experts, expert_dim
    KH = K * H
    w1c, b1c, w2c = packed["w1c"], packed["b1c"], packed["w2c"]
    wfull = w1c.shape[1]                                   # K*H + Kpad
    compute_dtype = w1c.dtype

    N = B * S
    tt = token_tile
    Npad = pl.cdiv(N, tt) * tt
    x2d = x.reshape(N, E)
    if Npad != N:
        x2d = jnp.pad(x2d, ((0, Npad - N), (0, 0)))
    x2d = x2d.astype(compute_dtype)

    kernel = functools.partial(moe_kernel, num_experts=K, expert_dim=H)

    # ---- VMEM budget: weights resident ONCE (single-buffered), token/out tiles
    #      double-buffered by the pipeline, plus in-kernel temporaries + headroom.
    wi = jnp.dtype(compute_dtype).itemsize
    weight_bytes = (w1c.size + w2c.size) * wi + b1c.size * 4
    tile_bytes = 2 * (tt * E * wi + tt * E * 4)            # x tile + out tile, 2x-buffered
    interm_bytes = tt * wfull * 4 + tt * KH * 4 + tt * wfull * wi
    vmem_limit = int(min(48 << 20,
                         max(16 << 20,
                             weight_bytes + tile_bytes + interm_bytes + (4 << 20))))

    single = pl.Buffered(1)   # grid-invariant operands: fetched once, no 2x residency

    out2d = pl.pallas_call(
        kernel,
        out_shape=jax.ShapeDtypeStruct((Npad, E), jnp.float32),
        grid_spec=pltpu.PrefetchScalarGridSpec(
            num_scalar_prefetch=0,
            grid=(Npad // tt,),
            in_specs=[
                pl.BlockSpec((tt, E), lambda i: (i, 0)),                        # tokens
                pl.BlockSpec((E, wfull), lambda i: (0, 0), pipeline_mode=single),
                pl.BlockSpec((1, wfull), lambda i: (0, 0), pipeline_mode=single),
                pl.BlockSpec((wfull, E), lambda i: (0, 0), pipeline_mode=single),
            ],
            out_specs=pl.BlockSpec((tt, E), lambda i: (i, 0)),
        ),
        compiler_params=pltpu.CompilerParams(
            dimension_semantics=("parallel",),
            vmem_limit_bytes=vmem_limit),
    )(x2d, w1c, b1c, w2c)

    if Npad != N:
        out2d = out2d[:N]
    return out2d.reshape(B, S, E)


# ----------------------------------------------------------------------------------
# Pure-JAX references / rest of the TransformerModel forward (plain JAX around kernel)
# ----------------------------------------------------------------------------------
def moe_reference(x, p):
    """Pure-JAX f32 reference mirroring the PyTorch MixtureOfExperts forward."""
    gate = jax.nn.softmax(jnp.einsum("bse,ek->bsk", x, p["wg"]) + p["bg"][0], axis=-1)
    h = jnp.maximum(jnp.einsum("bse,keh->kbsh", x, p["w1"]) + p["b1"][:, None], 0.0)
    y = jnp.einsum("kbsh,khe->kbse", h, p["w2"]) + p["b2"][:, None]       # (K,B,S,E)
    return jnp.einsum("kbse,bsk->bse", y, gate)


def layer_norm(x, g, b, eps=1e-5):
    mu = jnp.mean(x, axis=-1, keepdims=True)
    var = jnp.mean((x - mu) ** 2, axis=-1, keepdims=True)
    return (x - mu) * jax.lax.rsqrt(var + eps) * g + b


def mqa_attention(x, p, num_heads):
    """Multi-query attention matching the PyTorch module (scale = embed_dim ** 0.5,
    as written in the original torch code, not head_dim ** 0.5)."""
    # TODO(synk): attention / LayerNorm / embedding / fc_out are left to XLA; the MoE
    # (the dominant FLOPs block here) is the Pallas kernel.
    B, S, E = x.shape
    D = E // num_heads
    q = (x @ p["wq"] + p["bq"]).reshape(B, S, num_heads, D)
    k = x @ p["wk"] + p["bk"]                                        # (B, S, D) shared
    v = x @ p["wv"] + p["bv"]                                        # (B, S, D) shared
    scores = jnp.einsum("bqhd,bkd->bhqk", q, k) / (E ** 0.5)
    w = jax.nn.softmax(scores, axis=-1)
    o = jnp.einsum("bhqk,bkd->bqhd", w, v).reshape(B, S, E)
    return o @ p["wo"] + p["bo"]


def transformer_forward(src_tokens, params, *, num_heads, moe_fn):
    """Full TransformerModel forward: embedding -> encoder layers -> final LN -> fc_out."""
    x = params["embedding"][src_tokens]                              # (B, S, E)
    for lp in params["layers"]:
        x = x + mqa_attention(x, lp, num_heads)
        x = layer_norm(x, lp["ln1_g"], lp["ln1_b"])
        x = x + moe_fn(x, lp)
        x = layer_norm(x, lp["ln2_g"], lp["ln2_b"])
    x = layer_norm(x, params["final_ln_g"], params["final_ln_b"])
    return x @ params["fc_w"] + params["fc_b"]                       # (B, S, vocab)


# ----------------------------------------------------------------------------------
# Deterministic parameter init (PyTorch-Linear-style uniform +/- 1/sqrt(fan_in))
# ----------------------------------------------------------------------------------
def init_model_params(key, vocab_size, embed_dim, num_layers, num_heads,
                      expert_dim, num_experts):
    E, H, K = embed_dim, expert_dim, num_experts
    D = E // num_heads

    def uniform(k, shape, fan_in):
        bound = 1.0 / jnp.sqrt(fan_in)
        return jax.random.uniform(k, shape, jnp.float32, -bound, bound)

    def layer_params(k):
        ks = jax.random.split(k, 14)
        return {
            "wq": uniform(ks[0], (E, E), E), "bq": uniform(ks[1], (E,), E),
            "wk": uniform(ks[2], (E, D), E), "bk": uniform(ks[3], (D,), E),
            "wv": uniform(ks[4], (E, D), E), "bv": uniform(ks[5], (D,), E),
            "wo": uniform(ks[6], (E, E), E), "bo": uniform(ks[7], (E,), E),
            "moe": {
                "wg": uniform(ks[8], (E, K), E), "bg": uniform(ks[9], (1, K), E),
                "w1": uniform(ks[10], (K, E, H), E), "b1": uniform(ks[11], (K, 1, H), E),
                "w2": uniform(ks[12], (K, H, E), H), "b2": uniform(ks[13], (K, 1, E), H),
            },
            "ln1_g": jnp.ones((E,), jnp.float32), "ln1_b": jnp.zeros((E,), jnp.float32),
            "ln2_g": jnp.ones((E,), jnp.float32), "ln2_b": jnp.zeros((E,), jnp.float32),
        }

    k_emb, k_fcw, k_fcb, *k_layers = jax.random.split(key, 3 + num_layers)
    return {
        "embedding": jax.random.normal(k_emb, (vocab_size, E), jnp.float32),
        "layers": [layer_params(k) for k in k_layers],
        "final_ln_g": jnp.ones((E,), jnp.float32),
        "final_ln_b": jnp.zeros((E,), jnp.float32),
        "fc_w": uniform(k_fcw, (E, vocab_size), E),
        "fc_b": uniform(k_fcb, (vocab_size,), E),
    }


# ----------------------------------------------------------------------------------
if __name__ == "__main__":
    VOCAB, E, LAYERS, HEADS, H, K = 1000, 128, 2, 4, 256, 4
    B, S = 2, 128            # N = B*S = 256 tokens -> token_tile=128 -> grid of 2

    key = jax.random.PRNGKey(0)
    k_tok, k_par, k_x = jax.random.split(key, 3)
    params = init_model_params(k_par, VOCAB, E, LAYERS, HEADS, H, K)
    tokens = jax.random.randint(k_tok, (B, S), 0, VOCAB)

    # One-time weight preprocessing (slab packing hoisted OUT of the jitted forward).
    packed_params = pack_transformer_params(params)

    # --- 1) MoE Pallas kernel vs pure-JAX f32 reference (primary correctness gate).
    #     bf16 matmul operands (f32 accumulation) -> loosened tolerance vs f32 ref.
    x = jax.random.normal(k_x, (B, S, E), dtype=jnp.float32)
    moe_p = params["layers"][0]["moe"]
    moe_packed = pack_moe_params(moe_p)
    moe_jit = jax.jit(functools.partial(moe_forward, num_experts=K, expert_dim=H,
                                        token_tile=128))
    out = jax.block_until_ready(moe_jit(x, moe_packed))
    ref = moe_reference(x, moe_p)
    assert out.shape == (B, S, E)
    moe_err = float(jnp.max(jnp.abs(out - ref)))
    assert moe_err < 5e-2, f"MoE Pallas kernel mismatch vs reference: max err {moe_err}"

    # --- 2) Full TransformerModel forward with the Pallas MoE plugged into every layer.
    pallas_moe_fn = lambda xx, lp: moe_forward(xx, lp["moe_packed"],
                                               num_experts=K, expert_dim=H,
                                               token_tile=128)
    ref_moe_fn = lambda xx, lp: moe_reference(xx, lp["moe"])
    pallas_model = jax.jit(lambda t, p: transformer_forward(
        t, p, num_heads=HEADS, moe_fn=pallas_moe_fn))
    ref_model = jax.jit(lambda t, p: transformer_forward(
        t, p, num_heads=HEADS, moe_fn=ref_moe_fn))

    logits = jax.block_until_ready(pallas_model(tokens, packed_params))
    logits_ref = ref_model(tokens, params)
    assert logits.shape == (B, S, VOCAB)
    assert bool(jnp.all(jnp.isfinite(logits)))
    full_err = float(jnp.max(jnp.abs(logits - logits_ref)))
    assert full_err < 0.5, f"full-model mismatch vs reference: max err {full_err}"

    print("KERNEL_OK")
</pallas_src>

<mosaic_0001>
module attributes {stable_mosaic.version = 11 : i64} {
  func.func @moe_kernel(%arg0: i32, %arg1: memref<128x128xbf16, #tpu.memory_space<vmem>>, %arg2: memref<128x1152xbf16, #tpu.memory_space<vmem>>, %arg3: memref<1x1152xf32, #tpu.memory_space<vmem>>, %arg4: memref<1152x128xbf16, #tpu.memory_space<vmem>>, %arg5: memref<128x128xf32, #tpu.memory_space<vmem>>) attributes {dimension_semantics = [#tpu.dimension_semantics<parallel>], iteration_bounds = array<i64: 2>, scalar_prefetch = 0 : i64, scratch_operands = 0 : i64, tpu.core_type = #tpu.core_type<tc>, window_params = [{transform_indices = @transform_0, window_bounds = array<i64: 128, 128>}, {pipeline_mode = #tpu.pipeline_mode<synchronous>, transform_indices = @transform_1, window_bounds = array<i64: 128, 1152>}, {pipeline_mode = #tpu.pipeline_mode<synchronous>, transform_indices = @transform_2, window_bounds = array<i64: 1, 1152>}, {pipeline_mode = #tpu.pipeline_mode<synchronous>, transform_indices = @transform_3, window_bounds = array<i64: 1152, 128>}, {transform_indices = @transform_4, window_bounds = array<i64: 128, 128>}]} {
    %c0 = arith.constant 0 : index
    %c0_0 = arith.constant 0 : index
    %0 = vector.load %arg1[%c0, %c0_0] : memref<128x128xbf16, #tpu.memory_space<vmem>>, vector<128x128xbf16>
    %c0_1 = arith.constant 0 : index
    %c0_2 = arith.constant 0 : index
    %1 = vector.load %arg2[%c0_1, %c0_2] : memref<128x1152xbf16, #tpu.memory_space<vmem>>, vector<128x1152xbf16>
    %cst = arith.constant dense<0.000000e+00> : vector<128x1152xf32>
    %2 = tpu.matmul %0, %1, %cst {dimension_numbers = #tpu.dot_dimension_numbers<[1], [0], [0], [1], [0, 0, 1, 1], [], []>} : vector<128x128xbf16>, vector<128x1152xbf16>, vector<128x1152xf32> -> vector<128x1152xf32>
    %c0_3 = arith.constant 0 : index
    %c0_4 = arith.constant 0 : index
    %3 = vector.load %arg3[%c0_3, %c0_4] : memref<1x1152xf32, #tpu.memory_space<vmem>>, vector<1x1152xf32>
    %4 = vector.broadcast %3 : vector<1x1152xf32> to vector<128x1152xf32>
    %5 = arith.addf %2, %4 : vector<128x1152xf32>
    %6 = vector.extract_strided_slice %5 {offsets = [0, 1024], sizes = [128, 128], strides = [1, 1]} : vector<128x1152xf32> to vector<128x128xf32>
    %7 = tpu.iota {dimensions = array<i32: 1>} : vector<128x128xi32>
    %c4_i32 = arith.constant 4 : i32
    %8 = vector.broadcast %c4_i32 : i32 to vector<128x128xi32>
    %9 = arith.cmpi slt, %7, %8 : vector<128x128xi32>
    %cst_5 = arith.constant -1.000000e+30 : f32
    %10 = vector.broadcast %cst_5 : f32 to vector<128x128xf32>
    %11 = arith.select %9, %6, %10 : vector<128x128xi1>, vector<128x128xf32>
    %cst_6 = arith.constant dense<0xFF800000> : vector<128xf32>
    %12 = vector.multi_reduction <maximumf>, %11, %cst_6 [1] : vector<128x128xf32> to vector<128xf32>
    %13 = vector.shape_cast %12 : vector<128xf32> to vector<128x1xf32>
    %14 = vector.broadcast %13 : vector<128x1xf32> to vector<128x128xf32>
    %15 = arith.subf %11, %14 : vector<128x128xf32>
    %16 = math.exp %15 : vector<128x128xf32>
    %cst_7 = arith.constant 0.000000e+00 : f32
    %17 = vector.broadcast %cst_7 : f32 to vector<128x128xf32>
    %18 = arith.select %9, %16, %17 : vector<128x128xi1>, vector<128x128xf32>
    %cst_8 = arith.constant dense<0.000000e+00> : vector<128xf32>
    %19 = vector.multi_reduction <add>, %18, %cst_8 [1] : vector<128x128xf32> to vector<128xf32>
    %20 = vector.shape_cast %19 : vector<128xf32> to vector<128x1xf32>
    %21 = tpu.reciprocal %20 {approx = true} : vector<128x1xf32> -> vector<128x1xf32>
    %22 = vector.broadcast %21 : vector<128x1xf32> to vector<128x128xf32>
    %23 = arith.mulf %18, %22 : vector<128x128xf32>
    %24 = vector.extract_strided_slice %23 {offsets = [0, 0], sizes = [128, 4], strides = [1, 1]} : vector<128x128xf32> to vector<128x4xf32>
    %25 = vector.extract_strided_slice %5 {offsets = [0, 0], sizes = [128, 1024], strides = [1, 1]} : vector<128x1152xf32> to vector<128x1024xf32>
    %cst_9 = arith.constant 0.000000e+00 : f32
    %26 = vector.broadcast %cst_9 : f32 to vector<128x1024xf32>
    %27 = arith.maximumf %25, %26 : vector<128x1024xf32>
    %28 = vector.shape_cast %27 : vector<128x1024xf32> to vector<128x4x256xf32>
    %29 = vector.shape_cast %24 : vector<128x4xf32> to vector<128x4x1xf32>
    %30 = vector.broadcast %29 : vector<128x4x1xf32> to vector<128x4x256xf32>
    %31 = arith.mulf %28, %30 : vector<128x4x256xf32>
    %32 = vector.shape_cast %31 : vector<128x4x256xf32> to vector<128x1024xf32>
    %33 = tpu.concatenate %32, %23 in 1 : vector<128x1024xf32>, vector<128x128xf32> -> vector<128x1152xf32>
    %34 = arith.truncf %33 : vector<128x1152xf32> to vector<128x1152xbf16>
    %c0_10 = arith.constant 0 : index
    %c0_11 = arith.constant 0 : index
    %35 = vector.load %arg4[%c0_10, %c0_11] : memref<1152x128xbf16, #tpu.memory_space<vmem>>, vector<1152x128xbf16>
    %cst_12 = arith.constant dense<0.000000e+00> : vector<128x128xf32>
    %36 = tpu.matmul %34, %35, %cst_12 {dimension_numbers = #tpu.dot_dimension_numbers<[1], [0], [0], [1], [0, 0, 1, 1], [], []>} : vector<128x1152xbf16>, vector<1152x128xbf16>, vector<128x128xf32> -> vector<128x128xf32>
    %c0_13 = arith.constant 0 : index
    %c0_14 = arith.constant 0 : index
    %37 = vector.load %arg5[%c0_13, %c0_14] : memref<128x128xf32, #tpu.memory_space<vmem>>, vector<128x128xf32>
    tpu.vector_store %arg5[%c0_13, %c0_14], %36 {strides = array<i32>} : memref<128x128xf32, #tpu.memory_space<vmem>>, vector<128x128xf32>,
    return
  }
  func.func @transform_0(%arg0: i32) -> (i32, i32) {
    %c0_i32 = arith.constant 0 : i32
    %c0_i32_0 = arith.constant 0 : i32
    return %arg0, %c0_i32 : i32, i32
  }
  func.func @transform_1(%arg0: i32) -> (i32, i32) {
    %c0_i32 = arith.constant 0 : i32
    %c0_i32_0 = arith.constant 0 : i32
    %c0_i32_1 = arith.constant 0 : i32
    return %c0_i32, %c0_i32_0 : i32, i32
  }
  func.func @transform_2(%arg0: i32) -> (i32, i32) {
    %c0_i32 = arith.constant 0 : i32
    %c0_i32_0 = arith.constant 0 : i32
    %c0_i32_1 = arith.constant 0 : i32
    return %c0_i32, %c0_i32_0 : i32, i32
  }
  func.func @transform_3(%arg0: i32) -> (i32, i32) {
    %c0_i32 = arith.constant 0 : i32
    %c0_i32_0 = arith.constant 0 : i32
    %c0_i32_1 = arith.constant 0 : i32
    return %c0_i32, %c0_i32_0 : i32, i32
  }
  func.func @transform_4(%arg0: i32) -> (i32, i32) {
    %c0_i32 = arith.constant 0 : i32
    %c0_i32_0 = arith.constant 0 : i32
    return %arg0, %c0_i32 : i32, i32
  }
}

</mosaic_0001>

<llo_original>
// kernel: moe_forward.1
$region0: #{moe_forward.1}
  #allocation0 [shape = 'u32[]', space=smem, size = 0x4, offset = 0x4, fixed_abs, tag = 'smem constant byte address 0x4 - core index']
  #allocation1 [shape = 'u32[144,128]{1,0:T(1,128)}', space=vmem, size = 0x12000, scoped, tag = 'internal scratch']
  %s0 = inlined_call_operand.vmem [shape: bf16[256,128], index: 0, kind: input, shape index: {}]
  %s1 = inlined_call_operand.hbm [shape: bf16[128,1152], index: 1, kind: input, shape index: {}]
  %s2 = inlined_call_operand.vmem [shape: f32[1,1152], index: 2, kind: input, shape index: {}]
  %s3 = inlined_call_operand.hbm [shape: bf16[1152,128], index: 3, kind: input, shape index: {}]
  %s4 = inlined_call_operand.hbm [shape: f32[256,128], index: 4, kind: output, shape index: {}]
  %s5 = sld [smem:[#allocation0]]
  $region57: #{moe_forward.1} parent=0
    _
  %s7 = ssub.s32 1, %s5
  %s8 = scalar_select 0, %s7, %s5
  $region1: #{moe_forward.1} parent=0
    #allocation2 [shape = 'u8[294912]{0}', space=vmem, size = 0x48000, scoped, tag = 'input window, operand 1, single buffered']
    #allocation3 [shape = 's32[2]{0}', space=sflag, size = 0x8, scoped, tag = 'scoped memory for moe_forward.1']
    #allocation4 [shape = 's32[2]{0}', space=sflag, size = 0x8, scoped, tag = 'scoped memory for moe_forward.1']
    #allocation5 [shape = 'u8[294912]{0}', space=vmem, size = 0x48000, scoped, tag = 'input window, operand 3, single buffered']
    #allocation6 [shape = 's32[1]{0}', space=sflag, size = 0x4, scoped, tag = 'scoped memory for moe_forward.1']
    #allocation7 [shape = 'u8[131072]{0}', space=vmem, size = 0x20000, scoped, tag = 'output window, operand 0']
    %9 = vsyncpa [#allocation3], 0
    %10 = vsyncpa [#allocation6], 0
    %11 = vsyncpa [#allocation4], 0
    %s12 = scalar_lea.sflag [#allocation4], 1
    %13 = vsyncpa %s12, 0
    loop: start=0, step=1, limit=4
    $region2: #{moe_forward.1} parent=1 // loop_pre_header
      _
    $region3: #{moe_forward.1} parent=1 // loop_header
      %s15 = sphi 0, %s19
      %p16 = scmp.ge.s32.totalorder %s15, 4
      %s25 = sphi 0, %s27
      %s28 = sphi 0, %s25
      %s29 = sphi 0, %s28
      %s45 = sphi 0, %s29
      %s49 = sphi 0, %s49
      %s51 = sphi 0, %s49
      %s52 = sphi 0, %s51
      %s66 = sphi 0, %s52
      %s70 = sphi 0, %s70
      %s72 = sphi 0, %s70
      %s73 = sphi 0, %s72
      %s87 = sphi 0, %s73
      %s91 = sphi 0, %s91
      %s93 = sphi 0, %s91
      %s94 = sphi 0, %s93
      %s108 = sphi 0, %s94
      %s114 = sphi 0, %s116
      %s117 = sphi 0, %s114
      %s118 = sphi 0, %s117
      %s134 = sphi 0, %s118
    $region4: #{moe_forward.1} parent=1 // loop_header_branch
      %18 = sbr.rel (%p16) target = $region8
    $region5: #{moe_forward.1} parent=1 // loop_body
      %s20 = ssub.s32 %s15, 1
      %s21 = ssub.s32 %s15, 2
      %s22 = sadd.s32 %s15, 1
      %s23 = ssub.s32 %s15, %s22
      %p24 = scmp.eq.s32.totalorder %s23, 0
      %s26 = sadd.s32 %s25, 1
      %s27 = scalar_select %p24, %s25, %s26
      %p30 = pneg %p24
      %p31 = scmp.eq.s32.totalorder %s15, 1
      %p32 = por %p30, %p31
      %p33 = scmp.ne.s32.totalorder %s25, %s28
      %p34 = scmp.eq.s32.totalorder %s15, 0
      %p35 = por %p33, %p34
      %p36 = scmp.ne.s32.totalorder %s25, %s28
      %p37 = scmp.eq.s32.totalorder %s20, 1
      %p38 = por %p36, %p37
      %p39 = scmp.ne.s32.totalorder %s28, %s29
      %p40 = scmp.eq.s32.totalorder %s20, 0
      %p41 = por %p39, %p40
      %p42 = scmp.ne.s32.totalorder %s28, %s29
      %p43 = scmp.eq.s32.totalorder %s21, 1
      %p44 = por %p42, %p43
      %p46 = scmp.ne.s32.totalorder %s29, %s45
      %p47 = scmp.eq.s32.totalorder %s21, 0
      %p48 = por %p46, %p47
      %s50 = sadd.s32 %s49, 1
      %p53 = scmp.eq.s32.totalorder %s15, 1
      %p54 = scmp.ne.s32.totalorder %s49, %s51
      %p55 = scmp.eq.s32.totalorder %s15, 0
      %p56 = por %p54, %p55
      %p57 = scmp.ne.s32.totalorder %s49, %s51
      %p58 = scmp.eq.s32.totalorder %s20, 1
      %p59 = por %p57, %p58
      %p60 = scmp.ne.s32.totalorder %s51, %s52
      %p61 = scmp.eq.s32.totalorder %s20, 0
      %p62 = por %p60, %p61
      %p63 = scmp.ne.s32.totalorder %s51, %s52
      %p64 = scmp.eq.s32.totalorder %s21, 1
      %p65 = por %p63, %p64
      %p67 = scmp.ne.s32.totalorder %s52, %s66
      %p68 = scmp.eq.s32.totalorder %s21, 0
      %p69 = por %p67, %p68
      %s71 = sadd.s32 %s70, 1
      %p74 = scmp.eq.s32.totalorder %s15, 1
      %p75 = scmp.ne.s32.totalorder %s70, %s72
      %p76 = scmp.eq.s32.totalorder %s15, 0
      %p77 = por %p75, %p76
      %p78 = scmp.ne.s32.totalorder %s70, %s72
      %p79 = scmp.eq.s32.totalorder %s20, 1
      %p80 = por %p78, %p79
      %p81 = scmp.ne.s32.totalorder %s72, %s73
      %p82 = scmp.eq.s32.totalorder %s20, 0
      %p83 = por %p81, %p82
      %p84 = scmp.ne.s32.totalorder %s72, %s73
      %p85 = scmp.eq.s32.totalorder %s21, 1
      %p86 = por %p84, %p85
      %p88 = scmp.ne.s32.totalorder %s73, %s87
      %p89 = scmp.eq.s32.totalorder %s21, 0
      %p90 = por %p88, %p89
      %s92 = sadd.s32 %s91, 1
      %p95 = scmp.eq.s32.totalorder %s15, 1
      %p96 = scmp.ne.s32.totalorder %s91, %s93
      %p97 = scmp.eq.s32.totalorder %s15, 0
      %p98 = por %p96, %p97
      %p99 = scmp.ne.s32.totalorder %s91, %s93
      %p100 = scmp.eq.s32.totalorder %s20, 1
      %p101 = por %p99, %p100
      %p102 = scmp.ne.s32.totalorder %s93, %s94
      %p103 = scmp.eq.s32.totalorder %s20, 0
      %p104 = por %p102, %p103
      %p105 = scmp.ne.s32.totalorder %s93, %s94
      %p106 = scmp.eq.s32.totalorder %s21, 1
      %p107 = por %p105, %p106
      %p109 = scmp.ne.s32.totalorder %s94, %s108
      %p110 = scmp.eq.s32.totalorder %s21, 0
      %p111 = por %p109, %p110
      %s112 = ssub.s32 %s15, %s22
      %p113 = scmp.eq.s32.totalorder %s112, 0
      %s115 = sadd.s32 %s114, 1
      %s116 = scalar_select %p113, %s114, %s115
      %p119 = pneg %p113
      %p120 = scmp.eq.s32.totalorder %s15, 1
      %p121 = por %p119, %p120
      %p122 = scmp.ne.s32.totalorder %s114, %s117
      %p123 = scmp.eq.s32.totalorder %s15, 0
      %p124 = por %p122, %p123
      %p125 = scmp.ne.s32.totalorder %s114, %s117
      %p126 = scmp.eq.s32.totalorder %s20, 1
      %p127 = por %p125, %p126
      %p128 = scmp.ne.s32.totalorder %s117, %s118
      %p129 = scmp.eq.s32.totalorder %s20, 0
      %p130 = por %p128, %p129
      %p131 = scmp.ne.s32.totalorder %s117, %s118
      %p132 = scmp.eq.s32.totalorder %s21, 1
      %p133 = por %p131, %p132
      %p135 = scmp.ne.s32.totalorder %s118, %s134
      %p136 = scmp.eq.s32.totalorder %s21, 0
      %p137 = por %p135, %p136
      %p138 = scmp.le.s32.totalorder 1, %s15
      %p139 = scmp.lt.s32.totalorder %s15, 3
      %p140 = pnand %p138, %p139
      %p141 = pneg %p140
      // Predicated region
      $region9: #{moe_forward.1} parent=5 // pred_check
        _
      $region10: #{moe_forward.1} parent=5 // pred_check_branch
        %143 = sbr.rel (%p140) target = $region12
      $region11: #{moe_forward.1} parent=5 // pred_region
        %s144 = ssub.s32 %s15, 1
        // Predicated region
        $region13: #{moe_forward.1} parent=11 // pred_check
          %p145 = pneg %p62
        $region14: #{moe_forward.1} parent=11 // pred_check_branch
          %147 = sbr.rel (%p145) target = $region16
        $region15: #{moe_forward.1} parent=11 // pred_region
          %s149 = ssub.s32 9216, 9216
          %150 = vsyncadd [#allocation3], %s149
          %s151 = sshll.u32 [#allocation2], 4
          %s152 = int_to_ptr.vmem [resolvable:$true] %s151
          %157 = dma.hbm_to_vmem [thread:$0]  %s1, 9216, %s152, [#allocation3], 576, 576, 36
        $region16: #{moe_forward.1} parent=11 // pred_fallthru
          _
        // Predicated region
        $region17: #{moe_forward.1} parent=11 // pred_check
          %p158 = pneg %p83
        $region18: #{moe_forward.1} parent=11 // pred_check_branch
          %160 = sbr.rel (%p158) target = $region20
        $region19: #{moe_forward.1} parent=11 // pred_region
          _
        $region20: #{moe_forward.1} parent=11 // pred_fallthru
          _
        // Predicated region
        $region21: #{moe_forward.1} parent=11 // pred_check
          %p161 = pneg %p104
        $region22: #{moe_forward.1} parent=11 // pred_check_branch
          %163 = sbr.rel (%p161) target = $region24
        $region23: #{moe_forward.1} parent=11 // pred_region
          %s165 = ssub.s32 9216, 9216
          %166 = vsyncadd [#allocation6], %s165
          %s167 = sshll.u32 [#allocation5], 4
          %s168 = int_to_ptr.vmem [resolvable:$true] %s167
          %173 = dma.hbm_to_vmem [thread:$0]  %s3, 9216, %s168, [#allocation6], 64, 64, 4
        $region24: #{moe_forward.1} parent=11 // pred_fallthru
          _
      $region12: #{moe_forward.1} parent=5 // pred_fallthru
        _
      %p174 = scmp.lt.s32.totalorder %s15, 2
      // Predicated region
      $region25: #{moe_forward.1} parent=5 // pred_check
        %p175 = pneg %p174
      $region26: #{moe_forward.1} parent=5 // pred_check_branch
        %177 = sbr.rel (%p175) target = $region28
      $region27: #{moe_forward.1} parent=5 // pred_region
        // Predicated region
        $region29: #{moe_forward.1} parent=27 // pred_check
          %p178 = pneg %p35
        $region30: #{moe_forward.1} parent=27 // pred_check_branch
          %180 = sbr.rel (%p178) target = $region32
        $region31: #{moe_forward.1} parent=27 // pred_region
          %s181 = smul.u32 16, %s15
          %p182 = scmp.lt.s32.totalorder %s181, 31
          %s183 = scalar_select %p182, %s181, 31
          %s184 = smul.addr %s183, 4
          %s185 = scalar_lea.vmem %s0, %s184
          %s186 = smul.u32 16, %s15
        $region32: #{moe_forward.1} parent=27 // pred_fallthru
          _
      $region28: #{moe_forward.1} parent=5 // pred_fallthru
        _
      %p187 = scmp.le.s32.totalorder 1, %s15
      %p188 = scmp.lt.s32.totalorder %s15, 3
      %p189 = pnand %p187, %p188
      %p190 = pneg %p189
      // Predicated region
      $region33: #{moe_forward.1} parent=5 // pred_check
        _
      $region34: #{moe_forward.1} parent=5 // pred_check_branch
        %192 = sbr.rel (%p189) target = $region36
      $region35: #{moe_forward.1} parent=5 // pred_region
        %s193 = ssub.s32 %s15, 1
        // Predicated region
        $region37: #{moe_forward.1} parent=35 // pred_check
          %p194 = pneg %p62
        $region38: #{moe_forward.1} parent=35 // pred_check_branch
          %196 = sbr.rel (%p194) target = $region40
        $region39: #{moe_forward.1} parent=35 // pred_region
          %197 = dma.done [#allocation3], 9216
        $region40: #{moe_forward.1} parent=35 // pred_fallthru
          _
        // Predicated region
        $region41: #{moe_forward.1} parent=35 // pred_check
          %p198 = pneg %p104
        $region42: #{moe_forward.1} parent=35 // pred_check_branch
          %200 = sbr.rel (%p198) target = $region44
        $region43: #{moe_forward.1} parent=35 // pred_region
          %201 = dma.done [#allocation6], 9216
        $region44: #{moe_forward.1} parent=35 // pred_fallthru
          _
        %s202 = smul.u32 16, %s20
        %p203 = scmp.lt.s32.totalorder %s202, 31
        %s204 = scalar_select %p203, %s202, 31
        %s205 = smul.addr %s204, 4
        %s206 = scalar_lea.vmem %s0, %s205
        %p207 = pneg %p41
        %p208 = pneg %p38
        %p209 = pneg %p62
        %p210 = pneg %p59
        %p211 = pneg %p83
        %p212 = pneg %p80
        %p213 = pneg %p104
        %p214 = pneg %p101
        %p215 = pneg %p130
        %p216 = pneg %p127
        %s217 = sand.u32 %s117, 1
        %s218 = scalar_lea.sflag [#allocation4], %s217
        %s219 = sand.u32 %s117, 1
        %s220 = smul.addr %s219, 128
        %s221 = scalar_lea.vmem [#allocation7], %s220
        %s222 = smul.u32 16, %s20
        %p223 = scmp.lt.s32.totalorder %s222, 31
        %s224 = scalar_select %p223, %s222, 31
        %s225 = smul.addr %s224, 4
        %s226 = scalar_lea.vmem %s0, %s225
        %s227 = smul.u32 16, %s20
        %s228 = smul.u32 16, %s20
        %v230 = vld [vmem:[%s226] sm:$0xf]
        %v231 = vld [vmem:[%s226 + $0x4] sm:$0xf]
        %v232 = vld [vmem:[%s226 + $0x8] sm:$0xf]
        %v233 = vld [vmem:[%s226 + $0xc] sm:$0xf]
        %v234 = vld [vmem:[%s226 + $0x10] sm:$0xf]
        %v235 = vld [vmem:[%s226 + $0x14] sm:$0xf]
        %v236 = vld [vmem:[%s226 + $0x18] sm:$0xf]
        %v237 = vld [vmem:[%s226 + $0x1c] sm:$0xf]
        %v238 = vld [vmem:[%s226 + $0x20] sm:$0xf]
        %v239 = vld [vmem:[%s226 + $0x24] sm:$0xf]
        %v240 = vld [vmem:[%s226 + $0x28] sm:$0xf]
        %v241 = vld [vmem:[%s226 + $0x2c] sm:$0xf]
        %v242 = vld [vmem:[%s226 + $0x30] sm:$0xf]
        %v243 = vld [vmem:[%s226 + $0x34] sm:$0xf]
        %v244 = vld [vmem:[%s226 + $0x38] sm:$0xf]
        %v245 = vld [vmem:[%s226 + $0x3c] sm:$0xf]
        %v246 = vld [vmem:[#allocation2] sm:$0xff]
        %v247 = vld [vmem:[#allocation2 + $0x8] sm:$0xff]
        %v248 = vld [vmem:[#allocation2 + $0x10] sm:$0xff]
        %v249 = vld [vmem:[#allocation2 + $0x18] sm:$0xff]
        %v250 = vld [vmem:[#allocation2 + $0x20] sm:$0xf]
        %v251 = vld [vmem:[#allocation2 + $0x24] sm:$0xff]
        %v252 = vld [vmem:[#allocation2 + $0x2c] sm:$0xff]
        %v253 = vld [vmem:[#allocation2 + $0x34] sm:$0xff]
        %v254 = vld [vmem:[#allocation2 + $0x3c] sm:$0xff]
        %v255 = vld [vmem:[#allocation2 + $0x44] sm:$0xf]
        %v256 = vld [vmem:[#allocation2 + $0x48] sm:$0xff]
        %v257 = vld [vmem:[#allocation2 + $0x50] sm:$0xff]
        %v258 = vld [vmem:[#allocation2 + $0x58] sm:$0xff]
        %v259 = vld [vmem:[#allocation2 + $0x60] sm:$0xff]
        %v260 = vld [vmem:[#allocation2 + $0x68] sm:$0xf]
        %v261 = vld [vmem:[#allocation2 + $0x6c] sm:$0xff]
        %v262 = vld [vmem:[#allocation2 + $0x74] sm:$0xff]
        %v263 = vld [vmem:[#allocation2 + $0x7c] sm:$0xff]
        %v264 = vld [vmem:[#allocation2 + $0x84] sm:$0xff]
        %v265 = vld [vmem:[#allocation2 + $0x8c] sm:$0xf]
        %v266 = vld [vmem:[#allocation2 + $0x90] sm:$0xff]
        %v267 = vld [vmem:[#allocation2 + $0x98] sm:$0xff]
        %v268 = vld [vmem:[#allocation2 + $0xa0] sm:$0xff]
        %v269 = vld [vmem:[#allocation2 + $0xa8] sm:$0xff]
        %v270 = vld [vmem:[#allocation2 + $0xb0] sm:$0xf]
        %v271 = vld [vmem:[#allocation2 + $0xb4] sm:$0xff]
        %v272 = vld [vmem:[#allocation2 + $0xbc] sm:$0xff]
        %v273 = vld [vmem:[#allocation2 + $0xc4] sm:$0xff]
        %v274 = vld [vmem:[#allocation2 + $0xcc] sm:$0xff]
        %v275 = vld [vmem:[#allocation2 + $0xd4] sm:$0xf]
        %v276 = vld [vmem:[#allocation2 + $0xd8] sm:$0xff]
        %v277 = vld [vmem:[#allocation2 + $0xe0] sm:$0xff]
        %v278 = vld [vmem:[#allocation2 + $0xe8] sm:$0xff]
        %v279 = vld [vmem:[#allocation2 + $0xf0] sm:$0xff]
        %v280 = vld [vmem:[#allocation2 + $0xf8] sm:$0xf]
        %v281 = vld [vmem:[#allocation2 + $0xfc] sm:$0xff]
        %v282 = vld [vmem:[#allocation2 + $0x104] sm:$0xff]
        %v283 = vld [vmem:[#allocation2 + $0x10c] sm:$0xff]
        %v284 = vld [vmem:[#allocation2 + $0x114] sm:$0xff]
        %v285 = vld [vmem:[#allocation2 + $0x11c] sm:$0xf]
        %v286 = vld [vmem:[#allocation2 + $0x120] sm:$0xff]
        %v287 = vld [vmem:[#allocation2 + $0x128] sm:$0xff]
        %v288 = vld [vmem:[#allocation2 + $0x130] sm:$0xff]
        %v289 = vld [vmem:[#allocation2 + $0x138] sm:$0xff]
        %v290 = vld [vmem:[#allocation2 + $0x140] sm:$0xf]
        %v291 = vld [vmem:[#allocation2 + $0x144] sm:$0xff]
        %v292 = vld [vmem:[#allocation2 + $0x14c] sm:$0xff]
        %v293 = vld [vmem:[#allocation2 + $0x154] sm:$0xff]
        %v294 = vld [vmem:[#allocation2 + $0x15c] sm:$0xff]
        %v295 = vld [vmem:[#allocation2 + $0x164] sm:$0xf]
        %v296 = vld [vmem:[#allocation2 + $0x168] sm:$0xff]
        %v297 = vld [vmem:[#allocation2 + $0x170] sm:$0xff]
        %v298 = vld [vmem:[#allocation2 + $0x178] sm:$0xff]
        %v299 = vld [vmem:[#allocation2 + $0x180] sm:$0xff]
        %v300 = vld [vmem:[#allocation2 + $0x188] sm:$0xf]
        %v301 = vld [vmem:[#allocation2 + $0x18c] sm:$0xff]
        %v302 = vld [vmem:[#allocation2 + $0x194] sm:$0xff]
        %v303 = vld [vmem:[#allocation2 + $0x19c] sm:$0xff]
        %v304 = vld [vmem:[#allocation2 + $0x1a4] sm:$0xff]
        %v305 = vld [vmem:[#allocation2 + $0x1ac] sm:$0xf]
        %v306 = vld [vmem:[#allocation2 + $0x1b0] sm:$0xff]
        %v307 = vld [vmem:[#allocation2 + $0x1b8] sm:$0xff]
        %v308 = vld [vmem:[#allocation2 + $0x1c0] sm:$0xff]
        %v309 = vld [vmem:[#allocation2 + $0x1c8] sm:$0xff]
        %v310 = vld [vmem:[#allocation2 + $0x1d0] sm:$0xf]
        %v311 = vld [vmem:[#allocation2 + $0x1d4] sm:$0xff]
        %v312 = vld [vmem:[#allocation2 + $0x1dc] sm:$0xff]
        %v313 = vld [vmem:[#allocation2 + $0x1e4] sm:$0xff]
        %v314 = vld [vmem:[#allocation2 + $0x1ec] sm:$0xff]
        %v315 = vld [vmem:[#allocation2 + $0x1f4] sm:$0xf]
        %v316 = vld [vmem:[#allocation2 + $0x1f8] sm:$0xff]
        %v317 = vld [vmem:[#allocation2 + $0x200] sm:$0xff]
        %v318 = vld [vmem:[#allocation2 + $0x208] sm:$0xff]
        %v319 = vld [vmem:[#allocation2 + $0x210] sm:$0xff]
        %v320 = vld [vmem:[#allocation2 + $0x218] sm:$0xf]
        %v321 = vld [vmem:[#allocation2 + $0x21c] sm:$0xff]
        %v322 = vld [vmem:[#allocation2 + $0x224] sm:$0xff]
        %v323 = vld [vmem:[#allocation2 + $0x22c] sm:$0xff]
        %v324 = vld [vmem:[#allocation2 + $0x234] sm:$0xff]
        %v325 = vld [vmem:[#allocation2 + $0x23c] sm:$0xf]
        %v326 = vld [vmem:[%s2] sm:$0xff]
        %v327 = vld [vmem:[%s2 + $0x8] sm:$0x1]
        %v330 = vlaneseq
        %v331 = vshrl.u32 %v330, 7
        %v332 = vsub.s32 0, %v331
        %v333 = vrot.slane %v326, %v332
        %v334 = vlaneseq
        %v335 = vshrl.u32 %v334, 7
        %v336 = vsub.s32 1, %v335
        %v337 = vrot.slane %v326, %v336
        %v338 = vlaneseq
        %v339 = vshrl.u32 %v338, 7
        %v340 = vsub.s32 2, %v339
        %v341 = vrot.slane %v326, %v340
        %v342 = vlaneseq
        %v343 = vshrl.u32 %v342, 7
        %v344 = vsub.s32 3, %v343
        %v345 = vrot.slane %v326, %v344
        %v346 = vlaneseq
        %v347 = vshrl.u32 %v346, 7
        %v348 = vsub.s32 4, %v347
        %v349 = vrot.slane %v326, %v348
        %v350 = vlaneseq
        %v351 = vshrl.u32 %v350, 7
        %v352 = vsub.s32 5, %v351
        %v353 = vrot.slane %v326, %v352
        %v354 = vlaneseq
        %v355 = vshrl.u32 %v354, 7
        %v356 = vsub.s32 6, %v355
        %v357 = vrot.slane %v326, %v356
        %v358 = vlaneseq
        %v359 = vshrl.u32 %v358, 7
        %v360 = vsub.s32 7, %v359
        %v361 = vrot.slane %v326, %v360
        %v362 = vlaneseq
        %v363 = vshrl.u32 %v362, 7
        %v364 = vsub.s32 0, %v363
        %v365 = vrot.slane %v327, %v364
        %v391 = vunpack.c.l.b16 %v230
        %v392 = vunpack.c.l.b16 %v231
        %v393 = vunpack.c.l.b16 %v232
        %v394 = vunpack.c.l.b16 %v233
        %v395 = vunpack.c.l.b16 %v234
        %v396 = vunpack.c.l.b16 %v235
        %v397 = vunpack.c.l.b16 %v236
        %v398 = vunpack.c.l.b16 %v237
        %v399 = vunpack.c.l.b16 %v238
        %v400 = vunpack.c.l.b16 %v239
        %v401 = vunpack.c.l.b16 %v240
        %v402 = vunpack.c.l.b16 %v241
        %v403 = vunpack.c.l.b16 %v242
        %v404 = vunpack.c.l.b16 %v243
        %v405 = vunpack.c.l.b16 %v244
        %v406 = vunpack.c.l.b16 %v245
        %v407 = vpack.c.b16 %v392, %v391
        %v408 = vpack.c.b16 %v394, %v393
        %v409 = vpack.c.b16 %v396, %v395
        %v410 = vpack.c.b16 %v398, %v397
        %v411 = vpack.c.b16 %v400, %v399
        %v412 = vpack.c.b16 %v402, %v401
        %v413 = vpack.c.b16 %v404, %v403
        %v414 = vpack.c.b16 %v406, %v405
        %v503 = vunpack.c.l.b16 %v246
        %v504 = vunpack.c.h.b16 %v246
        %v505 = vunpack.c.l.b16 %v247
        %v506 = vunpack.c.h.b16 %v247
        %v507 = vunpack.c.l.b16 %v248
        %v508 = vunpack.c.h.b16 %v248
        %v509 = vunpack.c.l.b16 %v249
        %v510 = vunpack.c.h.b16 %v249
        %v511 = vunpack.c.l.b16 %v250
        %v512 = vunpack.c.l.b16 %v251
        %v513 = vunpack.c.h.b16 %v251
        %v514 = vunpack.c.l.b16 %v252
        %v515 = vunpack.c.h.b16 %v252
        %v516 = vunpack.c.l.b16 %v253
        %v517 = vunpack.c.h.b16 %v253
        %v518 = vunpack.c.l.b16 %v254
        %v519 = vunpack.c.h.b16 %v254
        %v520 = vunpack.c.l.b16 %v255
        %v521 = vunpack.c.l.b16 %v256
        %v522 = vunpack.c.h.b16 %v256
        %v523 = vunpack.c.l.b16 %v257
        %v524 = vunpack.c.h.b16 %v257
        %v525 = vunpack.c.l.b16 %v258
        %v526 = vunpack.c.h.b16 %v258
        %v527 = vunpack.c.l.b16 %v259
        %v528 = vunpack.c.h.b16 %v259
        %v529 = vunpack.c.l.b16 %v260
        %v530 = vunpack.c.l.b16 %v261
        %v531 = vunpack.c.h.b16 %v261
        %v532 = vunpack.c.l.b16 %v262
        %v533 = vunpack.c.h.b16 %v262
        %v534 = vunpack.c.l.b16 %v263
        %v535 = vunpack.c.h.b16 %v263
        %v536 = vunpack.c.l.b16 %v264
        %v537 = vunpack.c.h.b16 %v264
        %v538 = vunpack.c.l.b16 %v265
        %v539 = vunpack.c.l.b16 %v266
        %v540 = vunpack.c.h.b16 %v266
        %v541 = vunpack.c.l.b16 %v267
        %v542 = vunpack.c.h.b16 %v267
        %v543 = vunpack.c.l.b16 %v268
        %v544 = vunpack.c.h.b16 %v268
        %v545 = vunpack.c.l.b16 %v269
        %v546 = vunpack.c.h.b16 %v269
        %v547 = vunpack.c.l.b16 %v270
        %v548 = vunpack.c.l.b16 %v271
        %v549 = vunpack.c.h.b16 %v271
        %v550 = vunpack.c.l.b16 %v272
        %v551 = vunpack.c.h.b16 %v272
        %v552 = vunpack.c.l.b16 %v273
        %v553 = vunpack.c.h.b16 %v273
        %v554 = vunpack.c.l.b16 %v274
        %v555 = vunpack.c.h.b16 %v274
        %v556 = vunpack.c.l.b16 %v275
        %v557 = vunpack.c.l.b16 %v276
        %v558 = vunpack.c.h.b16 %v276
        %v559 = vunpack.c.l.b16 %v277
        %v560 = vunpack.c.h.b16 %v277
        %v561 = vunpack.c.l.b16 %v278
        %v562 = vunpack.c.h.b16 %v278
        %v563 = vunpack.c.l.b16 %v279
        %v564 = vunpack.c.h.b16 %v279
        %v565 = vunpack.c.l.b16 %v280
        %v566 = vunpack.c.l.b16 %v281
        %v567 = vunpack.c.h.b16 %v281
        %v568 = vunpack.c.l.b16 %v282
        %v569 = vunpack.c.h.b16 %v282
        %v570 = vunpack.c.l.b16 %v283
        %v571 = vunpack.c.h.b16 %v283
        %v572 = vunpack.c.l.b16 %v284
        %v573 = vunpack.c.h.b16 %v284
        %v574 = vunpack.c.l.b16 %v285
        %v575 = vunpack.c.l.b16 %v286
        %v576 = vunpack.c.h.b16 %v286
        %v577 = vunpack.c.l.b16 %v287
        %v578 = vunpack.c.h.b16 %v287
        %v579 = vunpack.c.l.b16 %v288
        %v580 = vunpack.c.h.b16 %v288
        %v581 = vunpack.c.l.b16 %v289
        %v582 = vunpack.c.h.b16 %v289
        %v583 = vunpack.c.l.b16 %v290
        %v584 = vunpack.c.l.b16 %v291
        %v585 = vunpack.c.h.b16 %v291
        %v586 = vunpack.c.l.b16 %v292
        %v587 = vunpack.c.h.b16 %v292
        %v588 = vunpack.c.l.b16 %v293
        %v589 = vunpack.c.h.b16 %v293
        %v590 = vunpack.c.l.b16 %v294
        %v591 = vunpack.c.h.b16 %v294
        %v592 = vunpack.c.l.b16 %v295
        %v593 = vunpack.c.l.b16 %v296
        %v594 = vunpack.c.h.b16 %v296
        %v595 = vunpack.c.l.b16 %v297
        %v596 = vunpack.c.h.b16 %v297
        %v597 = vunpack.c.l.b16 %v298
        %v598 = vunpack.c.h.b16 %v298
        %v599 = vunpack.c.l.b16 %v299
        %v600 = vunpack.c.h.b16 %v299
        %v601 = vunpack.c.l.b16 %v300
        %v602 = vunpack.c.l.b16 %v301
        %v603 = vunpack.c.h.b16 %v301
        %v604 = vunpack.c.l.b16 %v302
        %v605 = vunpack.c.h.b16 %v302
        %v606 = vunpack.c.l.b16 %v303
        %v607 = vunpack.c.h.b16 %v303
        %v608 = vunpack.c.l.b16 %v304
        %v609 = vunpack.c.h.b16 %v304
        %v610 = vunpack.c.l.b16 %v305
        %v611 = vunpack.c.l.b16 %v306
        %v612 = vunpack.c.h.b16 %v306
        %v613 = vunpack.c.l.b16 %v307
        %v614 = vunpack.c.h.b16 %v307
        %v615 = vunpack.c.l.b16 %v308
        %v616 = vunpack.c.h.b16 %v308
        %v617 = vunpack.c.l.b16 %v309
        %v618 = vunpack.c.h.b16 %v309
        %v619 = vunpack.c.l.b16 %v310
        %v620 = vunpack.c.l.b16 %v311
        %v621 = vunpack.c.h.b16 %v311
        %v622 = vunpack.c.l.b16 %v312
        %v623 = vunpack.c.h.b16 %v312
        %v624 = vunpack.c.l.b16 %v313
        %v625 = vunpack.c.h.b16 %v313
        %v626 = vunpack.c.l.b16 %v314
        %v627 = vunpack.c.h.b16 %v314
        %v628 = vunpack.c.l.b16 %v315
        %v629 = vunpack.c.l.b16 %v316
        %v630 = vunpack.c.h.b16 %v316
        %v631 = vunpack.c.l.b16 %v317
        %v632 = vunpack.c.h.b16 %v317
        %v633 = vunpack.c.l.b16 %v318
        %v634 = vunpack.c.h.b16 %v318
        %v635 = vunpack.c.l.b16 %v319
        %v636 = vunpack.c.h.b16 %v319
        %v637 = vunpack.c.l.b16 %v320
        %v638 = vunpack.c.l.b16 %v321
        %v639 = vunpack.c.h.b16 %v321
        %v640 = vunpack.c.l.b16 %v322
        %v641 = vunpack.c.h.b16 %v322
        %v642 = vunpack.c.l.b16 %v323
        %v643 = vunpack.c.h.b16 %v323
        %v644 = vunpack.c.l.b16 %v324
        %v645 = vunpack.c.h.b16 %v324
        %v646 = vunpack.c.l.b16 %v325
        %v647 = vpack.c.b16 %v512, %v503
        %v648 = vpack.c.b16 %v513, %v504
        %v649 = vpack.c.b16 %v514, %v505
        %v650 = vpack.c.b16 %v515, %v506
        %v651 = vpack.c.b16 %v516, %v507
        %v652 = vpack.c.b16 %v517, %v508
        %v653 = vpack.c.b16 %v518, %v509
        %v654 = vpack.c.b16 %v519, %v510
        %v655 = vpack.c.b16 %v520, %v511
        %v656 = vpack.c.b16 %v530, %v521
        %v657 = vpack.c.b16 %v531, %v522
        %v658 = vpack.c.b16 %v532, %v523
        %v659 = vpack.c.b16 %v533, %v524
        %v660 = vpack.c.b16 %v534, %v525
        %v661 = vpack.c.b16 %v535, %v526
        %v662 = vpack.c.b16 %v536, %v527
        %v663 = vpack.c.b16 %v537, %v528
        %v664 = vpack.c.b16 %v538, %v529
        %v665 = vpack.c.b16 %v548, %v539
        %v666 = vpack.c.b16 %v549, %v540
        %v667 = vpack.c.b16 %v550, %v541
        %v668 = vpack.c.b16 %v551, %v542
        %v669 = vpack.c.b16 %v552, %v543
        %v670 = vpack.c.b16 %v553, %v544
        %v671 = vpack.c.b16 %v554, %v545
        %v672 = vpack.c.b16 %v555, %v546
        %v673 = vpack.c.b16 %v556, %v547
        %v674 = vpack.c.b16 %v566, %v557
        %v675 = vpack.c.b16 %v567, %v558
        %v676 = vpack.c.b16 %v568, %v559
        %v677 = vpack.c.b16 %v569, %v560
        %v678 = vpack.c.b16 %v570, %v561
        %v679 = vpack.c.b16 %v571, %v562
        %v680 = vpack.c.b16 %v572, %v563
        %v681 = vpack.c.b16 %v573, %v564
        %v682 = vpack.c.b16 %v574, %v565
        %v683 = vpack.c.b16 %v584, %v575
        %v684 = vpack.c.b16 %v585, %v576
        %v685 = vpack.c.b16 %v586, %v577
        %v686 = vpack.c.b16 %v587, %v578
        %v687 = vpack.c.b16 %v588, %v579
        %v688 = vpack.c.b16 %v589, %v580
        %v689 = vpack.c.b16 %v590, %v581
        %v690 = vpack.c.b16 %v591, %v582
        %v691 = vpack.c.b16 %v592, %v583
        %v692 = vpack.c.b16 %v602, %v593
        %v693 = vpack.c.b16 %v603, %v594
        %v694 = vpack.c.b16 %v604, %v595
        %v695 = vpack.c.b16 %v605, %v596
        %v696 = vpack.c.b16 %v606, %v597
        %v697 = vpack.c.b16 %v607, %v598
        %v698 = vpack.c.b16 %v608, %v599
        %v699 = vpack.c.b16 %v609, %v600
        %v700 = vpack.c.b16 %v610, %v601
        %v701 = vpack.c.b16 %v620, %v611
        %v702 = vpack.c.b16 %v621, %v612
        %v703 = vpack.c.b16 %v622, %v613
        %v704 = vpack.c.b16 %v623, %v614
        %v705 = vpack.c.b16 %v624, %v615
        %v706 = vpack.c.b16 %v625, %v616
        %v707 = vpack.c.b16 %v626, %v617
        %v708 = vpack.c.b16 %v627, %v618
        %v709 = vpack.c.b16 %v628, %v619
        %v710 = vpack.c.b16 %v638, %v629
        %v711 = vpack.c.b16 %v639, %v630
        %v712 = vpack.c.b16 %v640, %v631
        %v713 = vpack.c.b16 %v641, %v632
        %v714 = vpack.c.b16 %v642, %v633
        %v715 = vpack.c.b16 %v643, %v634
        %v716 = vpack.c.b16 %v644, %v635
        %v717 = vpack.c.b16 %v645, %v636
        %v718 = vpack.c.b16 %v646, %v637
        %791 = vmatprep.subr.bf16.mxu0 %v711
        %792 = vmatpush1.bf16.msra.mxu0 %v710
        %793 = vmatprep.subr.bf16.mxu0 %v702
        %794 = vmatpush1.bf16.msra.mxu0 %v701
        %795 = vmatprep.subr.bf16.mxu0 %v693
        %796 = vmatpush1.bf16.msra.mxu0 %v692
        %797 = vmatprep.subr.bf16.mxu0 %v684
        %798 = vmatpush1.bf16.msra.mxu0 %v683
        %799 = vmatprep.subr.bf16.mxu0 %v675
        %800 = vmatpush1.bf16.msra.mxu0 %v674
        %801 = vmatprep.subr.bf16.mxu0 %v666
        %802 = vmatpush1.bf16.msra.mxu0 %v665
        %803 = vmatprep.subr.bf16.mxu0 %v657
        %804 = vmatpush1.bf16.msra.mxu0 %v656
        %805 = vmatprep.subr.bf16.mxu0 %v648
        %806 = vmatpush1.bf16.msra.mxu0 %v647
        %807 = vmatprep.subr.bf16.mxu0 0
        %808 = vmatpush2.bf16.msra.mxu0 0
        %809 = vmatprep.subr.bf16.mxu0 0
        %810 = vmatpush2.bf16.msra.mxu0 0
        %811 = vmatprep.subr.bf16.mxu0 0
        %812 = vmatpush2.bf16.msra.mxu0 0
        %813 = vmatprep.subr.bf16.mxu0 0
        %814 = vmatpush2.bf16.msra.mxu0 0
        %815 = vmatprep.subr.bf16.mxu0 0
        %816 = vmatpush2.bf16.msra.mxu0 0
        %817 = vmatprep.subr.bf16.mxu0 0
        %818 = vmatpush2.bf16.msra.mxu0 0
        %819 = vmatprep.subr.bf16.mxu0 0
        %820 = vmatpush2.bf16.msra.mxu0 0
        %821 = vmatprep.subr.bf16.mxu0 0
        %822 = vmatpush2.bf16.msra.mxu0 0
        %823 = vmatprep.mubr.bf16.mxu0 0
        %824 = vmatmul.mubr.bf16.gmra.mxu0 %v407
        %v825 = vpop.f32.mrf.mxu0
        %v826 = vadd.f32 %v333, %v825
        %v827 = vpop.f32.mrf.mxu0
        %v828 = vadd.f32 %v337, %v827
        %v829 = vpop.f32.mrf.mxu0
        %v830 = vadd.f32 %v333, %v829
        %v831 = vpop.f32.mrf.mxu0
        %v832 = vadd.f32 %v337, %v831
        %833 = vmatprep.mubr.bf16.mxu0 0
        %834 = vmatmul.mubr.bf16.gmra.mxu0 %v408
        %v835 = vpop.f32.mrf.mxu0
        %v836 = vadd.f32 %v333, %v835
        %v837 = vpop.f32.mrf.mxu0
        %v838 = vadd.f32 %v337, %v837
        %v839 = vpop.f32.mrf.mxu0
        %v840 = vadd.f32 %v333, %v839
        %v841 = vpop.f32.mrf.mxu0
        %v842 = vadd.f32 %v337, %v841
        %843 = vmatprep.mubr.bf16.mxu0 0
        %844 = vmatmul.mubr.bf16.gmra.mxu0 %v409
        %v845 = vpop.f32.mrf.mxu0
        %v846 = vadd.f32 %v333, %v845
        %v847 = vpop.f32.mrf.mxu0
        %v848 = vadd.f32 %v337, %v847
        %v849 = vpop.f32.mrf.mxu0
        %v850 = vadd.f32 %v333, %v849
        %v851 = vpop.f32.mrf.mxu0
        %v852 = vadd.f32 %v337, %v851
        %853 = vmatprep.mubr.bf16.mxu0 0
        %854 = vmatmul.mubr.bf16.gmra.mxu0 %v410
        %v855 = vpop.f32.mrf.mxu0
        %v856 = vadd.f32 %v333, %v855
        %v857 = vpop.f32.mrf.mxu0
        %v858 = vadd.f32 %v337, %v857
        %v859 = vpop.f32.mrf.mxu0
        %v860 = vadd.f32 %v333, %v859
        %v861 = vpop.f32.mrf.mxu0
        %v862 = vadd.f32 %v337, %v861
        %863 = vmatprep.mubr.bf16.mxu0 0
        %864 = vmatmul.mubr.bf16.gmra.mxu0 %v411
        %v865 = vpop.f32.mrf.mxu0
        %v866 = vadd.f32 %v333, %v865
        %v867 = vpop.f32.mrf.mxu0
        %v868 = vadd.f32 %v337, %v867
        %v869 = vpop.f32.mrf.mxu0
        %v870 = vadd.f32 %v333, %v869
        %v871 = vpop.f32.mrf.mxu0
        %v872 = vadd.f32 %v337, %v871
        %873 = vmatprep.mubr.bf16.mxu0 0
        %874 = vmatmul.mubr.bf16.gmra.mxu0 %v412
        %v875 = vpop.f32.mrf.mxu0
        %v876 = vadd.f32 %v333, %v875
        %v877 = vpop.f32.mrf.mxu0
        %v878 = vadd.f32 %v337, %v877
        %v879 = vpop.f32.mrf.mxu0
        %v880 = vadd.f32 %v333, %v879
        %v881 = vpop.f32.mrf.mxu0
        %v882 = vadd.f32 %v337, %v881
        %883 = vmatprep.mubr.bf16.mxu0 0
        %884 = vmatmul.mubr.bf16.gmra.mxu0 %v413
        %v885 = vpop.f32.mrf.mxu0
        %v886 = vadd.f32 %v333, %v885
        %v887 = vpop.f32.mrf.mxu0
        %v888 = vadd.f32 %v337, %v887
        %v889 = vpop.f32.mrf.mxu0
        %v890 = vadd.f32 %v333, %v889
        %v891 = vpop.f32.mrf.mxu0
        %v892 = vadd.f32 %v337, %v891
        %893 = vmatprep.mubr.bf16.mxu0 0
        %894 = vmatmul.mubr.bf16.gmra.mxu0 %v414
        %v895 = vpop.f32.mrf.mxu0
        %v896 = vadd.f32 %v333, %v895
        %v897 = vpop.f32.mrf.mxu0
        %v898 = vadd.f32 %v337, %v897
        %v899 = vpop.f32.mrf.mxu0
        %v900 = vadd.f32 %v333, %v899
        %v901 = vpop.f32.mrf.mxu0
        %v902 = vadd.f32 %v337, %v901
        %903 = vdwg.mxu0
        %904 = vmatprep.subr.bf16.mxu0 %v713
        %905 = vmatpush1.bf16.msra.mxu0 %v712
        %906 = vmatprep.subr.bf16.mxu0 %v704
        %907 = vmatpush1.bf16.msra.mxu0 %v703
        %908 = vmatprep.subr.bf16.mxu0 %v695
        %909 = vmatpush1.bf16.msra.mxu0 %v694
        %910 = vmatprep.subr.bf16.mxu0 %v686
        %911 = vmatpush1.bf16.msra.mxu0 %v685
        %912 = vmatprep.subr.bf16.mxu0 %v677
        %913 = vmatpush1.bf16.msra.mxu0 %v676
        %914 = vmatprep.subr.bf16.mxu0 %v668
        %915 = vmatpush1.bf16.msra.mxu0 %v667
        %916 = vmatprep.subr.bf16.mxu0 %v659
        %917 = vmatpush1.bf16.msra.mxu0 %v658
        %918 = vmatprep.subr.bf16.mxu0 %v650
        %919 = vmatpush1.bf16.msra.mxu0 %v649
        %920 = vmatprep.subr.bf16.mxu0 0
        %921 = vmatpush2.bf16.msra.mxu0 0
        %922 = vmatprep.subr.bf16.mxu0 0
        %923 = vmatpush2.bf16.msra.mxu0 0
        %924 = vmatprep.subr.bf16.mxu0 0
        %925 = vmatpush2.bf16.msra.mxu0 0
        %926 = vmatprep.subr.bf16.mxu0 0
        %927 = vmatpush2.bf16.msra.mxu0 0
        %928 = vmatprep.subr.bf16.mxu0 0
        %929 = vmatpush2.bf16.msra.mxu0 0
        %930 = vmatprep.subr.bf16.mxu0 0
        %931 = vmatpush2.bf16.msra.mxu0 0
        %932 = vmatprep.subr.bf16.mxu0 0
        %933 = vmatpush2.bf16.msra.mxu0 0
        %934 = vmatprep.subr.bf16.mxu0 0
        %935 = vmatpush2.bf16.msra.mxu0 0
        %936 = vmatprep.mubr.bf16.mxu0 0
        %937 = vmatmul.mubr.bf16.gmra.mxu0 %v407
        %v938 = vpop.f32.mrf.mxu0
        %v939 = vadd.f32 %v341, %v938
        %v940 = vpop.f32.mrf.mxu0
        %v941 = vadd.f32 %v345, %v940
        %v942 = vpop.f32.mrf.mxu0
        %v943 = vadd.f32 %v341, %v942
        %v944 = vpop.f32.mrf.mxu0
        %v945 = vadd.f32 %v345, %v944
        %946 = vmatprep.mubr.bf16.mxu0 0
        %947 = vmatmul.mubr.bf16.gmra.mxu0 %v408
        %v948 = vpop.f32.mrf.mxu0
        %v949 = vadd.f32 %v341, %v948
        %v950 = vpop.f32.mrf.mxu0
        %v951 = vadd.f32 %v345, %v950
        %v952 = vpop.f32.mrf.mxu0
        %v953 = vadd.f32 %v341, %v952
        %v954 = vpop.f32.mrf.mxu0
        %v955 = vadd.f32 %v345, %v954
        %956 = vmatprep.mubr.bf16.mxu0 0
        %957 = vmatmul.mubr.bf16.gmra.mxu0 %v409
        %v958 = vpop.f32.mrf.mxu0
        %v959 = vadd.f32 %v341, %v958
        %v960 = vpop.f32.mrf.mxu0
        %v961 = vadd.f32 %v345, %v960
        %v962 = vpop.f32.mrf.mxu0
        %v963 = vadd.f32 %v341, %v962
        %v964 = vpop.f32.mrf.mxu0
        %v965 = vadd.f32 %v345, %v964
        %966 = vmatprep.mubr.bf16.mxu0 0
        %967 = vmatmul.mubr.bf16.gmra.mxu0 %v410
        %v968 = vpop.f32.mrf.mxu0
        %v969 = vadd.f32 %v341, %v968
        %v970 = vpop.f32.mrf.mxu0
        %v971 = vadd.f32 %v345, %v970
        %v972 = vpop.f32.mrf.mxu0
        %v973 = vadd.f32 %v341, %v972
        %v974 = vpop.f32.mrf.mxu0
        %v975 = vadd.f32 %v345, %v974
        %976 = vmatprep.mubr.bf16.mxu0 0
        %977 = vmatmul.mubr.bf16.gmra.mxu0 %v411
        %v978 = vpop.f32.mrf.mxu0
        %v979 = vadd.f32 %v341, %v978
        %v980 = vpop.f32.mrf.mxu0
        %v981 = vadd.f32 %v345, %v980
        %v982 = vpop.f32.mrf.mxu0
        %v983 = vadd.f32 %v341, %v982
        %v984 = vpop.f32.mrf.mxu0
        %v985 = vadd.f32 %v345, %v984
        %986 = vmatprep.mubr.bf16.mxu0 0
        %987 = vmatmul.mubr.bf16.gmra.mxu0 %v412
        %v988 = vpop.f32.mrf.mxu0
        %v989 = vadd.f32 %v341, %v988
        %v990 = vpop.f32.mrf.mxu0
        %v991 = vadd.f32 %v345, %v990
        %v992 = vpop.f32.mrf.mxu0
        %v993 = vadd.f32 %v341, %v992
        %v994 = vpop.f32.mrf.mxu0
        %v995 = vadd.f32 %v345, %v994
        %996 = vmatprep.mubr.bf16.mxu0 0
        %997 = vmatmul.mubr.bf16.gmra.mxu0 %v413
        %v998 = vpop.f32.mrf.mxu0
        %v999 = vadd.f32 %v341, %v998
        %v1000 = vpop.f32.mrf.mxu0
        %v1001 = vadd.f32 %v345, %v1000
        %v1002 = vpop.f32.mrf.mxu0
        %v1003 = vadd.f32 %v341, %v1002
        %v1004 = vpop.f32.mrf.mxu0
        %v1005 = vadd.f32 %v345, %v1004
        %1006 = vmatprep.mubr.bf16.mxu0 0
        %1007 = vmatmul.mubr.bf16.gmra.mxu0 %v414
        %v1008 = vpop.f32.mrf.mxu0
        %v1009 = vadd.f32 %v341, %v1008
        %v1010 = vpop.f32.mrf.mxu0
        %v1011 = vadd.f32 %v345, %v1010
        %v1012 = vpop.f32.mrf.mxu0
        %v1013 = vadd.f32 %v341, %v1012
        %v1014 = vpop.f32.mrf.mxu0
        %v1015 = vadd.f32 %v345, %v1014
        %1016 = vdwg.mxu0
        %1017 = vmatprep.subr.bf16.mxu0 %v715
        %1018 = vmatpush1.bf16.msra.mxu0 %v714
        %1019 = vmatprep.subr.bf16.mxu0 %v706
        %1020 = vmatpush1.bf16.msra.mxu0 %v705
        %1021 = vmatprep.subr.bf16.mxu0 %v697
        %1022 = vmatpush1.bf16.msra.mxu0 %v696
        %1023 = vmatprep.subr.bf16.mxu0 %v688
        %1024 = vmatpush1.bf16.msra.mxu0 %v687
        %1025 = vmatprep.subr.bf16.mxu0 %v679
        %1026 = vmatpush1.bf16.msra.mxu0 %v678
        %1027 = vmatprep.subr.bf16.mxu0 %v670
        %1028 = vmatpush1.bf16.msra.mxu0 %v669
        %1029 = vmatprep.subr.bf16.mxu0 %v661
        %1030 = vmatpush1.bf16.msra.mxu0 %v660
        %1031 = vmatprep.subr.bf16.mxu0 %v652
        %1032 = vmatpush1.bf16.msra.mxu0 %v651
        %1033 = vmatprep.subr.bf16.mxu0 0
        %1034 = vmatpush2.bf16.msra.mxu0 0
        %1035 = vmatprep.subr.bf16.mxu0 0
        %1036 = vmatpush2.bf16.msra.mxu0 0
        %1037 = vmatprep.subr.bf16.mxu0 0
        %1038 = vmatpush2.bf16.msra.mxu0 0
        %1039 = vmatprep.subr.bf16.mxu0 0
        %1040 = vmatpush2.bf16.msra.mxu0 0
        %1041 = vmatprep.subr.bf16.mxu0 0
        %1042 = vmatpush2.bf16.msra.mxu0 0
        %1043 = vmatprep.subr.bf16.mxu0 0
        %1044 = vmatpush2.bf16.msra.mxu0 0
        %1045 = vmatprep.subr.bf16.mxu0 0
        %1046 = vmatpush2.bf16.msra.mxu0 0
        %1047 = vmatprep.subr.bf16.mxu0 0
        %1048 = vmatpush2.bf16.msra.mxu0 0
        %1049 = vmatprep.mubr.bf16.mxu0 0
        %1050 = vmatmul.mubr.bf16.gmra.mxu0 %v407
        %v1051 = vpop.f32.mrf.mxu0
        %v1052 = vadd.f32 %v349, %v1051
        %v1053 = vpop.f32.mrf.mxu0
        %v1054 = vadd.f32 %v353, %v1053
        %v1055 = vpop.f32.mrf.mxu0
        %v1056 = vadd.f32 %v349, %v1055
        %v1057 = vpop.f32.mrf.mxu0
        %v1058 = vadd.f32 %v353, %v1057
        %1059 = vmatprep.mubr.bf16.mxu0 0
        %1060 = vmatmul.mubr.bf16.gmra.mxu0 %v408
        %v1061 = vpop.f32.mrf.mxu0
        %v1062 = vadd.f32 %v349, %v1061
        %v1063 = vpop.f32.mrf.mxu0
        %v1064 = vadd.f32 %v353, %v1063
        %v1065 = vpop.f32.mrf.mxu0
        %v1066 = vadd.f32 %v349, %v1065
        %v1067 = vpop.f32.mrf.mxu0
        %v1068 = vadd.f32 %v353, %v1067
        %1069 = vmatprep.mubr.bf16.mxu0 0
        %1070 = vmatmul.mubr.bf16.gmra.mxu0 %v409
        %v1071 = vpop.f32.mrf.mxu0
        %v1072 = vadd.f32 %v349, %v1071
        %v1073 = vpop.f32.mrf.mxu0
        %v1074 = vadd.f32 %v353, %v1073
        %v1075 = vpop.f32.mrf.mxu0
        %v1076 = vadd.f32 %v349, %v1075
        %v1077 = vpop.f32.mrf.mxu0
        %v1078 = vadd.f32 %v353, %v1077
        %1079 = vmatprep.mubr.bf16.mxu0 0
        %1080 = vmatmul.mubr.bf16.gmra.mxu0 %v410
        %v1081 = vpop.f32.mrf.mxu0
        %v1082 = vadd.f32 %v349, %v1081
        %v1083 = vpop.f32.mrf.mxu0
        %v1084 = vadd.f32 %v353, %v1083
        %v1085 = vpop.f32.mrf.mxu0
        %v1086 = vadd.f32 %v349, %v1085
        %v1087 = vpop.f32.mrf.mxu0
        %v1088 = vadd.f32 %v353, %v1087
        %1089 = vmatprep.mubr.bf16.mxu0 0
        %1090 = vmatmul.mubr.bf16.gmra.mxu0 %v411
        %v1091 = vpop.f32.mrf.mxu0
        %v1092 = vadd.f32 %v349, %v1091
        %v1093 = vpop.f32.mrf.mxu0
        %v1094 = vadd.f32 %v353, %v1093
        %v1095 = vpop.f32.mrf.mxu0
        %v1096 = vadd.f32 %v349, %v1095
        %v1097 = vpop.f32.mrf.mxu0
        %v1098 = vadd.f32 %v353, %v1097
        %1099 = vmatprep.mubr.bf16.mxu0 0
        %1100 = vmatmul.mubr.bf16.gmra.mxu0 %v412
        %v1101 = vpop.f32.mrf.mxu0
        %v1102 = vadd.f32 %v349, %v1101
        %v1103 = vpop.f32.mrf.mxu0
        %v1104 = vadd.f32 %v353, %v1103
        %v1105 = vpop.f32.mrf.mxu0
        %v1106 = vadd.f32 %v349, %v1105
        %v1107 = vpop.f32.mrf.mxu0
        %v1108 = vadd.f32 %v353, %v1107
        %1109 = vmatprep.mubr.bf16.mxu0 0
        %1110 = vmatmul.mubr.bf16.gmra.mxu0 %v413
        %v1111 = vpop.f32.mrf.mxu0
        %v1112 = vadd.f32 %v349, %v1111
        %v1113 = vpop.f32.mrf.mxu0
        %v1114 = vadd.f32 %v353, %v1113
        %v1115 = vpop.f32.mrf.mxu0
        %v1116 = vadd.f32 %v349, %v1115
        %v1117 = vpop.f32.mrf.mxu0
        %v1118 = vadd.f32 %v353, %v1117
        %1119 = vmatprep.mubr.bf16.mxu0 0
        %1120 = vmatmul.mubr.bf16.gmra.mxu0 %v414
        %v1121 = vpop.f32.mrf.mxu0
        %v1122 = vadd.f32 %v349, %v1121
        %v1123 = vpop.f32.mrf.mxu0
        %v1124 = vadd.f32 %v353, %v1123
        %v1125 = vpop.f32.mrf.mxu0
        %v1126 = vadd.f32 %v349, %v1125
        %v1127 = vpop.f32.mrf.mxu0
        %v1128 = vadd.f32 %v353, %v1127
        %1129 = vdwg.mxu0
        %1130 = vmatprep.subr.bf16.mxu0 %v717
        %1131 = vmatpush1.bf16.msra.mxu0 %v716
        %1132 = vmatprep.subr.bf16.mxu0 %v708
        %1133 = vmatpush1.bf16.msra.mxu0 %v707
        %1134 = vmatprep.subr.bf16.mxu0 %v699
        %1135 = vmatpush1.bf16.msra.mxu0 %v698
        %1136 = vmatprep.subr.bf16.mxu0 %v690
        %1137 = vmatpush1.bf16.msra.mxu0 %v689
        %1138 = vmatprep.subr.bf16.mxu0 %v681
        %1139 = vmatpush1.bf16.msra.mxu0 %v680
        %1140 = vmatprep.subr.bf16.mxu0 %v672
        %1141 = vmatpush1.bf16.msra.mxu0 %v671
        %1142 = vmatprep.subr.bf16.mxu0 %v663
        %1143 = vmatpush1.bf16.msra.mxu0 %v662
        %1144 = vmatprep.subr.bf16.mxu0 %v654
        %1145 = vmatpush1.bf16.msra.mxu0 %v653
        %1146 = vmatprep.subr.bf16.mxu0 0
        %1147 = vmatpush2.bf16.msra.mxu0 0
        %1148 = vmatprep.subr.bf16.mxu0 0
        %1149 = vmatpush2.bf16.msra.mxu0 0
        %1150 = vmatprep.subr.bf16.mxu0 0
        %1151 = vmatpush2.bf16.msra.mxu0 0
        %1152 = vmatprep.subr.bf16.mxu0 0
        %1153 = vmatpush2.bf16.msra.mxu0 0
        %1154 = vmatprep.subr.bf16.mxu0 0
        %1155 = vmatpush2.bf16.msra.mxu0 0
        %1156 = vmatprep.subr.bf16.mxu0 0
        %1157 = vmatpush2.bf16.msra.mxu0 0
        %1158 = vmatprep.subr.bf16.mxu0 0
        %1159 = vmatpush2.bf16.msra.mxu0 0
        %1160 = vmatprep.subr.bf16.mxu0 0
        %1161 = vmatpush2.bf16.msra.mxu0 0
        %1162 = vmatprep.mubr.bf16.mxu0 0
        %1163 = vmatmul.mubr.bf16.gmra.mxu0 %v407
        %v1164 = vpop.f32.mrf.mxu0
        %v1165 = vadd.f32 %v357, %v1164
        %v1166 = vpop.f32.mrf.mxu0
        %v1167 = vadd.f32 %v361, %v1166
        %v1168 = vpop.f32.mrf.mxu0
        %v1169 = vadd.f32 %v357, %v1168
        %v1170 = vpop.f32.mrf.mxu0
        %v1171 = vadd.f32 %v361, %v1170
        %1172 = vmatprep.mubr.bf16.mxu0 0
        %1173 = vmatmul.mubr.bf16.gmra.mxu0 %v408
        %v1174 = vpop.f32.mrf.mxu0
        %v1175 = vadd.f32 %v357, %v1174
        %v1176 = vpop.f32.mrf.mxu0
        %v1177 = vadd.f32 %v361, %v1176
        %v1178 = vpop.f32.mrf.mxu0
        %v1179 = vadd.f32 %v357, %v1178
        %v1180 = vpop.f32.mrf.mxu0
        %v1181 = vadd.f32 %v361, %v1180
        %1182 = vmatprep.mubr.bf16.mxu0 0
        %1183 = vmatmul.mubr.bf16.gmra.mxu0 %v409
        %v1184 = vpop.f32.mrf.mxu0
        %v1185 = vadd.f32 %v357, %v1184
        %v1186 = vpop.f32.mrf.mxu0
        %v1187 = vadd.f32 %v361, %v1186
        %v1188 = vpop.f32.mrf.mxu0
        %v1189 = vadd.f32 %v357, %v1188
        %v1190 = vpop.f32.mrf.mxu0
        %v1191 = vadd.f32 %v361, %v1190
        %1192 = vmatprep.mubr.bf16.mxu0 0
        %1193 = vmatmul.mubr.bf16.gmra.mxu0 %v410
        %v1194 = vpop.f32.mrf.mxu0
        %v1195 = vadd.f32 %v357, %v1194
        %v1196 = vpop.f32.mrf.mxu0
        %v1197 = vadd.f32 %v361, %v1196
        %v1198 = vpop.f32.mrf.mxu0
        %v1199 = vadd.f32 %v357, %v1198
        %v1200 = vpop.f32.mrf.mxu0
        %v1201 = vadd.f32 %v361, %v1200
        %1202 = vmatprep.mubr.bf16.mxu0 0
        %1203 = vmatmul.mubr.bf16.gmra.mxu0 %v411
        %v1204 = vpop.f32.mrf.mxu0
        %v1205 = vadd.f32 %v357, %v1204
        %v1206 = vpop.f32.mrf.mxu0
        %v1207 = vadd.f32 %v361, %v1206
        %v1208 = vpop.f32.mrf.mxu0
        %v1209 = vadd.f32 %v357, %v1208
        %v1210 = vpop.f32.mrf.mxu0
        %v1211 = vadd.f32 %v361, %v1210
        %1212 = vmatprep.mubr.bf16.mxu0 0
        %1213 = vmatmul.mubr.bf16.gmra.mxu0 %v412
        %v1214 = vpop.f32.mrf.mxu0
        %v1215 = vadd.f32 %v357, %v1214
        %v1216 = vpop.f32.mrf.mxu0
        %v1217 = vadd.f32 %v361, %v1216
        %v1218 = vpop.f32.mrf.mxu0
        %v1219 = vadd.f32 %v357, %v1218
        %v1220 = vpop.f32.mrf.mxu0
        %v1221 = vadd.f32 %v361, %v1220
        %1222 = vmatprep.mubr.bf16.mxu0 0
        %1223 = vmatmul.mubr.bf16.gmra.mxu0 %v413
        %v1224 = vpop.f32.mrf.mxu0
        %v1225 = vadd.f32 %v357, %v1224
        %v1226 = vpop.f32.mrf.mxu0
        %v1227 = vadd.f32 %v361, %v1226
        %v1228 = vpop.f32.mrf.mxu0
        %v1229 = vadd.f32 %v357, %v1228
        %v1230 = vpop.f32.mrf.mxu0
        %v1231 = vadd.f32 %v361, %v1230
        %1232 = vmatprep.mubr.bf16.mxu0 0
        %1233 = vmatmul.mubr.bf16.gmra.mxu0 %v414
        %v1234 = vpop.f32.mrf.mxu0
        %v1235 = vadd.f32 %v357, %v1234
        %v1236 = vpop.f32.mrf.mxu0
        %v1237 = vadd.f32 %v361, %v1236
        %v1238 = vpop.f32.mrf.mxu0
        %v1239 = vadd.f32 %v357, %v1238
        %v1240 = vpop.f32.mrf.mxu0
        %v1241 = vadd.f32 %v361, %v1240
        %1242 = vdwg.mxu0
        %1243 = vmatprep.subr.bf16.mxu0 0
        %1244 = vmatpush1.bf16.msra.mxu0 %v718
        %1245 = vmatprep.subr.bf16.mxu0 0
        %1246 = vmatpush1.bf16.msra.mxu0 %v709
        %1247 = vmatprep.subr.bf16.mxu0 0
        %1248 = vmatpush1.bf16.msra.mxu0 %v700
        %1249 = vmatprep.subr.bf16.mxu0 0
        %1250 = vmatpush1.bf16.msra.mxu0 %v691
        %1251 = vmatprep.subr.bf16.mxu0 0
        %1252 = vmatpush1.bf16.msra.mxu0 %v682
        %1253 = vmatprep.subr.bf16.mxu0 0
        %1254 = vmatpush1.bf16.msra.mxu0 %v673
        %1255 = vmatprep.subr.bf16.mxu0 0
        %1256 = vmatpush1.bf16.msra.mxu0 %v664
        %1257 = vmatprep.subr.bf16.mxu0 0
        %1258 = vmatpush1.bf16.msra.mxu0 %v655
        %1259 = vmatprep.subr.bf16.mxu0 0
        %1260 = vmatpush2.bf16.msra.mxu0 0
        %1261 = vmatprep.subr.bf16.mxu0 0
        %1262 = vmatpush2.bf16.msra.mxu0 0
        %1263 = vmatprep.subr.bf16.mxu0 0
        %1264 = vmatpush2.bf16.msra.mxu0 0
        %1265 = vmatprep.subr.bf16.mxu0 0
        %1266 = vmatpush2.bf16.msra.mxu0 0
        %1267 = vmatprep.subr.bf16.mxu0 0
        %1268 = vmatpush2.bf16.msra.mxu0 0
        %1269 = vmatprep.subr.bf16.mxu0 0
        %1270 = vmatpush2.bf16.msra.mxu0 0
        %1271 = vmatprep.subr.bf16.mxu0 0
        %1272 = vmatpush2.bf16.msra.mxu0 0
        %1273 = vmatprep.subr.bf16.mxu0 0
        %1274 = vmatpush2.bf16.msra.mxu0 0
        %1275 = vmatprep.mubr.bf16.mxu0 0
        %1276 = vmatmul.mubr.bf16.gmra.mxu0 %v407
        %v1277 = vpop.f32.mrf.mxu0
        %v1278 = vadd.f32 %v365, %v1277
        %v1279 = vpop.f32.mrf.mxu0
        %v1280 = vpop.f32.mrf.mxu0
        %v1281 = vadd.f32 %v365, %v1280
        %v1282 = vpop.f32.mrf.mxu0
        %1283 = vmatprep.mubr.bf16.mxu0 0
        %1284 = vmatmul.mubr.bf16.gmra.mxu0 %v408
        %v1285 = vpop.f32.mrf.mxu0
        %v1286 = vadd.f32 %v365, %v1285
        %v1287 = vpop.f32.mrf.mxu0
        %v1288 = vpop.f32.mrf.mxu0
        %v1289 = vadd.f32 %v365, %v1288
        %v1290 = vpop.f32.mrf.mxu0
        %1291 = vmatprep.mubr.bf16.mxu0 0
        %1292 = vmatmul.mubr.bf16.gmra.mxu0 %v409
        %v1293 = vpop.f32.mrf.mxu0
        %v1294 = vadd.f32 %v365, %v1293
        %v1295 = vpop.f32.mrf.mxu0
        %v1296 = vpop.f32.mrf.mxu0
        %v1297 = vadd.f32 %v365, %v1296
        %v1298 = vpop.f32.mrf.mxu0
        %1299 = vmatprep.mubr.bf16.mxu0 0
        %1300 = vmatmul.mubr.bf16.gmra.mxu0 %v410
        %v1301 = vpop.f32.mrf.mxu0
        %v1302 = vadd.f32 %v365, %v1301
        %v1303 = vpop.f32.mrf.mxu0
        %v1304 = vpop.f32.mrf.mxu0
        %v1305 = vadd.f32 %v365, %v1304
        %v1306 = vpop.f32.mrf.mxu0
        %1307 = vmatprep.mubr.bf16.mxu0 0
        %1308 = vmatmul.mubr.bf16.gmra.mxu0 %v411
        %v1309 = vpop.f32.mrf.mxu0
        %v1310 = vadd.f32 %v365, %v1309
        %v1311 = vpop.f32.mrf.mxu0
        %v1312 = vpop.f32.mrf.mxu0
        %v1313 = vadd.f32 %v365, %v1312
        %v1314 = vpop.f32.mrf.mxu0
        %1315 = vmatprep.mubr.bf16.mxu0 0
        %1316 = vmatmul.mubr.bf16.gmra.mxu0 %v412
        %v1317 = vpop.f32.mrf.mxu0
        %v1318 = vadd.f32 %v365, %v1317
        %v1319 = vpop.f32.mrf.mxu0
        %v1320 = vpop.f32.mrf.mxu0
        %v1321 = vadd.f32 %v365, %v1320
        %v1322 = vpop.f32.mrf.mxu0
        %1323 = vmatprep.mubr.bf16.mxu0 0
        %1324 = vmatmul.mubr.bf16.gmra.mxu0 %v413
        %v1325 = vpop.f32.mrf.mxu0
        %v1326 = vadd.f32 %v365, %v1325
        %v1327 = vpop.f32.mrf.mxu0
        %v1328 = vpop.f32.mrf.mxu0
        %v1329 = vadd.f32 %v365, %v1328
        %v1330 = vpop.f32.mrf.mxu0
        %1331 = vmatprep.mubr.bf16.mxu0 0
        %1332 = vmatmul.mubr.bf16.gmra.mxu0 %v414
        %v1333 = vpop.f32.mrf.mxu0
        %v1334 = vadd.f32 %v365, %v1333
        %v1335 = vpop.f32.mrf.mxu0
        %v1336 = vpop.f32.mrf.mxu0
        %v1337 = vadd.f32 %v365, %v1336
        %v1338 = vpop.f32.mrf.mxu0
        %1339 = vdwg.mxu0
        %v1340 = vlaneseq
        %v1341 = vand.u32 %v1340, 127
        %vm1342 = vcmp.lt.s32.totalorder %v1341, 4
        %v1343 = vsel %vm1342, %v1278, -1e+30
        %v1344 = vsel %vm1342, %v1281, -1e+30
        %v1345 = vsel %vm1342, %v1286, -1e+30
        %v1346 = vsel %vm1342, %v1289, -1e+30
        %v1347 = vsel %vm1342, %v1294, -1e+30
        %v1348 = vsel %vm1342, %v1297, -1e+30
        %v1349 = vsel %vm1342, %v1302, -1e+30
        %v1350 = vsel %vm1342, %v1305, -1e+30
        %v1351 = vsel %vm1342, %v1310, -1e+30
        %v1352 = vsel %vm1342, %v1313, -1e+30
        %v1353 = vsel %vm1342, %v1318, -1e+30
        %v1354 = vsel %vm1342, %v1321, -1e+30
        %v1355 = vsel %vm1342, %v1326, -1e+30
        %v1356 = vsel %vm1342, %v1329, -1e+30
        %v1357 = vsel %vm1342, %v1334, -1e+30
        %v1358 = vsel %vm1342, %v1337, -1e+30
        %1359 = vmax.xlane.f32.xlu0 %v1343
        %v1360 = vpop.xlane.xlu0 %1359
        %1361 = vmax.xlane.f32.xlu0 %v1344
        %v1362 = vpop.xlane.xlu0 %1361
        %1363 = vmax.xlane.f32.xlu0 %v1345
        %v1364 = vpop.xlane.xlu0 %1363
        %1365 = vmax.xlane.f32.xlu0 %v1346
        %v1366 = vpop.xlane.xlu0 %1365
        %1367 = vmax.xlane.f32.xlu0 %v1347
        %v1368 = vpop.xlane.xlu0 %1367
        %1369 = vmax.xlane.f32.xlu0 %v1348
        %v1370 = vpop.xlane.xlu0 %1369
        %1371 = vmax.xlane.f32.xlu0 %v1349
        %v1372 = vpop.xlane.xlu0 %1371
        %1373 = vmax.xlane.f32.xlu0 %v1350
        %v1374 = vpop.xlane.xlu0 %1373
        %1375 = vmax.xlane.f32.xlu0 %v1351
        %v1376 = vpop.xlane.xlu0 %1375
        %1377 = vmax.xlane.f32.xlu0 %v1352
        %v1378 = vpop.xlane.xlu0 %1377
        %1379 = vmax.xlane.f32.xlu0 %v1353
        %v1380 = vpop.xlane.xlu0 %1379
        %1381 = vmax.xlane.f32.xlu0 %v1354
        %v1382 = vpop.xlane.xlu0 %1381
        %1383 = vmax.xlane.f32.xlu0 %v1355
        %v1384 = vpop.xlane.xlu0 %1383
        %1385 = vmax.xlane.f32.xlu0 %v1356
        %v1386 = vpop.xlane.xlu0 %1385
        %1387 = vmax.xlane.f32.xlu0 %v1357
        %v1388 = vpop.xlane.xlu0 %1387
        %1389 = vmax.xlane.f32.xlu0 %v1358
        %v1390 = vpop.xlane.xlu0 %1389
        %v1391 = vsub.f32 %v1343, %v1360
        %v1392 = vsub.f32 %v1344, %v1362
        %v1393 = vsub.f32 %v1345, %v1364
        %v1394 = vsub.f32 %v1346, %v1366
        %v1395 = vsub.f32 %v1347, %v1368
        %v1396 = vsub.f32 %v1348, %v1370
        %v1397 = vsub.f32 %v1349, %v1372
        %v1398 = vsub.f32 %v1350, %v1374
        %v1399 = vsub.f32 %v1351, %v1376
        %v1400 = vsub.f32 %v1352, %v1378
        %v1401 = vsub.f32 %v1353, %v1380
        %v1402 = vsub.f32 %v1354, %v1382
        %v1403 = vsub.f32 %v1355, %v1384
        %v1404 = vsub.f32 %v1356, %v1386
        %v1405 = vsub.f32 %v1357, %v1388
        %v1406 = vsub.f32 %v1358, %v1390
        %v1407 = vmul.f32 %v1391, 1.442695
        %v1408 = vpow.pop %v1407
        %v1409 = vmul.f32 %v1392, 1.442695
        %v1410 = vpow.pop %v1409
        %v1411 = vmul.f32 %v1393, 1.442695
        %v1412 = vpow.pop %v1411
        %v1413 = vmul.f32 %v1394, 1.442695
        %v1414 = vpow.pop %v1413
        %v1415 = vmul.f32 %v1395, 1.442695
        %v1416 = vpow.pop %v1415
        %v1417 = vmul.f32 %v1396, 1.442695
        %v1418 = vpow.pop %v1417
        %v1419 = vmul.f32 %v1397, 1.442695
        %v1420 = vpow.pop %v1419
        %v1421 = vmul.f32 %v1398, 1.442695
        %v1422 = vpow.pop %v1421
        %v1423 = vmul.f32 %v1399, 1.442695
        %v1424 = vpow.pop %v1423
        %v1425 = vmul.f32 %v1400, 1.442695
        %v1426 = vpow.pop %v1425
        %v1427 = vmul.f32 %v1401, 1.442695
        %v1428 = vpow.pop %v1427
        %v1429 = vmul.f32 %v1402, 1.442695
        %v1430 = vpow.pop %v1429
        %v1431 = vmul.f32 %v1403, 1.442695
        %v1432 = vpow.pop %v1431
        %v1433 = vmul.f32 %v1404, 1.442695
        %v1434 = vpow.pop %v1433
        %v1435 = vmul.f32 %v1405, 1.442695
        %v1436 = vpow.pop %v1435
        %v1437 = vmul.f32 %v1406, 1.442695
        %v1438 = vpow.pop %v1437
        %v1439 = vsel %vm1342, %v1408, 0.0
        %v1440 = vsel %vm1342, %v1410, 0.0
        %v1441 = vsel %vm1342, %v1412, 0.0
        %v1442 = vsel %vm1342, %v1414, 0.0
        %v1443 = vsel %vm1342, %v1416, 0.0
        %v1444 = vsel %vm1342, %v1418, 0.0
        %v1445 = vsel %vm1342, %v1420, 0.0
        %v1446 = vsel %vm1342, %v1422, 0.0
        %v1447 = vsel %vm1342, %v1424, 0.0
        %v1448 = vsel %vm1342, %v1426, 0.0
        %v1449 = vsel %vm1342, %v1428, 0.0
        %v1450 = vsel %vm1342, %v1430, 0.0
        %v1451 = vsel %vm1342, %v1432, 0.0
        %v1452 = vsel %vm1342, %v1434, 0.0
        %v1453 = vsel %vm1342, %v1436, 0.0
        %v1454 = vsel %vm1342, %v1438, 0.0
        %1455 = vadd.xlane.f32.xlu0 %v1439
        %v1456 = vpop.xlane.xlu0 %1455
        %1457 = vadd.xlane.f32.xlu0 %v1440
        %v1458 = vpop.xlane.xlu0 %1457
        %1459 = vadd.xlane.f32.xlu0 %v1441
        %v1460 = vpop.xlane.xlu0 %1459
        %1461 = vadd.xlane.f32.xlu0 %v1442
        %v1462 = vpop.xlane.xlu0 %1461
        %1463 = vadd.xlane.f32.xlu0 %v1443
        %v1464 = vpop.xlane.xlu0 %1463
        %1465 = vadd.xlane.f32.xlu0 %v1444
        %v1466 = vpop.xlane.xlu0 %1465
        %1467 = vadd.xlane.f32.xlu0 %v1445
        %v1468 = vpop.xlane.xlu0 %1467
        %1469 = vadd.xlane.f32.xlu0 %v1446
        %v1470 = vpop.xlane.xlu0 %1469
        %1471 = vadd.xlane.f32.xlu0 %v1447
        %v1472 = vpop.xlane.xlu0 %1471
        %1473 = vadd.xlane.f32.xlu0 %v1448
        %v1474 = vpop.xlane.xlu0 %1473
        %1475 = vadd.xlane.f32.xlu0 %v1449
        %v1476 = vpop.xlane.xlu0 %1475
        %1477 = vadd.xlane.f32.xlu0 %v1450
        %v1478 = vpop.xlane.xlu0 %1477
        %1479 = vadd.xlane.f32.xlu0 %v1451
        %v1480 = vpop.xlane.xlu0 %1479
        %1481 = vadd.xlane.f32.xlu0 %v1452
        %v1482 = vpop.xlane.xlu0 %1481
        %1483 = vadd.xlane.f32.xlu0 %v1453
        %v1484 = vpop.xlane.xlu0 %1483
        %1485 = vadd.xlane.f32.xlu0 %v1454
        %v1486 = vpop.xlane.xlu0 %1485
        %v1487 = vrcp.pop %v1456
        %v1488 = vrcp.pop %v1458
        %v1489 = vrcp.pop %v1460
        %v1490 = vrcp.pop %v1462
        %v1491 = vrcp.pop %v1464
        %v1492 = vrcp.pop %v1466
        %v1493 = vrcp.pop %v1468
        %v1494 = vrcp.pop %v1470
        %v1495 = vrcp.pop %v1472
        %v1496 = vrcp.pop %v1474
        %v1497 = vrcp.pop %v1476
        %v1498 = vrcp.pop %v1478
        %v1499 = vrcp.pop %v1480
        %v1500 = vrcp.pop %v1482
        %v1501 = vrcp.pop %v1484
        %v1502 = vrcp.pop %v1486
        %v1503 = vmul.f32 %v1439, %v1487
        %v1504 = vmul.f32 %v1440, %v1488
        %v1505 = vmul.f32 %v1441, %v1489
        %v1506 = vmul.f32 %v1442, %v1490
        %v1507 = vmul.f32 %v1443, %v1491
        %v1508 = vmul.f32 %v1444, %v1492
        %v1509 = vmul.f32 %v1445, %v1493
        %v1510 = vmul.f32 %v1446, %v1494
        %v1511 = vmul.f32 %v1447, %v1495
        %v1512 = vmul.f32 %v1448, %v1496
        %v1513 = vmul.f32 %v1449, %v1497
        %v1514 = vmul.f32 %v1450, %v1498
        %v1515 = vmul.f32 %v1451, %v1499
        %v1516 = vmul.f32 %v1452, %v1500
        %v1517 = vmul.f32 %v1453, %v1501
        %v1518 = vmul.f32 %v1454, %v1502
        %v1519 = vmax.f32 %v826, 0.0
        %v1520 = vmax.f32 %v828, 0.0
        %v1521 = vmax.f32 %v939, 0.0
        %v1522 = vmax.f32 %v941, 0.0
        %v1523 = vmax.f32 %v1052, 0.0
        %v1524 = vmax.f32 %v1054, 0.0
        %v1525 = vmax.f32 %v1165, 0.0
        %v1526 = vmax.f32 %v1167, 0.0
        %v1527 = vmax.f32 %v830, 0.0
        %v1528 = vmax.f32 %v832, 0.0
        %v1529 = vmax.f32 %v943, 0.0
        %v1530 = vmax.f32 %v945, 0.0
        %v1531 = vmax.f32 %v1056, 0.0
        %v1532 = vmax.f32 %v1058, 0.0
        %v1533 = vmax.f32 %v1169, 0.0
        %v1534 = vmax.f32 %v1171, 0.0
        %v1535 = vmax.f32 %v836, 0.0
        %v1536 = vmax.f32 %v838, 0.0
        %v1537 = vmax.f32 %v949, 0.0
        %v1538 = vmax.f32 %v951, 0.0
        %v1539 = vmax.f32 %v1062, 0.0
        %v1540 = vmax.f32 %v1064, 0.0
        %v1541 = vmax.f32 %v1175, 0.0
        %v1542 = vmax.f32 %v1177, 0.0
        %v1543 = vmax.f32 %v840, 0.0
        %v1544 = vmax.f32 %v842, 0.0
        %v1545 = vmax.f32 %v953, 0.0
        %v1546 = vmax.f32 %v955, 0.0
        %v1547 = vmax.f32 %v1066, 0.0
        %v1548 = vmax.f32 %v1068, 0.0
        %v1549 = vmax.f32 %v1179, 0.0
        %v1550 = vmax.f32 %v1181, 0.0
        %v1551 = vmax.f32 %v846, 0.0
        %v1552 = vmax.f32 %v848, 0.0
        %v1553 = vmax.f32 %v959, 0.0
        %v1554 = vmax.f32 %v961, 0.0
        %v1555 = vmax.f32 %v1072, 0.0
        %v1556 = vmax.f32 %v1074, 0.0
        %v1557 = vmax.f32 %v1185, 0.0
        %v1558 = vmax.f32 %v1187, 0.0
        %v1559 = vmax.f32 %v850, 0.0
        %v1560 = vmax.f32 %v852, 0.0
        %v1561 = vmax.f32 %v963, 0.0
        %v1562 = vmax.f32 %v965, 0.0
        %v1563 = vmax.f32 %v1076, 0.0
        %v1564 = vmax.f32 %v1078, 0.0
        %v1565 = vmax.f32 %v1189, 0.0
        %v1566 = vmax.f32 %v1191, 0.0
        %v1567 = vmax.f32 %v856, 0.0
        %v1568 = vmax.f32 %v858, 0.0
        %v1569 = vmax.f32 %v969, 0.0
        %v1570 = vmax.f32 %v971, 0.0
        %v1571 = vmax.f32 %v1082, 0.0
        %v1572 = vmax.f32 %v1084, 0.0
        %v1573 = vmax.f32 %v1195, 0.0
        %v1574 = vmax.f32 %v1197, 0.0
        %v1575 = vmax.f32 %v860, 0.0
        %v1576 = vmax.f32 %v862, 0.0
        %v1577 = vmax.f32 %v973, 0.0
        %v1578 = vmax.f32 %v975, 0.0
        %v1579 = vmax.f32 %v1086, 0.0
        %v1580 = vmax.f32 %v1088, 0.0
        %v1581 = vmax.f32 %v1199, 0.0
        %v1582 = vmax.f32 %v1201, 0.0
        %v1583 = vmax.f32 %v866, 0.0
        %v1584 = vmax.f32 %v868, 0.0
        %v1585 = vmax.f32 %v979, 0.0
        %v1586 = vmax.f32 %v981, 0.0
        %v1587 = vmax.f32 %v1092, 0.0
        %v1588 = vmax.f32 %v1094, 0.0
        %v1589 = vmax.f32 %v1205, 0.0
        %v1590 = vmax.f32 %v1207, 0.0
        %v1591 = vmax.f32 %v870, 0.0
        %v1592 = vmax.f32 %v872, 0.0
        %v1593 = vmax.f32 %v983, 0.0
        %v1594 = vmax.f32 %v985, 0.0
        %v1595 = vmax.f32 %v1096, 0.0
        %v1596 = vmax.f32 %v1098, 0.0
        %v1597 = vmax.f32 %v1209, 0.0
        %v1598 = vmax.f32 %v1211, 0.0
        %v1599 = vmax.f32 %v876, 0.0
        %v1600 = vmax.f32 %v878, 0.0
        %v1601 = vmax.f32 %v989, 0.0
        %v1602 = vmax.f32 %v991, 0.0
        %v1603 = vmax.f32 %v1102, 0.0
        %v1604 = vmax.f32 %v1104, 0.0
        %v1605 = vmax.f32 %v1215, 0.0
        %v1606 = vmax.f32 %v1217, 0.0
        %v1607 = vmax.f32 %v880, 0.0
        %v1608 = vmax.f32 %v882, 0.0
        %v1609 = vmax.f32 %v993, 0.0
        %v1610 = vmax.f32 %v995, 0.0
        %v1611 = vmax.f32 %v1106, 0.0
        %v1612 = vmax.f32 %v1108, 0.0
        %v1613 = vmax.f32 %v1219, 0.0
        %v1614 = vmax.f32 %v1221, 0.0
        %v1615 = vmax.f32 %v886, 0.0
        %v1616 = vmax.f32 %v888, 0.0
        %v1617 = vmax.f32 %v999, 0.0
        %v1618 = vmax.f32 %v1001, 0.0
        %v1619 = vmax.f32 %v1112, 0.0
        %v1620 = vmax.f32 %v1114, 0.0
        %v1621 = vmax.f32 %v1225, 0.0
        %v1622 = vmax.f32 %v1227, 0.0
        %v1623 = vmax.f32 %v890, 0.0
        %v1624 = vmax.f32 %v892, 0.0
        %v1625 = vmax.f32 %v1003, 0.0
        %v1626 = vmax.f32 %v1005, 0.0
        %v1627 = vmax.f32 %v1116, 0.0
        %v1628 = vmax.f32 %v1118, 0.0
        %v1629 = vmax.f32 %v1229, 0.0
        %v1630 = vmax.f32 %v1231, 0.0
        %v1631 = vmax.f32 %v896, 0.0
        %v1632 = vmax.f32 %v898, 0.0
        %v1633 = vmax.f32 %v1009, 0.0
        %v1634 = vmax.f32 %v1011, 0.0
        %v1635 = vmax.f32 %v1122, 0.0
        %v1636 = vmax.f32 %v1124, 0.0
        %v1637 = vmax.f32 %v1235, 0.0
        %v1638 = vmax.f32 %v1237, 0.0
        %v1639 = vmax.f32 %v900, 0.0
        %v1640 = vmax.f32 %v902, 0.0
        %v1641 = vmax.f32 %v1013, 0.0
        %v1642 = vmax.f32 %v1015, 0.0
        %v1643 = vmax.f32 %v1126, 0.0
        %v1644 = vmax.f32 %v1128, 0.0
        %v1645 = vmax.f32 %v1239, 0.0
        %v1646 = vmax.f32 %v1241, 0.0
        %v1775 = vcombine.low %v1519, %v1520
        %v1776 = vcombine.high %v1519, %v1520
        %v1777 = vcombine.low %v1527, %v1528
        %v1778 = vcombine.high %v1527, %v1528
        %v1779 = vcombine.low %v1535, %v1536
        %v1780 = vcombine.high %v1535, %v1536
        %v1781 = vcombine.low %v1543, %v1544
        %v1782 = vcombine.high %v1543, %v1544
        %v1783 = vcombine.low %v1551, %v1552
        %v1784 = vcombine.high %v1551, %v1552
        %v1785 = vcombine.low %v1559, %v1560
        %v1786 = vcombine.high %v1559, %v1560
        %v1787 = vcombine.low %v1567, %v1568
        %v1788 = vcombine.high %v1567, %v1568
        %v1789 = vcombine.low %v1575, %v1576
        %v1790 = vcombine.high %v1575, %v1576
        %v1791 = vcombine.low %v1583, %v1584
        %v1792 = vcombine.high %v1583, %v1584
        %v1793 = vcombine.low %v1591, %v1592
        %v1794 = vcombine.high %v1591, %v1592
        %v1795 = vcombine.low %v1599, %v1600
        %v1796 = vcombine.high %v1599, %v1600
        %v1797 = vcombine.low %v1607, %v1608
        %v1798 = vcombine.high %v1607, %v1608
        %v1799 = vcombine.low %v1615, %v1616
        %v1800 = vcombine.high %v1615, %v1616
        %v1801 = vcombine.low %v1623, %v1624
        %v1802 = vcombine.high %v1623, %v1624
        %v1803 = vcombine.low %v1631, %v1632
        %v1804 = vcombine.high %v1631, %v1632
        %v1805 = vcombine.low %v1639, %v1640
        %v1806 = vcombine.high %v1639, %v1640
        %v1807 = vcombine.low %v1521, %v1522
        %v1808 = vcombine.high %v1521, %v1522
        %v1809 = vcombine.low %v1529, %v1530
        %v1810 = vcombine.high %v1529, %v1530
        %v1811 = vcombine.low %v1537, %v1538
        %v1812 = vcombine.high %v1537, %v1538
        %v1813 = vcombine.low %v1545, %v1546
        %v1814 = vcombine.high %v1545, %v1546
        %v1815 = vcombine.low %v1553, %v1554
        %v1816 = vcombine.high %v1553, %v1554
        %v1817 = vcombine.low %v1561, %v1562
        %v1818 = vcombine.high %v1561, %v1562
        %v1819 = vcombine.low %v1569, %v1570
        %v1820 = vcombine.high %v1569, %v1570
        %v1821 = vcombine.low %v1577, %v1578
        %v1822 = vcombine.high %v1577, %v1578
        %v1823 = vcombine.low %v1585, %v1586
        %v1824 = vcombine.high %v1585, %v1586
        %v1825 = vcombine.low %v1593, %v1594
        %v1826 = vcombine.high %v1593, %v1594
        %v1827 = vcombine.low %v1601, %v1602
        %v1828 = vcombine.high %v1601, %v1602
        %v1829 = vcombine.low %v1609, %v1610
        %v1830 = vcombine.high %v1609, %v1610
        %v1831 = vcombine.low %v1617, %v1618
        %v1832 = vcombine.high %v1617, %v1618
        %v1833 = vcombine.low %v1625, %v1626
        %v1834 = vcombine.high %v1625, %v1626
        %v1835 = vcombine.low %v1633, %v1634
        %v1836 = vcombine.high %v1633, %v1634
        %v1837 = vcombine.low %v1641, %v1642
        %v1838 = vcombine.high %v1641, %v1642
        %v1839 = vcombine.low %v1523, %v1524
        %v1840 = vcombine.high %v1523, %v1524
        %v1841 = vcombine.low %v1531, %v1532
        %v1842 = vcombine.high %v1531, %v1532
        %v1843 = vcombine.low %v1539, %v1540
        %v1844 = vcombine.high %v1539, %v1540
        %v1845 = vcombine.low %v1547, %v1548
        %v1846 = vcombine.high %v1547, %v1548
        %v1847 = vcombine.low %v1555, %v1556
        %v1848 = vcombine.high %v1555, %v1556
        %v1849 = vcombine.low %v1563, %v1564
        %v1850 = vcombine.high %v1563, %v1564
        %v1851 = vcombine.low %v1571, %v1572
        %v1852 = vcombine.high %v1571, %v1572
        %v1853 = vcombine.low %v1579, %v1580
        %v1854 = vcombine.high %v1579, %v1580
        %v1855 = vcombine.low %v1587, %v1588
        %v1856 = vcombine.high %v1587, %v1588
        %v1857 = vcombine.low %v1595, %v1596
        %v1858 = vcombine.high %v1595, %v1596
        %v1859 = vcombine.low %v1603, %v1604
        %v1860 = vcombine.high %v1603, %v1604
        %v1861 = vcombine.low %v1611, %v1612
        %v1862 = vcombine.high %v1611, %v1612
        %v1863 = vcombine.low %v1619, %v1620
        %v1864 = vcombine.high %v1619, %v1620
        %v1865 = vcombine.low %v1627, %v1628
        %v1866 = vcombine.high %v1627, %v1628
        %v1867 = vcombine.low %v1635, %v1636
        %v1868 = vcombine.high %v1635, %v1636
        %v1869 = vcombine.low %v1643, %v1644
        %v1870 = vcombine.high %v1643, %v1644
        %v1871 = vcombine.low %v1525, %v1526
        %v1872 = vcombine.high %v1525, %v1526
        %v1873 = vcombine.low %v1533, %v1534
        %v1874 = vcombine.high %v1533, %v1534
        %v1875 = vcombine.low %v1541, %v1542
        %v1876 = vcombine.high %v1541, %v1542
        %v1877 = vcombine.low %v1549, %v1550
        %v1878 = vcombine.high %v1549, %v1550
        %v1879 = vcombine.low %v1557, %v1558
        %v1880 = vcombine.high %v1557, %v1558
        %v1881 = vcombine.low %v1565, %v1566
        %v1882 = vcombine.high %v1565, %v1566
        %v1883 = vcombine.low %v1573, %v1574
        %v1884 = vcombine.high %v1573, %v1574
        %v1885 = vcombine.low %v1581, %v1582
        %v1886 = vcombine.high %v1581, %v1582
        %v1887 = vcombine.low %v1589, %v1590
        %v1888 = vcombine.high %v1589, %v1590
        %v1889 = vcombine.low %v1597, %v1598
        %v1890 = vcombine.high %v1597, %v1598
        %v1891 = vcombine.low %v1605, %v1606
        %v1892 = vcombine.high %v1605, %v1606
        %v1893 = vcombine.low %v1613, %v1614
        %v1894 = vcombine.high %v1613, %v1614
        %v1895 = vcombine.low %v1621, %v1622
        %v1896 = vcombine.high %v1621, %v1622
        %v1897 = vcombine.low %v1629, %v1630
        %v1898 = vcombine.high %v1629, %v1630
        %v1899 = vcombine.low %v1637, %v1638
        %v1900 = vcombine.high %v1637, %v1638
        %v1901 = vcombine.low %v1645, %v1646
        %v1902 = vcombine.high %v1645, %v1646
        %v2031 = vcombine.low %v1775, %v1839
        %v2032 = vcombine.high %v1775, %v1839
        %v2034 = vunpack.c.l.s4 1983009808
        %v2035 = vunpack.c.0.s8 %v2034
        %v2036 = vlaneseq
        %v2037 = vshrl.u32 %v2036, 7
        %v2038 = vsub.s32 %v2035, %v2037
        %v2039 = vrot.slane %v2031, %v2038
        %v2041 = vunpack.c.l.s4 1983009808
        %v2042 = vunpack.c.0.s8 %v2041
        %v2043 = vlaneseq
        %v2044 = vshrl.u32 %v2043, 7
        %v2045 = vsub.s32 %v2042, %v2044
        %v2046 = vrot.slane %v2032, %v2045
        %v2047 = vcombine.low %v1807, %v1871
        %v2048 = vcombine.high %v1807, %v1871
        %v2050 = vunpack.c.l.s4 1983009808
        %v2051 = vunpack.c.0.s8 %v2050
        %v2052 = vlaneseq
        %v2053 = vshrl.u32 %v2052, 7
        %v2054 = vsub.s32 %v2051, %v2053
        %v2055 = vrot.slane %v2047, %v2054
        %v2057 = vunpack.c.l.s4 1983009808
        %v2058 = vunpack.c.0.s8 %v2057
        %v2059 = vlaneseq
        %v2060 = vshrl.u32 %v2059, 7
        %v2061 = vsub.s32 %v2058, %v2060
        %v2062 = vrot.slane %v2048, %v2061
        %v2063 = vcombine.low %v2039, %v2055
        %v2064 = vcombine.high %v2039, %v2055
        %v2066 = vunpack.c.l.s4 1934713408
        %v2067 = vunpack.c.0.s8 %v2066
        %v2068 = vlaneseq
        %v2069 = vshrl.u32 %v2068, 7
        %v2070 = vsub.s32 %v2067, %v2069
        %v2071 = vrot.slane %v2063, %v2070
        %v2073 = vunpack.c.l.s4 1934713408
        %v2074 = vunpack.c.0.s8 %v2073
        %v2075 = vlaneseq
        %v2076 = vshrl.u32 %v2075, 7
        %v2077 = vsub.s32 %v2074, %v2076
        %v2078 = vrot.slane %v2064, %v2077
        %v2079 = vcombine.low %v2046, %v2062
        %v2080 = vcombine.high %v2046, %v2062
        %v2082 = vunpack.c.l.s4 1934713408
        %v2083 = vunpack.c.0.s8 %v2082
        %v2084 = vlaneseq
        %v2085 = vshrl.u32 %v2084, 7
        %v2086 = vsub.s32 %v2083, %v2085
        %v2087 = vrot.slane %v2079, %v2086
        %v2089 = vunpack.c.l.s4 1934713408
        %v2090 = vunpack.c.0.s8 %v2089
        %v2091 = vlaneseq
        %v2092 = vshrl.u32 %v2091, 7
        %v2093 = vsub.s32 %v2090, %v2092
        %v2094 = vrot.slane %v2080, %v2093
        %v2095 = vcombine.low %v2071, %v2087
        %v2096 = vcombine.high %v2071, %v2087
        %v2097 = vcombine.low %v2078, %v2094
        %v2098 = vcombine.high %v2078, %v2094
        %v2099 = vcombine.low %v1776, %v1840
        %v2100 = vcombine.high %v1776, %v1840
        %v2102 = vunpack.c.l.s4 1983009808
        %v2103 = vunpack.c.0.s8 %v2102
        %v2104 = vlaneseq
        %v2105 = vshrl.u32 %v2104, 7
        %v2106 = vsub.s32 %v2103, %v2105
        %v2107 = vrot.slane %v2099, %v2106
        %v2109 = vunpack.c.l.s4 1983009808
        %v2110 = vunpack.c.0.s8 %v2109
        %v2111 = vlaneseq
        %v2112 = vshrl.u32 %v2111, 7
        %v2113 = vsub.s32 %v2110, %v2112
        %v2114 = vrot.slane %v2100, %v2113
        %v2115 = vcombine.low %v1808, %v1872
        %v2116 = vcombine.high %v1808, %v1872
        %v2118 = vunpack.c.l.s4 1983009808
        %v2119 = vunpack.c.0.s8 %v2118
        %v2120 = vlaneseq
        %v2121 = vshrl.u32 %v2120, 7
        %v2122 = vsub.s32 %v2119, %v2121
        %v2123 = vrot.slane %v2115, %v2122
        %v2125 = vunpack.c.l.s4 1983009808
        %v2126 = vunpack.c.0.s8 %v2125
        %v2127 = vlaneseq
        %v2128 = vshrl.u32 %v2127, 7
        %v2129 = vsub.s32 %v2126, %v2128
        %v2130 = vrot.slane %v2116, %v2129
        %v2131 = vcombine.low %v2107, %v2123
        %v2132 = vcombine.high %v2107, %v2123
        %v2134 = vunpack.c.l.s4 1934713408
        %v2135 = vunpack.c.0.s8 %v2134
        %v2136 = vlaneseq
        %v2137 = vshrl.u32 %v2136, 7
        %v2138 = vsub.s32 %v2135, %v2137
        %v2139 = vrot.slane %v2131, %v2138
        %v2141 = vunpack.c.l.s4 1934713408
        %v2142 = vunpack.c.0.s8 %v2141
        %v2143 = vlaneseq
        %v2144 = vshrl.u32 %v2143, 7
        %v2145 = vsub.s32 %v2142, %v2144
        %v2146 = vrot.slane %v2132, %v2145
        %v2147 = vcombine.low %v2114, %v2130
        %v2148 = vcombine.high %v2114, %v2130
        %v2150 = vunpack.c.l.s4 1934713408
        %v2151 = vunpack.c.0.s8 %v2150
        %v2152 = vlaneseq
        %v2153 = vshrl.u32 %v2152, 7
        %v2154 = vsub.s32 %v2151, %v2153
        %v2155 = vrot.slane %v2147, %v2154
        %v2157 = vunpack.c.l.s4 1934713408
        %v2158 = vunpack.c.0.s8 %v2157
        %v2159 = vlaneseq
        %v2160 = vshrl.u32 %v2159, 7
        %v2161 = vsub.s32 %v2158, %v2160
        %v2162 = vrot.slane %v2148, %v2161
        %v2163 = vcombine.low %v2139, %v2155
        %v2164 = vcombine.high %v2139, %v2155
        %v2165 = vcombine.low %v2146, %v2162
        %v2166 = vcombine.high %v2146, %v2162
        %v2167 = vcombine.low %v1777, %v1841
        %v2168 = vcombine.high %v1777, %v1841
        %v2170 = vunpack.c.l.s4 1983009808
        %v2171 = vunpack.c.0.s8 %v2170
        %v2172 = vlaneseq
        %v2173 = vshrl.u32 %v2172, 7
        %v2174 = vsub.s32 %v2171, %v2173
        %v2175 = vrot.slane %v2167, %v2174
        %v2177 = vunpack.c.l.s4 1983009808
        %v2178 = vunpack.c.0.s8 %v2177
        %v2179 = vlaneseq
        %v2180 = vshrl.u32 %v2179, 7
        %v2181 = vsub.s32 %v2178, %v2180
        %v2182 = vrot.slane %v2168, %v2181
        %v2183 = vcombine.low %v1809, %v1873
        %v2184 = vcombine.high %v1809, %v1873
        %v2186 = vunpack.c.l.s4 1983009808
        %v2187 = vunpack.c.0.s8 %v2186
        %v2188 = vlaneseq
        %v2189 = vshrl.u32 %v2188, 7
        %v2190 = vsub.s32 %v2187, %v2189
        %v2191 = vrot.slane %v2183, %v2190
        %v2193 = vunpack.c.l.s4 1983009808
        %v2194 = vunpack.c.0.s8 %v2193
        %v2195 = vlaneseq
        %v2196 = vshrl.u32 %v2195, 7
        %v2197 = vsub.s32 %v2194, %v2196
        %v2198 = vrot.slane %v2184, %v2197
        %v2199 = vcombine.low %v2175, %v2191
        %v2200 = vcombine.high %v2175, %v2191
        %v2202 = vunpack.c.l.s4 1934713408
        %v2203 = vunpack.c.0.s8 %v2202
        %v2204 = vlaneseq
        %v2205 = vshrl.u32 %v2204, 7
        %v2206 = vsub.s32 %v2203, %v2205
        %v2207 = vrot.slane %v2199, %v2206
        %v2209 = vunpack.c.l.s4 1934713408
        %v2210 = vunpack.c.0.s8 %v2209
        %v2211 = vlaneseq
        %v2212 = vshrl.u32 %v2211, 7
        %v2213 = vsub.s32 %v2210, %v2212
        %v2214 = vrot.slane %v2200, %v2213
        %v2215 = vcombine.low %v2182, %v2198
        %v2216 = vcombine.high %v2182, %v2198
        %v2218 = vunpack.c.l.s4 1934713408
        %v2219 = vunpack.c.0.s8 %v2218
        %v2220 = vlaneseq
        %v2221 = vshrl.u32 %v2220, 7
        %v2222 = vsub.s32 %v2219, %v2221
        %v2223 = vrot.slane %v2215, %v2222
        %v2225 = vunpack.c.l.s4 1934713408
        %v2226 = vunpack.c.0.s8 %v2225
        %v2227 = vlaneseq
        %v2228 = vshrl.u32 %v2227, 7
        %v2229 = vsub.s32 %v2226, %v2228
        %v2230 = vrot.slane %v2216, %v2229
        %v2231 = vcombine.low %v2207, %v2223
        %v2232 = vcombine.high %v2207, %v2223
        %v2233 = vcombine.low %v2214, %v2230
        %v2234 = vcombine.high %v2214, %v2230
        %v2235 = vcombine.low %v1778, %v1842
        %v2236 = vcombine.high %v1778, %v1842
        %v2238 = vunpack.c.l.s4 1983009808
        %v2239 = vunpack.c.0.s8 %v2238
        %v2240 = vlaneseq
        %v2241 = vshrl.u32 %v2240, 7
        %v2242 = vsub.s32 %v2239, %v2241
        %v2243 = vrot.slane %v2235, %v2242
        %v2245 = vunpack.c.l.s4 1983009808
        %v2246 = vunpack.c.0.s8 %v2245
        %v2247 = vlaneseq
        %v2248 = vshrl.u32 %v2247, 7
        %v2249 = vsub.s32 %v2246, %v2248
        %v2250 = vrot.slane %v2236, %v2249
        %v2251 = vcombine.low %v1810, %v1874
        %v2252 = vcombine.high %v1810, %v1874
        %v2254 = vunpack.c.l.s4 1983009808
        %v2255 = vunpack.c.0.s8 %v2254
        %v2256 = vlaneseq
        %v2257 = vshrl.u32 %v2256, 7
        %v2258 = vsub.s32 %v2255, %v2257
        %v2259 = vrot.slane %v2251, %v2258
        %v2261 = vunpack.c.l.s4 1983009808
        %v2262 = vunpack.c.0.s8 %v2261
        %v2263 = vlaneseq
        %v2264 = vshrl.u32 %v2263, 7
        %v2265 = vsub.s32 %v2262, %v2264
        %v2266 = vrot.slane %v2252, %v2265
        %v2267 = vcombine.low %v2243, %v2259
        %v2268 = vcombine.high %v2243, %v2259
        %v2270 = vunpack.c.l.s4 1934713408
        %v2271 = vunpack.c.0.s8 %v2270
        %v2272 = vlaneseq
        %v2273 = vshrl.u32 %v2272, 7
        %v2274 = vsub.s32 %v2271, %v2273
        %v2275 = vrot.slane %v2267, %v2274
        %v2277 = vunpack.c.l.s4 1934713408
        %v2278 = vunpack.c.0.s8 %v2277
        %v2279 = vlaneseq
        %v2280 = vshrl.u32 %v2279, 7
        %v2281 = vsub.s32 %v2278, %v2280
        %v2282 = vrot.slane %v2268, %v2281
        %v2283 = vcombine.low %v2250, %v2266
        %v2284 = vcombine.high %v2250, %v2266
        %v2286 = vunpack.c.l.s4 1934713408
        %v2287 = vunpack.c.0.s8 %v2286
        %v2288 = vlaneseq
        %v2289 = vshrl.u32 %v2288, 7
        %v2290 = vsub.s32 %v2287, %v2289
        %v2291 = vrot.slane %v2283, %v2290
        %v2293 = vunpack.c.l.s4 1934713408
        %v2294 = vunpack.c.0.s8 %v2293
        %v2295 = vlaneseq
        %v2296 = vshrl.u32 %v2295, 7
        %v2297 = vsub.s32 %v2294, %v2296
        %v2298 = vrot.slane %v2284, %v2297
        %v2299 = vcombine.low %v2275, %v2291
        %v2300 = vcombine.high %v2275, %v2291
        %v2301 = vcombine.low %v2282, %v2298
        %v2302 = vcombine.high %v2282, %v2298
        %v2303 = vcombine.low %v1779, %v1843
        %v2304 = vcombine.high %v1779, %v1843
        %v2306 = vunpack.c.l.s4 1983009808
        %v2307 = vunpack.c.0.s8 %v2306
        %v2308 = vlaneseq
        %v2309 = vshrl.u32 %v2308, 7
        %v2310 = vsub.s32 %v2307, %v2309
        %v2311 = vrot.slane %v2303, %v2310
        %v2313 = vunpack.c.l.s4 1983009808
        %v2314 = vunpack.c.0.s8 %v2313
        %v2315 = vlaneseq
        %v2316 = vshrl.u32 %v2315, 7
        %v2317 = vsub.s32 %v2314, %v2316
        %v2318 = vrot.slane %v2304, %v2317
        %v2319 = vcombine.low %v1811, %v1875
        %v2320 = vcombine.high %v1811, %v1875
        %v2322 = vunpack.c.l.s4 1983009808
        %v2323 = vunpack.c.0.s8 %v2322
        %v2324 = vlaneseq
        %v2325 = vshrl.u32 %v2324, 7
        %v2326 = vsub.s32 %v2323, %v2325
        %v2327 = vrot.slane %v2319, %v2326
        %v2329 = vunpack.c.l.s4 1983009808
        %v2330 = vunpack.c.0.s8 %v2329
        %v2331 = vlaneseq
        %v2332 = vshrl.u32 %v2331, 7
        %v2333 = vsub.s32 %v2330, %v2332
        %v2334 = vrot.slane %v2320, %v2333
        %v2335 = vcombine.low %v2311, %v2327
        %v2336 = vcombine.high %v2311, %v2327
        %v2338 = vunpack.c.l.s4 1934713408
        %v2339 = vunpack.c.0.s8 %v2338
        %v2340 = vlaneseq
        %v2341 = vshrl.u32 %v2340, 7
        %v2342 = vsub.s32 %v2339, %v2341
        %v2343 = vrot.slane %v2335, %v2342
        %v2345 = vunpack.c.l.s4 1934713408
        %v2346 = vunpack.c.0.s8 %v2345
        %v2347 = vlaneseq
        %v2348 = vshrl.u32 %v2347, 7
        %v2349 = vsub.s32 %v2346, %v2348
        %v2350 = vrot.slane %v2336, %v2349
        %v2351 = vcombine.low %v2318, %v2334
        %v2352 = vcombine.high %v2318, %v2334
        %v2354 = vunpack.c.l.s4 1934713408
        %v2355 = vunpack.c.0.s8 %v2354
        %v2356 = vlaneseq
        %v2357 = vshrl.u32 %v2356, 7
        %v2358 = vsub.s32 %v2355, %v2357
        %v2359 = vrot.slane %v2351, %v2358
        %v2361 = vunpack.c.l.s4 1934713408
        %v2362 = vunpack.c.0.s8 %v2361
        %v2363 = vlaneseq
        %v2364 = vshrl.u32 %v2363, 7
        %v2365 = vsub.s32 %v2362, %v2364
        %v2366 = vrot.slane %v2352, %v2365
        %v2367 = vcombine.low %v2343, %v2359
        %v2368 = vcombine.high %v2343, %v2359
        %v2369 = vcombine.low %v2350, %v2366
        %v2370 = vcombine.high %v2350, %v2366
        %v2371 = vcombine.low %v1780, %v1844
        %v2372 = vcombine.high %v1780, %v1844
        %v2374 = vunpack.c.l.s4 1983009808
        %v2375 = vunpack.c.0.s8 %v2374
        %v2376 = vlaneseq
        %v2377 = vshrl.u32 %v2376, 7
        %v2378 = vsub.s32 %v2375, %v2377
        %v2379 = vrot.slane %v2371, %v2378
        %v2381 = vunpack.c.l.s4 1983009808
        %v2382 = vunpack.c.0.s8 %v2381
        %v2383 = vlaneseq
        %v2384 = vshrl.u32 %v2383, 7
        %v2385 = vsub.s32 %v2382, %v2384
        %v2386 = vrot.slane %v2372, %v2385
        %v2387 = vcombine.low %v1812, %v1876
        %v2388 = vcombine.high %v1812, %v1876
        %v2390 = vunpack.c.l.s4 1983009808
        %v2391 = vunpack.c.0.s8 %v2390
        %v2392 = vlaneseq
        %v2393 = vshrl.u32 %v2392, 7
        %v2394 = vsub.s32 %v2391, %v2393
        %v2395 = vrot.slane %v2387, %v2394
        %v2397 = vunpack.c.l.s4 1983009808
        %v2398 = vunpack.c.0.s8 %v2397
        %v2399 = vlaneseq
        %v2400 = vshrl.u32 %v2399, 7
        %v2401 = vsub.s32 %v2398, %v2400
        %v2402 = vrot.slane %v2388, %v2401
        %v2403 = vcombine.low %v2379, %v2395
        %v2404 = vcombine.high %v2379, %v2395
        %v2406 = vunpack.c.l.s4 1934713408
        %v2407 = vunpack.c.0.s8 %v2406
        %v2408 = vlaneseq
        %v2409 = vshrl.u32 %v2408, 7
        %v2410 = vsub.s32 %v2407, %v2409
        %v2411 = vrot.slane %v2403, %v2410
        %v2413 = vunpack.c.l.s4 1934713408
        %v2414 = vunpack.c.0.s8 %v2413
        %v2415 = vlaneseq
        %v2416 = vshrl.u32 %v2415, 7
        %v2417 = vsub.s32 %v2414, %v2416
        %v2418 = vrot.slane %v2404, %v2417
        %v2419 = vcombine.low %v2386, %v2402
        %v2420 = vcombine.high %v2386, %v2402
        %v2422 = vunpack.c.l.s4 1934713408
        %v2423 = vunpack.c.0.s8 %v2422
        %v2424 = vlaneseq
        %v2425 = vshrl.u32 %v2424, 7
        %v2426 = vsub.s32 %v2423, %v2425
        %v2427 = vrot.slane %v2419, %v2426
        %v2429 = vunpack.c.l.s4 1934713408
        %v2430 = vunpack.c.0.s8 %v2429
        %v2431 = vlaneseq
        %v2432 = vshrl.u32 %v2431, 7
        %v2433 = vsub.s32 %v2430, %v2432
        %v2434 = vrot.slane %v2420, %v2433
        %v2435 = vcombine.low %v2411, %v2427
        %v2436 = vcombine.high %v2411, %v2427
        %v2437 = vcombine.low %v2418, %v2434
        %v2438 = vcombine.high %v2418, %v2434
        %v2439 = vcombine.low %v1781, %v1845
        %v2440 = vcombine.high %v1781, %v1845
        %v2442 = vunpack.c.l.s4 1983009808
        %v2443 = vunpack.c.0.s8 %v2442
        %v2444 = vlaneseq
        %v2445 = vshrl.u32 %v2444, 7
        %v2446 = vsub.s32 %v2443, %v2445
        %v2447 = vrot.slane %v2439, %v2446
        %v2449 = vunpack.c.l.s4 1983009808
        %v2450 = vunpack.c.0.s8 %v2449
        %v2451 = vlaneseq
        %v2452 = vshrl.u32 %v2451, 7
        %v2453 = vsub.s32 %v2450, %v2452
        %v2454 = vrot.slane %v2440, %v2453
        %v2455 = vcombine.low %v1813, %v1877
        %v2456 = vcombine.high %v1813, %v1877
        %v2458 = vunpack.c.l.s4 1983009808
        %v2459 = vunpack.c.0.s8 %v2458
        %v2460 = vlaneseq
        %v2461 = vshrl.u32 %v2460, 7
        %v2462 = vsub.s32 %v2459, %v2461
        %v2463 = vrot.slane %v2455, %v2462
        %v2465 = vunpack.c.l.s4 1983009808
        %v2466 = vunpack.c.0.s8 %v2465
        %v2467 = vlaneseq
        %v2468 = vshrl.u32 %v2467, 7
        %v2469 = vsub.s32 %v2466, %v2468
        %v2470 = vrot.slane %v2456, %v2469
        %v2471 = vcombine.low %v2447, %v2463
        %v2472 = vcombine.high %v2447, %v2463
        %v2474 = vunpack.c.l.s4 1934713408
        %v2475 = vunpack.c.0.s8 %v2474
        %v2476 = vlaneseq
        %v2477 = vshrl.u32 %v2476, 7
        %v2478 = vsub.s32 %v2475, %v2477
        %v2479 = vrot.slane %v2471, %v2478
        %v2481 = vunpack.c.l.s4 1934713408
        %v2482 = vunpack.c.0.s8 %v2481
        %v2483 = vlaneseq
        %v2484 = vshrl.u32 %v2483, 7
        %v2485 = vsub.s32 %v2482, %v2484
        %v2486 = vrot.slane %v2472, %v2485
        %v2487 = vcombine.low %v2454, %v2470
        %v2488 = vcombine.high %v2454, %v2470
        %v2490 = vunpack.c.l.s4 1934713408
        %v2491 = vunpack.c.0.s8 %v2490
        %v2492 = vlaneseq
        %v2493 = vshrl.u32 %v2492, 7
        %v2494 = vsub.s32 %v2491, %v2493
        %v2495 = vrot.slane %v2487, %v2494
        %v2497 = vunpack.c.l.s4 1934713408
        %v2498 = vunpack.c.0.s8 %v2497
        %v2499 = vlaneseq
        %v2500 = vshrl.u32 %v2499, 7
        %v2501 = vsub.s32 %v2498, %v2500
        %v2502 = vrot.slane %v2488, %v2501
        %v2503 = vcombine.low %v2479, %v2495
        %v2504 = vcombine.high %v2479, %v2495
        %v2505 = vcombine.low %v2486, %v2502
        %v2506 = vcombine.high %v2486, %v2502
        %v2507 = vcombine.low %v1782, %v1846
        %v2508 = vcombine.high %v1782, %v1846
        %v2510 = vunpack.c.l.s4 1983009808
        %v2511 = vunpack.c.0.s8 %v2510
        %v2512 = vlaneseq
        %v2513 = vshrl.u32 %v2512, 7
        %v2514 = vsub.s32 %v2511, %v2513
        %v2515 = vrot.slane %v2507, %v2514
        %v2517 = vunpack.c.l.s4 1983009808
        %v2518 = vunpack.c.0.s8 %v2517
        %v2519 = vlaneseq
        %v2520 = vshrl.u32 %v2519, 7
        %v2521 = vsub.s32 %v2518, %v2520
        %v2522 = vrot.slane %v2508, %v2521
        %v2523 = vcombine.low %v1814, %v1878
        %v2524 = vcombine.high %v1814, %v1878
        %v2526 = vunpack.c.l.s4 1983009808
        %v2527 = vunpack.c.0.s8 %v2526
        %v2528 = vlaneseq
        %v2529 = vshrl.u32 %v2528, 7
        %v2530 = vsub.s32 %v2527, %v2529
        %v2531 = vrot.slane %v2523, %v2530
        %v2533 = vunpack.c.l.s4 1983009808
        %v2534 = vunpack.c.0.s8 %v2533
        %v2535 = vlaneseq
        %v2536 = vshrl.u32 %v2535, 7
        %v2537 = vsub.s32 %v2534, %v2536
        %v2538 = vrot.slane %v2524, %v2537
        %v2539 = vcombine.low %v2515, %v2531
        %v2540 = vcombine.high %v2515, %v2531
        %v2542 = vunpack.c.l.s4 1934713408
        %v2543 = vunpack.c.0.s8 %v2542
        %v2544 = vlaneseq
        %v2545 = vshrl.u32 %v2544, 7
        %v2546 = vsub.s32 %v2543, %v2545
        %v2547 = vrot.slane %v2539, %v2546
        %v2549 = vunpack.c.l.s4 1934713408
        %v2550 = vunpack.c.0.s8 %v2549
        %v2551 = vlaneseq
        %v2552 = vshrl.u32 %v2551, 7
        %v2553 = vsub.s32 %v2550, %v2552
        %v2554 = vrot.slane %v2540, %v2553
        %v2555 = vcombine.low %v2522, %v2538
        %v2556 = vcombine.high %v2522, %v2538
        %v2558 = vunpack.c.l.s4 1934713408
        %v2559 = vunpack.c.0.s8 %v2558
        %v2560 = vlaneseq
        %v2561 = vshrl.u32 %v2560, 7
        %v2562 = vsub.s32 %v2559, %v2561
        %v2563 = vrot.slane %v2555, %v2562
        %v2565 = vunpack.c.l.s4 1934713408
        %v2566 = vunpack.c.0.s8 %v2565
        %v2567 = vlaneseq
        %v2568 = vshrl.u32 %v2567, 7
        %v2569 = vsub.s32 %v2566, %v2568
        %v2570 = vrot.slane %v2556, %v2569
        %v2571 = vcombine.low %v2547, %v2563
        %v2572 = vcombine.high %v2547, %v2563
        %v2573 = vcombine.low %v2554, %v2570
        %v2574 = vcombine.high %v2554, %v2570
        %v2575 = vcombine.low %v1783, %v1847
        %v2576 = vcombine.high %v1783, %v1847
        %v2578 = vunpack.c.l.s4 1983009808
        %v2579 = vunpack.c.0.s8 %v2578
        %v2580 = vlaneseq
        %v2581 = vshrl.u32 %v2580, 7
        %v2582 = vsub.s32 %v2579, %v2581
        %v2583 = vrot.slane %v2575, %v2582
        %v2585 = vunpack.c.l.s4 1983009808
        %v2586 = vunpack.c.0.s8 %v2585
        %v2587 = vlaneseq
        %v2588 = vshrl.u32 %v2587, 7
        %v2589 = vsub.s32 %v2586, %v2588
        %v2590 = vrot.slane %v2576, %v2589
        %v2591 = vcombine.low %v1815, %v1879
        %v2592 = vcombine.high %v1815, %v1879
        %v2594 = vunpack.c.l.s4 1983009808
        %v2595 = vunpack.c.0.s8 %v2594
        %v2596 = vlaneseq
        %v2597 = vshrl.u32 %v2596, 7
        %v2598 = vsub.s32 %v2595, %v2597
        %v2599 = vrot.slane %v2591, %v2598
        %v2601 = vunpack.c.l.s4 1983009808
        %v2602 = vunpack.c.0.s8 %v2601
        %v2603 = vlaneseq
        %v2604 = vshrl.u32 %v2603, 7
        %v2605 = vsub.s32 %v2602, %v2604
        %v2606 = vrot.slane %v2592, %v2605
        %v2607 = vcombine.low %v2583, %v2599
        %v2608 = vcombine.high %v2583, %v2599
        %v2610 = vunpack.c.l.s4 1934713408
        %v2611 = vunpack.c.0.s8 %v2610
        %v2612 = vlaneseq
        %v2613 = vshrl.u32 %v2612, 7
        %v2614 = vsub.s32 %v2611, %v2613
        %v2615 = vrot.slane %v2607, %v2614
        %v2617 = vunpack.c.l.s4 1934713408
        %v2618 = vunpack.c.0.s8 %v2617
        %v2619 = vlaneseq
        %v2620 = vshrl.u32 %v2619, 7
        %v2621 = vsub.s32 %v2618, %v2620
        %v2622 = vrot.slane %v2608, %v2621
        %v2623 = vcombine.low %v2590, %v2606
        %v2624 = vcombine.high %v2590, %v2606
        %v2626 = vunpack.c.l.s4 1934713408
        %v2627 = vunpack.c.0.s8 %v2626
        %v2628 = vlaneseq
        %v2629 = vshrl.u32 %v2628, 7
        %v2630 = vsub.s32 %v2627, %v2629
        %v2631 = vrot.slane %v2623, %v2630
        %v2633 = vunpack.c.l.s4 1934713408
        %v2634 = vunpack.c.0.s8 %v2633
        %v2635 = vlaneseq
        %v2636 = vshrl.u32 %v2635, 7
        %v2637 = vsub.s32 %v2634, %v2636
        %v2638 = vrot.slane %v2624, %v2637
        %v2639 = vcombine.low %v2615, %v2631
        %v2640 = vcombine.high %v2615, %v2631
        %v2641 = vcombine.low %v2622, %v2638
        %v2642 = vcombine.high %v2622, %v2638
        %v2643 = vcombine.low %v1784, %v1848
        %v2644 = vcombine.high %v1784, %v1848
        %v2646 = vunpack.c.l.s4 1983009808
        %v2647 = vunpack.c.0.s8 %v2646
        %v2648 = vlaneseq
        %v2649 = vshrl.u32 %v2648, 7
        %v2650 = vsub.s32 %v2647, %v2649
        %v2651 = vrot.slane %v2643, %v2650
        %v2653 = vunpack.c.l.s4 1983009808
        %v2654 = vunpack.c.0.s8 %v2653
        %v2655 = vlaneseq
        %v2656 = vshrl.u32 %v2655, 7
        %v2657 = vsub.s32 %v2654, %v2656
        %v2658 = vrot.slane %v2644, %v2657
        %v2659 = vcombine.low %v1816, %v1880
        %v2660 = vcombine.high %v1816, %v1880
        %v2662 = vunpack.c.l.s4 1983009808
        %v2663 = vunpack.c.0.s8 %v2662
        %v2664 = vlaneseq
        %v2665 = vshrl.u32 %v2664, 7
        %v2666 = vsub.s32 %v2663, %v2665
        %v2667 = vrot.slane %v2659, %v2666
        %v2669 = vunpack.c.l.s4 1983009808
        %v2670 = vunpack.c.0.s8 %v2669
        %v2671 = vlaneseq
        %v2672 = vshrl.u32 %v2671, 7
        %v2673 = vsub.s32 %v2670, %v2672
        %v2674 = vrot.slane %v2660, %v2673
        %v2675 = vcombine.low %v2651, %v2667
        %v2676 = vcombine.high %v2651, %v2667
        %v2678 = vunpack.c.l.s4 1934713408
        %v2679 = vunpack.c.0.s8 %v2678
        %v2680 = vlaneseq
        %v2681 = vshrl.u32 %v2680, 7
        %v2682 = vsub.s32 %v2679, %v2681
        %v2683 = vrot.slane %v2675, %v2682
        %v2685 = vunpack.c.l.s4 1934713408
        %v2686 = vunpack.c.0.s8 %v2685
        %v2687 = vlaneseq
        %v2688 = vshrl.u32 %v2687, 7
        %v2689 = vsub.s32 %v2686, %v2688
        %v2690 = vrot.slane %v2676, %v2689
        %v2691 = vcombine.low %v2658, %v2674
        %v2692 = vcombine.high %v2658, %v2674
        %v2694 = vunpack.c.l.s4 1934713408
        %v2695 = vunpack.c.0.s8 %v2694
        %v2696 = vlaneseq
        %v2697 = vshrl.u32 %v2696, 7
        %v2698 = vsub.s32 %v2695, %v2697
        %v2699 = vrot.slane %v2691, %v2698
        %v2701 = vunpack.c.l.s4 1934713408
        %v2702 = vunpack.c.0.s8 %v2701
        %v2703 = vlaneseq
        %v2704 = vshrl.u32 %v2703, 7
        %v2705 = vsub.s32 %v2702, %v2704
        %v2706 = vrot.slane %v2692, %v2705
        %v2707 = vcombine.low %v2683, %v2699
        %v2708 = vcombine.high %v2683, %v2699
        %v2709 = vcombine.low %v2690, %v2706
        %v2710 = vcombine.high %v2690, %v2706
        %v2711 = vcombine.low %v1785, %v1849
        %v2712 = vcombine.high %v1785, %v1849
        %v2714 = vunpack.c.l.s4 1983009808
        %v2715 = vunpack.c.0.s8 %v2714
        %v2716 = vlaneseq
        %v2717 = vshrl.u32 %v2716, 7
        %v2718 = vsub.s32 %v2715, %v2717
        %v2719 = vrot.slane %v2711, %v2718
        %v2721 = vunpack.c.l.s4 1983009808
        %v2722 = vunpack.c.0.s8 %v2721
        %v2723 = vlaneseq
        %v2724 = vshrl.u32 %v2723, 7
        %v2725 = vsub.s32 %v2722, %v2724
        %v2726 = vrot.slane %v2712, %v2725
        %v2727 = vcombine.low %v1817, %v1881
        %v2728 = vcombine.high %v1817, %v1881
        %v2730 = vunpack.c.l.s4 1983009808
        %v2731 = vunpack.c.0.s8 %v2730
        %v2732 = vlaneseq
        %v2733 = vshrl.u32 %v2732, 7
        %v2734 = vsub.s32 %v2731, %v2733
        %v2735 = vrot.slane %v2727, %v2734
        %v2737 = vunpack.c.l.s4 1983009808
        %v2738 = vunpack.c.0.s8 %v2737
        %v2739 = vlaneseq
        %v2740 = vshrl.u32 %v2739, 7
        %v2741 = vsub.s32 %v2738, %v2740
        %v2742 = vrot.slane %v2728, %v2741
        %v2743 = vcombine.low %v2719, %v2735
        %v2744 = vcombine.high %v2719, %v2735
        %v2746 = vunpack.c.l.s4 1934713408
        %v2747 = vunpack.c.0.s8 %v2746
        %v2748 = vlaneseq
        %v2749 = vshrl.u32 %v2748, 7
        %v2750 = vsub.s32 %v2747, %v2749
        %v2751 = vrot.slane %v2743, %v2750
        %v2753 = vunpack.c.l.s4 1934713408
        %v2754 = vunpack.c.0.s8 %v2753
        %v2755 = vlaneseq
        %v2756 = vshrl.u32 %v2755, 7
        %v2757 = vsub.s32 %v2754, %v2756
        %v2758 = vrot.slane %v2744, %v2757
        %v2759 = vcombine.low %v2726, %v2742
        %v2760 = vcombine.high %v2726, %v2742
        %v2762 = vunpack.c.l.s4 1934713408
        %v2763 = vunpack.c.0.s8 %v2762
        %v2764 = vlaneseq
        %v2765 = vshrl.u32 %v2764, 7
        %v2766 = vsub.s32 %v2763, %v2765
        %v2767 = vrot.slane %v2759, %v2766
        %v2769 = vunpack.c.l.s4 1934713408
        %v2770 = vunpack.c.0.s8 %v2769
        %v2771 = vlaneseq
        %v2772 = vshrl.u32 %v2771, 7
        %v2773 = vsub.s32 %v2770, %v2772
        %v2774 = vrot.slane %v2760, %v2773
        %v2775 = vcombine.low %v2751, %v2767
        %v2776 = vcombine.high %v2751, %v2767
        %v2777 = vcombine.low %v2758, %v2774
        %v2778 = vcombine.high %v2758, %v2774
        %v2779 = vcombine.low %v1786, %v1850
        %v2780 = vcombine.high %v1786, %v1850
        %v2782 = vunpack.c.l.s4 1983009808
        %v2783 = vunpack.c.0.s8 %v2782
        %v2784 = vlaneseq
        %v2785 = vshrl.u32 %v2784, 7
        %v2786 = vsub.s32 %v2783, %v2785
        %v2787 = vrot.slane %v2779, %v2786
        %v2789 = vunpack.c.l.s4 1983009808
        %v2790 = vunpack.c.0.s8 %v2789
        %v2791 = vlaneseq
        %v2792 = vshrl.u32 %v2791, 7
        %v2793 = vsub.s32 %v2790, %v2792
        %v2794 = vrot.slane %v2780, %v2793
        %v2795 = vcombine.low %v1818, %v1882
        %v2796 = vcombine.high %v1818, %v1882
        %v2798 = vunpack.c.l.s4 1983009808
        %v2799 = vunpack.c.0.s8 %v2798
        %v2800 = vlaneseq
        %v2801 = vshrl.u32 %v2800, 7
        %v2802 = vsub.s32 %v2799, %v2801
        %v2803 = vrot.slane %v2795, %v2802
        %v2805 = vunpack.c.l.s4 1983009808
        %v2806 = vunpack.c.0.s8 %v2805
        %v2807 = vlaneseq
        %v2808 = vshrl.u32 %v2807, 7
        %v2809 = vsub.s32 %v2806, %v2808
        %v2810 = vrot.slane %v2796, %v2809
        %v2811 = vcombine.low %v2787, %v2803
        %v2812 = vcombine.high %v2787, %v2803
        %v2814 = vunpack.c.l.s4 1934713408
        %v2815 = vunpack.c.0.s8 %v2814
        %v2816 = vlaneseq
        %v2817 = vshrl.u32 %v2816, 7
        %v2818 = vsub.s32 %v2815, %v2817
        %v2819 = vrot.slane %v2811, %v2818
        %v2821 = vunpack.c.l.s4 1934713408
        %v2822 = vunpack.c.0.s8 %v2821
        %v2823 = vlaneseq
        %v2824 = vshrl.u32 %v2823, 7
        %v2825 = vsub.s32 %v2822, %v2824
        %v2826 = vrot.slane %v2812, %v2825
        %v2827 = vcombine.low %v2794, %v2810
        %v2828 = vcombine.high %v2794, %v2810
        %v2830 = vunpack.c.l.s4 1934713408
        %v2831 = vunpack.c.0.s8 %v2830
        %v2832 = vlaneseq
        %v2833 = vshrl.u32 %v2832, 7
        %v2834 = vsub.s32 %v2831, %v2833
        %v2835 = vrot.slane %v2827, %v2834
        %v2837 = vunpack.c.l.s4 1934713408
        %v2838 = vunpack.c.0.s8 %v2837
        %v2839 = vlaneseq
        %v2840 = vshrl.u32 %v2839, 7
        %v2841 = vsub.s32 %v2838, %v2840
        %v2842 = vrot.slane %v2828, %v2841
        %v2843 = vcombine.low %v2819, %v2835
        %v2844 = vcombine.high %v2819, %v2835
        %v2845 = vcombine.low %v2826, %v2842
        %v2846 = vcombine.high %v2826, %v2842
        %v2847 = vcombine.low %v1787, %v1851
        %v2848 = vcombine.high %v1787, %v1851
        %v2850 = vunpack.c.l.s4 1983009808
        %v2851 = vunpack.c.0.s8 %v2850
        %v2852 = vlaneseq
        %v2853 = vshrl.u32 %v2852, 7
        %v2854 = vsub.s32 %v2851, %v2853
        %v2855 = vrot.slane %v2847, %v2854
        %v2857 = vunpack.c.l.s4 1983009808
        %v2858 = vunpack.c.0.s8 %v2857
        %v2859 = vlaneseq
        %v2860 = vshrl.u32 %v2859, 7
        %v2861 = vsub.s32 %v2858, %v2860
        %v2862 = vrot.slane %v2848, %v2861
        %v2863 = vcombine.low %v1819, %v1883
        %v2864 = vcombine.high %v1819, %v1883
        %v2866 = vunpack.c.l.s4 1983009808
        %v2867 = vunpack.c.0.s8 %v2866
        %v2868 = vlaneseq
        %v2869 = vshrl.u32 %v2868, 7
        %v2870 = vsub.s32 %v2867, %v2869
        %v2871 = vrot.slane %v2863, %v2870
        %v2873 = vunpack.c.l.s4 1983009808
        %v2874 = vunpack.c.0.s8 %v2873
        %v2875 = vlaneseq
        %v2876 = vshrl.u32 %v2875, 7
        %v2877 = vsub.s32 %v2874, %v2876
        %v2878 = vrot.slane %v2864, %v2877
        %v2879 = vcombine.low %v2855, %v2871
        %v2880 = vcombine.high %v2855, %v2871
        %v2882 = vunpack.c.l.s4 1934713408
        %v2883 = vunpack.c.0.s8 %v2882
        %v2884 = vlaneseq
        %v2885 = vshrl.u32 %v2884, 7
        %v2886 = vsub.s32 %v2883, %v2885
        %v2887 = vrot.slane %v2879, %v2886
        %v2889 = vunpack.c.l.s4 1934713408
        %v2890 = vunpack.c.0.s8 %v2889
        %v2891 = vlaneseq
        %v2892 = vshrl.u32 %v2891, 7
        %v2893 = vsub.s32 %v2890, %v2892
        %v2894 = vrot.slane %v2880, %v2893
        %v2895 = vcombine.low %v2862, %v2878
        %v2896 = vcombine.high %v2862, %v2878
        %v2898 = vunpack.c.l.s4 1934713408
        %v2899 = vunpack.c.0.s8 %v2898
        %v2900 = vlaneseq
        %v2901 = vshrl.u32 %v2900, 7
        %v2902 = vsub.s32 %v2899, %v2901
        %v2903 = vrot.slane %v2895, %v2902
        %v2905 = vunpack.c.l.s4 1934713408
        %v2906 = vunpack.c.0.s8 %v2905
        %v2907 = vlaneseq
        %v2908 = vshrl.u32 %v2907, 7
        %v2909 = vsub.s32 %v2906, %v2908
        %v2910 = vrot.slane %v2896, %v2909
        %v2911 = vcombine.low %v2887, %v2903
        %v2912 = vcombine.high %v2887, %v2903
        %v2913 = vcombine.low %v2894, %v2910
        %v2914 = vcombine.high %v2894, %v2910
        %v2915 = vcombine.low %v1788, %v1852
        %v2916 = vcombine.high %v1788, %v1852
        %v2918 = vunpack.c.l.s4 1983009808
        %v2919 = vunpack.c.0.s8 %v2918
        %v2920 = vlaneseq
        %v2921 = vshrl.u32 %v2920, 7
        %v2922 = vsub.s32 %v2919, %v2921
        %v2923 = vrot.slane %v2915, %v2922
        %v2925 = vunpack.c.l.s4 1983009808
        %v2926 = vunpack.c.0.s8 %v2925
        %v2927 = vlaneseq
        %v2928 = vshrl.u32 %v2927, 7
        %v2929 = vsub.s32 %v2926, %v2928
        %v2930 = vrot.slane %v2916, %v2929
        %v2931 = vcombine.low %v1820, %v1884
        %v2932 = vcombine.high %v1820, %v1884
        %v2934 = vunpack.c.l.s4 1983009808
        %v2935 = vunpack.c.0.s8 %v2934
        %v2936 = vlaneseq
        %v2937 = vshrl.u32 %v2936, 7
        %v2938 = vsub.s32 %v2935, %v2937
        %v2939 = vrot.slane %v2931, %v2938
        %v2941 = vunpack.c.l.s4 1983009808
        %v2942 = vunpack.c.0.s8 %v2941
        %v2943 = vlaneseq
        %v2944 = vshrl.u32 %v2943, 7
        %v2945 = vsub.s32 %v2942, %v2944
        %v2946 = vrot.slane %v2932, %v2945
        %v2947 = vcombine.low %v2923, %v2939
        %v2948 = vcombine.high %v2923, %v2939
        %v2950 = vunpack.c.l.s4 1934713408
        %v2951 = vunpack.c.0.s8 %v2950
        %v2952 = vlaneseq
        %v2953 = vshrl.u32 %v2952, 7
        %v2954 = vsub.s32 %v2951, %v2953
        %v2955 = vrot.slane %v2947, %v2954
        %v2957 = vunpack.c.l.s4 1934713408
        %v2958 = vunpack.c.0.s8 %v2957
        %v2959 = vlaneseq
        %v2960 = vshrl.u32 %v2959, 7
        %v2961 = vsub.s32 %v2958, %v2960
        %v2962 = vrot.slane %v2948, %v2961
        %v2963 = vcombine.low %v2930, %v2946
        %v2964 = vcombine.high %v2930, %v2946
        %v2966 = vunpack.c.l.s4 1934713408
        %v2967 = vunpack.c.0.s8 %v2966
        %v2968 = vlaneseq
        %v2969 = vshrl.u32 %v2968, 7
        %v2970 = vsub.s32 %v2967, %v2969
        %v2971 = vrot.slane %v2963, %v2970
        %v2973 = vunpack.c.l.s4 1934713408
        %v2974 = vunpack.c.0.s8 %v2973
        %v2975 = vlaneseq
        %v2976 = vshrl.u32 %v2975, 7
        %v2977 = vsub.s32 %v2974, %v2976
        %v2978 = vrot.slane %v2964, %v2977
        %v2979 = vcombine.low %v2955, %v2971
        %v2980 = vcombine.high %v2955, %v2971
        %v2981 = vcombine.low %v2962, %v2978
        %v2982 = vcombine.high %v2962, %v2978
        %v2983 = vcombine.low %v1789, %v1853
        %v2984 = vcombine.high %v1789, %v1853
        %v2986 = vunpack.c.l.s4 1983009808
        %v2987 = vunpack.c.0.s8 %v2986
        %v2988 = vlaneseq
        %v2989 = vshrl.u32 %v2988, 7
        %v2990 = vsub.s32 %v2987, %v2989
        %v2991 = vrot.slane %v2983, %v2990
        %v2993 = vunpack.c.l.s4 1983009808
        %v2994 = vunpack.c.0.s8 %v2993
        %v2995 = vlaneseq
        %v2996 = vshrl.u32 %v2995, 7
        %v2997 = vsub.s32 %v2994, %v2996
        %v2998 = vrot.slane %v2984, %v2997
        %v2999 = vcombine.low %v1821, %v1885
        %v3000 = vcombine.high %v1821, %v1885
        %v3002 = vunpack.c.l.s4 1983009808
        %v3003 = vunpack.c.0.s8 %v3002
        %v3004 = vlaneseq
        %v3005 = vshrl.u32 %v3004, 7
        %v3006 = vsub.s32 %v3003, %v3005
        %v3007 = vrot.slane %v2999, %v3006
        %v3009 = vunpack.c.l.s4 1983009808
        %v3010 = vunpack.c.0.s8 %v3009
        %v3011 = vlaneseq
        %v3012 = vshrl.u32 %v3011, 7
        %v3013 = vsub.s32 %v3010, %v3012
        %v3014 = vrot.slane %v3000, %v3013
        %v3015 = vcombine.low %v2991, %v3007
        %v3016 = vcombine.high %v2991, %v3007
        %v3018 = vunpack.c.l.s4 1934713408
        %v3019 = vunpack.c.0.s8 %v3018
        %v3020 = vlaneseq
        %v3021 = vshrl.u32 %v3020, 7
        %v3022 = vsub.s32 %v3019, %v3021
        %v3023 = vrot.slane %v3015, %v3022
        %v3025 = vunpack.c.l.s4 1934713408
        %v3026 = vunpack.c.0.s8 %v3025
        %v3027 = vlaneseq
        %v3028 = vshrl.u32 %v3027, 7
        %v3029 = vsub.s32 %v3026, %v3028
        %v3030 = vrot.slane %v3016, %v3029
        %v3031 = vcombine.low %v2998, %v3014
        %v3032 = vcombine.high %v2998, %v3014
        %v3034 = vunpack.c.l.s4 1934713408
        %v3035 = vunpack.c.0.s8 %v3034
        %v3036 = vlaneseq
        %v3037 = vshrl.u32 %v3036, 7
        %v3038 = vsub.s32 %v3035, %v3037
        %v3039 = vrot.slane %v3031, %v3038
        %v3041 = vunpack.c.l.s4 1934713408
        %v3042 = vunpack.c.0.s8 %v3041
        %v3043 = vlaneseq
        %v3044 = vshrl.u32 %v3043, 7
        %v3045 = vsub.s32 %v3042, %v3044
        %v3046 = vrot.slane %v3032, %v3045
        %v3047 = vcombine.low %v3023, %v3039
        %v3048 = vcombine.high %v3023, %v3039
        %v3049 = vcombine.low %v3030, %v3046
        %v3050 = vcombine.high %v3030, %v3046
        %v3051 = vcombine.low %v1790, %v1854
        %v3052 = vcombine.high %v1790, %v1854
        %v3054 = vunpack.c.l.s4 1983009808
        %v3055 = vunpack.c.0.s8 %v3054
        %v3056 = vlaneseq
        %v3057 = vshrl.u32 %v3056, 7
        %v3058 = vsub.s32 %v3055, %v3057
        %v3059 = vrot.slane %v3051, %v3058
        %v3061 = vunpack.c.l.s4 1983009808
        %v3062 = vunpack.c.0.s8 %v3061
        %v3063 = vlaneseq
        %v3064 = vshrl.u32 %v3063, 7
        %v3065 = vsub.s32 %v3062, %v3064
        %v3066 = vrot.slane %v3052, %v3065
        %v3067 = vcombine.low %v1822, %v1886
        %v3068 = vcombine.high %v1822, %v1886
        %v3070 = vunpack.c.l.s4 1983009808
        %v3071 = vunpack.c.0.s8 %v3070
        %v3072 = vlaneseq
        %v3073 = vshrl.u32 %v3072, 7
        %v3074 = vsub.s32 %v3071, %v3073
        %v3075 = vrot.slane %v3067, %v3074
        %v3077 = vunpack.c.l.s4 1983009808
        %v3078 = vunpack.c.0.s8 %v3077
        %v3079 = vlaneseq
        %v3080 = vshrl.u32 %v3079, 7
        %v3081 = vsub.s32 %v3078, %v3080
        %v3082 = vrot.slane %v3068, %v3081
        %v3083 = vcombine.low %v3059, %v3075
        %v3084 = vcombine.high %v3059, %v3075
        %v3086 = vunpack.c.l.s4 1934713408
        %v3087 = vunpack.c.0.s8 %v3086
        %v3088 = vlaneseq
        %v3089 = vshrl.u32 %v3088, 7
        %v3090 = vsub.s32 %v3087, %v3089
        %v3091 = vrot.slane %v3083, %v3090
        %v3093 = vunpack.c.l.s4 1934713408
        %v3094 = vunpack.c.0.s8 %v3093
        %v3095 = vlaneseq
        %v3096 = vshrl.u32 %v3095, 7
        %v3097 = vsub.s32 %v3094, %v3096
        %v3098 = vrot.slane %v3084, %v3097
        %v3099 = vcombine.low %v3066, %v3082
        %v3100 = vcombine.high %v3066, %v3082
        %v3102 = vunpack.c.l.s4 1934713408
        %v3103 = vunpack.c.0.s8 %v3102
        %v3104 = vlaneseq
        %v3105 = vshrl.u32 %v3104, 7
        %v3106 = vsub.s32 %v3103, %v3105
        %v3107 = vrot.slane %v3099, %v3106
        %v3109 = vunpack.c.l.s4 1934713408
        %v3110 = vunpack.c.0.s8 %v3109
        %v3111 = vlaneseq
        %v3112 = vshrl.u32 %v3111, 7
        %v3113 = vsub.s32 %v3110, %v3112
        %v3114 = vrot.slane %v3100, %v3113
        %v3115 = vcombine.low %v3091, %v3107
        %v3116 = vcombine.high %v3091, %v3107
        %v3117 = vcombine.low %v3098, %v3114
        %v3118 = vcombine.high %v3098, %v3114
        %v3119 = vcombine.low %v1791, %v1855
        %v3120 = vcombine.high %v1791, %v1855
        %v3122 = vunpack.c.l.s4 1983009808
        %v3123 = vunpack.c.0.s8 %v3122
        %v3124 = vlaneseq
        %v3125 = vshrl.u32 %v3124, 7
        %v3126 = vsub.s32 %v3123, %v3125
        %v3127 = vrot.slane %v3119, %v3126
        %v3129 = vunpack.c.l.s4 1983009808
        %v3130 = vunpack.c.0.s8 %v3129
        %v3131 = vlaneseq
        %v3132 = vshrl.u32 %v3131, 7
        %v3133 = vsub.s32 %v3130, %v3132
        %v3134 = vrot.slane %v3120, %v3133
        %v3135 = vcombine.low %v1823, %v1887
        %v3136 = vcombine.high %v1823, %v1887
        %v3138 = vunpack.c.l.s4 1983009808
        %v3139 = vunpack.c.0.s8 %v3138
        %v3140 = vlaneseq
        %v3141 = vshrl.u32 %v3140, 7
        %v3142 = vsub.s32 %v3139, %v3141
        %v3143 = vrot.slane %v3135, %v3142
        %v3145 = vunpack.c.l.s4 1983009808
        %v3146 = vunpack.c.0.s8 %v3145
        %v3147 = vlaneseq
        %v3148 = vshrl.u32 %v3147, 7
        %v3149 = vsub.s32 %v3146, %v3148
        %v3150 = vrot.slane %v3136, %v3149
        %v3151 = vcombine.low %v3127, %v3143
        %v3152 = vcombine.high %v3127, %v3143
        %v3154 = vunpack.c.l.s4 1934713408
        %v3155 = vunpack.c.0.s8 %v3154
        %v3156 = vlaneseq
        %v3157 = vshrl.u32 %v3156, 7
        %v3158 = vsub.s32 %v3155, %v3157
        %v3159 = vrot.slane %v3151, %v3158
        %v3161 = vunpack.c.l.s4 1934713408
        %v3162 = vunpack.c.0.s8 %v3161
        %v3163 = vlaneseq
        %v3164 = vshrl.u32 %v3163, 7
        %v3165 = vsub.s32 %v3162, %v3164
        %v3166 = vrot.slane %v3152, %v3165
        %v3167 = vcombine.low %v3134, %v3150
        %v3168 = vcombine.high %v3134, %v3150
        %v3170 = vunpack.c.l.s4 1934713408
        %v3171 = vunpack.c.0.s8 %v3170
        %v3172 = vlaneseq
        %v3173 = vshrl.u32 %v3172, 7
        %v3174 = vsub.s32 %v3171, %v3173
        %v3175 = vrot.slane %v3167, %v3174
        %v3177 = vunpack.c.l.s4 1934713408
        %v3178 = vunpack.c.0.s8 %v3177
        %v3179 = vlaneseq
        %v3180 = vshrl.u32 %v3179, 7
        %v3181 = vsub.s32 %v3178, %v3180
        %v3182 = vrot.slane %v3168, %v3181
        %v3183 = vcombine.low %v3159, %v3175
        %v3184 = vcombine.high %v3159, %v3175
        %v3185 = vcombine.low %v3166, %v3182
        %v3186 = vcombine.high %v3166, %v3182
        %v3187 = vcombine.low %v1792, %v1856
        %v3188 = vcombine.high %v1792, %v1856
        %v3190 = vunpack.c.l.s4 1983009808
        %v3191 = vunpack.c.0.s8 %v3190
        %v3192 = vlaneseq
        %v3193 = vshrl.u32 %v3192, 7
        %v3194 = vsub.s32 %v3191, %v3193
        %v3195 = vrot.slane %v3187, %v3194
        %v3197 = vunpack.c.l.s4 1983009808
        %v3198 = vunpack.c.0.s8 %v3197
        %v3199 = vlaneseq
        %v3200 = vshrl.u32 %v3199, 7
        %v3201 = vsub.s32 %v3198, %v3200
        %v3202 = vrot.slane %v3188, %v3201
        %v3203 = vcombine.low %v1824, %v1888
        %v3204 = vcombine.high %v1824, %v1888
        %v3206 = vunpack.c.l.s4 1983009808
        %v3207 = vunpack.c.0.s8 %v3206
        %v3208 = vlaneseq
        %v3209 = vshrl.u32 %v3208, 7
        %v3210 = vsub.s32 %v3207, %v3209
        %v3211 = vrot.slane %v3203, %v3210
        %v3213 = vunpack.c.l.s4 1983009808
        %v3214 = vunpack.c.0.s8 %v3213
        %v3215 = vlaneseq
        %v3216 = vshrl.u32 %v3215, 7
        %v3217 = vsub.s32 %v3214, %v3216
        %v3218 = vrot.slane %v3204, %v3217
        %v3219 = vcombine.low %v3195, %v3211
        %v3220 = vcombine.high %v3195, %v3211
        %v3222 = vunpack.c.l.s4 1934713408
        %v3223 = vunpack.c.0.s8 %v3222
        %v3224 = vlaneseq
        %v3225 = vshrl.u32 %v3224, 7
        %v3226 = vsub.s32 %v3223, %v3225
        %v3227 = vrot.slane %v3219, %v3226
        %v3229 = vunpack.c.l.s4 1934713408
        %v3230 = vunpack.c.0.s8 %v3229
        %v3231 = vlaneseq
        %v3232 = vshrl.u32 %v3231, 7
        %v3233 = vsub.s32 %v3230, %v3232
        %v3234 = vrot.slane %v3220, %v3233
        %v3235 = vcombine.low %v3202, %v3218
        %v3236 = vcombine.high %v3202, %v3218
        %v3238 = vunpack.c.l.s4 1934713408
        %v3239 = vunpack.c.0.s8 %v3238
        %v3240 = vlaneseq
        %v3241 = vshrl.u32 %v3240, 7
        %v3242 = vsub.s32 %v3239, %v3241
        %v3243 = vrot.slane %v3235, %v3242
        %v3245 = vunpack.c.l.s4 1934713408
        %v3246 = vunpack.c.0.s8 %v3245
        %v3247 = vlaneseq
        %v3248 = vshrl.u32 %v3247, 7
        %v3249 = vsub.s32 %v3246, %v3248
        %v3250 = vrot.slane %v3236, %v3249
        %v3251 = vcombine.low %v3227, %v3243
        %v3252 = vcombine.high %v3227, %v3243
        %v3253 = vcombine.low %v3234, %v3250
        %v3254 = vcombine.high %v3234, %v3250
        %v3255 = vcombine.low %v1793, %v1857
        %v3256 = vcombine.high %v1793, %v1857
        %v3258 = vunpack.c.l.s4 1983009808
        %v3259 = vunpack.c.0.s8 %v3258
        %v3260 = vlaneseq
        %v3261 = vshrl.u32 %v3260, 7
        %v3262 = vsub.s32 %v3259, %v3261
        %v3263 = vrot.slane %v3255, %v3262
        %v3265 = vunpack.c.l.s4 1983009808
        %v3266 = vunpack.c.0.s8 %v3265
        %v3267 = vlaneseq
        %v3268 = vshrl.u32 %v3267, 7
        %v3269 = vsub.s32 %v3266, %v3268
        %v3270 = vrot.slane %v3256, %v3269
        %v3271 = vcombine.low %v1825, %v1889
        %v3272 = vcombine.high %v1825, %v1889
        %v3274 = vunpack.c.l.s4 1983009808
        %v3275 = vunpack.c.0.s8 %v3274
        %v3276 = vlaneseq
        %v3277 = vshrl.u32 %v3276, 7
        %v3278 = vsub.s32 %v3275, %v3277
        %v3279 = vrot.slane %v3271, %v3278
        %v3281 = vunpack.c.l.s4 1983009808
        %v3282 = vunpack.c.0.s8 %v3281
        %v3283 = vlaneseq
        %v3284 = vshrl.u32 %v3283, 7
        %v3285 = vsub.s32 %v3282, %v3284
        %v3286 = vrot.slane %v3272, %v3285
        %v3287 = vcombine.low %v3263, %v3279
        %v3288 = vcombine.high %v3263, %v3279
        %v3290 = vunpack.c.l.s4 1934713408
        %v3291 = vunpack.c.0.s8 %v3290
        %v3292 = vlaneseq
        %v3293 = vshrl.u32 %v3292, 7
        %v3294 = vsub.s32 %v3291, %v3293
        %v3295 = vrot.slane %v3287, %v3294
        %v3297 = vunpack.c.l.s4 1934713408
        %v3298 = vunpack.c.0.s8 %v3297
        %v3299 = vlaneseq
        %v3300 = vshrl.u32 %v3299, 7
        %v3301 = vsub.s32 %v3298, %v3300
        %v3302 = vrot.slane %v3288, %v3301
        %v3303 = vcombine.low %v3270, %v3286
        %v3304 = vcombine.high %v3270, %v3286
        %v3306 = vunpack.c.l.s4 1934713408
        %v3307 = vunpack.c.0.s8 %v3306
        %v3308 = vlaneseq
        %v3309 = vshrl.u32 %v3308, 7
        %v3310 = vsub.s32 %v3307, %v3309
        %v3311 = vrot.slane %v3303, %v3310
        %v3313 = vunpack.c.l.s4 1934713408
        %v3314 = vunpack.c.0.s8 %v3313
        %v3315 = vlaneseq
        %v3316 = vshrl.u32 %v3315, 7
        %v3317 = vsub.s32 %v3314, %v3316
        %v3318 = vrot.slane %v3304, %v3317
        %v3319 = vcombine.low %v3295, %v3311
        %v3320 = vcombine.high %v3295, %v3311
        %v3321 = vcombine.low %v3302, %v3318
        %v3322 = vcombine.high %v3302, %v3318
        %v3323 = vcombine.low %v1794, %v1858
        %v3324 = vcombine.high %v1794, %v1858
        %v3326 = vunpack.c.l.s4 1983009808
        %v3327 = vunpack.c.0.s8 %v3326
        %v3328 = vlaneseq
        %v3329 = vshrl.u32 %v3328, 7
        %v3330 = vsub.s32 %v3327, %v3329
        %v3331 = vrot.slane %v3323, %v3330
        %v3333 = vunpack.c.l.s4 1983009808
        %v3334 = vunpack.c.0.s8 %v3333
        %v3335 = vlaneseq
        %v3336 = vshrl.u32 %v3335, 7
        %v3337 = vsub.s32 %v3334, %v3336
        %v3338 = vrot.slane %v3324, %v3337
        %v3339 = vcombine.low %v1826, %v1890
        %v3340 = vcombine.high %v1826, %v1890
        %v3342 = vunpack.c.l.s4 1983009808
        %v3343 = vunpack.c.0.s8 %v3342
        %v3344 = vlaneseq
        %v3345 = vshrl.u32 %v3344, 7
        %v3346 = vsub.s32 %v3343, %v3345
        %v3347 = vrot.slane %v3339, %v3346
        %v3349 = vunpack.c.l.s4 1983009808
        %v3350 = vunpack.c.0.s8 %v3349
        %v3351 = vlaneseq
        %v3352 = vshrl.u32 %v3351, 7
        %v3353 = vsub.s32 %v3350, %v3352
        %v3354 = vrot.slane %v3340, %v3353
        %v3355 = vcombine.low %v3331, %v3347
        %v3356 = vcombine.high %v3331, %v3347
        %v3358 = vunpack.c.l.s4 1934713408
        %v3359 = vunpack.c.0.s8 %v3358
        %v3360 = vlaneseq
        %v3361 = vshrl.u32 %v3360, 7
        %v3362 = vsub.s32 %v3359, %v3361
        %v3363 = vrot.slane %v3355, %v3362
        %v3365 = vunpack.c.l.s4 1934713408
        %v3366 = vunpack.c.0.s8 %v3365
        %v3367 = vlaneseq
        %v3368 = vshrl.u32 %v3367, 7
        %v3369 = vsub.s32 %v3366, %v3368
        %v3370 = vrot.slane %v3356, %v3369
        %v3371 = vcombine.low %v3338, %v3354
        %v3372 = vcombine.high %v3338, %v3354
        %v3374 = vunpack.c.l.s4 1934713408
        %v3375 = vunpack.c.0.s8 %v3374
        %v3376 = vlaneseq
        %v3377 = vshrl.u32 %v3376, 7
        %v3378 = vsub.s32 %v3375, %v3377
        %v3379 = vrot.slane %v3371, %v3378
        %v3381 = vunpack.c.l.s4 1934713408
        %v3382 = vunpack.c.0.s8 %v3381
        %v3383 = vlaneseq
        %v3384 = vshrl.u32 %v3383, 7
        %v3385 = vsub.s32 %v3382, %v3384
        %v3386 = vrot.slane %v3372, %v3385
        %v3387 = vcombine.low %v3363, %v3379
        %v3388 = vcombine.high %v3363, %v3379
        %v3389 = vcombine.low %v3370, %v3386
        %v3390 = vcombine.high %v3370, %v3386
        %v3391 = vcombine.low %v1795, %v1859
        %v3392 = vcombine.high %v1795, %v1859
        %v3394 = vunpack.c.l.s4 1983009808
        %v3395 = vunpack.c.0.s8 %v3394
        %v3396 = vlaneseq
        %v3397 = vshrl.u32 %v3396, 7
        %v3398 = vsub.s32 %v3395, %v3397
        %v3399 = vrot.slane %v3391, %v3398
        %v3401 = vunpack.c.l.s4 1983009808
        %v3402 = vunpack.c.0.s8 %v3401
        %v3403 = vlaneseq
        %v3404 = vshrl.u32 %v3403, 7
        %v3405 = vsub.s32 %v3402, %v3404
        %v3406 = vrot.slane %v3392, %v3405
        %v3407 = vcombine.low %v1827, %v1891
        %v3408 = vcombine.high %v1827, %v1891
        %v3410 = vunpack.c.l.s4 1983009808
        %v3411 = vunpack.c.0.s8 %v3410
        %v3412 = vlaneseq
        %v3413 = vshrl.u32 %v3412, 7
        %v3414 = vsub.s32 %v3411, %v3413
        %v3415 = vrot.slane %v3407, %v3414
        %v3417 = vunpack.c.l.s4 1983009808
        %v3418 = vunpack.c.0.s8 %v3417
        %v3419 = vlaneseq
        %v3420 = vshrl.u32 %v3419, 7
        %v3421 = vsub.s32 %v3418, %v3420
        %v3422 = vrot.slane %v3408, %v3421
        %v3423 = vcombine.low %v3399, %v3415
        %v3424 = vcombine.high %v3399, %v3415
        %v3426 = vunpack.c.l.s4 1934713408
        %v3427 = vunpack.c.0.s8 %v3426
        %v3428 = vlaneseq
        %v3429 = vshrl.u32 %v3428, 7
        %v3430 = vsub.s32 %v3427, %v3429
        %v3431 = vrot.slane %v3423, %v3430
        %v3433 = vunpack.c.l.s4 1934713408
        %v3434 = vunpack.c.0.s8 %v3433
        %v3435 = vlaneseq
        %v3436 = vshrl.u32 %v3435, 7
        %v3437 = vsub.s32 %v3434, %v3436
        %v3438 = vrot.slane %v3424, %v3437
        %v3439 = vcombine.low %v3406, %v3422
        %v3440 = vcombine.high %v3406, %v3422
        %v3442 = vunpack.c.l.s4 1934713408
        %v3443 = vunpack.c.0.s8 %v3442
        %v3444 = vlaneseq
        %v3445 = vshrl.u32 %v3444, 7
        %v3446 = vsub.s32 %v3443, %v3445
        %v3447 = vrot.slane %v3439, %v3446
        %v3449 = vunpack.c.l.s4 1934713408
        %v3450 = vunpack.c.0.s8 %v3449
        %v3451 = vlaneseq
        %v3452 = vshrl.u32 %v3451, 7
        %v3453 = vsub.s32 %v3450, %v3452
        %v3454 = vrot.slane %v3440, %v3453
        %v3455 = vcombine.low %v3431, %v3447
        %v3456 = vcombine.high %v3431, %v3447
        %v3457 = vcombine.low %v3438, %v3454
        %v3458 = vcombine.high %v3438, %v3454
        %v3459 = vcombine.low %v1796, %v1860
        %v3460 = vcombine.high %v1796, %v1860
        %v3462 = vunpack.c.l.s4 1983009808
        %v3463 = vunpack.c.0.s8 %v3462
        %v3464 = vlaneseq
        %v3465 = vshrl.u32 %v3464, 7
        %v3466 = vsub.s32 %v3463, %v3465
        %v3467 = vrot.slane %v3459, %v3466
        %v3469 = vunpack.c.l.s4 1983009808
        %v3470 = vunpack.c.0.s8 %v3469
        %v3471 = vlaneseq
        %v3472 = vshrl.u32 %v3471, 7
        %v3473 = vsub.s32 %v3470, %v3472
        %v3474 = vrot.slane %v3460, %v3473
        %v3475 = vcombine.low %v1828, %v1892
        %v3476 = vcombine.high %v1828, %v1892
        %v3478 = vunpack.c.l.s4 1983009808
        %v3479 = vunpack.c.0.s8 %v3478
        %v3480 = vlaneseq
        %v3481 = vshrl.u32 %v3480, 7
        %v3482 = vsub.s32 %v3479, %v3481
        %v3483 = vrot.slane %v3475, %v3482
        %v3485 = vunpack.c.l.s4 1983009808
        %v3486 = vunpack.c.0.s8 %v3485
        %v3487 = vlaneseq
        %v3488 = vshrl.u32 %v3487, 7
        %v3489 = vsub.s32 %v3486, %v3488
        %v3490 = vrot.slane %v3476, %v3489
        %v3491 = vcombine.low %v3467, %v3483
        %v3492 = vcombine.high %v3467, %v3483
        %v3494 = vunpack.c.l.s4 1934713408
        %v3495 = vunpack.c.0.s8 %v3494
        %v3496 = vlaneseq
        %v3497 = vshrl.u32 %v3496, 7
        %v3498 = vsub.s32 %v3495, %v3497
        %v3499 = vrot.slane %v3491, %v3498
        %v3501 = vunpack.c.l.s4 1934713408
        %v3502 = vunpack.c.0.s8 %v3501
        %v3503 = vlaneseq
        %v3504 = vshrl.u32 %v3503, 7
        %v3505 = vsub.s32 %v3502, %v3504
        %v3506 = vrot.slane %v3492, %v3505
        %v3507 = vcombine.low %v3474, %v3490
        %v3508 = vcombine.high %v3474, %v3490
        %v3510 = vunpack.c.l.s4 1934713408
        %v3511 = vunpack.c.0.s8 %v3510
        %v3512 = vlaneseq
        %v3513 = vshrl.u32 %v3512, 7
        %v3514 = vsub.s32 %v3511, %v3513
        %v3515 = vrot.slane %v3507, %v3514
        %v3517 = vunpack.c.l.s4 1934713408
        %v3518 = vunpack.c.0.s8 %v3517
        %v3519 = vlaneseq
        %v3520 = vshrl.u32 %v3519, 7
        %v3521 = vsub.s32 %v3518, %v3520
        %v3522 = vrot.slane %v3508, %v3521
        %v3523 = vcombine.low %v3499, %v3515
        %v3524 = vcombine.high %v3499, %v3515
        %v3525 = vcombine.low %v3506, %v3522
        %v3526 = vcombine.high %v3506, %v3522
        %v3527 = vcombine.low %v1797, %v1861
        %v3528 = vcombine.high %v1797, %v1861
        %v3530 = vunpack.c.l.s4 1983009808
        %v3531 = vunpack.c.0.s8 %v3530
        %v3532 = vlaneseq
        %v3533 = vshrl.u32 %v3532, 7
        %v3534 = vsub.s32 %v3531, %v3533
        %v3535 = vrot.slane %v3527, %v3534
        %v3537 = vunpack.c.l.s4 1983009808
        %v3538 = vunpack.c.0.s8 %v3537
        %v3539 = vlaneseq
        %v3540 = vshrl.u32 %v3539, 7
        %v3541 = vsub.s32 %v3538, %v3540
        %v3542 = vrot.slane %v3528, %v3541
        %v3543 = vcombine.low %v1829, %v1893
        %v3544 = vcombine.high %v1829, %v1893
        %v3546 = vunpack.c.l.s4 1983009808
        %v3547 = vunpack.c.0.s8 %v3546
        %v3548 = vlaneseq
        %v3549 = vshrl.u32 %v3548, 7
        %v3550 = vsub.s32 %v3547, %v3549
        %v3551 = vrot.slane %v3543, %v3550
        %v3553 = vunpack.c.l.s4 1983009808
        %v3554 = vunpack.c.0.s8 %v3553
        %v3555 = vlaneseq
        %v3556 = vshrl.u32 %v3555, 7
        %v3557 = vsub.s32 %v3554, %v3556
        %v3558 = vrot.slane %v3544, %v3557
        %v3559 = vcombine.low %v3535, %v3551
        %v3560 = vcombine.high %v3535, %v3551
        %v3562 = vunpack.c.l.s4 1934713408
        %v3563 = vunpack.c.0.s8 %v3562
        %v3564 = vlaneseq
        %v3565 = vshrl.u32 %v3564, 7
        %v3566 = vsub.s32 %v3563, %v3565
        %v3567 = vrot.slane %v3559, %v3566
        %v3569 = vunpack.c.l.s4 1934713408
        %v3570 = vunpack.c.0.s8 %v3569
        %v3571 = vlaneseq
        %v3572 = vshrl.u32 %v3571, 7
        %v3573 = vsub.s32 %v3570, %v3572
        %v3574 = vrot.slane %v3560, %v3573
        %v3575 = vcombine.low %v3542, %v3558
        %v3576 = vcombine.high %v3542, %v3558
        %v3578 = vunpack.c.l.s4 1934713408
        %v3579 = vunpack.c.0.s8 %v3578
        %v3580 = vlaneseq
        %v3581 = vshrl.u32 %v3580, 7
        %v3582 = vsub.s32 %v3579, %v3581
        %v3583 = vrot.slane %v3575, %v3582
        %v3585 = vunpack.c.l.s4 1934713408
        %v3586 = vunpack.c.0.s8 %v3585
        %v3587 = vlaneseq
        %v3588 = vshrl.u32 %v3587, 7
        %v3589 = vsub.s32 %v3586, %v3588
        %v3590 = vrot.slane %v3576, %v3589
        %v3591 = vcombine.low %v3567, %v3583
        %v3592 = vcombine.high %v3567, %v3583
        %v3593 = vcombine.low %v3574, %v3590
        %v3594 = vcombine.high %v3574, %v3590
        %v3595 = vcombine.low %v1798, %v1862
        %v3596 = vcombine.high %v1798, %v1862
        %v3598 = vunpack.c.l.s4 1983009808
        %v3599 = vunpack.c.0.s8 %v3598
        %v3600 = vlaneseq
        %v3601 = vshrl.u32 %v3600, 7
        %v3602 = vsub.s32 %v3599, %v3601
        %v3603 = vrot.slane %v3595, %v3602
        %v3605 = vunpack.c.l.s4 1983009808
        %v3606 = vunpack.c.0.s8 %v3605
        %v3607 = vlaneseq
        %v3608 = vshrl.u32 %v3607, 7
        %v3609 = vsub.s32 %v3606, %v3608
        %v3610 = vrot.slane %v3596, %v3609
        %v3611 = vcombine.low %v1830, %v1894
        %v3612 = vcombine.high %v1830, %v1894
        %v3614 = vunpack.c.l.s4 1983009808
        %v3615 = vunpack.c.0.s8 %v3614
        %v3616 = vlaneseq
        %v3617 = vshrl.u32 %v3616, 7
        %v3618 = vsub.s32 %v3615, %v3617
        %v3619 = vrot.slane %v3611, %v3618
        %v3621 = vunpack.c.l.s4 1983009808
        %v3622 = vunpack.c.0.s8 %v3621
        %v3623 = vlaneseq
        %v3624 = vshrl.u32 %v3623, 7
        %v3625 = vsub.s32 %v3622, %v3624
        %v3626 = vrot.slane %v3612, %v3625
        %v3627 = vcombine.low %v3603, %v3619
        %v3628 = vcombine.high %v3603, %v3619
        %v3630 = vunpack.c.l.s4 1934713408
        %v3631 = vunpack.c.0.s8 %v3630
        %v3632 = vlaneseq
        %v3633 = vshrl.u32 %v3632, 7
        %v3634 = vsub.s32 %v3631, %v3633
        %v3635 = vrot.slane %v3627, %v3634
        %v3637 = vunpack.c.l.s4 1934713408
        %v3638 = vunpack.c.0.s8 %v3637
        %v3639 = vlaneseq
        %v3640 = vshrl.u32 %v3639, 7
        %v3641 = vsub.s32 %v3638, %v3640
        %v3642 = vrot.slane %v3628, %v3641
        %v3643 = vcombine.low %v3610, %v3626
        %v3644 = vcombine.high %v3610, %v3626
        %v3646 = vunpack.c.l.s4 1934713408
        %v3647 = vunpack.c.0.s8 %v3646
        %v3648 = vlaneseq
        %v3649 = vshrl.u32 %v3648, 7
        %v3650 = vsub.s32 %v3647, %v3649
        %v3651 = vrot.slane %v3643, %v3650
        %v3653 = vunpack.c.l.s4 1934713408
        %v3654 = vunpack.c.0.s8 %v3653
        %v3655 = vlaneseq
        %v3656 = vshrl.u32 %v3655, 7
        %v3657 = vsub.s32 %v3654, %v3656
        %v3658 = vrot.slane %v3644, %v3657
        %v3659 = vcombine.low %v3635, %v3651
        %v3660 = vcombine.high %v3635, %v3651
        %v3661 = vcombine.low %v3642, %v3658
        %v3662 = vcombine.high %v3642, %v3658
        %v3663 = vcombine.low %v1799, %v1863
        %v3664 = vcombine.high %v1799, %v1863
        %v3666 = vunpack.c.l.s4 1983009808
        %v3667 = vunpack.c.0.s8 %v3666
        %v3668 = vlaneseq
        %v3669 = vshrl.u32 %v3668, 7
        %v3670 = vsub.s32 %v3667, %v3669
        %v3671 = vrot.slane %v3663, %v3670
        %v3673 = vunpack.c.l.s4 1983009808
        %v3674 = vunpack.c.0.s8 %v3673
        %v3675 = vlaneseq
        %v3676 = vshrl.u32 %v3675, 7
        %v3677 = vsub.s32 %v3674, %v3676
        %v3678 = vrot.slane %v3664, %v3677
        %v3679 = vcombine.low %v1831, %v1895
        %v3680 = vcombine.high %v1831, %v1895
        %v3682 = vunpack.c.l.s4 1983009808
        %v3683 = vunpack.c.0.s8 %v3682
        %v3684 = vlaneseq
        %v3685 = vshrl.u32 %v3684, 7
        %v3686 = vsub.s32 %v3683, %v3685
        %v3687 = vrot.slane %v3679, %v3686
        %v3689 = vunpack.c.l.s4 1983009808
        %v3690 = vunpack.c.0.s8 %v3689
        %v3691 = vlaneseq
        %v3692 = vshrl.u32 %v3691, 7
        %v3693 = vsub.s32 %v3690, %v3692
        %v3694 = vrot.slane %v3680, %v3693
        %v3695 = vcombine.low %v3671, %v3687
        %v3696 = vcombine.high %v3671, %v3687
        %v3698 = vunpack.c.l.s4 1934713408
        %v3699 = vunpack.c.0.s8 %v3698
        %v3700 = vlaneseq
        %v3701 = vshrl.u32 %v3700, 7
        %v3702 = vsub.s32 %v3699, %v3701
        %v3703 = vrot.slane %v3695, %v3702
        %v3705 = vunpack.c.l.s4 1934713408
        %v3706 = vunpack.c.0.s8 %v3705
        %v3707 = vlaneseq
        %v3708 = vshrl.u32 %v3707, 7
        %v3709 = vsub.s32 %v3706, %v3708
        %v3710 = vrot.slane %v3696, %v3709
        %v3711 = vcombine.low %v3678, %v3694
        %v3712 = vcombine.high %v3678, %v3694
        %v3714 = vunpack.c.l.s4 1934713408
        %v3715 = vunpack.c.0.s8 %v3714
        %v3716 = vlaneseq
        %v3717 = vshrl.u32 %v3716, 7
        %v3718 = vsub.s32 %v3715, %v3717
        %v3719 = vrot.slane %v3711, %v3718
        %v3721 = vunpack.c.l.s4 1934713408
        %v3722 = vunpack.c.0.s8 %v3721
        %v3723 = vlaneseq
        %v3724 = vshrl.u32 %v3723, 7
        %v3725 = vsub.s32 %v3722, %v3724
        %v3726 = vrot.slane %v3712, %v3725
        %v3727 = vcombine.low %v3703, %v3719
        %v3728 = vcombine.high %v3703, %v3719
        %v3729 = vcombine.low %v3710, %v3726
        %v3730 = vcombine.high %v3710, %v3726
        %v3731 = vcombine.low %v1800, %v1864
        %v3732 = vcombine.high %v1800, %v1864
        %v3734 = vunpack.c.l.s4 1983009808
        %v3735 = vunpack.c.0.s8 %v3734
        %v3736 = vlaneseq
        %v3737 = vshrl.u32 %v3736, 7
        %v3738 = vsub.s32 %v3735, %v3737
        %v3739 = vrot.slane %v3731, %v3738
        %v3741 = vunpack.c.l.s4 1983009808
        %v3742 = vunpack.c.0.s8 %v3741
        %v3743 = vlaneseq
        %v3744 = vshrl.u32 %v3743, 7
        %v3745 = vsub.s32 %v3742, %v3744
        %v3746 = vrot.slane %v3732, %v3745
        %v3747 = vcombine.low %v1832, %v1896
        %v3748 = vcombine.high %v1832, %v1896
        %v3750 = vunpack.c.l.s4 1983009808
        %v3751 = vunpack.c.0.s8 %v3750
        %v3752 = vlaneseq
        %v3753 = vshrl.u32 %v3752, 7
        %v3754 = vsub.s32 %v3751, %v3753
        %v3755 = vrot.slane %v3747, %v3754
        %v3757 = vunpack.c.l.s4 1983009808
        %v3758 = vunpack.c.0.s8 %v3757
        %v3759 = vlaneseq
        %v3760 = vshrl.u32 %v3759, 7
        %v3761 = vsub.s32 %v3758, %v3760
        %v3762 = vrot.slane %v3748, %v3761
        %v3763 = vcombine.low %v3739, %v3755
        %v3764 = vcombine.high %v3739, %v3755
        %v3766 = vunpack.c.l.s4 1934713408
        %v3767 = vunpack.c.0.s8 %v3766
        %v3768 = vlaneseq
        %v3769 = vshrl.u32 %v3768, 7
        %v3770 = vsub.s32 %v3767, %v3769
        %v3771 = vrot.slane %v3763, %v3770
        %v3773 = vunpack.c.l.s4 1934713408
        %v3774 = vunpack.c.0.s8 %v3773
        %v3775 = vlaneseq
        %v3776 = vshrl.u32 %v3775, 7
        %v3777 = vsub.s32 %v3774, %v3776
        %v3778 = vrot.slane %v3764, %v3777
        %v3779 = vcombine.low %v3746, %v3762
        %v3780 = vcombine.high %v3746, %v3762
        %v3782 = vunpack.c.l.s4 1934713408
        %v3783 = vunpack.c.0.s8 %v3782
        %v3784 = vlaneseq
        %v3785 = vshrl.u32 %v3784, 7
        %v3786 = vsub.s32 %v3783, %v3785
        %v3787 = vrot.slane %v3779, %v3786
        %v3789 = vunpack.c.l.s4 1934713408
        %v3790 = vunpack.c.0.s8 %v3789
        %v3791 = vlaneseq
        %v3792 = vshrl.u32 %v3791, 7
        %v3793 = vsub.s32 %v3790, %v3792
        %v3794 = vrot.slane %v3780, %v3793
        %v3795 = vcombine.low %v3771, %v3787
        %v3796 = vcombine.high %v3771, %v3787
        %v3797 = vcombine.low %v3778, %v3794
        %v3798 = vcombine.high %v3778, %v3794
        %v3799 = vcombine.low %v1801, %v1865
        %v3800 = vcombine.high %v1801, %v1865
        %v3802 = vunpack.c.l.s4 1983009808
        %v3803 = vunpack.c.0.s8 %v3802
        %v3804 = vlaneseq
        %v3805 = vshrl.u32 %v3804, 7
        %v3806 = vsub.s32 %v3803, %v3805
        %v3807 = vrot.slane %v3799, %v3806
        %v3809 = vunpack.c.l.s4 1983009808
        %v3810 = vunpack.c.0.s8 %v3809
        %v3811 = vlaneseq
        %v3812 = vshrl.u32 %v3811, 7
        %v3813 = vsub.s32 %v3810, %v3812
        %v3814 = vrot.slane %v3800, %v3813
        %v3815 = vcombine.low %v1833, %v1897
        %v3816 = vcombine.high %v1833, %v1897
        %v3818 = vunpack.c.l.s4 1983009808
        %v3819 = vunpack.c.0.s8 %v3818
        %v3820 = vlaneseq
        %v3821 = vshrl.u32 %v3820, 7
        %v3822 = vsub.s32 %v3819, %v3821
        %v3823 = vrot.slane %v3815, %v3822
        %v3825 = vunpack.c.l.s4 1983009808
        %v3826 = vunpack.c.0.s8 %v3825
        %v3827 = vlaneseq
        %v3828 = vshrl.u32 %v3827, 7
        %v3829 = vsub.s32 %v3826, %v3828
        %v3830 = vrot.slane %v3816, %v3829
        %v3831 = vcombine.low %v3807, %v3823
        %v3832 = vcombine.high %v3807, %v3823
        %v3834 = vunpack.c.l.s4 1934713408
        %v3835 = vunpack.c.0.s8 %v3834
        %v3836 = vlaneseq
        %v3837 = vshrl.u32 %v3836, 7
        %v3838 = vsub.s32 %v3835, %v3837
        %v3839 = vrot.slane %v3831, %v3838
        %v3841 = vunpack.c.l.s4 1934713408
        %v3842 = vunpack.c.0.s8 %v3841
        %v3843 = vlaneseq
        %v3844 = vshrl.u32 %v3843, 7
        %v3845 = vsub.s32 %v3842, %v3844
        %v3846 = vrot.slane %v3832, %v3845
        %v3847 = vcombine.low %v3814, %v3830
        %v3848 = vcombine.high %v3814, %v3830
        %v3850 = vunpack.c.l.s4 1934713408
        %v3851 = vunpack.c.0.s8 %v3850
        %v3852 = vlaneseq
        %v3853 = vshrl.u32 %v3852, 7
        %v3854 = vsub.s32 %v3851, %v3853
        %v3855 = vrot.slane %v3847, %v3854
        %v3857 = vunpack.c.l.s4 1934713408
        %v3858 = vunpack.c.0.s8 %v3857
        %v3859 = vlaneseq
        %v3860 = vshrl.u32 %v3859, 7
        %v3861 = vsub.s32 %v3858, %v3860
        %v3862 = vrot.slane %v3848, %v3861
        %v3863 = vcombine.low %v3839, %v3855
        %v3864 = vcombine.high %v3839, %v3855
        %v3865 = vcombine.low %v3846, %v3862
        %v3866 = vcombine.high %v3846, %v3862
        %v3867 = vcombine.low %v1802, %v1866
        %v3868 = vcombine.high %v1802, %v1866
        %v3870 = vunpack.c.l.s4 1983009808
        %v3871 = vunpack.c.0.s8 %v3870
        %v3872 = vlaneseq
        %v3873 = vshrl.u32 %v3872, 7
        %v3874 = vsub.s32 %v3871, %v3873
        %v3875 = vrot.slane %v3867, %v3874
        %v3877 = vunpack.c.l.s4 1983009808
        %v3878 = vunpack.c.0.s8 %v3877
        %v3879 = vlaneseq
        %v3880 = vshrl.u32 %v3879, 7
        %v3881 = vsub.s32 %v3878, %v3880
        %v3882 = vrot.slane %v3868, %v3881
        %v3883 = vcombine.low %v1834, %v1898
        %v3884 = vcombine.high %v1834, %v1898
        %v3886 = vunpack.c.l.s4 1983009808
        %v3887 = vunpack.c.0.s8 %v3886
        %v3888 = vlaneseq
        %v3889 = vshrl.u32 %v3888, 7
        %v3890 = vsub.s32 %v3887, %v3889
        %v3891 = vrot.slane %v3883, %v3890
        %v3893 = vunpack.c.l.s4 1983009808
        %v3894 = vunpack.c.0.s8 %v3893
        %v3895 = vlaneseq
        %v3896 = vshrl.u32 %v3895, 7
        %v3897 = vsub.s32 %v3894, %v3896
        %v3898 = vrot.slane %v3884, %v3897
        %v3899 = vcombine.low %v3875, %v3891
        %v3900 = vcombine.high %v3875, %v3891
        %v3902 = vunpack.c.l.s4 1934713408
        %v3903 = vunpack.c.0.s8 %v3902
        %v3904 = vlaneseq
        %v3905 = vshrl.u32 %v3904, 7
        %v3906 = vsub.s32 %v3903, %v3905
        %v3907 = vrot.slane %v3899, %v3906
        %v3909 = vunpack.c.l.s4 1934713408
        %v3910 = vunpack.c.0.s8 %v3909
        %v3911 = vlaneseq
        %v3912 = vshrl.u32 %v3911, 7
        %v3913 = vsub.s32 %v3910, %v3912
        %v3914 = vrot.slane %v3900, %v3913
        %v3915 = vcombine.low %v3882, %v3898
        %v3916 = vcombine.high %v3882, %v3898
        %v3918 = vunpack.c.l.s4 1934713408
        %v3919 = vunpack.c.0.s8 %v3918
        %v3920 = vlaneseq
        %v3921 = vshrl.u32 %v3920, 7
        %v3922 = vsub.s32 %v3919, %v3921
        %v3923 = vrot.slane %v3915, %v3922
        %v3925 = vunpack.c.l.s4 1934713408
        %v3926 = vunpack.c.0.s8 %v3925
        %v3927 = vlaneseq
        %v3928 = vshrl.u32 %v3927, 7
        %v3929 = vsub.s32 %v3926, %v3928
        %v3930 = vrot.slane %v3916, %v3929
        %v3931 = vcombine.low %v3907, %v3923
        %v3932 = vcombine.high %v3907, %v3923
        %v3933 = vcombine.low %v3914, %v3930
        %v3934 = vcombine.high %v3914, %v3930
        %v3935 = vcombine.low %v1803, %v1867
        %v3936 = vcombine.high %v1803, %v1867
        %v3938 = vunpack.c.l.s4 1983009808
        %v3939 = vunpack.c.0.s8 %v3938
        %v3940 = vlaneseq
        %v3941 = vshrl.u32 %v3940, 7
        %v3942 = vsub.s32 %v3939, %v3941
        %v3943 = vrot.slane %v3935, %v3942
        %v3945 = vunpack.c.l.s4 1983009808
        %v3946 = vunpack.c.0.s8 %v3945
        %v3947 = vlaneseq
        %v3948 = vshrl.u32 %v3947, 7
        %v3949 = vsub.s32 %v3946, %v3948
        %v3950 = vrot.slane %v3936, %v3949
        %v3951 = vcombine.low %v1835, %v1899
        %v3952 = vcombine.high %v1835, %v1899
        %v3954 = vunpack.c.l.s4 1983009808
        %v3955 = vunpack.c.0.s8 %v3954
        %v3956 = vlaneseq
        %v3957 = vshrl.u32 %v3956, 7
        %v3958 = vsub.s32 %v3955, %v3957
        %v3959 = vrot.slane %v3951, %v3958
        %v3961 = vunpack.c.l.s4 1983009808
        %v3962 = vunpack.c.0.s8 %v3961
        %v3963 = vlaneseq
        %v3964 = vshrl.u32 %v3963, 7
        %v3965 = vsub.s32 %v3962, %v3964
        %v3966 = vrot.slane %v3952, %v3965
        %v3967 = vcombine.low %v3943, %v3959
        %v3968 = vcombine.high %v3943, %v3959
        %v3970 = vunpack.c.l.s4 1934713408
        %v3971 = vunpack.c.0.s8 %v3970
        %v3972 = vlaneseq
        %v3973 = vshrl.u32 %v3972, 7
        %v3974 = vsub.s32 %v3971, %v3973
        %v3975 = vrot.slane %v3967, %v3974
        %v3977 = vunpack.c.l.s4 1934713408
        %v3978 = vunpack.c.0.s8 %v3977
        %v3979 = vlaneseq
        %v3980 = vshrl.u32 %v3979, 7
        %v3981 = vsub.s32 %v3978, %v3980
        %v3982 = vrot.slane %v3968, %v3981
        %v3983 = vcombine.low %v3950, %v3966
        %v3984 = vcombine.high %v3950, %v3966
        %v3986 = vunpack.c.l.s4 1934713408
        %v3987 = vunpack.c.0.s8 %v3986
        %v3988 = vlaneseq
        %v3989 = vshrl.u32 %v3988, 7
        %v3990 = vsub.s32 %v3987, %v3989
        %v3991 = vrot.slane %v3983, %v3990
        %v3993 = vunpack.c.l.s4 1934713408
        %v3994 = vunpack.c.0.s8 %v3993
        %v3995 = vlaneseq
        %v3996 = vshrl.u32 %v3995, 7
        %v3997 = vsub.s32 %v3994, %v3996
        %v3998 = vrot.slane %v3984, %v3997
        %v3999 = vcombine.low %v3975, %v3991
        %v4000 = vcombine.high %v3975, %v3991
        %v4001 = vcombine.low %v3982, %v3998
        %v4002 = vcombine.high %v3982, %v3998
        %v4003 = vcombine.low %v1804, %v1868
        %v4004 = vcombine.high %v1804, %v1868
        %v4006 = vunpack.c.l.s4 1983009808
        %v4007 = vunpack.c.0.s8 %v4006
        %v4008 = vlaneseq
        %v4009 = vshrl.u32 %v4008, 7
        %v4010 = vsub.s32 %v4007, %v4009
        %v4011 = vrot.slane %v4003, %v4010
        %v4013 = vunpack.c.l.s4 1983009808
        %v4014 = vunpack.c.0.s8 %v4013
        %v4015 = vlaneseq
        %v4016 = vshrl.u32 %v4015, 7
        %v4017 = vsub.s32 %v4014, %v4016
        %v4018 = vrot.slane %v4004, %v4017
        %v4019 = vcombine.low %v1836, %v1900
        %v4020 = vcombine.high %v1836, %v1900
        %v4022 = vunpack.c.l.s4 1983009808
        %v4023 = vunpack.c.0.s8 %v4022
        %v4024 = vlaneseq
        %v4025 = vshrl.u32 %v4024, 7
        %v4026 = vsub.s32 %v4023, %v4025
        %v4027 = vrot.slane %v4019, %v4026
        %v4029 = vunpack.c.l.s4 1983009808
        %v4030 = vunpack.c.0.s8 %v4029
        %v4031 = vlaneseq
        %v4032 = vshrl.u32 %v4031, 7
        %v4033 = vsub.s32 %v4030, %v4032
        %v4034 = vrot.slane %v4020, %v4033
        %v4035 = vcombine.low %v4011, %v4027
        %v4036 = vcombine.high %v4011, %v4027
        %v4038 = vunpack.c.l.s4 1934713408
        %v4039 = vunpack.c.0.s8 %v4038
        %v4040 = vlaneseq
        %v4041 = vshrl.u32 %v4040, 7
        %v4042 = vsub.s32 %v4039, %v4041
        %v4043 = vrot.slane %v4035, %v4042
        %v4045 = vunpack.c.l.s4 1934713408
        %v4046 = vunpack.c.0.s8 %v4045
        %v4047 = vlaneseq
        %v4048 = vshrl.u32 %v4047, 7
        %v4049 = vsub.s32 %v4046, %v4048
        %v4050 = vrot.slane %v4036, %v4049
        %v4051 = vcombine.low %v4018, %v4034
        %v4052 = vcombine.high %v4018, %v4034
        %v4054 = vunpack.c.l.s4 1934713408
        %v4055 = vunpack.c.0.s8 %v4054
        %v4056 = vlaneseq
        %v4057 = vshrl.u32 %v4056, 7
        %v4058 = vsub.s32 %v4055, %v4057
        %v4059 = vrot.slane %v4051, %v4058
        %v4061 = vunpack.c.l.s4 1934713408
        %v4062 = vunpack.c.0.s8 %v4061
        %v4063 = vlaneseq
        %v4064 = vshrl.u32 %v4063, 7
        %v4065 = vsub.s32 %v4062, %v4064
        %v4066 = vrot.slane %v4052, %v4065
        %v4067 = vcombine.low %v4043, %v4059
        %v4068 = vcombine.high %v4043, %v4059
        %v4069 = vcombine.low %v4050, %v4066
        %v4070 = vcombine.high %v4050, %v4066
        %v4071 = vcombine.low %v1805, %v1869
        %v4072 = vcombine.high %v1805, %v1869
        %v4074 = vunpack.c.l.s4 1983009808
        %v4075 = vunpack.c.0.s8 %v4074
        %v4076 = vlaneseq
        %v4077 = vshrl.u32 %v4076, 7
        %v4078 = vsub.s32 %v4075, %v4077
        %v4079 = vrot.slane %v4071, %v4078
        %v4081 = vunpack.c.l.s4 1983009808
        %v4082 = vunpack.c.0.s8 %v4081
        %v4083 = vlaneseq
        %v4084 = vshrl.u32 %v4083, 7
        %v4085 = vsub.s32 %v4082, %v4084
        %v4086 = vrot.slane %v4072, %v4085
        %v4087 = vcombine.low %v1837, %v1901
        %v4088 = vcombine.high %v1837, %v1901
        %v4090 = vunpack.c.l.s4 1983009808
        %v4091 = vunpack.c.0.s8 %v4090
        %v4092 = vlaneseq
        %v4093 = vshrl.u32 %v4092, 7
        %v4094 = vsub.s32 %v4091, %v4093
        %v4095 = vrot.slane %v4087, %v4094
        %v4097 = vunpack.c.l.s4 1983009808
        %v4098 = vunpack.c.0.s8 %v4097
        %v4099 = vlaneseq
        %v4100 = vshrl.u32 %v4099, 7
        %v4101 = vsub.s32 %v4098, %v4100
        %v4102 = vrot.slane %v4088, %v4101
        %v4103 = vcombine.low %v4079, %v4095
        %v4104 = vcombine.high %v4079, %v4095
        %v4106 = vunpack.c.l.s4 1934713408
        %v4107 = vunpack.c.0.s8 %v4106
        %v4108 = vlaneseq
        %v4109 = vshrl.u32 %v4108, 7
        %v4110 = vsub.s32 %v4107, %v4109
        %v4111 = vrot.slane %v4103, %v4110
        %v4113 = vunpack.c.l.s4 1934713408
        %v4114 = vunpack.c.0.s8 %v4113
        %v4115 = vlaneseq
        %v4116 = vshrl.u32 %v4115, 7
        %v4117 = vsub.s32 %v4114, %v4116
        %v4118 = vrot.slane %v4104, %v4117
        %v4119 = vcombine.low %v4086, %v4102
        %v4120 = vcombine.high %v4086, %v4102
        %v4122 = vunpack.c.l.s4 1934713408
        %v4123 = vunpack.c.0.s8 %v4122
        %v4124 = vlaneseq
        %v4125 = vshrl.u32 %v4124, 7
        %v4126 = vsub.s32 %v4123, %v4125
        %v4127 = vrot.slane %v4119, %v4126
        %v4129 = vunpack.c.l.s4 1934713408
        %v4130 = vunpack.c.0.s8 %v4129
        %v4131 = vlaneseq
        %v4132 = vshrl.u32 %v4131, 7
        %v4133 = vsub.s32 %v4130, %v4132
        %v4134 = vrot.slane %v4120, %v4133
        %v4135 = vcombine.low %v4111, %v4127
        %v4136 = vcombine.high %v4111, %v4127
        %v4137 = vcombine.low %v4118, %v4134
        %v4138 = vcombine.high %v4118, %v4134
        %v4139 = vcombine.low %v1806, %v1870
        %v4140 = vcombine.high %v1806, %v1870
        %v4142 = vunpack.c.l.s4 1983009808
        %v4143 = vunpack.c.0.s8 %v4142
        %v4144 = vlaneseq
        %v4145 = vshrl.u32 %v4144, 7
        %v4146 = vsub.s32 %v4143, %v4145
        %v4147 = vrot.slane %v4139, %v4146
        %v4149 = vunpack.c.l.s4 1983009808
        %v4150 = vunpack.c.0.s8 %v4149
        %v4151 = vlaneseq
        %v4152 = vshrl.u32 %v4151, 7
        %v4153 = vsub.s32 %v4150, %v4152
        %v4154 = vrot.slane %v4140, %v4153
        %v4155 = vcombine.low %v1838, %v1902
        %v4156 = vcombine.high %v1838, %v1902
        %v4158 = vunpack.c.l.s4 1983009808
        %v4159 = vunpack.c.0.s8 %v4158
        %v4160 = vlaneseq
        %v4161 = vshrl.u32 %v4160, 7
        %v4162 = vsub.s32 %v4159, %v4161
        %v4163 = vrot.slane %v4155, %v4162
        %v4165 = vunpack.c.l.s4 1983009808
        %v4166 = vunpack.c.0.s8 %v4165
        %v4167 = vlaneseq
        %v4168 = vshrl.u32 %v4167, 7
        %v4169 = vsub.s32 %v4166, %v4168
        %v4170 = vrot.slane %v4156, %v4169
        %v4171 = vcombine.low %v4147, %v4163
        %v4172 = vcombine.high %v4147, %v4163
        %v4174 = vunpack.c.l.s4 1934713408
        %v4175 = vunpack.c.0.s8 %v4174
        %v4176 = vlaneseq
        %v4177 = vshrl.u32 %v4176, 7
        %v4178 = vsub.s32 %v4175, %v4177
        %v4179 = vrot.slane %v4171, %v4178
        %v4181 = vunpack.c.l.s4 1934713408
        %v4182 = vunpack.c.0.s8 %v4181
        %v4183 = vlaneseq
        %v4184 = vshrl.u32 %v4183, 7
        %v4185 = vsub.s32 %v4182, %v4184
        %v4186 = vrot.slane %v4172, %v4185
        %v4187 = vcombine.low %v4154, %v4170
        %v4188 = vcombine.high %v4154, %v4170
        %v4190 = vunpack.c.l.s4 1934713408
        %v4191 = vunpack.c.0.s8 %v4190
        %v4192 = vlaneseq
        %v4193 = vshrl.u32 %v4192, 7
        %v4194 = vsub.s32 %v4191, %v4193
        %v4195 = vrot.slane %v4187, %v4194
        %v4197 = vunpack.c.l.s4 1934713408
        %v4198 = vunpack.c.0.s8 %v4197
        %v4199 = vlaneseq
        %v4200 = vshrl.u32 %v4199, 7
        %v4201 = vsub.s32 %v4198, %v4200
        %v4202 = vrot.slane %v4188, %v4201
        %v4203 = vcombine.low %v4179, %v4195
        %v4204 = vcombine.high %v4179, %v4195
        %v4205 = vcombine.low %v4186, %v4202
        %v4206 = vcombine.high %v4186, %v4202
        %v4207 = vlaneseq
        %v4208 = vshrl.u32 %v4207, 7
        %v4209 = vsub.s32 0, %v4208
        %v4210 = vrot.slane %v1503, %v4209
        %4212 = vbcast.lane.b32.xlu0 %v4210, 256
        %v4213 = vpop.permute.xlu0 %4212
        %v4214 = vlaneseq
        %v4215 = vshrl.u32 %v4214, 7
        %v4216 = vsub.s32 1, %v4215
        %v4217 = vrot.slane %v1503, %v4216
        %4219 = vbcast.lane.b32.xlu0 %v4217, 256
        %v4220 = vpop.permute.xlu0 %4219
        %v4221 = vlaneseq
        %v4222 = vshrl.u32 %v4221, 7
        %v4223 = vsub.s32 2, %v4222
        %v4224 = vrot.slane %v1503, %v4223
        %4226 = vbcast.lane.b32.xlu0 %v4224, 256
        %v4227 = vpop.permute.xlu0 %4226
        %v4228 = vlaneseq
        %v4229 = vshrl.u32 %v4228, 7
        %v4230 = vsub.s32 3, %v4229
        %v4231 = vrot.slane %v1503, %v4230
        %4233 = vbcast.lane.b32.xlu0 %v4231, 256
        %v4234 = vpop.permute.xlu0 %4233
        %v4235 = vlaneseq
        %v4236 = vshrl.u32 %v4235, 7
        %v4237 = vsub.s32 4, %v4236
        %v4238 = vrot.slane %v1503, %v4237
        %4240 = vbcast.lane.b32.xlu0 %v4238, 256
        %v4241 = vpop.permute.xlu0 %4240
        %v4242 = vlaneseq
        %v4243 = vshrl.u32 %v4242, 7
        %v4244 = vsub.s32 5, %v4243
        %v4245 = vrot.slane %v1503, %v4244
        %4247 = vbcast.lane.b32.xlu0 %v4245, 256
        %v4248 = vpop.permute.xlu0 %4247
        %v4249 = vlaneseq
        %v4250 = vshrl.u32 %v4249, 7
        %v4251 = vsub.s32 6, %v4250
        %v4252 = vrot.slane %v1503, %v4251
        %4254 = vbcast.lane.b32.xlu0 %v4252, 256
        %v4255 = vpop.permute.xlu0 %4254
        %v4256 = vlaneseq
        %v4257 = vshrl.u32 %v4256, 7
        %v4258 = vsub.s32 7, %v4257
        %v4259 = vrot.slane %v1503, %v4258
        %4261 = vbcast.lane.b32.xlu0 %v4259, 256
        %v4262 = vpop.permute.xlu0 %4261
        %v4263 = vlaneseq
        %v4264 = vshrl.u32 %v4263, 7
        %v4265 = vsub.s32 0, %v4264
        %v4266 = vrot.slane %v1504, %v4265
        %4268 = vbcast.lane.b32.xlu0 %v4266, 256
        %v4269 = vpop.permute.xlu0 %4268
        %v4270 = vlaneseq
        %v4271 = vshrl.u32 %v4270, 7
        %v4272 = vsub.s32 1, %v4271
        %v4273 = vrot.slane %v1504, %v4272
        %4275 = vbcast.lane.b32.xlu0 %v4273, 256
        %v4276 = vpop.permute.xlu0 %4275
        %v4277 = vlaneseq
        %v4278 = vshrl.u32 %v4277, 7
        %v4279 = vsub.s32 2, %v4278
        %v4280 = vrot.slane %v1504, %v4279
        %4282 = vbcast.lane.b32.xlu0 %v4280, 256
        %v4283 = vpop.permute.xlu0 %4282
        %v4284 = vlaneseq
        %v4285 = vshrl.u32 %v4284, 7
        %v4286 = vsub.s32 3, %v4285
        %v4287 = vrot.slane %v1504, %v4286
        %4289 = vbcast.lane.b32.xlu0 %v4287, 256
        %v4290 = vpop.permute.xlu0 %4289
        %v4291 = vlaneseq
        %v4292 = vshrl.u32 %v4291, 7
        %v4293 = vsub.s32 4, %v4292
        %v4294 = vrot.slane %v1504, %v4293
        %4296 = vbcast.lane.b32.xlu0 %v4294, 256
        %v4297 = vpop.permute.xlu0 %4296
        %v4298 = vlaneseq
        %v4299 = vshrl.u32 %v4298, 7
        %v4300 = vsub.s32 5, %v4299
        %v4301 = vrot.slane %v1504, %v4300
        %4303 = vbcast.lane.b32.xlu0 %v4301, 256
        %v4304 = vpop.permute.xlu0 %4303
        %v4305 = vlaneseq
        %v4306 = vshrl.u32 %v4305, 7
        %v4307 = vsub.s32 6, %v4306
        %v4308 = vrot.slane %v1504, %v4307
        %4310 = vbcast.lane.b32.xlu0 %v4308, 256
        %v4311 = vpop.permute.xlu0 %4310
        %v4312 = vlaneseq
        %v4313 = vshrl.u32 %v4312, 7
        %v4314 = vsub.s32 7, %v4313
        %v4315 = vrot.slane %v1504, %v4314
        %4317 = vbcast.lane.b32.xlu0 %v4315, 256
        %v4318 = vpop.permute.xlu0 %4317
        %v4319 = vlaneseq
        %v4320 = vshrl.u32 %v4319, 7
        %v4321 = vsub.s32 0, %v4320
        %v4322 = vrot.slane %v1505, %v4321
        %4324 = vbcast.lane.b32.xlu0 %v4322, 256
        %v4325 = vpop.permute.xlu0 %4324
        %v4326 = vlaneseq
        %v4327 = vshrl.u32 %v4326, 7
        %v4328 = vsub.s32 1, %v4327
        %v4329 = vrot.slane %v1505, %v4328
        %4331 = vbcast.lane.b32.xlu0 %v4329, 256
        %v4332 = vpop.permute.xlu0 %4331
        %v4333 = vlaneseq
        %v4334 = vshrl.u32 %v4333, 7
        %v4335 = vsub.s32 2, %v4334
        %v4336 = vrot.slane %v1505, %v4335
        %4338 = vbcast.lane.b32.xlu0 %v4336, 256
        %v4339 = vpop.permute.xlu0 %4338
        %v4340 = vlaneseq
        %v4341 = vshrl.u32 %v4340, 7
        %v4342 = vsub.s32 3, %v4341
        %v4343 = vrot.slane %v1505, %v4342
        %4345 = vbcast.lane.b32.xlu0 %v4343, 256
        %v4346 = vpop.permute.xlu0 %4345
        %v4347 = vlaneseq
        %v4348 = vshrl.u32 %v4347, 7
        %v4349 = vsub.s32 4, %v4348
        %v4350 = vrot.slane %v1505, %v4349
        %4352 = vbcast.lane.b32.xlu0 %v4350, 256
        %v4353 = vpop.permute.xlu0 %4352
        %v4354 = vlaneseq
        %v4355 = vshrl.u32 %v4354, 7
        %v4356 = vsub.s32 5, %v4355
        %v4357 = vrot.slane %v1505, %v4356
        %4359 = vbcast.lane.b32.xlu0 %v4357, 256
        %v4360 = vpop.permute.xlu0 %4359
        %v4361 = vlaneseq
        %v4362 = vshrl.u32 %v4361, 7
        %v4363 = vsub.s32 6, %v4362
        %v4364 = vrot.slane %v1505, %v4363
        %4366 = vbcast.lane.b32.xlu0 %v4364, 256
        %v4367 = vpop.permute.xlu0 %4366
        %v4368 = vlaneseq
        %v4369 = vshrl.u32 %v4368, 7
        %v4370 = vsub.s32 7, %v4369
        %v4371 = vrot.slane %v1505, %v4370
        %4373 = vbcast.lane.b32.xlu0 %v4371, 256
        %v4374 = vpop.permute.xlu0 %4373
        %v4375 = vlaneseq
        %v4376 = vshrl.u32 %v4375, 7
        %v4377 = vsub.s32 0, %v4376
        %v4378 = vrot.slane %v1506, %v4377
        %4380 = vbcast.lane.b32.xlu0 %v4378, 256
        %v4381 = vpop.permute.xlu0 %4380
        %v4382 = vlaneseq
        %v4383 = vshrl.u32 %v4382, 7
        %v4384 = vsub.s32 1, %v4383
        %v4385 = vrot.slane %v1506, %v4384
        %4387 = vbcast.lane.b32.xlu0 %v4385, 256
        %v4388 = vpop.permute.xlu0 %4387
        %v4389 = vlaneseq
        %v4390 = vshrl.u32 %v4389, 7
        %v4391 = vsub.s32 2, %v4390
        %v4392 = vrot.slane %v1506, %v4391
        %4394 = vbcast.lane.b32.xlu0 %v4392, 256
        %v4395 = vpop.permute.xlu0 %4394
        %v4396 = vlaneseq
        %v4397 = vshrl.u32 %v4396, 7
        %v4398 = vsub.s32 3, %v4397
        %v4399 = vrot.slane %v1506, %v4398
        %4401 = vbcast.lane.b32.xlu0 %v4399, 256
        %v4402 = vpop.permute.xlu0 %4401
        %v4403 = vlaneseq
        %v4404 = vshrl.u32 %v4403, 7
        %v4405 = vsub.s32 4, %v4404
        %v4406 = vrot.slane %v1506, %v4405
        %4408 = vbcast.lane.b32.xlu0 %v4406, 256
        %v4409 = vpop.permute.xlu0 %4408
        %v4410 = vlaneseq
        %v4411 = vshrl.u32 %v4410, 7
        %v4412 = vsub.s32 5, %v4411
        %v4413 = vrot.slane %v1506, %v4412
        %4415 = vbcast.lane.b32.xlu0 %v4413, 256
        %v4416 = vpop.permute.xlu0 %4415
        %v4417 = vlaneseq
        %v4418 = vshrl.u32 %v4417, 7
        %v4419 = vsub.s32 6, %v4418
        %v4420 = vrot.slane %v1506, %v4419
        %4422 = vbcast.lane.b32.xlu0 %v4420, 256
        %v4423 = vpop.permute.xlu0 %4422
        %v4424 = vlaneseq
        %v4425 = vshrl.u32 %v4424, 7
        %v4426 = vsub.s32 7, %v4425
        %v4427 = vrot.slane %v1506, %v4426
        %4429 = vbcast.lane.b32.xlu0 %v4427, 256
        %v4430 = vpop.permute.xlu0 %4429
        %v4431 = vlaneseq
        %v4432 = vshrl.u32 %v4431, 7
        %v4433 = vsub.s32 0, %v4432
        %v4434 = vrot.slane %v1507, %v4433
        %4436 = vbcast.lane.b32.xlu0 %v4434, 256
        %v4437 = vpop.permute.xlu0 %4436
        %v4438 = vlaneseq
        %v4439 = vshrl.u32 %v4438, 7
        %v4440 = vsub.s32 1, %v4439
        %v4441 = vrot.slane %v1507, %v4440
        %4443 = vbcast.lane.b32.xlu0 %v4441, 256
        %v4444 = vpop.permute.xlu0 %4443
        %v4445 = vlaneseq
        %v4446 = vshrl.u32 %v4445, 7
        %v4447 = vsub.s32 2, %v4446
        %v4448 = vrot.slane %v1507, %v4447
        %4450 = vbcast.lane.b32.xlu0 %v4448, 256
        %v4451 = vpop.permute.xlu0 %4450
        %v4452 = vlaneseq
        %v4453 = vshrl.u32 %v4452, 7
        %v4454 = vsub.s32 3, %v4453
        %v4455 = vrot.slane %v1507, %v4454
        %4457 = vbcast.lane.b32.xlu0 %v4455, 256
        %v4458 = vpop.permute.xlu0 %4457
        %v4459 = vlaneseq
        %v4460 = vshrl.u32 %v4459, 7
        %v4461 = vsub.s32 4, %v4460
        %v4462 = vrot.slane %v1507, %v4461
        %4464 = vbcast.lane.b32.xlu0 %v4462, 256
        %v4465 = vpop.permute.xlu0 %4464
        %v4466 = vlaneseq
        %v4467 = vshrl.u32 %v4466, 7
        %v4468 = vsub.s32 5, %v4467
        %v4469 = vrot.slane %v1507, %v4468
        %4471 = vbcast.lane.b32.xlu0 %v4469, 256
        %v4472 = vpop.permute.xlu0 %4471
        %v4473 = vlaneseq
        %v4474 = vshrl.u32 %v4473, 7
        %v4475 = vsub.s32 6, %v4474
        %v4476 = vrot.slane %v1507, %v4475
        %4478 = vbcast.lane.b32.xlu0 %v4476, 256
        %v4479 = vpop.permute.xlu0 %4478
        %v4480 = vlaneseq
        %v4481 = vshrl.u32 %v4480, 7
        %v4482 = vsub.s32 7, %v4481
        %v4483 = vrot.slane %v1507, %v4482
        %4485 = vbcast.lane.b32.xlu0 %v4483, 256
        %v4486 = vpop.permute.xlu0 %4485
        %v4487 = vlaneseq
        %v4488 = vshrl.u32 %v4487, 7
        %v4489 = vsub.s32 0, %v4488
        %v4490 = vrot.slane %v1508, %v4489
        %4492 = vbcast.lane.b32.xlu0 %v4490, 256
        %v4493 = vpop.permute.xlu0 %4492
        %v4494 = vlaneseq
        %v4495 = vshrl.u32 %v4494, 7
        %v4496 = vsub.s32 1, %v4495
        %v4497 = vrot.slane %v1508, %v4496
        %4499 = vbcast.lane.b32.xlu0 %v4497, 256
        %v4500 = vpop.permute.xlu0 %4499
        %v4501 = vlaneseq
        %v4502 = vshrl.u32 %v4501, 7
        %v4503 = vsub.s32 2, %v4502
        %v4504 = vrot.slane %v1508, %v4503
        %4506 = vbcast.lane.b32.xlu0 %v4504, 256
        %v4507 = vpop.permute.xlu0 %4506
        %v4508 = vlaneseq
        %v4509 = vshrl.u32 %v4508, 7
        %v4510 = vsub.s32 3, %v4509
        %v4511 = vrot.slane %v1508, %v4510
        %4513 = vbcast.lane.b32.xlu0 %v4511, 256
        %v4514 = vpop.permute.xlu0 %4513
        %v4515 = vlaneseq
        %v4516 = vshrl.u32 %v4515, 7
        %v4517 = vsub.s32 4, %v4516
        %v4518 = vrot.slane %v1508, %v4517
        %4520 = vbcast.lane.b32.xlu0 %v4518, 256
        %v4521 = vpop.permute.xlu0 %4520
        %v4522 = vlaneseq
        %v4523 = vshrl.u32 %v4522, 7
        %v4524 = vsub.s32 5, %v4523
        %v4525 = vrot.slane %v1508, %v4524
        %4527 = vbcast.lane.b32.xlu0 %v4525, 256
        %v4528 = vpop.permute.xlu0 %4527
        %v4529 = vlaneseq
        %v4530 = vshrl.u32 %v4529, 7
        %v4531 = vsub.s32 6, %v4530
        %v4532 = vrot.slane %v1508, %v4531
        %4534 = vbcast.lane.b32.xlu0 %v4532, 256
        %v4535 = vpop.permute.xlu0 %4534
        %v4536 = vlaneseq
        %v4537 = vshrl.u32 %v4536, 7
        %v4538 = vsub.s32 7, %v4537
        %v4539 = vrot.slane %v1508, %v4538
        %4541 = vbcast.lane.b32.xlu0 %v4539, 256
        %v4542 = vpop.permute.xlu0 %4541
        %v4543 = vlaneseq
        %v4544 = vshrl.u32 %v4543, 7
        %v4545 = vsub.s32 0, %v4544
        %v4546 = vrot.slane %v1509, %v4545
        %4548 = vbcast.lane.b32.xlu0 %v4546, 256
        %v4549 = vpop.permute.xlu0 %4548
        %v4550 = vlaneseq
        %v4551 = vshrl.u32 %v4550, 7
        %v4552 = vsub.s32 1, %v4551
        %v4553 = vrot.slane %v1509, %v4552
        %4555 = vbcast.lane.b32.xlu0 %v4553, 256
        %v4556 = vpop.permute.xlu0 %4555
        %v4557 = vlaneseq
        %v4558 = vshrl.u32 %v4557, 7
        %v4559 = vsub.s32 2, %v4558
        %v4560 = vrot.slane %v1509, %v4559
        %4562 = vbcast.lane.b32.xlu0 %v4560, 256
        %v4563 = vpop.permute.xlu0 %4562
        %v4564 = vlaneseq
        %v4565 = vshrl.u32 %v4564, 7
        %v4566 = vsub.s32 3, %v4565
        %v4567 = vrot.slane %v1509, %v4566
        %4569 = vbcast.lane.b32.xlu0 %v4567, 256
        %v4570 = vpop.permute.xlu0 %4569
        %v4571 = vlaneseq
        %v4572 = vshrl.u32 %v4571, 7
        %v4573 = vsub.s32 4, %v4572
        %v4574 = vrot.slane %v1509, %v4573
        %4576 = vbcast.lane.b32.xlu0 %v4574, 256
        %v4577 = vpop.permute.xlu0 %4576
        %v4578 = vlaneseq
        %v4579 = vshrl.u32 %v4578, 7
        %v4580 = vsub.s32 5, %v4579
        %v4581 = vrot.slane %v1509, %v4580
        %4583 = vbcast.lane.b32.xlu0 %v4581, 256
        %v4584 = vpop.permute.xlu0 %4583
        %v4585 = vlaneseq
        %v4586 = vshrl.u32 %v4585, 7
        %v4587 = vsub.s32 6, %v4586
        %v4588 = vrot.slane %v1509, %v4587
        %4590 = vbcast.lane.b32.xlu0 %v4588, 256
        %v4591 = vpop.permute.xlu0 %4590
        %v4592 = vlaneseq
        %v4593 = vshrl.u32 %v4592, 7
        %v4594 = vsub.s32 7, %v4593
        %v4595 = vrot.slane %v1509, %v4594
        %4597 = vbcast.lane.b32.xlu0 %v4595, 256
        %v4598 = vpop.permute.xlu0 %4597
        %v4599 = vlaneseq
        %v4600 = vshrl.u32 %v4599, 7
        %v4601 = vsub.s32 0, %v4600
        %v4602 = vrot.slane %v1510, %v4601
        %4604 = vbcast.lane.b32.xlu0 %v4602, 256
        %v4605 = vpop.permute.xlu0 %4604
        %v4606 = vlaneseq
        %v4607 = vshrl.u32 %v4606, 7
        %v4608 = vsub.s32 1, %v4607
        %v4609 = vrot.slane %v1510, %v4608
        %4611 = vbcast.lane.b32.xlu0 %v4609, 256
        %v4612 = vpop.permute.xlu0 %4611
        %v4613 = vlaneseq
        %v4614 = vshrl.u32 %v4613, 7
        %v4615 = vsub.s32 2, %v4614
        %v4616 = vrot.slane %v1510, %v4615
        %4618 = vbcast.lane.b32.xlu0 %v4616, 256
        %v4619 = vpop.permute.xlu0 %4618
        %v4620 = vlaneseq
        %v4621 = vshrl.u32 %v4620, 7
        %v4622 = vsub.s32 3, %v4621
        %v4623 = vrot.slane %v1510, %v4622
        %4625 = vbcast.lane.b32.xlu0 %v4623, 256
        %v4626 = vpop.permute.xlu0 %4625
        %v4627 = vlaneseq
        %v4628 = vshrl.u32 %v4627, 7
        %v4629 = vsub.s32 4, %v4628
        %v4630 = vrot.slane %v1510, %v4629
        %4632 = vbcast.lane.b32.xlu0 %v4630, 256
        %v4633 = vpop.permute.xlu0 %4632
        %v4634 = vlaneseq
        %v4635 = vshrl.u32 %v4634, 7
        %v4636 = vsub.s32 5, %v4635
        %v4637 = vrot.slane %v1510, %v4636
        %4639 = vbcast.lane.b32.xlu0 %v4637, 256
        %v4640 = vpop.permute.xlu0 %4639
        %v4641 = vlaneseq
        %v4642 = vshrl.u32 %v4641, 7
        %v4643 = vsub.s32 6, %v4642
        %v4644 = vrot.slane %v1510, %v4643
        %4646 = vbcast.lane.b32.xlu0 %v4644, 256
        %v4647 = vpop.permute.xlu0 %4646
        %v4648 = vlaneseq
        %v4649 = vshrl.u32 %v4648, 7
        %v4650 = vsub.s32 7, %v4649
        %v4651 = vrot.slane %v1510, %v4650
        %4653 = vbcast.lane.b32.xlu0 %v4651, 256
        %v4654 = vpop.permute.xlu0 %4653
        %v4655 = vlaneseq
        %v4656 = vshrl.u32 %v4655, 7
        %v4657 = vsub.s32 0, %v4656
        %v4658 = vrot.slane %v1511, %v4657
        %4660 = vbcast.lane.b32.xlu0 %v4658, 256
        %v4661 = vpop.permute.xlu0 %4660
        %v4662 = vlaneseq
        %v4663 = vshrl.u32 %v4662, 7
        %v4664 = vsub.s32 1, %v4663
        %v4665 = vrot.slane %v1511, %v4664
        %4667 = vbcast.lane.b32.xlu0 %v4665, 256
        %v4668 = vpop.permute.xlu0 %4667
        %v4669 = vlaneseq
        %v4670 = vshrl.u32 %v4669, 7
        %v4671 = vsub.s32 2, %v4670
        %v4672 = vrot.slane %v1511, %v4671
        %4674 = vbcast.lane.b32.xlu0 %v4672, 256
        %v4675 = vpop.permute.xlu0 %4674
        %v4676 = vlaneseq
        %v4677 = vshrl.u32 %v4676, 7
        %v4678 = vsub.s32 3, %v4677
        %v4679 = vrot.slane %v1511, %v4678
        %4681 = vbcast.lane.b32.xlu0 %v4679, 256
        %v4682 = vpop.permute.xlu0 %4681
        %v4683 = vlaneseq
        %v4684 = vshrl.u32 %v4683, 7
        %v4685 = vsub.s32 4, %v4684
        %v4686 = vrot.slane %v1511, %v4685
        %4688 = vbcast.lane.b32.xlu0 %v4686, 256
        %v4689 = vpop.permute.xlu0 %4688
        %v4690 = vlaneseq
        %v4691 = vshrl.u32 %v4690, 7
        %v4692 = vsub.s32 5, %v4691
        %v4693 = vrot.slane %v1511, %v4692
        %4695 = vbcast.lane.b32.xlu0 %v4693, 256
        %v4696 = vpop.permute.xlu0 %4695
        %v4697 = vlaneseq
        %v4698 = vshrl.u32 %v4697, 7
        %v4699 = vsub.s32 6, %v4698
        %v4700 = vrot.slane %v1511, %v4699
        %4702 = vbcast.lane.b32.xlu0 %v4700, 256
        %v4703 = vpop.permute.xlu0 %4702
        %v4704 = vlaneseq
        %v4705 = vshrl.u32 %v4704, 7
        %v4706 = vsub.s32 7, %v4705
        %v4707 = vrot.slane %v1511, %v4706
        %4709 = vbcast.lane.b32.xlu0 %v4707, 256
        %v4710 = vpop.permute.xlu0 %4709
        %v4711 = vlaneseq
        %v4712 = vshrl.u32 %v4711, 7
        %v4713 = vsub.s32 0, %v4712
        %v4714 = vrot.slane %v1512, %v4713
        %4716 = vbcast.lane.b32.xlu0 %v4714, 256
        %v4717 = vpop.permute.xlu0 %4716
        %v4718 = vlaneseq
        %v4719 = vshrl.u32 %v4718, 7
        %v4720 = vsub.s32 1, %v4719
        %v4721 = vrot.slane %v1512, %v4720
        %4723 = vbcast.lane.b32.xlu0 %v4721, 256
        %v4724 = vpop.permute.xlu0 %4723
        %v4725 = vlaneseq
        %v4726 = vshrl.u32 %v4725, 7
        %v4727 = vsub.s32 2, %v4726
        %v4728 = vrot.slane %v1512, %v4727
        %4730 = vbcast.lane.b32.xlu0 %v4728, 256
        %v4731 = vpop.permute.xlu0 %4730
        %v4732 = vlaneseq
        %v4733 = vshrl.u32 %v4732, 7
        %v4734 = vsub.s32 3, %v4733
        %v4735 = vrot.slane %v1512, %v4734
        %4737 = vbcast.lane.b32.xlu0 %v4735, 256
        %v4738 = vpop.permute.xlu0 %4737
        %v4739 = vlaneseq
        %v4740 = vshrl.u32 %v4739, 7
        %v4741 = vsub.s32 4, %v4740
        %v4742 = vrot.slane %v1512, %v4741
        %4744 = vbcast.lane.b32.xlu0 %v4742, 256
        %v4745 = vpop.permute.xlu0 %4744
        %v4746 = vlaneseq
        %v4747 = vshrl.u32 %v4746, 7
        %v4748 = vsub.s32 5, %v4747
        %v4749 = vrot.slane %v1512, %v4748
        %4751 = vbcast.lane.b32.xlu0 %v4749, 256
        %v4752 = vpop.permute.xlu0 %4751
        %v4753 = vlaneseq
        %v4754 = vshrl.u32 %v4753, 7
        %v4755 = vsub.s32 6, %v4754
        %v4756 = vrot.slane %v1512, %v4755
        %4758 = vbcast.lane.b32.xlu0 %v4756, 256
        %v4759 = vpop.permute.xlu0 %4758
        %v4760 = vlaneseq
        %v4761 = vshrl.u32 %v4760, 7
        %v4762 = vsub.s32 7, %v4761
        %v4763 = vrot.slane %v1512, %v4762
        %4765 = vbcast.lane.b32.xlu0 %v4763, 256
        %v4766 = vpop.permute.xlu0 %4765
        %v4767 = vlaneseq
        %v4768 = vshrl.u32 %v4767, 7
        %v4769 = vsub.s32 0, %v4768
        %v4770 = vrot.slane %v1513, %v4769
        %4772 = vbcast.lane.b32.xlu0 %v4770, 256
        %v4773 = vpop.permute.xlu0 %4772
        %v4774 = vlaneseq
        %v4775 = vshrl.u32 %v4774, 7
        %v4776 = vsub.s32 1, %v4775
        %v4777 = vrot.slane %v1513, %v4776
        %4779 = vbcast.lane.b32.xlu0 %v4777, 256
        %v4780 = vpop.permute.xlu0 %4779
        %v4781 = vlaneseq
        %v4782 = vshrl.u32 %v4781, 7
        %v4783 = vsub.s32 2, %v4782
        %v4784 = vrot.slane %v1513, %v4783
        %4786 = vbcast.lane.b32.xlu0 %v4784, 256
        %v4787 = vpop.permute.xlu0 %4786
        %v4788 = vlaneseq
        %v4789 = vshrl.u32 %v4788, 7
        %v4790 = vsub.s32 3, %v4789
        %v4791 = vrot.slane %v1513, %v4790
        %4793 = vbcast.lane.b32.xlu0 %v4791, 256
        %v4794 = vpop.permute.xlu0 %4793
        %v4795 = vlaneseq
        %v4796 = vshrl.u32 %v4795, 7
        %v4797 = vsub.s32 4, %v4796
        %v4798 = vrot.slane %v1513, %v4797
        %4800 = vbcast.lane.b32.xlu0 %v4798, 256
        %v4801 = vpop.permute.xlu0 %4800
        %v4802 = vlaneseq
        %v4803 = vshrl.u32 %v4802, 7
        %v4804 = vsub.s32 5, %v4803
        %v4805 = vrot.slane %v1513, %v4804
        %4807 = vbcast.lane.b32.xlu0 %v4805, 256
        %v4808 = vpop.permute.xlu0 %4807
        %v4809 = vlaneseq
        %v4810 = vshrl.u32 %v4809, 7
        %v4811 = vsub.s32 6, %v4810
        %v4812 = vrot.slane %v1513, %v4811
        %4814 = vbcast.lane.b32.xlu0 %v4812, 256
        %v4815 = vpop.permute.xlu0 %4814
        %v4816 = vlaneseq
        %v4817 = vshrl.u32 %v4816, 7
        %v4818 = vsub.s32 7, %v4817
        %v4819 = vrot.slane %v1513, %v4818
        %4821 = vbcast.lane.b32.xlu0 %v4819, 256
        %v4822 = vpop.permute.xlu0 %4821
        %v4823 = vlaneseq
        %v4824 = vshrl.u32 %v4823, 7
        %v4825 = vsub.s32 0, %v4824
        %v4826 = vrot.slane %v1514, %v4825
        %4828 = vbcast.lane.b32.xlu0 %v4826, 256
        %v4829 = vpop.permute.xlu0 %4828
        %v4830 = vlaneseq
        %v4831 = vshrl.u32 %v4830, 7
        %v4832 = vsub.s32 1, %v4831
        %v4833 = vrot.slane %v1514, %v4832
        %4835 = vbcast.lane.b32.xlu0 %v4833, 256
        %v4836 = vpop.permute.xlu0 %4835
        %v4837 = vlaneseq
        %v4838 = vshrl.u32 %v4837, 7
        %v4839 = vsub.s32 2, %v4838
        %v4840 = vrot.slane %v1514, %v4839
        %4842 = vbcast.lane.b32.xlu0 %v4840, 256
        %v4843 = vpop.permute.xlu0 %4842
        %v4844 = vlaneseq
        %v4845 = vshrl.u32 %v4844, 7
        %v4846 = vsub.s32 3, %v4845
        %v4847 = vrot.slane %v1514, %v4846
        %4849 = vbcast.lane.b32.xlu0 %v4847, 256
        %v4850 = vpop.permute.xlu0 %4849
        %v4851 = vlaneseq
        %v4852 = vshrl.u32 %v4851, 7
        %v4853 = vsub.s32 4, %v4852
        %v4854 = vrot.slane %v1514, %v4853
        %4856 = vbcast.lane.b32.xlu0 %v4854, 256
        %v4857 = vpop.permute.xlu0 %4856
        %v4858 = vlaneseq
        %v4859 = vshrl.u32 %v4858, 7
        %v4860 = vsub.s32 5, %v4859
        %v4861 = vrot.slane %v1514, %v4860
        %4863 = vbcast.lane.b32.xlu0 %v4861, 256
        %v4864 = vpop.permute.xlu0 %4863
        %v4865 = vlaneseq
        %v4866 = vshrl.u32 %v4865, 7
        %v4867 = vsub.s32 6, %v4866
        %v4868 = vrot.slane %v1514, %v4867
        %4870 = vbcast.lane.b32.xlu0 %v4868, 256
        %v4871 = vpop.permute.xlu0 %4870
        %v4872 = vlaneseq
        %v4873 = vshrl.u32 %v4872, 7
        %v4874 = vsub.s32 7, %v4873
        %v4875 = vrot.slane %v1514, %v4874
        %4877 = vbcast.lane.b32.xlu0 %v4875, 256
        %v4878 = vpop.permute.xlu0 %4877
        %v4879 = vlaneseq
        %v4880 = vshrl.u32 %v4879, 7
        %v4881 = vsub.s32 0, %v4880
        %v4882 = vrot.slane %v1515, %v4881
        %4884 = vbcast.lane.b32.xlu0 %v4882, 256
        %v4885 = vpop.permute.xlu0 %4884
        %v4886 = vlaneseq
        %v4887 = vshrl.u32 %v4886, 7
        %v4888 = vsub.s32 1, %v4887
        %v4889 = vrot.slane %v1515, %v4888
        %4891 = vbcast.lane.b32.xlu0 %v4889, 256
        %v4892 = vpop.permute.xlu0 %4891
        %v4893 = vlaneseq
        %v4894 = vshrl.u32 %v4893, 7
        %v4895 = vsub.s32 2, %v4894
        %v4896 = vrot.slane %v1515, %v4895
        %4898 = vbcast.lane.b32.xlu0 %v4896, 256
        %v4899 = vpop.permute.xlu0 %4898
        %v4900 = vlaneseq
        %v4901 = vshrl.u32 %v4900, 7
        %v4902 = vsub.s32 3, %v4901
        %v4903 = vrot.slane %v1515, %v4902
        %4905 = vbcast.lane.b32.xlu0 %v4903, 256
        %v4906 = vpop.permute.xlu0 %4905
        %v4907 = vlaneseq
        %v4908 = vshrl.u32 %v4907, 7
        %v4909 = vsub.s32 4, %v4908
        %v4910 = vrot.slane %v1515, %v4909
        %4912 = vbcast.lane.b32.xlu0 %v4910, 256
        %v4913 = vpop.permute.xlu0 %4912
        %v4914 = vlaneseq
        %v4915 = vshrl.u32 %v4914, 7
        %v4916 = vsub.s32 5, %v4915
        %v4917 = vrot.slane %v1515, %v4916
        %4919 = vbcast.lane.b32.xlu0 %v4917, 256
        %v4920 = vpop.permute.xlu0 %4919
        %v4921 = vlaneseq
        %v4922 = vshrl.u32 %v4921, 7
        %v4923 = vsub.s32 6, %v4922
        %v4924 = vrot.slane %v1515, %v4923
        %4926 = vbcast.lane.b32.xlu0 %v4924, 256
        %v4927 = vpop.permute.xlu0 %4926
        %v4928 = vlaneseq
        %v4929 = vshrl.u32 %v4928, 7
        %v4930 = vsub.s32 7, %v4929
        %v4931 = vrot.slane %v1515, %v4930
        %4933 = vbcast.lane.b32.xlu0 %v4931, 256
        %v4934 = vpop.permute.xlu0 %4933
        %v4935 = vlaneseq
        %v4936 = vshrl.u32 %v4935, 7
        %v4937 = vsub.s32 0, %v4936
        %v4938 = vrot.slane %v1516, %v4937
        %4940 = vbcast.lane.b32.xlu0 %v4938, 256
        %v4941 = vpop.permute.xlu0 %4940
        %v4942 = vlaneseq
        %v4943 = vshrl.u32 %v4942, 7
        %v4944 = vsub.s32 1, %v4943
        %v4945 = vrot.slane %v1516, %v4944
        %4947 = vbcast.lane.b32.xlu0 %v4945, 256
        %v4948 = vpop.permute.xlu0 %4947
        %v4949 = vlaneseq
        %v4950 = vshrl.u32 %v4949, 7
        %v4951 = vsub.s32 2, %v4950
        %v4952 = vrot.slane %v1516, %v4951
        %4954 = vbcast.lane.b32.xlu0 %v4952, 256
        %v4955 = vpop.permute.xlu0 %4954
        %v4956 = vlaneseq
        %v4957 = vshrl.u32 %v4956, 7
        %v4958 = vsub.s32 3, %v4957
        %v4959 = vrot.slane %v1516, %v4958
        %4961 = vbcast.lane.b32.xlu0 %v4959, 256
        %v4962 = vpop.permute.xlu0 %4961
        %v4963 = vlaneseq
        %v4964 = vshrl.u32 %v4963, 7
        %v4965 = vsub.s32 4, %v4964
        %v4966 = vrot.slane %v1516, %v4965
        %4968 = vbcast.lane.b32.xlu0 %v4966, 256
        %v4969 = vpop.permute.xlu0 %4968
        %v4970 = vlaneseq
        %v4971 = vshrl.u32 %v4970, 7
        %v4972 = vsub.s32 5, %v4971
        %v4973 = vrot.slane %v1516, %v4972
        %4975 = vbcast.lane.b32.xlu0 %v4973, 256
        %v4976 = vpop.permute.xlu0 %4975
        %v4977 = vlaneseq
        %v4978 = vshrl.u32 %v4977, 7
        %v4979 = vsub.s32 6, %v4978
        %v4980 = vrot.slane %v1516, %v4979
        %4982 = vbcast.lane.b32.xlu0 %v4980, 256
        %v4983 = vpop.permute.xlu0 %4982
        %v4984 = vlaneseq
        %v4985 = vshrl.u32 %v4984, 7
        %v4986 = vsub.s32 7, %v4985
        %v4987 = vrot.slane %v1516, %v4986
        %4989 = vbcast.lane.b32.xlu0 %v4987, 256
        %v4990 = vpop.permute.xlu0 %4989
        %v4991 = vlaneseq
        %v4992 = vshrl.u32 %v4991, 7
        %v4993 = vsub.s32 0, %v4992
        %v4994 = vrot.slane %v1517, %v4993
        %4996 = vbcast.lane.b32.xlu0 %v4994, 256
        %v4997 = vpop.permute.xlu0 %4996
        %v4998 = vlaneseq
        %v4999 = vshrl.u32 %v4998, 7
        %v5000 = vsub.s32 1, %v4999
        %v5001 = vrot.slane %v1517, %v5000
        %5003 = vbcast.lane.b32.xlu0 %v5001, 256
        %v5004 = vpop.permute.xlu0 %5003
        %v5005 = vlaneseq
        %v5006 = vshrl.u32 %v5005, 7
        %v5007 = vsub.s32 2, %v5006
        %v5008 = vrot.slane %v1517, %v5007
        %5010 = vbcast.lane.b32.xlu0 %v5008, 256
        %v5011 = vpop.permute.xlu0 %5010
        %v5012 = vlaneseq
        %v5013 = vshrl.u32 %v5012, 7
        %v5014 = vsub.s32 3, %v5013
        %v5015 = vrot.slane %v1517, %v5014
        %5017 = vbcast.lane.b32.xlu0 %v5015, 256
        %v5018 = vpop.permute.xlu0 %5017
        %v5019 = vlaneseq
        %v5020 = vshrl.u32 %v5019, 7
        %v5021 = vsub.s32 4, %v5020
        %v5022 = vrot.slane %v1517, %v5021
        %5024 = vbcast.lane.b32.xlu0 %v5022, 256
        %v5025 = vpop.permute.xlu0 %5024
        %v5026 = vlaneseq
        %v5027 = vshrl.u32 %v5026, 7
        %v5028 = vsub.s32 5, %v5027
        %v5029 = vrot.slane %v1517, %v5028
        %5031 = vbcast.lane.b32.xlu0 %v5029, 256
        %v5032 = vpop.permute.xlu0 %5031
        %v5033 = vlaneseq
        %v5034 = vshrl.u32 %v5033, 7
        %v5035 = vsub.s32 6, %v5034
        %v5036 = vrot.slane %v1517, %v5035
        %5038 = vbcast.lane.b32.xlu0 %v5036, 256
        %v5039 = vpop.permute.xlu0 %5038
        %v5040 = vlaneseq
        %v5041 = vshrl.u32 %v5040, 7
        %v5042 = vsub.s32 7, %v5041
        %v5043 = vrot.slane %v1517, %v5042
        %5045 = vbcast.lane.b32.xlu0 %v5043, 256
        %v5046 = vpop.permute.xlu0 %5045
        %v5047 = vlaneseq
        %v5048 = vshrl.u32 %v5047, 7
        %v5049 = vsub.s32 0, %v5048
        %v5050 = vrot.slane %v1518, %v5049
        %5052 = vbcast.lane.b32.xlu0 %v5050, 256
        %v5053 = vpop.permute.xlu0 %5052
        %v5054 = vlaneseq
        %v5055 = vshrl.u32 %v5054, 7
        %v5056 = vsub.s32 1, %v5055
        %v5057 = vrot.slane %v1518, %v5056
        %5059 = vbcast.lane.b32.xlu0 %v5057, 256
        %v5060 = vpop.permute.xlu0 %5059
        %v5061 = vlaneseq
        %v5062 = vshrl.u32 %v5061, 7
        %v5063 = vsub.s32 2, %v5062
        %v5064 = vrot.slane %v1518, %v5063
        %5066 = vbcast.lane.b32.xlu0 %v5064, 256
        %v5067 = vpop.permute.xlu0 %5066
        %v5068 = vlaneseq
        %v5069 = vshrl.u32 %v5068, 7
        %v5070 = vsub.s32 3, %v5069
        %v5071 = vrot.slane %v1518, %v5070
        %5073 = vbcast.lane.b32.xlu0 %v5071, 256
        %v5074 = vpop.permute.xlu0 %5073
        %v5075 = vlaneseq
        %v5076 = vshrl.u32 %v5075, 7
        %v5077 = vsub.s32 4, %v5076
        %v5078 = vrot.slane %v1518, %v5077
        %5080 = vbcast.lane.b32.xlu0 %v5078, 256
        %v5081 = vpop.permute.xlu0 %5080
        %v5082 = vlaneseq
        %v5083 = vshrl.u32 %v5082, 7
        %v5084 = vsub.s32 5, %v5083
        %v5085 = vrot.slane %v1518, %v5084
        %5087 = vbcast.lane.b32.xlu0 %v5085, 256
        %v5088 = vpop.permute.xlu0 %5087
        %v5089 = vlaneseq
        %v5090 = vshrl.u32 %v5089, 7
        %v5091 = vsub.s32 6, %v5090
        %v5092 = vrot.slane %v1518, %v5091
        %5094 = vbcast.lane.b32.xlu0 %v5092, 256
        %v5095 = vpop.permute.xlu0 %5094
        %v5096 = vlaneseq
        %v5097 = vshrl.u32 %v5096, 7
        %v5098 = vsub.s32 7, %v5097
        %v5099 = vrot.slane %v1518, %v5098
        %5101 = vbcast.lane.b32.xlu0 %v5099, 256
        %v5102 = vpop.permute.xlu0 %5101
        %v5232 = vunpack.c.l.s4 839922192
        %v5233 = vunpack.c.0.s8 %v5232
        %v5234 = vlaneseq
        %v5235 = vshrl.u32 %v5234, 7
        %v5236 = vsub.s32 %v5233, %v5235
        %v5237 = vrot.slane %v4213, %v5236
        %v5239 = vunpack.c.l.s4 839922192
        %v5240 = vunpack.c.0.s8 %v5239
        %v5241 = vlaneseq
        %v5242 = vshrl.u32 %v5241, 7
        %v5243 = vsub.s32 %v5240, %v5242
        %v5244 = vrot.slane %v4220, %v5243
        %v5246 = vunpack.c.l.s4 839922192
        %v5247 = vunpack.c.0.s8 %v5246
        %v5248 = vlaneseq
        %v5249 = vshrl.u32 %v5248, 7
        %v5250 = vsub.s32 %v5247, %v5249
        %v5251 = vrot.slane %v4227, %v5250
        %v5253 = vunpack.c.l.s4 839922192
        %v5254 = vunpack.c.0.s8 %v5253
        %v5255 = vlaneseq
        %v5256 = vshrl.u32 %v5255, 7
        %v5257 = vsub.s32 %v5254, %v5256
        %v5258 = vrot.slane %v4234, %v5257
        %v5260 = vunpack.c.l.s4 839922192
        %v5261 = vunpack.c.0.s8 %v5260
        %v5262 = vlaneseq
        %v5263 = vshrl.u32 %v5262, 7
        %v5264 = vsub.s32 %v5261, %v5263
        %v5265 = vrot.slane %v4241, %v5264
        %v5267 = vunpack.c.l.s4 839922192
        %v5268 = vunpack.c.0.s8 %v5267
        %v5269 = vlaneseq
        %v5270 = vshrl.u32 %v5269, 7
        %v5271 = vsub.s32 %v5268, %v5270
        %v5272 = vrot.slane %v4248, %v5271
        %v5274 = vunpack.c.l.s4 839922192
        %v5275 = vunpack.c.0.s8 %v5274
        %v5276 = vlaneseq
        %v5277 = vshrl.u32 %v5276, 7
        %v5278 = vsub.s32 %v5275, %v5277
        %v5279 = vrot.slane %v4255, %v5278
        %v5281 = vunpack.c.l.s4 839922192
        %v5282 = vunpack.c.0.s8 %v5281
        %v5283 = vlaneseq
        %v5284 = vshrl.u32 %v5283, 7
        %v5285 = vsub.s32 %v5282, %v5284
        %v5286 = vrot.slane %v4262, %v5285
        %v5288 = vunpack.c.l.s4 839922192
        %v5289 = vunpack.c.0.s8 %v5288
        %v5290 = vlaneseq
        %v5291 = vshrl.u32 %v5290, 7
        %v5292 = vsub.s32 %v5289, %v5291
        %v5293 = vrot.slane %v4269, %v5292
        %v5295 = vunpack.c.l.s4 839922192
        %v5296 = vunpack.c.0.s8 %v5295
        %v5297 = vlaneseq
        %v5298 = vshrl.u32 %v5297, 7
        %v5299 = vsub.s32 %v5296, %v5298
        %v5300 = vrot.slane %v4276, %v5299
        %v5302 = vunpack.c.l.s4 839922192
        %v5303 = vunpack.c.0.s8 %v5302
        %v5304 = vlaneseq
        %v5305 = vshrl.u32 %v5304, 7
        %v5306 = vsub.s32 %v5303, %v5305
        %v5307 = vrot.slane %v4283, %v5306
        %v5309 = vunpack.c.l.s4 839922192
        %v5310 = vunpack.c.0.s8 %v5309
        %v5311 = vlaneseq
        %v5312 = vshrl.u32 %v5311, 7
        %v5313 = vsub.s32 %v5310, %v5312
        %v5314 = vrot.slane %v4290, %v5313
        %v5316 = vunpack.c.l.s4 839922192
        %v5317 = vunpack.c.0.s8 %v5316
        %v5318 = vlaneseq
        %v5319 = vshrl.u32 %v5318, 7
        %v5320 = vsub.s32 %v5317, %v5319
        %v5321 = vrot.slane %v4297, %v5320
        %v5323 = vunpack.c.l.s4 839922192
        %v5324 = vunpack.c.0.s8 %v5323
        %v5325 = vlaneseq
        %v5326 = vshrl.u32 %v5325, 7
        %v5327 = vsub.s32 %v5324, %v5326
        %v5328 = vrot.slane %v4304, %v5327
        %v5330 = vunpack.c.l.s4 839922192
        %v5331 = vunpack.c.0.s8 %v5330
        %v5332 = vlaneseq
        %v5333 = vshrl.u32 %v5332, 7
        %v5334 = vsub.s32 %v5331, %v5333
        %v5335 = vrot.slane %v4311, %v5334
        %v5337 = vunpack.c.l.s4 839922192
        %v5338 = vunpack.c.0.s8 %v5337
        %v5339 = vlaneseq
        %v5340 = vshrl.u32 %v5339, 7
        %v5341 = vsub.s32 %v5338, %v5340
        %v5342 = vrot.slane %v4318, %v5341
        %v5344 = vunpack.c.l.s4 839922192
        %v5345 = vunpack.c.0.s8 %v5344
        %v5346 = vlaneseq
        %v5347 = vshrl.u32 %v5346, 7
        %v5348 = vsub.s32 %v5345, %v5347
        %v5349 = vrot.slane %v4325, %v5348
        %v5351 = vunpack.c.l.s4 839922192
        %v5352 = vunpack.c.0.s8 %v5351
        %v5353 = vlaneseq
        %v5354 = vshrl.u32 %v5353, 7
        %v5355 = vsub.s32 %v5352, %v5354
        %v5356 = vrot.slane %v4332, %v5355
        %v5358 = vunpack.c.l.s4 839922192
        %v5359 = vunpack.c.0.s8 %v5358
        %v5360 = vlaneseq
        %v5361 = vshrl.u32 %v5360, 7
        %v5362 = vsub.s32 %v5359, %v5361
        %v5363 = vrot.slane %v4339, %v5362
        %v5365 = vunpack.c.l.s4 839922192
        %v5366 = vunpack.c.0.s8 %v5365
        %v5367 = vlaneseq
        %v5368 = vshrl.u32 %v5367, 7
        %v5369 = vsub.s32 %v5366, %v5368
        %v5370 = vrot.slane %v4346, %v5369
        %v5372 = vunpack.c.l.s4 839922192
        %v5373 = vunpack.c.0.s8 %v5372
        %v5374 = vlaneseq
        %v5375 = vshrl.u32 %v5374, 7
        %v5376 = vsub.s32 %v5373, %v5375
        %v5377 = vrot.slane %v4353, %v5376
        %v5379 = vunpack.c.l.s4 839922192
        %v5380 = vunpack.c.0.s8 %v5379
        %v5381 = vlaneseq
        %v5382 = vshrl.u32 %v5381, 7
        %v5383 = vsub.s32 %v5380, %v5382
        %v5384 = vrot.slane %v4360, %v5383
        %v5386 = vunpack.c.l.s4 839922192
        %v5387 = vunpack.c.0.s8 %v5386
        %v5388 = vlaneseq
        %v5389 = vshrl.u32 %v5388, 7
        %v5390 = vsub.s32 %v5387, %v5389
        %v5391 = vrot.slane %v4367, %v5390
        %v5393 = vunpack.c.l.s4 839922192
        %v5394 = vunpack.c.0.s8 %v5393
        %v5395 = vlaneseq
        %v5396 = vshrl.u32 %v5395, 7
        %v5397 = vsub.s32 %v5394, %v5396
        %v5398 = vrot.slane %v4374, %v5397
        %v5400 = vunpack.c.l.s4 839922192
        %v5401 = vunpack.c.0.s8 %v5400
        %v5402 = vlaneseq
        %v5403 = vshrl.u32 %v5402, 7
        %v5404 = vsub.s32 %v5401, %v5403
        %v5405 = vrot.slane %v4381, %v5404
        %v5407 = vunpack.c.l.s4 839922192
        %v5408 = vunpack.c.0.s8 %v5407
        %v5409 = vlaneseq
        %v5410 = vshrl.u32 %v5409, 7
        %v5411 = vsub.s32 %v5408, %v5410
        %v5412 = vrot.slane %v4388, %v5411
        %v5414 = vunpack.c.l.s4 839922192
        %v5415 = vunpack.c.0.s8 %v5414
        %v5416 = vlaneseq
        %v5417 = vshrl.u32 %v5416, 7
        %v5418 = vsub.s32 %v5415, %v5417
        %v5419 = vrot.slane %v4395, %v5418
        %v5421 = vunpack.c.l.s4 839922192
        %v5422 = vunpack.c.0.s8 %v5421
        %v5423 = vlaneseq
        %v5424 = vshrl.u32 %v5423, 7
        %v5425 = vsub.s32 %v5422, %v5424
        %v5426 = vrot.slane %v4402, %v5425
        %v5428 = vunpack.c.l.s4 839922192
        %v5429 = vunpack.c.0.s8 %v5428
        %v5430 = vlaneseq
        %v5431 = vshrl.u32 %v5430, 7
        %v5432 = vsub.s32 %v5429, %v5431
        %v5433 = vrot.slane %v4409, %v5432
        %v5435 = vunpack.c.l.s4 839922192
        %v5436 = vunpack.c.0.s8 %v5435
        %v5437 = vlaneseq
        %v5438 = vshrl.u32 %v5437, 7
        %v5439 = vsub.s32 %v5436, %v5438
        %v5440 = vrot.slane %v4416, %v5439
        %v5442 = vunpack.c.l.s4 839922192
        %v5443 = vunpack.c.0.s8 %v5442
        %v5444 = vlaneseq
        %v5445 = vshrl.u32 %v5444, 7
        %v5446 = vsub.s32 %v5443, %v5445
        %v5447 = vrot.slane %v4423, %v5446
        %v5449 = vunpack.c.l.s4 839922192
        %v5450 = vunpack.c.0.s8 %v5449
        %v5451 = vlaneseq
        %v5452 = vshrl.u32 %v5451, 7
        %v5453 = vsub.s32 %v5450, %v5452
        %v5454 = vrot.slane %v4430, %v5453
        %v5456 = vunpack.c.l.s4 839922192
        %v5457 = vunpack.c.0.s8 %v5456
        %v5458 = vlaneseq
        %v5459 = vshrl.u32 %v5458, 7
        %v5460 = vsub.s32 %v5457, %v5459
        %v5461 = vrot.slane %v4437, %v5460
        %v5463 = vunpack.c.l.s4 839922192
        %v5464 = vunpack.c.0.s8 %v5463
        %v5465 = vlaneseq
        %v5466 = vshrl.u32 %v5465, 7
        %v5467 = vsub.s32 %v5464, %v5466
        %v5468 = vrot.slane %v4444, %v5467
        %v5470 = vunpack.c.l.s4 839922192
        %v5471 = vunpack.c.0.s8 %v5470
        %v5472 = vlaneseq
        %v5473 = vshrl.u32 %v5472, 7
        %v5474 = vsub.s32 %v5471, %v5473
        %v5475 = vrot.slane %v4451, %v5474
        %v5477 = vunpack.c.l.s4 839922192
        %v5478 = vunpack.c.0.s8 %v5477
        %v5479 = vlaneseq
        %v5480 = vshrl.u32 %v5479, 7
        %v5481 = vsub.s32 %v5478, %v5480
        %v5482 = vrot.slane %v4458, %v5481
        %v5484 = vunpack.c.l.s4 839922192
        %v5485 = vunpack.c.0.s8 %v5484
        %v5486 = vlaneseq
        %v5487 = vshrl.u32 %v5486, 7
        %v5488 = vsub.s32 %v5485, %v5487
        %v5489 = vrot.slane %v4465, %v5488
        %v5491 = vunpack.c.l.s4 839922192
        %v5492 = vunpack.c.0.s8 %v5491
        %v5493 = vlaneseq
        %v5494 = vshrl.u32 %v5493, 7
        %v5495 = vsub.s32 %v5492, %v5494
        %v5496 = vrot.slane %v4472, %v5495
        %v5498 = vunpack.c.l.s4 839922192
        %v5499 = vunpack.c.0.s8 %v5498
        %v5500 = vlaneseq
        %v5501 = vshrl.u32 %v5500, 7
        %v5502 = vsub.s32 %v5499, %v5501
        %v5503 = vrot.slane %v4479, %v5502
        %v5505 = vunpack.c.l.s4 839922192
        %v5506 = vunpack.c.0.s8 %v5505
        %v5507 = vlaneseq
        %v5508 = vshrl.u32 %v5507, 7
        %v5509 = vsub.s32 %v5506, %v5508
        %v5510 = vrot.slane %v4486, %v5509
        %v5512 = vunpack.c.l.s4 839922192
        %v5513 = vunpack.c.0.s8 %v5512
        %v5514 = vlaneseq
        %v5515 = vshrl.u32 %v5514, 7
        %v5516 = vsub.s32 %v5513, %v5515
        %v5517 = vrot.slane %v4493, %v5516
        %v5519 = vunpack.c.l.s4 839922192
        %v5520 = vunpack.c.0.s8 %v5519
        %v5521 = vlaneseq
        %v5522 = vshrl.u32 %v5521, 7
        %v5523 = vsub.s32 %v5520, %v5522
        %v5524 = vrot.slane %v4500, %v5523
        %v5526 = vunpack.c.l.s4 839922192
        %v5527 = vunpack.c.0.s8 %v5526
        %v5528 = vlaneseq
        %v5529 = vshrl.u32 %v5528, 7
        %v5530 = vsub.s32 %v5527, %v5529
        %v5531 = vrot.slane %v4507, %v5530
        %v5533 = vunpack.c.l.s4 839922192
        %v5534 = vunpack.c.0.s8 %v5533
        %v5535 = vlaneseq
        %v5536 = vshrl.u32 %v5535, 7
        %v5537 = vsub.s32 %v5534, %v5536
        %v5538 = vrot.slane %v4514, %v5537
        %v5540 = vunpack.c.l.s4 839922192
        %v5541 = vunpack.c.0.s8 %v5540
        %v5542 = vlaneseq
        %v5543 = vshrl.u32 %v5542, 7
        %v5544 = vsub.s32 %v5541, %v5543
        %v5545 = vrot.slane %v4521, %v5544
        %v5547 = vunpack.c.l.s4 839922192
        %v5548 = vunpack.c.0.s8 %v5547
        %v5549 = vlaneseq
        %v5550 = vshrl.u32 %v5549, 7
        %v5551 = vsub.s32 %v5548, %v5550
        %v5552 = vrot.slane %v4528, %v5551
        %v5554 = vunpack.c.l.s4 839922192
        %v5555 = vunpack.c.0.s8 %v5554
        %v5556 = vlaneseq
        %v5557 = vshrl.u32 %v5556, 7
        %v5558 = vsub.s32 %v5555, %v5557
        %v5559 = vrot.slane %v4535, %v5558
        %v5561 = vunpack.c.l.s4 839922192
        %v5562 = vunpack.c.0.s8 %v5561
        %v5563 = vlaneseq
        %v5564 = vshrl.u32 %v5563, 7
        %v5565 = vsub.s32 %v5562, %v5564
        %v5566 = vrot.slane %v4542, %v5565
        %v5568 = vunpack.c.l.s4 839922192
        %v5569 = vunpack.c.0.s8 %v5568
        %v5570 = vlaneseq
        %v5571 = vshrl.u32 %v5570, 7
        %v5572 = vsub.s32 %v5569, %v5571
        %v5573 = vrot.slane %v4549, %v5572
        %v5575 = vunpack.c.l.s4 839922192
        %v5576 = vunpack.c.0.s8 %v5575
        %v5577 = vlaneseq
        %v5578 = vshrl.u32 %v5577, 7
        %v5579 = vsub.s32 %v5576, %v5578
        %v5580 = vrot.slane %v4556, %v5579
        %v5582 = vunpack.c.l.s4 839922192
        %v5583 = vunpack.c.0.s8 %v5582
        %v5584 = vlaneseq
        %v5585 = vshrl.u32 %v5584, 7
        %v5586 = vsub.s32 %v5583, %v5585
        %v5587 = vrot.slane %v4563, %v5586
        %v5589 = vunpack.c.l.s4 839922192
        %v5590 = vunpack.c.0.s8 %v5589
        %v5591 = vlaneseq
        %v5592 = vshrl.u32 %v5591, 7
        %v5593 = vsub.s32 %v5590, %v5592
        %v5594 = vrot.slane %v4570, %v5593
        %v5596 = vunpack.c.l.s4 839922192
        %v5597 = vunpack.c.0.s8 %v5596
        %v5598 = vlaneseq
        %v5599 = vshrl.u32 %v5598, 7
        %v5600 = vsub.s32 %v5597, %v5599
        %v5601 = vrot.slane %v4577, %v5600
        %v5603 = vunpack.c.l.s4 839922192
        %v5604 = vunpack.c.0.s8 %v5603
        %v5605 = vlaneseq
        %v5606 = vshrl.u32 %v5605, 7
        %v5607 = vsub.s32 %v5604, %v5606
        %v5608 = vrot.slane %v4584, %v5607
        %v5610 = vunpack.c.l.s4 839922192
        %v5611 = vunpack.c.0.s8 %v5610
        %v5612 = vlaneseq
        %v5613 = vshrl.u32 %v5612, 7
        %v5614 = vsub.s32 %v5611, %v5613
        %v5615 = vrot.slane %v4591, %v5614
        %v5617 = vunpack.c.l.s4 839922192
        %v5618 = vunpack.c.0.s8 %v5617
        %v5619 = vlaneseq
        %v5620 = vshrl.u32 %v5619, 7
        %v5621 = vsub.s32 %v5618, %v5620
        %v5622 = vrot.slane %v4598, %v5621
        %v5624 = vunpack.c.l.s4 839922192
        %v5625 = vunpack.c.0.s8 %v5624
        %v5626 = vlaneseq
        %v5627 = vshrl.u32 %v5626, 7
        %v5628 = vsub.s32 %v5625, %v5627
        %v5629 = vrot.slane %v4605, %v5628
        %v5631 = vunpack.c.l.s4 839922192
        %v5632 = vunpack.c.0.s8 %v5631
        %v5633 = vlaneseq
        %v5634 = vshrl.u32 %v5633, 7
        %v5635 = vsub.s32 %v5632, %v5634
        %v5636 = vrot.slane %v4612, %v5635
        %v5638 = vunpack.c.l.s4 839922192
        %v5639 = vunpack.c.0.s8 %v5638
        %v5640 = vlaneseq
        %v5641 = vshrl.u32 %v5640, 7
        %v5642 = vsub.s32 %v5639, %v5641
        %v5643 = vrot.slane %v4619, %v5642
        %v5645 = vunpack.c.l.s4 839922192
        %v5646 = vunpack.c.0.s8 %v5645
        %v5647 = vlaneseq
        %v5648 = vshrl.u32 %v5647, 7
        %v5649 = vsub.s32 %v5646, %v5648
        %v5650 = vrot.slane %v4626, %v5649
        %v5652 = vunpack.c.l.s4 839922192
        %v5653 = vunpack.c.0.s8 %v5652
        %v5654 = vlaneseq
        %v5655 = vshrl.u32 %v5654, 7
        %v5656 = vsub.s32 %v5653, %v5655
        %v5657 = vrot.slane %v4633, %v5656
        %v5659 = vunpack.c.l.s4 839922192
        %v5660 = vunpack.c.0.s8 %v5659
        %v5661 = vlaneseq
        %v5662 = vshrl.u32 %v5661, 7
        %v5663 = vsub.s32 %v5660, %v5662
        %v5664 = vrot.slane %v4640, %v5663
        %v5666 = vunpack.c.l.s4 839922192
        %v5667 = vunpack.c.0.s8 %v5666
        %v5668 = vlaneseq
        %v5669 = vshrl.u32 %v5668, 7
        %v5670 = vsub.s32 %v5667, %v5669
        %v5671 = vrot.slane %v4647, %v5670
        %v5673 = vunpack.c.l.s4 839922192
        %v5674 = vunpack.c.0.s8 %v5673
        %v5675 = vlaneseq
        %v5676 = vshrl.u32 %v5675, 7
        %v5677 = vsub.s32 %v5674, %v5676
        %v5678 = vrot.slane %v4654, %v5677
        %v5680 = vunpack.c.l.s4 839922192
        %v5681 = vunpack.c.0.s8 %v5680
        %v5682 = vlaneseq
        %v5683 = vshrl.u32 %v5682, 7
        %v5684 = vsub.s32 %v5681, %v5683
        %v5685 = vrot.slane %v4661, %v5684
        %v5687 = vunpack.c.l.s4 839922192
        %v5688 = vunpack.c.0.s8 %v5687
        %v5689 = vlaneseq
        %v5690 = vshrl.u32 %v5689, 7
        %v5691 = vsub.s32 %v5688, %v5690
        %v5692 = vrot.slane %v4668, %v5691
        %v5694 = vunpack.c.l.s4 839922192
        %v5695 = vunpack.c.0.s8 %v5694
        %v5696 = vlaneseq
        %v5697 = vshrl.u32 %v5696, 7
        %v5698 = vsub.s32 %v5695, %v5697
        %v5699 = vrot.slane %v4675, %v5698
        %v5701 = vunpack.c.l.s4 839922192
        %v5702 = vunpack.c.0.s8 %v5701
        %v5703 = vlaneseq
        %v5704 = vshrl.u32 %v5703, 7
        %v5705 = vsub.s32 %v5702, %v5704
        %v5706 = vrot.slane %v4682, %v5705
        %v5708 = vunpack.c.l.s4 839922192
        %v5709 = vunpack.c.0.s8 %v5708
        %v5710 = vlaneseq
        %v5711 = vshrl.u32 %v5710, 7
        %v5712 = vsub.s32 %v5709, %v5711
        %v5713 = vrot.slane %v4689, %v5712
        %v5715 = vunpack.c.l.s4 839922192
        %v5716 = vunpack.c.0.s8 %v5715
        %v5717 = vlaneseq
        %v5718 = vshrl.u32 %v5717, 7
        %v5719 = vsub.s32 %v5716, %v5718
        %v5720 = vrot.slane %v4696, %v5719
        %v5722 = vunpack.c.l.s4 839922192
        %v5723 = vunpack.c.0.s8 %v5722
        %v5724 = vlaneseq
        %v5725 = vshrl.u32 %v5724, 7
        %v5726 = vsub.s32 %v5723, %v5725
        %v5727 = vrot.slane %v4703, %v5726
        %v5729 = vunpack.c.l.s4 839922192
        %v5730 = vunpack.c.0.s8 %v5729
        %v5731 = vlaneseq
        %v5732 = vshrl.u32 %v5731, 7
        %v5733 = vsub.s32 %v5730, %v5732
        %v5734 = vrot.slane %v4710, %v5733
        %v5736 = vunpack.c.l.s4 839922192
        %v5737 = vunpack.c.0.s8 %v5736
        %v5738 = vlaneseq
        %v5739 = vshrl.u32 %v5738, 7
        %v5740 = vsub.s32 %v5737, %v5739
        %v5741 = vrot.slane %v4717, %v5740
        %v5743 = vunpack.c.l.s4 839922192
        %v5744 = vunpack.c.0.s8 %v5743
        %v5745 = vlaneseq
        %v5746 = vshrl.u32 %v5745, 7
        %v5747 = vsub.s32 %v5744, %v5746
        %v5748 = vrot.slane %v4724, %v5747
        %v5750 = vunpack.c.l.s4 839922192
        %v5751 = vunpack.c.0.s8 %v5750
        %v5752 = vlaneseq
        %v5753 = vshrl.u32 %v5752, 7
        %v5754 = vsub.s32 %v5751, %v5753
        %v5755 = vrot.slane %v4731, %v5754
        %v5757 = vunpack.c.l.s4 839922192
        %v5758 = vunpack.c.0.s8 %v5757
        %v5759 = vlaneseq
        %v5760 = vshrl.u32 %v5759, 7
        %v5761 = vsub.s32 %v5758, %v5760
        %v5762 = vrot.slane %v4738, %v5761
        %v5764 = vunpack.c.l.s4 839922192
        %v5765 = vunpack.c.0.s8 %v5764
        %v5766 = vlaneseq
        %v5767 = vshrl.u32 %v5766, 7
        %v5768 = vsub.s32 %v5765, %v5767
        %v5769 = vrot.slane %v4745, %v5768
        %v5771 = vunpack.c.l.s4 839922192
        %v5772 = vunpack.c.0.s8 %v5771
        %v5773 = vlaneseq
        %v5774 = vshrl.u32 %v5773, 7
        %v5775 = vsub.s32 %v5772, %v5774
        %v5776 = vrot.slane %v4752, %v5775
        %v5778 = vunpack.c.l.s4 839922192
        %v5779 = vunpack.c.0.s8 %v5778
        %v5780 = vlaneseq
        %v5781 = vshrl.u32 %v5780, 7
        %v5782 = vsub.s32 %v5779, %v5781
        %v5783 = vrot.slane %v4759, %v5782
        %v5785 = vunpack.c.l.s4 839922192
        %v5786 = vunpack.c.0.s8 %v5785
        %v5787 = vlaneseq
        %v5788 = vshrl.u32 %v5787, 7
        %v5789 = vsub.s32 %v5786, %v5788
        %v5790 = vrot.slane %v4766, %v5789
        %v5792 = vunpack.c.l.s4 839922192
        %v5793 = vunpack.c.0.s8 %v5792
        %v5794 = vlaneseq
        %v5795 = vshrl.u32 %v5794, 7
        %v5796 = vsub.s32 %v5793, %v5795
        %v5797 = vrot.slane %v4773, %v5796
        %v5799 = vunpack.c.l.s4 839922192
        %v5800 = vunpack.c.0.s8 %v5799
        %v5801 = vlaneseq
        %v5802 = vshrl.u32 %v5801, 7
        %v5803 = vsub.s32 %v5800, %v5802
        %v5804 = vrot.slane %v4780, %v5803
        %v5806 = vunpack.c.l.s4 839922192
        %v5807 = vunpack.c.0.s8 %v5806
        %v5808 = vlaneseq
        %v5809 = vshrl.u32 %v5808, 7
        %v5810 = vsub.s32 %v5807, %v5809
        %v5811 = vrot.slane %v4787, %v5810
        %v5813 = vunpack.c.l.s4 839922192
        %v5814 = vunpack.c.0.s8 %v5813
        %v5815 = vlaneseq
        %v5816 = vshrl.u32 %v5815, 7
        %v5817 = vsub.s32 %v5814, %v5816
        %v5818 = vrot.slane %v4794, %v5817
        %v5820 = vunpack.c.l.s4 839922192
        %v5821 = vunpack.c.0.s8 %v5820
        %v5822 = vlaneseq
        %v5823 = vshrl.u32 %v5822, 7
        %v5824 = vsub.s32 %v5821, %v5823
        %v5825 = vrot.slane %v4801, %v5824
        %v5827 = vunpack.c.l.s4 839922192
        %v5828 = vunpack.c.0.s8 %v5827
        %v5829 = vlaneseq
        %v5830 = vshrl.u32 %v5829, 7
        %v5831 = vsub.s32 %v5828, %v5830
        %v5832 = vrot.slane %v4808, %v5831
        %v5834 = vunpack.c.l.s4 839922192
        %v5835 = vunpack.c.0.s8 %v5834
        %v5836 = vlaneseq
        %v5837 = vshrl.u32 %v5836, 7
        %v5838 = vsub.s32 %v5835, %v5837
        %v5839 = vrot.slane %v4815, %v5838
        %v5841 = vunpack.c.l.s4 839922192
        %v5842 = vunpack.c.0.s8 %v5841
        %v5843 = vlaneseq
        %v5844 = vshrl.u32 %v5843, 7
        %v5845 = vsub.s32 %v5842, %v5844
        %v5846 = vrot.slane %v4822, %v5845
        %v5848 = vunpack.c.l.s4 839922192
        %v5849 = vunpack.c.0.s8 %v5848
        %v5850 = vlaneseq
        %v5851 = vshrl.u32 %v5850, 7
        %v5852 = vsub.s32 %v5849, %v5851
        %v5853 = vrot.slane %v4829, %v5852
        %v5855 = vunpack.c.l.s4 839922192
        %v5856 = vunpack.c.0.s8 %v5855
        %v5857 = vlaneseq
        %v5858 = vshrl.u32 %v5857, 7
        %v5859 = vsub.s32 %v5856, %v5858
        %v5860 = vrot.slane %v4836, %v5859
        %v5862 = vunpack.c.l.s4 839922192
        %v5863 = vunpack.c.0.s8 %v5862
        %v5864 = vlaneseq
        %v5865 = vshrl.u32 %v5864, 7
        %v5866 = vsub.s32 %v5863, %v5865
        %v5867 = vrot.slane %v4843, %v5866
        %v5869 = vunpack.c.l.s4 839922192
        %v5870 = vunpack.c.0.s8 %v5869
        %v5871 = vlaneseq
        %v5872 = vshrl.u32 %v5871, 7
        %v5873 = vsub.s32 %v5870, %v5872
        %v5874 = vrot.slane %v4850, %v5873
        %v5876 = vunpack.c.l.s4 839922192
        %v5877 = vunpack.c.0.s8 %v5876
        %v5878 = vlaneseq
        %v5879 = vshrl.u32 %v5878, 7
        %v5880 = vsub.s32 %v5877, %v5879
        %v5881 = vrot.slane %v4857, %v5880
        %v5883 = vunpack.c.l.s4 839922192
        %v5884 = vunpack.c.0.s8 %v5883
        %v5885 = vlaneseq
        %v5886 = vshrl.u32 %v5885, 7
        %v5887 = vsub.s32 %v5884, %v5886
        %v5888 = vrot.slane %v4864, %v5887
        %v5890 = vunpack.c.l.s4 839922192
        %v5891 = vunpack.c.0.s8 %v5890
        %v5892 = vlaneseq
        %v5893 = vshrl.u32 %v5892, 7
        %v5894 = vsub.s32 %v5891, %v5893
        %v5895 = vrot.slane %v4871, %v5894
        %v5897 = vunpack.c.l.s4 839922192
        %v5898 = vunpack.c.0.s8 %v5897
        %v5899 = vlaneseq
        %v5900 = vshrl.u32 %v5899, 7
        %v5901 = vsub.s32 %v5898, %v5900
        %v5902 = vrot.slane %v4878, %v5901
        %v5904 = vunpack.c.l.s4 839922192
        %v5905 = vunpack.c.0.s8 %v5904
        %v5906 = vlaneseq
        %v5907 = vshrl.u32 %v5906, 7
        %v5908 = vsub.s32 %v5905, %v5907
        %v5909 = vrot.slane %v4885, %v5908
        %v5911 = vunpack.c.l.s4 839922192
        %v5912 = vunpack.c.0.s8 %v5911
        %v5913 = vlaneseq
        %v5914 = vshrl.u32 %v5913, 7
        %v5915 = vsub.s32 %v5912, %v5914
        %v5916 = vrot.slane %v4892, %v5915
        %v5918 = vunpack.c.l.s4 839922192
        %v5919 = vunpack.c.0.s8 %v5918
        %v5920 = vlaneseq
        %v5921 = vshrl.u32 %v5920, 7
        %v5922 = vsub.s32 %v5919, %v5921
        %v5923 = vrot.slane %v4899, %v5922
        %v5925 = vunpack.c.l.s4 839922192
        %v5926 = vunpack.c.0.s8 %v5925
        %v5927 = vlaneseq
        %v5928 = vshrl.u32 %v5927, 7
        %v5929 = vsub.s32 %v5926, %v5928
        %v5930 = vrot.slane %v4906, %v5929
        %v5932 = vunpack.c.l.s4 839922192
        %v5933 = vunpack.c.0.s8 %v5932
        %v5934 = vlaneseq
        %v5935 = vshrl.u32 %v5934, 7
        %v5936 = vsub.s32 %v5933, %v5935
        %v5937 = vrot.slane %v4913, %v5936
        %v5939 = vunpack.c.l.s4 839922192
        %v5940 = vunpack.c.0.s8 %v5939
        %v5941 = vlaneseq
        %v5942 = vshrl.u32 %v5941, 7
        %v5943 = vsub.s32 %v5940, %v5942
        %v5944 = vrot.slane %v4920, %v5943
        %v5946 = vunpack.c.l.s4 839922192
        %v5947 = vunpack.c.0.s8 %v5946
        %v5948 = vlaneseq
        %v5949 = vshrl.u32 %v5948, 7
        %v5950 = vsub.s32 %v5947, %v5949
        %v5951 = vrot.slane %v4927, %v5950
        %v5953 = vunpack.c.l.s4 839922192
        %v5954 = vunpack.c.0.s8 %v5953
        %v5955 = vlaneseq
        %v5956 = vshrl.u32 %v5955, 7
        %v5957 = vsub.s32 %v5954, %v5956
        %v5958 = vrot.slane %v4934, %v5957
        %v5960 = vunpack.c.l.s4 839922192
        %v5961 = vunpack.c.0.s8 %v5960
        %v5962 = vlaneseq
        %v5963 = vshrl.u32 %v5962, 7
        %v5964 = vsub.s32 %v5961, %v5963
        %v5965 = vrot.slane %v4941, %v5964
        %v5967 = vunpack.c.l.s4 839922192
        %v5968 = vunpack.c.0.s8 %v5967
        %v5969 = vlaneseq
        %v5970 = vshrl.u32 %v5969, 7
        %v5971 = vsub.s32 %v5968, %v5970
        %v5972 = vrot.slane %v4948, %v5971
        %v5974 = vunpack.c.l.s4 839922192
        %v5975 = vunpack.c.0.s8 %v5974
        %v5976 = vlaneseq
        %v5977 = vshrl.u32 %v5976, 7
        %v5978 = vsub.s32 %v5975, %v5977
        %v5979 = vrot.slane %v4955, %v5978
        %v5981 = vunpack.c.l.s4 839922192
        %v5982 = vunpack.c.0.s8 %v5981
        %v5983 = vlaneseq
        %v5984 = vshrl.u32 %v5983, 7
        %v5985 = vsub.s32 %v5982, %v5984
        %v5986 = vrot.slane %v4962, %v5985
        %v5988 = vunpack.c.l.s4 839922192
        %v5989 = vunpack.c.0.s8 %v5988
        %v5990 = vlaneseq
        %v5991 = vshrl.u32 %v5990, 7
        %v5992 = vsub.s32 %v5989, %v5991
        %v5993 = vrot.slane %v4969, %v5992
        %v5995 = vunpack.c.l.s4 839922192
        %v5996 = vunpack.c.0.s8 %v5995
        %v5997 = vlaneseq
        %v5998 = vshrl.u32 %v5997, 7
        %v5999 = vsub.s32 %v5996, %v5998
        %v6000 = vrot.slane %v4976, %v5999
        %v6002 = vunpack.c.l.s4 839922192
        %v6003 = vunpack.c.0.s8 %v6002
        %v6004 = vlaneseq
        %v6005 = vshrl.u32 %v6004, 7
        %v6006 = vsub.s32 %v6003, %v6005
        %v6007 = vrot.slane %v4983, %v6006
        %v6009 = vunpack.c.l.s4 839922192
        %v6010 = vunpack.c.0.s8 %v6009
        %v6011 = vlaneseq
        %v6012 = vshrl.u32 %v6011, 7
        %v6013 = vsub.s32 %v6010, %v6012
        %v6014 = vrot.slane %v4990, %v6013
        %v6016 = vunpack.c.l.s4 839922192
        %v6017 = vunpack.c.0.s8 %v6016
        %v6018 = vlaneseq
        %v6019 = vshrl.u32 %v6018, 7
        %v6020 = vsub.s32 %v6017, %v6019
        %v6021 = vrot.slane %v4997, %v6020
        %v6023 = vunpack.c.l.s4 839922192
        %v6024 = vunpack.c.0.s8 %v6023
        %v6025 = vlaneseq
        %v6026 = vshrl.u32 %v6025, 7
        %v6027 = vsub.s32 %v6024, %v6026
        %v6028 = vrot.slane %v5004, %v6027
        %v6030 = vunpack.c.l.s4 839922192
        %v6031 = vunpack.c.0.s8 %v6030
        %v6032 = vlaneseq
        %v6033 = vshrl.u32 %v6032, 7
        %v6034 = vsub.s32 %v6031, %v6033
        %v6035 = vrot.slane %v5011, %v6034
        %v6037 = vunpack.c.l.s4 839922192
        %v6038 = vunpack.c.0.s8 %v6037
        %v6039 = vlaneseq
        %v6040 = vshrl.u32 %v6039, 7
        %v6041 = vsub.s32 %v6038, %v6040
        %v6042 = vrot.slane %v5018, %v6041
        %v6044 = vunpack.c.l.s4 839922192
        %v6045 = vunpack.c.0.s8 %v6044
        %v6046 = vlaneseq
        %v6047 = vshrl.u32 %v6046, 7
        %v6048 = vsub.s32 %v6045, %v6047
        %v6049 = vrot.slane %v5025, %v6048
        %v6051 = vunpack.c.l.s4 839922192
        %v6052 = vunpack.c.0.s8 %v6051
        %v6053 = vlaneseq
        %v6054 = vshrl.u32 %v6053, 7
        %v6055 = vsub.s32 %v6052, %v6054
        %v6056 = vrot.slane %v5032, %v6055
        %v6058 = vunpack.c.l.s4 839922192
        %v6059 = vunpack.c.0.s8 %v6058
        %v6060 = vlaneseq
        %v6061 = vshrl.u32 %v6060, 7
        %v6062 = vsub.s32 %v6059, %v6061
        %v6063 = vrot.slane %v5039, %v6062
        %v6065 = vunpack.c.l.s4 839922192
        %v6066 = vunpack.c.0.s8 %v6065
        %v6067 = vlaneseq
        %v6068 = vshrl.u32 %v6067, 7
        %v6069 = vsub.s32 %v6066, %v6068
        %v6070 = vrot.slane %v5046, %v6069
        %v6072 = vunpack.c.l.s4 839922192
        %v6073 = vunpack.c.0.s8 %v6072
        %v6074 = vlaneseq
        %v6075 = vshrl.u32 %v6074, 7
        %v6076 = vsub.s32 %v6073, %v6075
        %v6077 = vrot.slane %v5053, %v6076
        %v6079 = vunpack.c.l.s4 839922192
        %v6080 = vunpack.c.0.s8 %v6079
        %v6081 = vlaneseq
        %v6082 = vshrl.u32 %v6081, 7
        %v6083 = vsub.s32 %v6080, %v6082
        %v6084 = vrot.slane %v5060, %v6083
        %v6086 = vunpack.c.l.s4 839922192
        %v6087 = vunpack.c.0.s8 %v6086
        %v6088 = vlaneseq
        %v6089 = vshrl.u32 %v6088, 7
        %v6090 = vsub.s32 %v6087, %v6089
        %v6091 = vrot.slane %v5067, %v6090
        %v6093 = vunpack.c.l.s4 839922192
        %v6094 = vunpack.c.0.s8 %v6093
        %v6095 = vlaneseq
        %v6096 = vshrl.u32 %v6095, 7
        %v6097 = vsub.s32 %v6094, %v6096
        %v6098 = vrot.slane %v5074, %v6097
        %v6100 = vunpack.c.l.s4 839922192
        %v6101 = vunpack.c.0.s8 %v6100
        %v6102 = vlaneseq
        %v6103 = vshrl.u32 %v6102, 7
        %v6104 = vsub.s32 %v6101, %v6103
        %v6105 = vrot.slane %v5081, %v6104
        %v6107 = vunpack.c.l.s4 839922192
        %v6108 = vunpack.c.0.s8 %v6107
        %v6109 = vlaneseq
        %v6110 = vshrl.u32 %v6109, 7
        %v6111 = vsub.s32 %v6108, %v6110
        %v6112 = vrot.slane %v5088, %v6111
        %v6114 = vunpack.c.l.s4 839922192
        %v6115 = vunpack.c.0.s8 %v6114
        %v6116 = vlaneseq
        %v6117 = vshrl.u32 %v6116, 7
        %v6118 = vsub.s32 %v6115, %v6117
        %v6119 = vrot.slane %v5095, %v6118
        %v6121 = vunpack.c.l.s4 839922192
        %v6122 = vunpack.c.0.s8 %v6121
        %v6123 = vlaneseq
        %v6124 = vshrl.u32 %v6123, 7
        %v6125 = vsub.s32 %v6122, %v6124
        %v6126 = vrot.slane %v5102, %v6125
        %v6255 = vmul.f32 %v2095, %v5237
        %v6256 = vmul.f32 %v2096, %v5244
        %v6257 = vmul.f32 %v2097, %v5251
        %v6258 = vmul.f32 %v2098, %v5258
        %v6259 = vmul.f32 %v2163, %v5265
        %v6260 = vmul.f32 %v2164, %v5272
        %v6261 = vmul.f32 %v2165, %v5279
        %v6262 = vmul.f32 %v2166, %v5286
        %v6263 = vmul.f32 %v2231, %v5293
        %v6264 = vmul.f32 %v2232, %v5300
        %v6265 = vmul.f32 %v2233, %v5307
        %v6266 = vmul.f32 %v2234, %v5314
        %v6267 = vmul.f32 %v2299, %v5321
        %v6268 = vmul.f32 %v2300, %v5328
        %v6269 = vmul.f32 %v2301, %v5335
        %v6270 = vmul.f32 %v2302, %v5342
        %v6271 = vmul.f32 %v2367, %v5349
        %v6272 = vmul.f32 %v2368, %v5356
        %v6273 = vmul.f32 %v2369, %v5363
        %v6274 = vmul.f32 %v2370, %v5370
        %v6275 = vmul.f32 %v2435, %v5377
        %v6276 = vmul.f32 %v2436, %v5384
        %v6277 = vmul.f32 %v2437, %v5391
        %v6278 = vmul.f32 %v2438, %v5398
        %v6279 = vmul.f32 %v2503, %v5405
        %v6280 = vmul.f32 %v2504, %v5412
        %v6281 = vmul.f32 %v2505, %v5419
        %v6282 = vmul.f32 %v2506, %v5426
        %v6283 = vmul.f32 %v2571, %v5433
        %v6284 = vmul.f32 %v2572, %v5440
        %v6285 = vmul.f32 %v2573, %v5447
        %v6286 = vmul.f32 %v2574, %v5454
        %v6287 = vmul.f32 %v2639, %v5461
        %v6288 = vmul.f32 %v2640, %v5468
        %v6289 = vmul.f32 %v2641, %v5475
        %v6290 = vmul.f32 %v2642, %v5482
        %v6291 = vmul.f32 %v2707, %v5489
        %v6292 = vmul.f32 %v2708, %v5496
        %v6293 = vmul.f32 %v2709, %v5503
        %v6294 = vmul.f32 %v2710, %v5510
        %v6295 = vmul.f32 %v2775, %v5517
        %v6296 = vmul.f32 %v2776, %v5524
        %v6297 = vmul.f32 %v2777, %v5531
        %v6298 = vmul.f32 %v2778, %v5538
        %v6299 = vmul.f32 %v2843, %v5545
        %v6300 = vmul.f32 %v2844, %v5552
        %v6301 = vmul.f32 %v2845, %v5559
        %v6302 = vmul.f32 %v2846, %v5566
        %v6303 = vmul.f32 %v2911, %v5573
        %v6304 = vmul.f32 %v2912, %v5580
        %v6305 = vmul.f32 %v2913, %v5587
        %v6306 = vmul.f32 %v2914, %v5594
        %v6307 = vmul.f32 %v2979, %v5601
        %v6308 = vmul.f32 %v2980, %v5608
        %v6309 = vmul.f32 %v2981, %v5615
        %v6310 = vmul.f32 %v2982, %v5622
        %v6311 = vmul.f32 %v3047, %v5629
        %v6312 = vmul.f32 %v3048, %v5636
        %v6313 = vmul.f32 %v3049, %v5643
        %v6314 = vmul.f32 %v3050, %v5650
        %v6315 = vmul.f32 %v3115, %v5657
        %v6316 = vmul.f32 %v3116, %v5664
        %v6317 = vmul.f32 %v3117, %v5671
        %v6318 = vmul.f32 %v3118, %v5678
        %v6319 = vmul.f32 %v3183, %v5685
        %v6320 = vmul.f32 %v3184, %v5692
        %v6321 = vmul.f32 %v3185, %v5699
        %v6322 = vmul.f32 %v3186, %v5706
        %v6323 = vmul.f32 %v3251, %v5713
        %v6324 = vmul.f32 %v3252, %v5720
        %v6325 = vmul.f32 %v3253, %v5727
        %v6326 = vmul.f32 %v3254, %v5734
        %v6327 = vmul.f32 %v3319, %v5741
        %v6328 = vmul.f32 %v3320, %v5748
        %v6329 = vmul.f32 %v3321, %v5755
        %v6330 = vmul.f32 %v3322, %v5762
        %v6331 = vmul.f32 %v3387, %v5769
        %v6332 = vmul.f32 %v3388, %v5776
        %v6333 = vmul.f32 %v3389, %v5783
        %v6334 = vmul.f32 %v3390, %v5790
        %v6335 = vmul.f32 %v3455, %v5797
        %v6336 = vmul.f32 %v3456, %v5804
        %v6337 = vmul.f32 %v3457, %v5811
        %v6338 = vmul.f32 %v3458, %v5818
        %v6339 = vmul.f32 %v3523, %v5825
        %v6340 = vmul.f32 %v3524, %v5832
        %v6341 = vmul.f32 %v3525, %v5839
        %v6342 = vmul.f32 %v3526, %v5846
        %v6343 = vmul.f32 %v3591, %v5853
        %v6344 = vmul.f32 %v3592, %v5860
        %v6345 = vmul.f32 %v3593, %v5867
        %v6346 = vmul.f32 %v3594, %v5874
        %v6347 = vmul.f32 %v3659, %v5881
        %v6348 = vmul.f32 %v3660, %v5888
        %v6349 = vmul.f32 %v3661, %v5895
        %v6350 = vmul.f32 %v3662, %v5902
        %v6351 = vmul.f32 %v3727, %v5909
        %v6352 = vmul.f32 %v3728, %v5916
        %v6353 = vmul.f32 %v3729, %v5923
        %v6354 = vmul.f32 %v3730, %v5930
        %v6355 = vmul.f32 %v3795, %v5937
        %v6356 = vmul.f32 %v3796, %v5944
        %v6357 = vmul.f32 %v3797, %v5951
        %v6358 = vmul.f32 %v3798, %v5958
        %v6359 = vmul.f32 %v3863, %v5965
        %v6360 = vmul.f32 %v3864, %v5972
        %v6361 = vmul.f32 %v3865, %v5979
        %v6362 = vmul.f32 %v3866, %v5986
        %v6363 = vmul.f32 %v3931, %v5993
        %v6364 = vmul.f32 %v3932, %v6000
        %v6365 = vmul.f32 %v3933, %v6007
        %v6366 = vmul.f32 %v3934, %v6014
        %v6367 = vmul.f32 %v3999, %v6021
        %v6368 = vmul.f32 %v4000, %v6028
        %v6369 = vmul.f32 %v4001, %v6035
        %v6370 = vmul.f32 %v4002, %v6042
        %v6371 = vmul.f32 %v4067, %v6049
        %v6372 = vmul.f32 %v4068, %v6056
        %v6373 = vmul.f32 %v4069, %v6063
        %v6374 = vmul.f32 %v4070, %v6070
        %v6375 = vmul.f32 %v4135, %v6077
        %v6376 = vmul.f32 %v4136, %v6084
        %v6377 = vmul.f32 %v4137, %v6091
        %v6378 = vmul.f32 %v4138, %v6098
        %v6379 = vmul.f32 %v4203, %v6105
        %v6380 = vmul.f32 %v4204, %v6112
        %v6381 = vmul.f32 %v4205, %v6119
        %v6382 = vmul.f32 %v4206, %v6126
        %v6383 = vcombine.low %v6255, %v6257
        %v6384 = vcombine.high %v6255, %v6257
        %v6386 = vunpack.c.l.s4 1983009808
        %v6387 = vunpack.c.0.s8 %v6386
        %v6388 = vlaneseq
        %v6389 = vshrl.u32 %v6388, 7
        %v6390 = vsub.s32 %v6387, %v6389
        %v6391 = vrot.slane %v6383, %v6390
        %v6393 = vunpack.c.l.s4 1983009808
        %v6394 = vunpack.c.0.s8 %v6393
        %v6395 = vlaneseq
        %v6396 = vshrl.u32 %v6395, 7
        %v6397 = vsub.s32 %v6394, %v6396
        %v6398 = vrot.slane %v6384, %v6397
        %v6399 = vcombine.low %v6256, %v6258
        %v6400 = vcombine.high %v6256, %v6258
        %v6402 = vunpack.c.l.s4 1983009808
        %v6403 = vunpack.c.0.s8 %v6402
        %v6404 = vlaneseq
        %v6405 = vshrl.u32 %v6404, 7
        %v6406 = vsub.s32 %v6403, %v6405
        %v6407 = vrot.slane %v6399, %v6406
        %v6409 = vunpack.c.l.s4 1983009808
        %v6410 = vunpack.c.0.s8 %v6409
        %v6411 = vlaneseq
        %v6412 = vshrl.u32 %v6411, 7
        %v6413 = vsub.s32 %v6410, %v6412
        %v6414 = vrot.slane %v6400, %v6413
        %v6415 = vcombine.low %v6391, %v6407
        %v6416 = vcombine.high %v6391, %v6407
        %v6418 = vunpack.c.l.s4 1934713408
        %v6419 = vunpack.c.0.s8 %v6418
        %v6420 = vlaneseq
        %v6421 = vshrl.u32 %v6420, 7
        %v6422 = vsub.s32 %v6419, %v6421
        %v6423 = vrot.slane %v6415, %v6422
        %v6425 = vunpack.c.l.s4 1934713408
        %v6426 = vunpack.c.0.s8 %v6425
        %v6427 = vlaneseq
        %v6428 = vshrl.u32 %v6427, 7
        %v6429 = vsub.s32 %v6426, %v6428
        %v6430 = vrot.slane %v6416, %v6429
        %v6431 = vcombine.low %v6398, %v6414
        %v6432 = vcombine.high %v6398, %v6414
        %v6434 = vunpack.c.l.s4 1934713408
        %v6435 = vunpack.c.0.s8 %v6434
        %v6436 = vlaneseq
        %v6437 = vshrl.u32 %v6436, 7
        %v6438 = vsub.s32 %v6435, %v6437
        %v6439 = vrot.slane %v6431, %v6438
        %v6441 = vunpack.c.l.s4 1934713408
        %v6442 = vunpack.c.0.s8 %v6441
        %v6443 = vlaneseq
        %v6444 = vshrl.u32 %v6443, 7
        %v6445 = vsub.s32 %v6442, %v6444
        %v6446 = vrot.slane %v6432, %v6445
        %v6447 = vcombine.low %v6423, %v6439
        %v6448 = vcombine.high %v6423, %v6439
        %v6449 = vcombine.low %v6430, %v6446
        %v6450 = vcombine.high %v6430, %v6446
        %v6451 = vcombine.low %v6259, %v6261
        %v6452 = vcombine.high %v6259, %v6261
        %v6454 = vunpack.c.l.s4 1983009808
        %v6455 = vunpack.c.0.s8 %v6454
        %v6456 = vlaneseq
        %v6457 = vshrl.u32 %v6456, 7
        %v6458 = vsub.s32 %v6455, %v6457
        %v6459 = vrot.slane %v6451, %v6458
        %v6461 = vunpack.c.l.s4 1983009808
        %v6462 = vunpack.c.0.s8 %v6461
        %v6463 = vlaneseq
        %v6464 = vshrl.u32 %v6463, 7
        %v6465 = vsub.s32 %v6462, %v6464
        %v6466 = vrot.slane %v6452, %v6465
        %v6467 = vcombine.low %v6260, %v6262
        %v6468 = vcombine.high %v6260, %v6262
        %v6470 = vunpack.c.l.s4 1983009808
        %v6471 = vunpack.c.0.s8 %v6470
        %v6472 = vlaneseq
        %v6473 = vshrl.u32 %v6472, 7
        %v6474 = vsub.s32 %v6471, %v6473
        %v6475 = vrot.slane %v6467, %v6474
        %v6477 = vunpack.c.l.s4 1983009808
        %v6478 = vunpack.c.0.s8 %v6477
        %v6479 = vlaneseq
        %v6480 = vshrl.u32 %v6479, 7
        %v6481 = vsub.s32 %v6478, %v6480
        %v6482 = vrot.slane %v6468, %v6481
        %v6483 = vcombine.low %v6459, %v6475
        %v6484 = vcombine.high %v6459, %v6475
        %v6486 = vunpack.c.l.s4 1934713408
        %v6487 = vunpack.c.0.s8 %v6486
        %v6488 = vlaneseq
        %v6489 = vshrl.u32 %v6488, 7
        %v6490 = vsub.s32 %v6487, %v6489
        %v6491 = vrot.slane %v6483, %v6490
        %v6493 = vunpack.c.l.s4 1934713408
        %v6494 = vunpack.c.0.s8 %v6493
        %v6495 = vlaneseq
        %v6496 = vshrl.u32 %v6495, 7
        %v6497 = vsub.s32 %v6494, %v6496
        %v6498 = vrot.slane %v6484, %v6497
        %v6499 = vcombine.low %v6466, %v6482
        %v6500 = vcombine.high %v6466, %v6482
        %v6502 = vunpack.c.l.s4 1934713408
        %v6503 = vunpack.c.0.s8 %v6502
        %v6504 = vlaneseq
        %v6505 = vshrl.u32 %v6504, 7
        %v6506 = vsub.s32 %v6503, %v6505
        %v6507 = vrot.slane %v6499, %v6506
        %v6509 = vunpack.c.l.s4 1934713408
        %v6510 = vunpack.c.0.s8 %v6509
        %v6511 = vlaneseq
        %v6512 = vshrl.u32 %v6511, 7
        %v6513 = vsub.s32 %v6510, %v6512
        %v6514 = vrot.slane %v6500, %v6513
        %v6515 = vcombine.low %v6491, %v6507
        %v6516 = vcombine.high %v6491, %v6507
        %v6517 = vcombine.low %v6498, %v6514
        %v6518 = vcombine.high %v6498, %v6514
        %v6519 = vcombine.low %v6263, %v6265
        %v6520 = vcombine.high %v6263, %v6265
        %v6522 = vunpack.c.l.s4 1983009808
        %v6523 = vunpack.c.0.s8 %v6522
        %v6524 = vlaneseq
        %v6525 = vshrl.u32 %v6524, 7
        %v6526 = vsub.s32 %v6523, %v6525
        %v6527 = vrot.slane %v6519, %v6526
        %v6529 = vunpack.c.l.s4 1983009808
        %v6530 = vunpack.c.0.s8 %v6529
        %v6531 = vlaneseq
        %v6532 = vshrl.u32 %v6531, 7
        %v6533 = vsub.s32 %v6530, %v6532
        %v6534 = vrot.slane %v6520, %v6533
        %v6535 = vcombine.low %v6264, %v6266
        %v6536 = vcombine.high %v6264, %v6266
        %v6538 = vunpack.c.l.s4 1983009808
        %v6539 = vunpack.c.0.s8 %v6538
        %v6540 = vlaneseq
        %v6541 = vshrl.u32 %v6540, 7
        %v6542 = vsub.s32 %v6539, %v6541
        %v6543 = vrot.slane %v6535, %v6542
        %v6545 = vunpack.c.l.s4 1983009808
        %v6546 = vunpack.c.0.s8 %v6545
        %v6547 = vlaneseq
        %v6548 = vshrl.u32 %v6547, 7
        %v6549 = vsub.s32 %v6546, %v6548
        %v6550 = vrot.slane %v6536, %v6549
        %v6551 = vcombine.low %v6527, %v6543
        %v6552 = vcombine.high %v6527, %v6543
        %v6554 = vunpack.c.l.s4 1934713408
        %v6555 = vunpack.c.0.s8 %v6554
        %v6556 = vlaneseq
        %v6557 = vshrl.u32 %v6556, 7
        %v6558 = vsub.s32 %v6555, %v6557
        %v6559 = vrot.slane %v6551, %v6558
        %v6561 = vunpack.c.l.s4 1934713408
        %v6562 = vunpack.c.0.s8 %v6561
        %v6563 = vlaneseq
        %v6564 = vshrl.u32 %v6563, 7
        %v6565 = vsub.s32 %v6562, %v6564
        %v6566 = vrot.slane %v6552, %v6565
        %v6567 = vcombine.low %v6534, %v6550
        %v6568 = vcombine.high %v6534, %v6550
        %v6570 = vunpack.c.l.s4 1934713408
        %v6571 = vunpack.c.0.s8 %v6570
        %v6572 = vlaneseq
        %v6573 = vshrl.u32 %v6572, 7
        %v6574 = vsub.s32 %v6571, %v6573
        %v6575 = vrot.slane %v6567, %v6574
        %v6577 = vunpack.c.l.s4 1934713408
        %v6578 = vunpack.c.0.s8 %v6577
        %v6579 = vlaneseq
        %v6580 = vshrl.u32 %v6579, 7
        %v6581 = vsub.s32 %v6578, %v6580
        %v6582 = vrot.slane %v6568, %v6581
        %v6583 = vcombine.low %v6559, %v6575
        %v6584 = vcombine.high %v6559, %v6575
        %v6585 = vcombine.low %v6566, %v6582
        %v6586 = vcombine.high %v6566, %v6582
        %v6587 = vcombine.low %v6267, %v6269
        %v6588 = vcombine.high %v6267, %v6269
        %v6590 = vunpack.c.l.s4 1983009808
        %v6591 = vunpack.c.0.s8 %v6590
        %v6592 = vlaneseq
        %v6593 = vshrl.u32 %v6592, 7
        %v6594 = vsub.s32 %v6591, %v6593
        %v6595 = vrot.slane %v6587, %v6594
        %v6597 = vunpack.c.l.s4 1983009808
        %v6598 = vunpack.c.0.s8 %v6597
        %v6599 = vlaneseq
        %v6600 = vshrl.u32 %v6599, 7
        %v6601 = vsub.s32 %v6598, %v6600
        %v6602 = vrot.slane %v6588, %v6601
        %v6603 = vcombine.low %v6268, %v6270
        %v6604 = vcombine.high %v6268, %v6270
        %v6606 = vunpack.c.l.s4 1983009808
        %v6607 = vunpack.c.0.s8 %v6606
        %v6608 = vlaneseq
        %v6609 = vshrl.u32 %v6608, 7
        %v6610 = vsub.s32 %v6607, %v6609
        %v6611 = vrot.slane %v6603, %v6610
        %v6613 = vunpack.c.l.s4 1983009808
        %v6614 = vunpack.c.0.s8 %v6613
        %v6615 = vlaneseq
        %v6616 = vshrl.u32 %v6615, 7
        %v6617 = vsub.s32 %v6614, %v6616
        %v6618 = vrot.slane %v6604, %v6617
        %v6619 = vcombine.low %v6595, %v6611
        %v6620 = vcombine.high %v6595, %v6611
        %v6622 = vunpack.c.l.s4 1934713408
        %v6623 = vunpack.c.0.s8 %v6622
        %v6624 = vlaneseq
        %v6625 = vshrl.u32 %v6624, 7
        %v6626 = vsub.s32 %v6623, %v6625
        %v6627 = vrot.slane %v6619, %v6626
        %v6629 = vunpack.c.l.s4 1934713408
        %v6630 = vunpack.c.0.s8 %v6629
        %v6631 = vlaneseq
        %v6632 = vshrl.u32 %v6631, 7
        %v6633 = vsub.s32 %v6630, %v6632
        %v6634 = vrot.slane %v6620, %v6633
        %v6635 = vcombine.low %v6602, %v6618
        %v6636 = vcombine.high %v6602, %v6618
        %v6638 = vunpack.c.l.s4 1934713408
        %v6639 = vunpack.c.0.s8 %v6638
        %v6640 = vlaneseq
        %v6641 = vshrl.u32 %v6640, 7
        %v6642 = vsub.s32 %v6639, %v6641
        %v6643 = vrot.slane %v6635, %v6642
        %v6645 = vunpack.c.l.s4 1934713408
        %v6646 = vunpack.c.0.s8 %v6645
        %v6647 = vlaneseq
        %v6648 = vshrl.u32 %v6647, 7
        %v6649 = vsub.s32 %v6646, %v6648
        %v6650 = vrot.slane %v6636, %v6649
        %v6651 = vcombine.low %v6627, %v6643
        %v6652 = vcombine.high %v6627, %v6643
        %v6653 = vcombine.low %v6634, %v6650
        %v6654 = vcombine.high %v6634, %v6650
        %v6655 = vcombine.low %v6271, %v6273
        %v6656 = vcombine.high %v6271, %v6273
        %v6658 = vunpack.c.l.s4 1983009808
        %v6659 = vunpack.c.0.s8 %v6658
        %v6660 = vlaneseq
        %v6661 = vshrl.u32 %v6660, 7
        %v6662 = vsub.s32 %v6659, %v6661
        %v6663 = vrot.slane %v6655, %v6662
        %v6665 = vunpack.c.l.s4 1983009808
        %v6666 = vunpack.c.0.s8 %v6665
        %v6667 = vlaneseq
        %v6668 = vshrl.u32 %v6667, 7
        %v6669 = vsub.s32 %v6666, %v6668
        %v6670 = vrot.slane %v6656, %v6669
        %v6671 = vcombine.low %v6272, %v6274
        %v6672 = vcombine.high %v6272, %v6274
        %v6674 = vunpack.c.l.s4 1983009808
        %v6675 = vunpack.c.0.s8 %v6674
        %v6676 = vlaneseq
        %v6677 = vshrl.u32 %v6676, 7
        %v6678 = vsub.s32 %v6675, %v6677
        %v6679 = vrot.slane %v6671, %v6678
        %v6681 = vunpack.c.l.s4 1983009808
        %v6682 = vunpack.c.0.s8 %v6681
        %v6683 = vlaneseq
        %v6684 = vshrl.u32 %v6683, 7
        %v6685 = vsub.s32 %v6682, %v6684
        %v6686 = vrot.slane %v6672, %v6685
        %v6687 = vcombine.low %v6663, %v6679
        %v6688 = vcombine.high %v6663, %v6679
        %v6690 = vunpack.c.l.s4 1934713408
        %v6691 = vunpack.c.0.s8 %v6690
        %v6692 = vlaneseq
        %v6693 = vshrl.u32 %v6692, 7
        %v6694 = vsub.s32 %v6691, %v6693
        %v6695 = vrot.slane %v6687, %v6694
        %v6697 = vunpack.c.l.s4 1934713408
        %v6698 = vunpack.c.0.s8 %v6697
        %v6699 = vlaneseq
        %v6700 = vshrl.u32 %v6699, 7
        %v6701 = vsub.s32 %v6698, %v6700
        %v6702 = vrot.slane %v6688, %v6701
        %v6703 = vcombine.low %v6670, %v6686
        %v6704 = vcombine.high %v6670, %v6686
        %v6706 = vunpack.c.l.s4 1934713408
        %v6707 = vunpack.c.0.s8 %v6706
        %v6708 = vlaneseq
        %v6709 = vshrl.u32 %v6708, 7
        %v6710 = vsub.s32 %v6707, %v6709
        %v6711 = vrot.slane %v6703, %v6710
        %v6713 = vunpack.c.l.s4 1934713408
        %v6714 = vunpack.c.0.s8 %v6713
        %v6715 = vlaneseq
        %v6716 = vshrl.u32 %v6715, 7
        %v6717 = vsub.s32 %v6714, %v6716
        %v6718 = vrot.slane %v6704, %v6717
        %v6719 = vcombine.low %v6695, %v6711
        %v6720 = vcombine.high %v6695, %v6711
        %v6721 = vcombine.low %v6702, %v6718
        %v6722 = vcombine.high %v6702, %v6718
        %v6723 = vcombine.low %v6275, %v6277
        %v6724 = vcombine.high %v6275, %v6277
        %v6726 = vunpack.c.l.s4 1983009808
        %v6727 = vunpack.c.0.s8 %v6726
        %v6728 = vlaneseq
        %v6729 = vshrl.u32 %v6728, 7
        %v6730 = vsub.s32 %v6727, %v6729
        %v6731 = vrot.slane %v6723, %v6730
        %v6733 = vunpack.c.l.s4 1983009808
        %v6734 = vunpack.c.0.s8 %v6733
        %v6735 = vlaneseq
        %v6736 = vshrl.u32 %v6735, 7
        %v6737 = vsub.s32 %v6734, %v6736
        %v6738 = vrot.slane %v6724, %v6737
        %v6739 = vcombine.low %v6276, %v6278
        %v6740 = vcombine.high %v6276, %v6278
        %v6742 = vunpack.c.l.s4 1983009808
        %v6743 = vunpack.c.0.s8 %v6742
        %v6744 = vlaneseq
        %v6745 = vshrl.u32 %v6744, 7
        %v6746 = vsub.s32 %v6743, %v6745
        %v6747 = vrot.slane %v6739, %v6746
        %v6749 = vunpack.c.l.s4 1983009808
        %v6750 = vunpack.c.0.s8 %v6749
        %v6751 = vlaneseq
        %v6752 = vshrl.u32 %v6751, 7
        %v6753 = vsub.s32 %v6750, %v6752
        %v6754 = vrot.slane %v6740, %v6753
        %v6755 = vcombine.low %v6731, %v6747
        %v6756 = vcombine.high %v6731, %v6747
        %v6758 = vunpack.c.l.s4 1934713408
        %v6759 = vunpack.c.0.s8 %v6758
        %v6760 = vlaneseq
        %v6761 = vshrl.u32 %v6760, 7
        %v6762 = vsub.s32 %v6759, %v6761
        %v6763 = vrot.slane %v6755, %v6762
        %v6765 = vunpack.c.l.s4 1934713408
        %v6766 = vunpack.c.0.s8 %v6765
        %v6767 = vlaneseq
        %v6768 = vshrl.u32 %v6767, 7
        %v6769 = vsub.s32 %v6766, %v6768
        %v6770 = vrot.slane %v6756, %v6769
        %v6771 = vcombine.low %v6738, %v6754
        %v6772 = vcombine.high %v6738, %v6754
        %v6774 = vunpack.c.l.s4 1934713408
        %v6775 = vunpack.c.0.s8 %v6774
        %v6776 = vlaneseq
        %v6777 = vshrl.u32 %v6776, 7
        %v6778 = vsub.s32 %v6775, %v6777
        %v6779 = vrot.slane %v6771, %v6778
        %v6781 = vunpack.c.l.s4 1934713408
        %v6782 = vunpack.c.0.s8 %v6781
        %v6783 = vlaneseq
        %v6784 = vshrl.u32 %v6783, 7
        %v6785 = vsub.s32 %v6782, %v6784
        %v6786 = vrot.slane %v6772, %v6785
        %v6787 = vcombine.low %v6763, %v6779
        %v6788 = vcombine.high %v6763, %v6779
        %v6789 = vcombine.low %v6770, %v6786
        %v6790 = vcombine.high %v6770, %v6786
        %v6791 = vcombine.low %v6279, %v6281
        %v6792 = vcombine.high %v6279, %v6281
        %v6794 = vunpack.c.l.s4 1983009808
        %v6795 = vunpack.c.0.s8 %v6794
        %v6796 = vlaneseq
        %v6797 = vshrl.u32 %v6796, 7
        %v6798 = vsub.s32 %v6795, %v6797
        %v6799 = vrot.slane %v6791, %v6798
        %v6801 = vunpack.c.l.s4 1983009808
        %v6802 = vunpack.c.0.s8 %v6801
        %v6803 = vlaneseq
        %v6804 = vshrl.u32 %v6803, 7
        %v6805 = vsub.s32 %v6802, %v6804
        %v6806 = vrot.slane %v6792, %v6805
        %v6807 = vcombine.low %v6280, %v6282
        %v6808 = vcombine.high %v6280, %v6282
        %v6810 = vunpack.c.l.s4 1983009808
        %v6811 = vunpack.c.0.s8 %v6810
        %v6812 = vlaneseq
        %v6813 = vshrl.u32 %v6812, 7
        %v6814 = vsub.s32 %v6811, %v6813
        %v6815 = vrot.slane %v6807, %v6814
        %v6817 = vunpack.c.l.s4 1983009808
        %v6818 = vunpack.c.0.s8 %v6817
        %v6819 = vlaneseq
        %v6820 = vshrl.u32 %v6819, 7
        %v6821 = vsub.s32 %v6818, %v6820
        %v6822 = vrot.slane %v6808, %v6821
        %v6823 = vcombine.low %v6799, %v6815
        %v6824 = vcombine.high %v6799, %v6815
        %v6826 = vunpack.c.l.s4 1934713408
        %v6827 = vunpack.c.0.s8 %v6826
        %v6828 = vlaneseq
        %v6829 = vshrl.u32 %v6828, 7
        %v6830 = vsub.s32 %v6827, %v6829
        %v6831 = vrot.slane %v6823, %v6830
        %v6833 = vunpack.c.l.s4 1934713408
        %v6834 = vunpack.c.0.s8 %v6833
        %v6835 = vlaneseq
        %v6836 = vshrl.u32 %v6835, 7
        %v6837 = vsub.s32 %v6834, %v6836
        %v6838 = vrot.slane %v6824, %v6837
        %v6839 = vcombine.low %v6806, %v6822
        %v6840 = vcombine.high %v6806, %v6822
        %v6842 = vunpack.c.l.s4 1934713408
        %v6843 = vunpack.c.0.s8 %v6842
        %v6844 = vlaneseq
        %v6845 = vshrl.u32 %v6844, 7
        %v6846 = vsub.s32 %v6843, %v6845
        %v6847 = vrot.slane %v6839, %v6846
        %v6849 = vunpack.c.l.s4 1934713408
        %v6850 = vunpack.c.0.s8 %v6849
        %v6851 = vlaneseq
        %v6852 = vshrl.u32 %v6851, 7
        %v6853 = vsub.s32 %v6850, %v6852
        %v6854 = vrot.slane %v6840, %v6853
        %v6855 = vcombine.low %v6831, %v6847
        %v6856 = vcombine.high %v6831, %v6847
        %v6857 = vcombine.low %v6838, %v6854
        %v6858 = vcombine.high %v6838, %v6854
        %v6859 = vcombine.low %v6283, %v6285
        %v6860 = vcombine.high %v6283, %v6285
        %v6862 = vunpack.c.l.s4 1983009808
        %v6863 = vunpack.c.0.s8 %v6862
        %v6864 = vlaneseq
        %v6865 = vshrl.u32 %v6864, 7
        %v6866 = vsub.s32 %v6863, %v6865
        %v6867 = vrot.slane %v6859, %v6866
        %v6869 = vunpack.c.l.s4 1983009808
        %v6870 = vunpack.c.0.s8 %v6869
        %v6871 = vlaneseq
        %v6872 = vshrl.u32 %v6871, 7
        %v6873 = vsub.s32 %v6870, %v6872
        %v6874 = vrot.slane %v6860, %v6873
        %v6875 = vcombine.low %v6284, %v6286
        %v6876 = vcombine.high %v6284, %v6286
        %v6878 = vunpack.c.l.s4 1983009808
        %v6879 = vunpack.c.0.s8 %v6878
        %v6880 = vlaneseq
        %v6881 = vshrl.u32 %v6880, 7
        %v6882 = vsub.s32 %v6879, %v6881
        %v6883 = vrot.slane %v6875, %v6882
        %v6885 = vunpack.c.l.s4 1983009808
        %v6886 = vunpack.c.0.s8 %v6885
        %v6887 = vlaneseq
        %v6888 = vshrl.u32 %v6887, 7
        %v6889 = vsub.s32 %v6886, %v6888
        %v6890 = vrot.slane %v6876, %v6889
        %v6891 = vcombine.low %v6867, %v6883
        %v6892 = vcombine.high %v6867, %v6883
        %v6894 = vunpack.c.l.s4 1934713408
        %v6895 = vunpack.c.0.s8 %v6894
        %v6896 = vlaneseq
        %v6897 = vshrl.u32 %v6896, 7
        %v6898 = vsub.s32 %v6895, %v6897
        %v6899 = vrot.slane %v6891, %v6898
        %v6901 = vunpack.c.l.s4 1934713408
        %v6902 = vunpack.c.0.s8 %v6901
        %v6903 = vlaneseq
        %v6904 = vshrl.u32 %v6903, 7
        %v6905 = vsub.s32 %v6902, %v6904
        %v6906 = vrot.slane %v6892, %v6905
        %v6907 = vcombine.low %v6874, %v6890
        %v6908 = vcombine.high %v6874, %v6890
        %v6910 = vunpack.c.l.s4 1934713408
        %v6911 = vunpack.c.0.s8 %v6910
        %v6912 = vlaneseq
        %v6913 = vshrl.u32 %v6912, 7
        %v6914 = vsub.s32 %v6911, %v6913
        %v6915 = vrot.slane %v6907, %v6914
        %v6917 = vunpack.c.l.s4 1934713408
        %v6918 = vunpack.c.0.s8 %v6917
        %v6919 = vlaneseq
        %v6920 = vshrl.u32 %v6919, 7
        %v6921 = vsub.s32 %v6918, %v6920
        %v6922 = vrot.slane %v6908, %v6921
        %v6923 = vcombine.low %v6899, %v6915
        %v6924 = vcombine.high %v6899, %v6915
        %v6925 = vcombine.low %v6906, %v6922
        %v6926 = vcombine.high %v6906, %v6922
        %v6927 = vcombine.low %v6287, %v6289
        %v6928 = vcombine.high %v6287, %v6289
        %v6930 = vunpack.c.l.s4 1983009808
        %v6931 = vunpack.c.0.s8 %v6930
        %v6932 = vlaneseq
        %v6933 = vshrl.u32 %v6932, 7
        %v6934 = vsub.s32 %v6931, %v6933
        %v6935 = vrot.slane %v6927, %v6934
        %v6937 = vunpack.c.l.s4 1983009808
        %v6938 = vunpack.c.0.s8 %v6937
        %v6939 = vlaneseq
        %v6940 = vshrl.u32 %v6939, 7
        %v6941 = vsub.s32 %v6938, %v6940
        %v6942 = vrot.slane %v6928, %v6941
        %v6943 = vcombine.low %v6288, %v6290
        %v6944 = vcombine.high %v6288, %v6290
        %v6946 = vunpack.c.l.s4 1983009808
        %v6947 = vunpack.c.0.s8 %v6946
        %v6948 = vlaneseq
        %v6949 = vshrl.u32 %v6948, 7
        %v6950 = vsub.s32 %v6947, %v6949
        %v6951 = vrot.slane %v6943, %v6950
        %v6953 = vunpack.c.l.s4 1983009808
        %v6954 = vunpack.c.0.s8 %v6953
        %v6955 = vlaneseq
        %v6956 = vshrl.u32 %v6955, 7
        %v6957 = vsub.s32 %v6954, %v6956
        %v6958 = vrot.slane %v6944, %v6957
        %v6959 = vcombine.low %v6935, %v6951
        %v6960 = vcombine.high %v6935, %v6951
        %v6962 = vunpack.c.l.s4 1934713408
        %v6963 = vunpack.c.0.s8 %v6962
        %v6964 = vlaneseq
        %v6965 = vshrl.u32 %v6964, 7
        %v6966 = vsub.s32 %v6963, %v6965
        %v6967 = vrot.slane %v6959, %v6966
        %v6969 = vunpack.c.l.s4 1934713408
        %v6970 = vunpack.c.0.s8 %v6969
        %v6971 = vlaneseq
        %v6972 = vshrl.u32 %v6971, 7
        %v6973 = vsub.s32 %v6970, %v6972
        %v6974 = vrot.slane %v6960, %v6973
        %v6975 = vcombine.low %v6942, %v6958
        %v6976 = vcombine.high %v6942, %v6958
        %v6978 = vunpack.c.l.s4 1934713408
        %v6979 = vunpack.c.0.s8 %v6978
        %v6980 = vlaneseq
        %v6981 = vshrl.u32 %v6980, 7
        %v6982 = vsub.s32 %v6979, %v6981
        %v6983 = vrot.slane %v6975, %v6982
        %v6985 = vunpack.c.l.s4 1934713408
        %v6986 = vunpack.c.0.s8 %v6985
        %v6987 = vlaneseq
        %v6988 = vshrl.u32 %v6987, 7
        %v6989 = vsub.s32 %v6986, %v6988
        %v6990 = vrot.slane %v6976, %v6989
        %v6991 = vcombine.low %v6967, %v6983
        %v6992 = vcombine.high %v6967, %v6983
        %v6993 = vcombine.low %v6974, %v6990
        %v6994 = vcombine.high %v6974, %v6990
        %v6995 = vcombine.low %v6291, %v6293
        %v6996 = vcombine.high %v6291, %v6293
        %v6998 = vunpack.c.l.s4 1983009808
        %v6999 = vunpack.c.0.s8 %v6998
        %v7000 = vlaneseq
        %v7001 = vshrl.u32 %v7000, 7
        %v7002 = vsub.s32 %v6999, %v7001
        %v7003 = vrot.slane %v6995, %v7002
        %v7005 = vunpack.c.l.s4 1983009808
        %v7006 = vunpack.c.0.s8 %v7005
        %v7007 = vlaneseq
        %v7008 = vshrl.u32 %v7007, 7
        %v7009 = vsub.s32 %v7006, %v7008
        %v7010 = vrot.slane %v6996, %v7009
        %v7011 = vcombine.low %v6292, %v6294
        %v7012 = vcombine.high %v6292, %v6294
        %v7014 = vunpack.c.l.s4 1983009808
        %v7015 = vunpack.c.0.s8 %v7014
        %v7016 = vlaneseq
        %v7017 = vshrl.u32 %v7016, 7
        %v7018 = vsub.s32 %v7015, %v7017
        %v7019 = vrot.slane %v7011, %v7018
        %v7021 = vunpack.c.l.s4 1983009808
        %v7022 = vunpack.c.0.s8 %v7021
        %v7023 = vlaneseq
        %v7024 = vshrl.u32 %v7023, 7
        %v7025 = vsub.s32 %v7022, %v7024
        %v7026 = vrot.slane %v7012, %v7025
        %v7027 = vcombine.low %v7003, %v7019
        %v7028 = vcombine.high %v7003, %v7019
        %v7030 = vunpack.c.l.s4 1934713408
        %v7031 = vunpack.c.0.s8 %v7030
        %v7032 = vlaneseq
        %v7033 = vshrl.u32 %v7032, 7
        %v7034 = vsub.s32 %v7031, %v7033
        %v7035 = vrot.slane %v7027, %v7034
        %v7037 = vunpack.c.l.s4 1934713408
        %v7038 = vunpack.c.0.s8 %v7037
        %v7039 = vlaneseq
        %v7040 = vshrl.u32 %v7039, 7
        %v7041 = vsub.s32 %v7038, %v7040
        %v7042 = vrot.slane %v7028, %v7041
        %v7043 = vcombine.low %v7010, %v7026
        %v7044 = vcombine.high %v7010, %v7026
        %v7046 = vunpack.c.l.s4 1934713408
        %v7047 = vunpack.c.0.s8 %v7046
        %v7048 = vlaneseq
        %v7049 = vshrl.u32 %v7048, 7
        %v7050 = vsub.s32 %v7047, %v7049
        %v7051 = vrot.slane %v7043, %v7050
        %v7053 = vunpack.c.l.s4 1934713408
        %v7054 = vunpack.c.0.s8 %v7053
        %v7055 = vlaneseq
        %v7056 = vshrl.u32 %v7055, 7
        %v7057 = vsub.s32 %v7054, %v7056
        %v7058 = vrot.slane %v7044, %v7057
        %v7059 = vcombine.low %v7035, %v7051
        %v7060 = vcombine.high %v7035, %v7051
        %v7061 = vcombine.low %v7042, %v7058
        %v7062 = vcombine.high %v7042, %v7058
        %v7063 = vcombine.low %v6295, %v6297
        %v7064 = vcombine.high %v6295, %v6297
        %v7066 = vunpack.c.l.s4 1983009808
        %v7067 = vunpack.c.0.s8 %v7066
        %v7068 = vlaneseq
        %v7069 = vshrl.u32 %v7068, 7
        %v7070 = vsub.s32 %v7067, %v7069
        %v7071 = vrot.slane %v7063, %v7070
        %v7073 = vunpack.c.l.s4 1983009808
        %v7074 = vunpack.c.0.s8 %v7073
        %v7075 = vlaneseq
        %v7076 = vshrl.u32 %v7075, 7
        %v7077 = vsub.s32 %v7074, %v7076
        %v7078 = vrot.slane %v7064, %v7077
        %v7079 = vcombine.low %v6296, %v6298
        %v7080 = vcombine.high %v6296, %v6298
        %v7082 = vunpack.c.l.s4 1983009808
        %v7083 = vunpack.c.0.s8 %v7082
        %v7084 = vlaneseq
        %v7085 = vshrl.u32 %v7084, 7
        %v7086 = vsub.s32 %v7083, %v7085
        %v7087 = vrot.slane %v7079, %v7086
        %v7089 = vunpack.c.l.s4 1983009808
        %v7090 = vunpack.c.0.s8 %v7089
        %v7091 = vlaneseq
        %v7092 = vshrl.u32 %v7091, 7
        %v7093 = vsub.s32 %v7090, %v7092
        %v7094 = vrot.slane %v7080, %v7093
        %v7095 = vcombine.low %v7071, %v7087
        %v7096 = vcombine.high %v7071, %v7087
        %v7098 = vunpack.c.l.s4 1934713408
        %v7099 = vunpack.c.0.s8 %v7098
        %v7100 = vlaneseq
        %v7101 = vshrl.u32 %v7100, 7
        %v7102 = vsub.s32 %v7099, %v7101
        %v7103 = vrot.slane %v7095, %v7102
        %v7105 = vunpack.c.l.s4 1934713408
        %v7106 = vunpack.c.0.s8 %v7105
        %v7107 = vlaneseq
        %v7108 = vshrl.u32 %v7107, 7
        %v7109 = vsub.s32 %v7106, %v7108
        %v7110 = vrot.slane %v7096, %v7109
        %v7111 = vcombine.low %v7078, %v7094
        %v7112 = vcombine.high %v7078, %v7094
        %v7114 = vunpack.c.l.s4 1934713408
        %v7115 = vunpack.c.0.s8 %v7114
        %v7116 = vlaneseq
        %v7117 = vshrl.u32 %v7116, 7
        %v7118 = vsub.s32 %v7115, %v7117
        %v7119 = vrot.slane %v7111, %v7118
        %v7121 = vunpack.c.l.s4 1934713408
        %v7122 = vunpack.c.0.s8 %v7121
        %v7123 = vlaneseq
        %v7124 = vshrl.u32 %v7123, 7
        %v7125 = vsub.s32 %v7122, %v7124
        %v7126 = vrot.slane %v7112, %v7125
        %v7127 = vcombine.low %v7103, %v7119
        %v7128 = vcombine.high %v7103, %v7119
        %v7129 = vcombine.low %v7110, %v7126
        %v7130 = vcombine.high %v7110, %v7126
        %v7131 = vcombine.low %v6299, %v6301
        %v7132 = vcombine.high %v6299, %v6301
        %v7134 = vunpack.c.l.s4 1983009808
        %v7135 = vunpack.c.0.s8 %v7134
        %v7136 = vlaneseq
        %v7137 = vshrl.u32 %v7136, 7
        %v7138 = vsub.s32 %v7135, %v7137
        %v7139 = vrot.slane %v7131, %v7138
        %v7141 = vunpack.c.l.s4 1983009808
        %v7142 = vunpack.c.0.s8 %v7141
        %v7143 = vlaneseq
        %v7144 = vshrl.u32 %v7143, 7
        %v7145 = vsub.s32 %v7142, %v7144
        %v7146 = vrot.slane %v7132, %v7145
        %v7147 = vcombine.low %v6300, %v6302
        %v7148 = vcombine.high %v6300, %v6302
        %v7150 = vunpack.c.l.s4 1983009808
        %v7151 = vunpack.c.0.s8 %v7150
        %v7152 = vlaneseq
        %v7153 = vshrl.u32 %v7152, 7
        %v7154 = vsub.s32 %v7151, %v7153
        %v7155 = vrot.slane %v7147, %v7154
        %v7157 = vunpack.c.l.s4 1983009808
        %v7158 = vunpack.c.0.s8 %v7157
        %v7159 = vlaneseq
        %v7160 = vshrl.u32 %v7159, 7
        %v7161 = vsub.s32 %v7158, %v7160
        %v7162 = vrot.slane %v7148, %v7161
        %v7163 = vcombine.low %v7139, %v7155
        %v7164 = vcombine.high %v7139, %v7155
        %v7166 = vunpack.c.l.s4 1934713408
        %v7167 = vunpack.c.0.s8 %v7166
        %v7168 = vlaneseq
        %v7169 = vshrl.u32 %v7168, 7
        %v7170 = vsub.s32 %v7167, %v7169
        %v7171 = vrot.slane %v7163, %v7170
        %v7173 = vunpack.c.l.s4 1934713408
        %v7174 = vunpack.c.0.s8 %v7173
        %v7175 = vlaneseq
        %v7176 = vshrl.u32 %v7175, 7
        %v7177 = vsub.s32 %v7174, %v7176
        %v7178 = vrot.slane %v7164, %v7177
        %v7179 = vcombine.low %v7146, %v7162
        %v7180 = vcombine.high %v7146, %v7162
        %v7182 = vunpack.c.l.s4 1934713408
        %v7183 = vunpack.c.0.s8 %v7182
        %v7184 = vlaneseq
        %v7185 = vshrl.u32 %v7184, 7
        %v7186 = vsub.s32 %v7183, %v7185
        %v7187 = vrot.slane %v7179, %v7186
        %v7189 = vunpack.c.l.s4 1934713408
        %v7190 = vunpack.c.0.s8 %v7189
        %v7191 = vlaneseq
        %v7192 = vshrl.u32 %v7191, 7
        %v7193 = vsub.s32 %v7190, %v7192
        %v7194 = vrot.slane %v7180, %v7193
        %v7195 = vcombine.low %v7171, %v7187
        %v7196 = vcombine.high %v7171, %v7187
        %v7197 = vcombine.low %v7178, %v7194
        %v7198 = vcombine.high %v7178, %v7194
        %v7199 = vcombine.low %v6303, %v6305
        %v7200 = vcombine.high %v6303, %v6305
        %v7202 = vunpack.c.l.s4 1983009808
        %v7203 = vunpack.c.0.s8 %v7202
        %v7204 = vlaneseq
        %v7205 = vshrl.u32 %v7204, 7
        %v7206 = vsub.s32 %v7203, %v7205
        %v7207 = vrot.slane %v7199, %v7206
        %v7209 = vunpack.c.l.s4 1983009808
        %v7210 = vunpack.c.0.s8 %v7209
        %v7211 = vlaneseq
        %v7212 = vshrl.u32 %v7211, 7
        %v7213 = vsub.s32 %v7210, %v7212
        %v7214 = vrot.slane %v7200, %v7213
        %v7215 = vcombine.low %v6304, %v6306
        %v7216 = vcombine.high %v6304, %v6306
        %v7218 = vunpack.c.l.s4 1983009808
        %v7219 = vunpack.c.0.s8 %v7218
        %v7220 = vlaneseq
        %v7221 = vshrl.u32 %v7220, 7
        %v7222 = vsub.s32 %v7219, %v7221
        %v7223 = vrot.slane %v7215, %v7222
        %v7225 = vunpack.c.l.s4 1983009808
        %v7226 = vunpack.c.0.s8 %v7225
        %v7227 = vlaneseq
        %v7228 = vshrl.u32 %v7227, 7
        %v7229 = vsub.s32 %v7226, %v7228
        %v7230 = vrot.slane %v7216, %v7229
        %v7231 = vcombine.low %v7207, %v7223
        %v7232 = vcombine.high %v7207, %v7223
        %v7234 = vunpack.c.l.s4 1934713408
        %v7235 = vunpack.c.0.s8 %v7234
        %v7236 = vlaneseq
        %v7237 = vshrl.u32 %v7236, 7
        %v7238 = vsub.s32 %v7235, %v7237
        %v7239 = vrot.slane %v7231, %v7238
        %v7241 = vunpack.c.l.s4 1934713408
        %v7242 = vunpack.c.0.s8 %v7241
        %v7243 = vlaneseq
        %v7244 = vshrl.u32 %v7243, 7
        %v7245 = vsub.s32 %v7242, %v7244
        %v7246 = vrot.slane %v7232, %v7245
        %v7247 = vcombine.low %v7214, %v7230
        %v7248 = vcombine.high %v7214, %v7230
        %v7250 = vunpack.c.l.s4 1934713408
        %v7251 = vunpack.c.0.s8 %v7250
        %v7252 = vlaneseq
        %v7253 = vshrl.u32 %v7252, 7
        %v7254 = vsub.s32 %v7251, %v7253
        %v7255 = vrot.slane %v7247, %v7254
        %v7257 = vunpack.c.l.s4 1934713408
        %v7258 = vunpack.c.0.s8 %v7257
        %v7259 = vlaneseq
        %v7260 = vshrl.u32 %v7259, 7
        %v7261 = vsub.s32 %v7258, %v7260
        %v7262 = vrot.slane %v7248, %v7261
        %v7263 = vcombine.low %v7239, %v7255
        %v7264 = vcombine.high %v7239, %v7255
        %v7265 = vcombine.low %v7246, %v7262
        %v7266 = vcombine.high %v7246, %v7262
        %v7267 = vcombine.low %v6307, %v6309
        %v7268 = vcombine.high %v6307, %v6309
        %v7270 = vunpack.c.l.s4 1983009808
        %v7271 = vunpack.c.0.s8 %v7270
        %v7272 = vlaneseq
        %v7273 = vshrl.u32 %v7272, 7
        %v7274 = vsub.s32 %v7271, %v7273
        %v7275 = vrot.slane %v7267, %v7274
        %v7277 = vunpack.c.l.s4 1983009808
        %v7278 = vunpack.c.0.s8 %v7277
        %v7279 = vlaneseq
        %v7280 = vshrl.u32 %v7279, 7
        %v7281 = vsub.s32 %v7278, %v7280
        %v7282 = vrot.slane %v7268, %v7281
        %v7283 = vcombine.low %v6308, %v6310
        %v7284 = vcombine.high %v6308, %v6310
        %v7286 = vunpack.c.l.s4 1983009808
        %v7287 = vunpack.c.0.s8 %v7286
        %v7288 = vlaneseq
        %v7289 = vshrl.u32 %v7288, 7
        %v7290 = vsub.s32 %v7287, %v7289
        %v7291 = vrot.slane %v7283, %v7290
        %v7293 = vunpack.c.l.s4 1983009808
        %v7294 = vunpack.c.0.s8 %v7293
        %v7295 = vlaneseq
        %v7296 = vshrl.u32 %v7295, 7
        %v7297 = vsub.s32 %v7294, %v7296
        %v7298 = vrot.slane %v7284, %v7297
        %v7299 = vcombine.low %v7275, %v7291
        %v7300 = vcombine.high %v7275, %v7291
        %v7302 = vunpack.c.l.s4 1934713408
        %v7303 = vunpack.c.0.s8 %v7302
        %v7304 = vlaneseq
        %v7305 = vshrl.u32 %v7304, 7
        %v7306 = vsub.s32 %v7303, %v7305
        %v7307 = vrot.slane %v7299, %v7306
        %v7309 = vunpack.c.l.s4 1934713408
        %v7310 = vunpack.c.0.s8 %v7309
        %v7311 = vlaneseq
        %v7312 = vshrl.u32 %v7311, 7
        %v7313 = vsub.s32 %v7310, %v7312
        %v7314 = vrot.slane %v7300, %v7313
        %v7315 = vcombine.low %v7282, %v7298
        %v7316 = vcombine.high %v7282, %v7298
        %v7318 = vunpack.c.l.s4 1934713408
        %v7319 = vunpack.c.0.s8 %v7318
        %v7320 = vlaneseq
        %v7321 = vshrl.u32 %v7320, 7
        %v7322 = vsub.s32 %v7319, %v7321
        %v7323 = vrot.slane %v7315, %v7322
        %v7325 = vunpack.c.l.s4 1934713408
        %v7326 = vunpack.c.0.s8 %v7325
        %v7327 = vlaneseq
        %v7328 = vshrl.u32 %v7327, 7
        %v7329 = vsub.s32 %v7326, %v7328
        %v7330 = vrot.slane %v7316, %v7329
        %v7331 = vcombine.low %v7307, %v7323
        %v7332 = vcombine.high %v7307, %v7323
        %v7333 = vcombine.low %v7314, %v7330
        %v7334 = vcombine.high %v7314, %v7330
        %v7335 = vcombine.low %v6311, %v6313
        %v7336 = vcombine.high %v6311, %v6313
        %v7338 = vunpack.c.l.s4 1983009808
        %v7339 = vunpack.c.0.s8 %v7338
        %v7340 = vlaneseq
        %v7341 = vshrl.u32 %v7340, 7
        %v7342 = vsub.s32 %v7339, %v7341
        %v7343 = vrot.slane %v7335, %v7342
        %v7345 = vunpack.c.l.s4 1983009808
        %v7346 = vunpack.c.0.s8 %v7345
        %v7347 = vlaneseq
        %v7348 = vshrl.u32 %v7347, 7
        %v7349 = vsub.s32 %v7346, %v7348
        %v7350 = vrot.slane %v7336, %v7349
        %v7351 = vcombine.low %v6312, %v6314
        %v7352 = vcombine.high %v6312, %v6314
        %v7354 = vunpack.c.l.s4 1983009808
        %v7355 = vunpack.c.0.s8 %v7354
        %v7356 = vlaneseq
        %v7357 = vshrl.u32 %v7356, 7
        %v7358 = vsub.s32 %v7355, %v7357
        %v7359 = vrot.slane %v7351, %v7358
        %v7361 = vunpack.c.l.s4 1983009808
        %v7362 = vunpack.c.0.s8 %v7361
        %v7363 = vlaneseq
        %v7364 = vshrl.u32 %v7363, 7
        %v7365 = vsub.s32 %v7362, %v7364
        %v7366 = vrot.slane %v7352, %v7365
        %v7367 = vcombine.low %v7343, %v7359
        %v7368 = vcombine.high %v7343, %v7359
        %v7370 = vunpack.c.l.s4 1934713408
        %v7371 = vunpack.c.0.s8 %v7370
        %v7372 = vlaneseq
        %v7373 = vshrl.u32 %v7372, 7
        %v7374 = vsub.s32 %v7371, %v7373
        %v7375 = vrot.slane %v7367, %v7374
        %v7377 = vunpack.c.l.s4 1934713408
        %v7378 = vunpack.c.0.s8 %v7377
        %v7379 = vlaneseq
        %v7380 = vshrl.u32 %v7379, 7
        %v7381 = vsub.s32 %v7378, %v7380
        %v7382 = vrot.slane %v7368, %v7381
        %v7383 = vcombine.low %v7350, %v7366
        %v7384 = vcombine.high %v7350, %v7366
        %v7386 = vunpack.c.l.s4 1934713408
        %v7387 = vunpack.c.0.s8 %v7386
        %v7388 = vlaneseq
        %v7389 = vshrl.u32 %v7388, 7
        %v7390 = vsub.s32 %v7387, %v7389
        %v7391 = vrot.slane %v7383, %v7390
        %v7393 = vunpack.c.l.s4 1934713408
        %v7394 = vunpack.c.0.s8 %v7393
        %v7395 = vlaneseq
        %v7396 = vshrl.u32 %v7395, 7
        %v7397 = vsub.s32 %v7394, %v7396
        %v7398 = vrot.slane %v7384, %v7397
        %v7399 = vcombine.low %v7375, %v7391
        %v7400 = vcombine.high %v7375, %v7391
        %v7401 = vcombine.low %v7382, %v7398
        %v7402 = vcombine.high %v7382, %v7398
        %v7403 = vcombine.low %v6315, %v6317
        %v7404 = vcombine.high %v6315, %v6317
        %v7406 = vunpack.c.l.s4 1983009808
        %v7407 = vunpack.c.0.s8 %v7406
        %v7408 = vlaneseq
        %v7409 = vshrl.u32 %v7408, 7
        %v7410 = vsub.s32 %v7407, %v7409
        %v7411 = vrot.slane %v7403, %v7410
        %v7413 = vunpack.c.l.s4 1983009808
        %v7414 = vunpack.c.0.s8 %v7413
        %v7415 = vlaneseq
        %v7416 = vshrl.u32 %v7415, 7
        %v7417 = vsub.s32 %v7414, %v7416
        %v7418 = vrot.slane %v7404, %v7417
        %v7419 = vcombine.low %v6316, %v6318
        %v7420 = vcombine.high %v6316, %v6318
        %v7422 = vunpack.c.l.s4 1983009808
        %v7423 = vunpack.c.0.s8 %v7422
        %v7424 = vlaneseq
        %v7425 = vshrl.u32 %v7424, 7
        %v7426 = vsub.s32 %v7423, %v7425
        %v7427 = vrot.slane %v7419, %v7426
        %v7429 = vunpack.c.l.s4 1983009808
        %v7430 = vunpack.c.0.s8 %v7429
        %v7431 = vlaneseq
        %v7432 = vshrl.u32 %v7431, 7
        %v7433 = vsub.s32 %v7430, %v7432
        %v7434 = vrot.slane %v7420, %v7433
        %v7435 = vcombine.low %v7411, %v7427
        %v7436 = vcombine.high %v7411, %v7427
        %v7438 = vunpack.c.l.s4 1934713408
        %v7439 = vunpack.c.0.s8 %v7438
        %v7440 = vlaneseq
        %v7441 = vshrl.u32 %v7440, 7
        %v7442 = vsub.s32 %v7439, %v7441
        %v7443 = vrot.slane %v7435, %v7442
        %v7445 = vunpack.c.l.s4 1934713408
        %v7446 = vunpack.c.0.s8 %v7445
        %v7447 = vlaneseq
        %v7448 = vshrl.u32 %v7447, 7
        %v7449 = vsub.s32 %v7446, %v7448
        %v7450 = vrot.slane %v7436, %v7449
        %v7451 = vcombine.low %v7418, %v7434
        %v7452 = vcombine.high %v7418, %v7434
        %v7454 = vunpack.c.l.s4 1934713408
        %v7455 = vunpack.c.0.s8 %v7454
        %v7456 = vlaneseq
        %v7457 = vshrl.u32 %v7456, 7
        %v7458 = vsub.s32 %v7455, %v7457
        %v7459 = vrot.slane %v7451, %v7458
        %v7461 = vunpack.c.l.s4 1934713408
        %v7462 = vunpack.c.0.s8 %v7461
        %v7463 = vlaneseq
        %v7464 = vshrl.u32 %v7463, 7
        %v7465 = vsub.s32 %v7462, %v7464
        %v7466 = vrot.slane %v7452, %v7465
        %v7467 = vcombine.low %v7443, %v7459
        %v7468 = vcombine.high %v7443, %v7459
        %v7469 = vcombine.low %v7450, %v7466
        %v7470 = vcombine.high %v7450, %v7466
        %v7471 = vcombine.low %v6319, %v6321
        %v7472 = vcombine.high %v6319, %v6321
        %v7474 = vunpack.c.l.s4 1983009808
        %v7475 = vunpack.c.0.s8 %v7474
        %v7476 = vlaneseq
        %v7477 = vshrl.u32 %v7476, 7
        %v7478 = vsub.s32 %v7475, %v7477
        %v7479 = vrot.slane %v7471, %v7478
        %v7481 = vunpack.c.l.s4 1983009808
        %v7482 = vunpack.c.0.s8 %v7481
        %v7483 = vlaneseq
        %v7484 = vshrl.u32 %v7483, 7
        %v7485 = vsub.s32 %v7482, %v7484
        %v7486 = vrot.slane %v7472, %v7485
        %v7487 = vcombine.low %v6320, %v6322
        %v7488 = vcombine.high %v6320, %v6322
        %v7490 = vunpack.c.l.s4 1983009808
        %v7491 = vunpack.c.0.s8 %v7490
        %v7492 = vlaneseq
        %v7493 = vshrl.u32 %v7492, 7
        %v7494 = vsub.s32 %v7491, %v7493
        %v7495 = vrot.slane %v7487, %v7494
        %v7497 = vunpack.c.l.s4 1983009808
        %v7498 = vunpack.c.0.s8 %v7497
        %v7499 = vlaneseq
        %v7500 = vshrl.u32 %v7499, 7
        %v7501 = vsub.s32 %v7498, %v7500
        %v7502 = vrot.slane %v7488, %v7501
        %v7503 = vcombine.low %v7479, %v7495
        %v7504 = vcombine.high %v7479, %v7495
        %v7506 = vunpack.c.l.s4 1934713408
        %v7507 = vunpack.c.0.s8 %v7506
        %v7508 = vlaneseq
        %v7509 = vshrl.u32 %v7508, 7
        %v7510 = vsub.s32 %v7507, %v7509
        %v7511 = vrot.slane %v7503, %v7510
        %v7513 = vunpack.c.l.s4 1934713408
        %v7514 = vunpack.c.0.s8 %v7513
        %v7515 = vlaneseq
        %v7516 = vshrl.u32 %v7515, 7
        %v7517 = vsub.s32 %v7514, %v7516
        %v7518 = vrot.slane %v7504, %v7517
        %v7519 = vcombine.low %v7486, %v7502
        %v7520 = vcombine.high %v7486, %v7502
        %v7522 = vunpack.c.l.s4 1934713408
        %v7523 = vunpack.c.0.s8 %v7522
        %v7524 = vlaneseq
        %v7525 = vshrl.u32 %v7524, 7
        %v7526 = vsub.s32 %v7523, %v7525
        %v7527 = vrot.slane %v7519, %v7526
        %v7529 = vunpack.c.l.s4 1934713408
        %v7530 = vunpack.c.0.s8 %v7529
        %v7531 = vlaneseq
        %v7532 = vshrl.u32 %v7531, 7
        %v7533 = vsub.s32 %v7530, %v7532
        %v7534 = vrot.slane %v7520, %v7533
        %v7535 = vcombine.low %v7511, %v7527
        %v7536 = vcombine.high %v7511, %v7527
        %v7537 = vcombine.low %v7518, %v7534
        %v7538 = vcombine.high %v7518, %v7534
        %v7539 = vcombine.low %v6323, %v6325
        %v7540 = vcombine.high %v6323, %v6325
        %v7542 = vunpack.c.l.s4 1983009808
        %v7543 = vunpack.c.0.s8 %v7542
        %v7544 = vlaneseq
        %v7545 = vshrl.u32 %v7544, 7
        %v7546 = vsub.s32 %v7543, %v7545
        %v7547 = vrot.slane %v7539, %v7546
        %v7549 = vunpack.c.l.s4 1983009808
        %v7550 = vunpack.c.0.s8 %v7549
        %v7551 = vlaneseq
        %v7552 = vshrl.u32 %v7551, 7
        %v7553 = vsub.s32 %v7550, %v7552
        %v7554 = vrot.slane %v7540, %v7553
        %v7555 = vcombine.low %v6324, %v6326
        %v7556 = vcombine.high %v6324, %v6326
        %v7558 = vunpack.c.l.s4 1983009808
        %v7559 = vunpack.c.0.s8 %v7558
        %v7560 = vlaneseq
        %v7561 = vshrl.u32 %v7560, 7
        %v7562 = vsub.s32 %v7559, %v7561
        %v7563 = vrot.slane %v7555, %v7562
        %v7565 = vunpack.c.l.s4 1983009808
        %v7566 = vunpack.c.0.s8 %v7565
        %v7567 = vlaneseq
        %v7568 = vshrl.u32 %v7567, 7
        %v7569 = vsub.s32 %v7566, %v7568
        %v7570 = vrot.slane %v7556, %v7569
        %v7571 = vcombine.low %v7547, %v7563
        %v7572 = vcombine.high %v7547, %v7563
        %v7574 = vunpack.c.l.s4 1934713408
        %v7575 = vunpack.c.0.s8 %v7574
        %v7576 = vlaneseq
        %v7577 = vshrl.u32 %v7576, 7
        %v7578 = vsub.s32 %v7575, %v7577
        %v7579 = vrot.slane %v7571, %v7578
        %v7581 = vunpack.c.l.s4 1934713408
        %v7582 = vunpack.c.0.s8 %v7581
        %v7583 = vlaneseq
        %v7584 = vshrl.u32 %v7583, 7
        %v7585 = vsub.s32 %v7582, %v7584
        %v7586 = vrot.slane %v7572, %v7585
        %v7587 = vcombine.low %v7554, %v7570
        %v7588 = vcombine.high %v7554, %v7570
        %v7590 = vunpack.c.l.s4 1934713408
        %v7591 = vunpack.c.0.s8 %v7590
        %v7592 = vlaneseq
        %v7593 = vshrl.u32 %v7592, 7
        %v7594 = vsub.s32 %v7591, %v7593
        %v7595 = vrot.slane %v7587, %v7594
        %v7597 = vunpack.c.l.s4 1934713408
        %v7598 = vunpack.c.0.s8 %v7597
        %v7599 = vlaneseq
        %v7600 = vshrl.u32 %v7599, 7
        %v7601 = vsub.s32 %v7598, %v7600
        %v7602 = vrot.slane %v7588, %v7601
        %v7603 = vcombine.low %v7579, %v7595
        %v7604 = vcombine.high %v7579, %v7595
        %v7605 = vcombine.low %v7586, %v7602
        %v7606 = vcombine.high %v7586, %v7602
        %v7607 = vcombine.low %v6327, %v6329
        %v7608 = vcombine.high %v6327, %v6329
        %v7610 = vunpack.c.l.s4 1983009808
        %v7611 = vunpack.c.0.s8 %v7610
        %v7612 = vlaneseq
        %v7613 = vshrl.u32 %v7612, 7
        %v7614 = vsub.s32 %v7611, %v7613
        %v7615 = vrot.slane %v7607, %v7614
        %v7617 = vunpack.c.l.s4 1983009808
        %v7618 = vunpack.c.0.s8 %v7617
        %v7619 = vlaneseq
        %v7620 = vshrl.u32 %v7619, 7
        %v7621 = vsub.s32 %v7618, %v7620
        %v7622 = vrot.slane %v7608, %v7621
        %v7623 = vcombine.low %v6328, %v6330
        %v7624 = vcombine.high %v6328, %v6330
        %v7626 = vunpack.c.l.s4 1983009808
        %v7627 = vunpack.c.0.s8 %v7626
        %v7628 = vlaneseq
        %v7629 = vshrl.u32 %v7628, 7
        %v7630 = vsub.s32 %v7627, %v7629
        %v7631 = vrot.slane %v7623, %v7630
        %v7633 = vunpack.c.l.s4 1983009808
        %v7634 = vunpack.c.0.s8 %v7633
        %v7635 = vlaneseq
        %v7636 = vshrl.u32 %v7635, 7
        %v7637 = vsub.s32 %v7634, %v7636
        %v7638 = vrot.slane %v7624, %v7637
        %v7639 = vcombine.low %v7615, %v7631
        %v7640 = vcombine.high %v7615, %v7631
        %v7642 = vunpack.c.l.s4 1934713408
        %v7643 = vunpack.c.0.s8 %v7642
        %v7644 = vlaneseq
        %v7645 = vshrl.u32 %v7644, 7
        %v7646 = vsub.s32 %v7643, %v7645
        %v7647 = vrot.slane %v7639, %v7646
        %v7649 = vunpack.c.l.s4 1934713408
        %v7650 = vunpack.c.0.s8 %v7649
        %v7651 = vlaneseq
        %v7652 = vshrl.u32 %v7651, 7
        %v7653 = vsub.s32 %v7650, %v7652
        %v7654 = vrot.slane %v7640, %v7653
        %v7655 = vcombine.low %v7622, %v7638
        %v7656 = vcombine.high %v7622, %v7638
        %v7658 = vunpack.c.l.s4 1934713408
        %v7659 = vunpack.c.0.s8 %v7658
        %v7660 = vlaneseq
        %v7661 = vshrl.u32 %v7660, 7
        %v7662 = vsub.s32 %v7659, %v7661
        %v7663 = vrot.slane %v7655, %v7662
        %v7665 = vunpack.c.l.s4 1934713408
        %v7666 = vunpack.c.0.s8 %v7665
        %v7667 = vlaneseq
        %v7668 = vshrl.u32 %v7667, 7
        %v7669 = vsub.s32 %v7666, %v7668
        %v7670 = vrot.slane %v7656, %v7669
        %v7671 = vcombine.low %v7647, %v7663
        %v7672 = vcombine.high %v7647, %v7663
        %v7673 = vcombine.low %v7654, %v7670
        %v7674 = vcombine.high %v7654, %v7670
        %v7675 = vcombine.low %v6331, %v6333
        %v7676 = vcombine.high %v6331, %v6333
        %v7678 = vunpack.c.l.s4 1983009808
        %v7679 = vunpack.c.0.s8 %v7678
        %v7680 = vlaneseq
        %v7681 = vshrl.u32 %v7680, 7
        %v7682 = vsub.s32 %v7679, %v7681
        %v7683 = vrot.slane %v7675, %v7682
        %v7685 = vunpack.c.l.s4 1983009808
        %v7686 = vunpack.c.0.s8 %v7685
        %v7687 = vlaneseq
        %v7688 = vshrl.u32 %v7687, 7
        %v7689 = vsub.s32 %v7686, %v7688
        %v7690 = vrot.slane %v7676, %v7689
        %v7691 = vcombine.low %v6332, %v6334
        %v7692 = vcombine.high %v6332, %v6334
        %v7694 = vunpack.c.l.s4 1983009808
        %v7695 = vunpack.c.0.s8 %v7694
        %v7696 = vlaneseq
        %v7697 = vshrl.u32 %v7696, 7
        %v7698 = vsub.s32 %v7695, %v7697
        %v7699 = vrot.slane %v7691, %v7698
        %v7701 = vunpack.c.l.s4 1983009808
        %v7702 = vunpack.c.0.s8 %v7701
        %v7703 = vlaneseq
        %v7704 = vshrl.u32 %v7703, 7
        %v7705 = vsub.s32 %v7702, %v7704
        %v7706 = vrot.slane %v7692, %v7705
        %v7707 = vcombine.low %v7683, %v7699
        %v7708 = vcombine.high %v7683, %v7699
        %v7710 = vunpack.c.l.s4 1934713408
        %v7711 = vunpack.c.0.s8 %v7710
        %v7712 = vlaneseq
        %v7713 = vshrl.u32 %v7712, 7
        %v7714 = vsub.s32 %v7711, %v7713
        %v7715 = vrot.slane %v7707, %v7714
        %v7717 = vunpack.c.l.s4 1934713408
        %v7718 = vunpack.c.0.s8 %v7717
        %v7719 = vlaneseq
        %v7720 = vshrl.u32 %v7719, 7
        %v7721 = vsub.s32 %v7718, %v7720
        %v7722 = vrot.slane %v7708, %v7721
        %v7723 = vcombine.low %v7690, %v7706
        %v7724 = vcombine.high %v7690, %v7706
        %v7726 = vunpack.c.l.s4 1934713408
        %v7727 = vunpack.c.0.s8 %v7726
        %v7728 = vlaneseq
        %v7729 = vshrl.u32 %v7728, 7
        %v7730 = vsub.s32 %v7727, %v7729
        %v7731 = vrot.slane %v7723, %v7730
        %v7733 = vunpack.c.l.s4 1934713408
        %v7734 = vunpack.c.0.s8 %v7733
        %v7735 = vlaneseq
        %v7736 = vshrl.u32 %v7735, 7
        %v7737 = vsub.s32 %v7734, %v7736
        %v7738 = vrot.slane %v7724, %v7737
        %v7739 = vcombine.low %v7715, %v7731
        %v7740 = vcombine.high %v7715, %v7731
        %v7741 = vcombine.low %v7722, %v7738
        %v7742 = vcombine.high %v7722, %v7738
        %v7743 = vcombine.low %v6335, %v6337
        %v7744 = vcombine.high %v6335, %v6337
        %v7746 = vunpack.c.l.s4 1983009808
        %v7747 = vunpack.c.0.s8 %v7746
        %v7748 = vlaneseq
        %v7749 = vshrl.u32 %v7748, 7
        %v7750 = vsub.s32 %v7747, %v7749
        %v7751 = vrot.slane %v7743, %v7750
        %v7753 = vunpack.c.l.s4 1983009808
        %v7754 = vunpack.c.0.s8 %v7753
        %v7755 = vlaneseq
        %v7756 = vshrl.u32 %v7755, 7
        %v7757 = vsub.s32 %v7754, %v7756
        %v7758 = vrot.slane %v7744, %v7757
        %v7759 = vcombine.low %v6336, %v6338
        %v7760 = vcombine.high %v6336, %v6338
        %v7762 = vunpack.c.l.s4 1983009808
        %v7763 = vunpack.c.0.s8 %v7762
        %v7764 = vlaneseq
        %v7765 = vshrl.u32 %v7764, 7
        %v7766 = vsub.s32 %v7763, %v7765
        %v7767 = vrot.slane %v7759, %v7766
        %v7769 = vunpack.c.l.s4 1983009808
        %v7770 = vunpack.c.0.s8 %v7769
        %v7771 = vlaneseq
        %v7772 = vshrl.u32 %v7771, 7
        %v7773 = vsub.s32 %v7770, %v7772
        %v7774 = vrot.slane %v7760, %v7773
        %v7775 = vcombine.low %v7751, %v7767
        %v7776 = vcombine.high %v7751, %v7767
        %v7778 = vunpack.c.l.s4 1934713408
        %v7779 = vunpack.c.0.s8 %v7778
        %v7780 = vlaneseq
        %v7781 = vshrl.u32 %v7780, 7
        %v7782 = vsub.s32 %v7779, %v7781
        %v7783 = vrot.slane %v7775, %v7782
        %v7785 = vunpack.c.l.s4 1934713408
        %v7786 = vunpack.c.0.s8 %v7785
        %v7787 = vlaneseq
        %v7788 = vshrl.u32 %v7787, 7
        %v7789 = vsub.s32 %v7786, %v7788
        %v7790 = vrot.slane %v7776, %v7789
        %v7791 = vcombine.low %v7758, %v7774
        %v7792 = vcombine.high %v7758, %v7774
        %v7794 = vunpack.c.l.s4 1934713408
        %v7795 = vunpack.c.0.s8 %v7794
        %v7796 = vlaneseq
        %v7797 = vshrl.u32 %v7796, 7
        %v7798 = vsub.s32 %v7795, %v7797
        %v7799 = vrot.slane %v7791, %v7798
        %v7801 = vunpack.c.l.s4 1934713408
        %v7802 = vunpack.c.0.s8 %v7801
        %v7803 = vlaneseq
        %v7804 = vshrl.u32 %v7803, 7
        %v7805 = vsub.s32 %v7802, %v7804
        %v7806 = vrot.slane %v7792, %v7805
        %v7807 = vcombine.low %v7783, %v7799
        %v7808 = vcombine.high %v7783, %v7799
        %v7809 = vcombine.low %v7790, %v7806
        %v7810 = vcombine.high %v7790, %v7806
        %v7811 = vcombine.low %v6339, %v6341
        %v7812 = vcombine.high %v6339, %v6341
        %v7814 = vunpack.c.l.s4 1983009808
        %v7815 = vunpack.c.0.s8 %v7814
        %v7816 = vlaneseq
        %v7817 = vshrl.u32 %v7816, 7
        %v7818 = vsub.s32 %v7815, %v7817
        %v7819 = vrot.slane %v7811, %v7818
        %v7821 = vunpack.c.l.s4 1983009808
        %v7822 = vunpack.c.0.s8 %v7821
        %v7823 = vlaneseq
        %v7824 = vshrl.u32 %v7823, 7
        %v7825 = vsub.s32 %v7822, %v7824
        %v7826 = vrot.slane %v7812, %v7825
        %v7827 = vcombine.low %v6340, %v6342
        %v7828 = vcombine.high %v6340, %v6342
        %v7830 = vunpack.c.l.s4 1983009808
        %v7831 = vunpack.c.0.s8 %v7830
        %v7832 = vlaneseq
        %v7833 = vshrl.u32 %v7832, 7
        %v7834 = vsub.s32 %v7831, %v7833
        %v7835 = vrot.slane %v7827, %v7834
        %v7837 = vunpack.c.l.s4 1983009808
        %v7838 = vunpack.c.0.s8 %v7837
        %v7839 = vlaneseq
        %v7840 = vshrl.u32 %v7839, 7
        %v7841 = vsub.s32 %v7838, %v7840
        %v7842 = vrot.slane %v7828, %v7841
        %v7843 = vcombine.low %v7819, %v7835
        %v7844 = vcombine.high %v7819, %v7835
        %v7846 = vunpack.c.l.s4 1934713408
        %v7847 = vunpack.c.0.s8 %v7846
        %v7848 = vlaneseq
        %v7849 = vshrl.u32 %v7848, 7
        %v7850 = vsub.s32 %v7847, %v7849
        %v7851 = vrot.slane %v7843, %v7850
        %v7853 = vunpack.c.l.s4 1934713408
        %v7854 = vunpack.c.0.s8 %v7853
        %v7855 = vlaneseq
        %v7856 = vshrl.u32 %v7855, 7
        %v7857 = vsub.s32 %v7854, %v7856
        %v7858 = vrot.slane %v7844, %v7857
        %v7859 = vcombine.low %v7826, %v7842
        %v7860 = vcombine.high %v7826, %v7842
        %v7862 = vunpack.c.l.s4 1934713408
        %v7863 = vunpack.c.0.s8 %v7862
        %v7864 = vlaneseq
        %v7865 = vshrl.u32 %v7864, 7
        %v7866 = vsub.s32 %v7863, %v7865
        %v7867 = vrot.slane %v7859, %v7866
        %v7869 = vunpack.c.l.s4 1934713408
        %v7870 = vunpack.c.0.s8 %v7869
        %v7871 = vlaneseq
        %v7872 = vshrl.u32 %v7871, 7
        %v7873 = vsub.s32 %v7870, %v7872
        %v7874 = vrot.slane %v7860, %v7873
        %v7875 = vcombine.low %v7851, %v7867
        %v7876 = vcombine.high %v7851, %v7867
        %v7877 = vcombine.low %v7858, %v7874
        %v7878 = vcombine.high %v7858, %v7874
        %v7879 = vcombine.low %v6343, %v6345
        %v7880 = vcombine.high %v6343, %v6345
        %v7882 = vunpack.c.l.s4 1983009808
        %v7883 = vunpack.c.0.s8 %v7882
        %v7884 = vlaneseq
        %v7885 = vshrl.u32 %v7884, 7
        %v7886 = vsub.s32 %v7883, %v7885
        %v7887 = vrot.slane %v7879, %v7886
        %v7889 = vunpack.c.l.s4 1983009808
        %v7890 = vunpack.c.0.s8 %v7889
        %v7891 = vlaneseq
        %v7892 = vshrl.u32 %v7891, 7
        %v7893 = vsub.s32 %v7890, %v7892
        %v7894 = vrot.slane %v7880, %v7893
        %v7895 = vcombine.low %v6344, %v6346
        %v7896 = vcombine.high %v6344, %v6346
        %v7898 = vunpack.c.l.s4 1983009808
        %v7899 = vunpack.c.0.s8 %v7898
        %v7900 = vlaneseq
        %v7901 = vshrl.u32 %v7900, 7
        %v7902 = vsub.s32 %v7899, %v7901
        %v7903 = vrot.slane %v7895, %v7902
        %v7905 = vunpack.c.l.s4 1983009808
        %v7906 = vunpack.c.0.s8 %v7905
        %v7907 = vlaneseq
        %v7908 = vshrl.u32 %v7907, 7
        %v7909 = vsub.s32 %v7906, %v7908
        %v7910 = vrot.slane %v7896, %v7909
        %v7911 = vcombine.low %v7887, %v7903
        %v7912 = vcombine.high %v7887, %v7903
        %v7914 = vunpack.c.l.s4 1934713408
        %v7915 = vunpack.c.0.s8 %v7914
        %v7916 = vlaneseq
        %v7917 = vshrl.u32 %v7916, 7
        %v7918 = vsub.s32 %v7915, %v7917
        %v7919 = vrot.slane %v7911, %v7918
        %v7921 = vunpack.c.l.s4 1934713408
        %v7922 = vunpack.c.0.s8 %v7921
        %v7923 = vlaneseq
        %v7924 = vshrl.u32 %v7923, 7
        %v7925 = vsub.s32 %v7922, %v7924
        %v7926 = vrot.slane %v7912, %v7925
        %v7927 = vcombine.low %v7894, %v7910
        %v7928 = vcombine.high %v7894, %v7910
        %v7930 = vunpack.c.l.s4 1934713408
        %v7931 = vunpack.c.0.s8 %v7930
        %v7932 = vlaneseq
        %v7933 = vshrl.u32 %v7932, 7
        %v7934 = vsub.s32 %v7931, %v7933
        %v7935 = vrot.slane %v7927, %v7934
        %v7937 = vunpack.c.l.s4 1934713408
        %v7938 = vunpack.c.0.s8 %v7937
        %v7939 = vlaneseq
        %v7940 = vshrl.u32 %v7939, 7
        %v7941 = vsub.s32 %v7938, %v7940
        %v7942 = vrot.slane %v7928, %v7941
        %v7943 = vcombine.low %v7919, %v7935
        %v7944 = vcombine.high %v7919, %v7935
        %v7945 = vcombine.low %v7926, %v7942
        %v7946 = vcombine.high %v7926, %v7942
        %v7947 = vcombine.low %v6347, %v6349
        %v7948 = vcombine.high %v6347, %v6349
        %v7950 = vunpack.c.l.s4 1983009808
        %v7951 = vunpack.c.0.s8 %v7950
        %v7952 = vlaneseq
        %v7953 = vshrl.u32 %v7952, 7
        %v7954 = vsub.s32 %v7951, %v7953
        %v7955 = vrot.slane %v7947, %v7954
        %v7957 = vunpack.c.l.s4 1983009808
        %v7958 = vunpack.c.0.s8 %v7957
        %v7959 = vlaneseq
        %v7960 = vshrl.u32 %v7959, 7
        %v7961 = vsub.s32 %v7958, %v7960
        %v7962 = vrot.slane %v7948, %v7961
        %v7963 = vcombine.low %v6348, %v6350
        %v7964 = vcombine.high %v6348, %v6350
        %v7966 = vunpack.c.l.s4 1983009808
        %v7967 = vunpack.c.0.s8 %v7966
        %v7968 = vlaneseq
        %v7969 = vshrl.u32 %v7968, 7
        %v7970 = vsub.s32 %v7967, %v7969
        %v7971 = vrot.slane %v7963, %v7970
        %v7973 = vunpack.c.l.s4 1983009808
        %v7974 = vunpack.c.0.s8 %v7973
        %v7975 = vlaneseq
        %v7976 = vshrl.u32 %v7975, 7
        %v7977 = vsub.s32 %v7974, %v7976
        %v7978 = vrot.slane %v7964, %v7977
        %v7979 = vcombine.low %v7955, %v7971
        %v7980 = vcombine.high %v7955, %v7971
        %v7982 = vunpack.c.l.s4 1934713408
        %v7983 = vunpack.c.0.s8 %v7982
        %v7984 = vlaneseq
        %v7985 = vshrl.u32 %v7984, 7
        %v7986 = vsub.s32 %v7983, %v7985
        %v7987 = vrot.slane %v7979, %v7986
        %v7989 = vunpack.c.l.s4 1934713408
        %v7990 = vunpack.c.0.s8 %v7989
        %v7991 = vlaneseq
        %v7992 = vshrl.u32 %v7991, 7
        %v7993 = vsub.s32 %v7990, %v7992
        %v7994 = vrot.slane %v7980, %v7993
        %v7995 = vcombine.low %v7962, %v7978
        %v7996 = vcombine.high %v7962, %v7978
        %v7998 = vunpack.c.l.s4 1934713408
        %v7999 = vunpack.c.0.s8 %v7998
        %v8000 = vlaneseq
        %v8001 = vshrl.u32 %v8000, 7
        %v8002 = vsub.s32 %v7999, %v8001
        %v8003 = vrot.slane %v7995, %v8002
        %v8005 = vunpack.c.l.s4 1934713408
        %v8006 = vunpack.c.0.s8 %v8005
        %v8007 = vlaneseq
        %v8008 = vshrl.u32 %v8007, 7
        %v8009 = vsub.s32 %v8006, %v8008
        %v8010 = vrot.slane %v7996, %v8009
        %v8011 = vcombine.low %v7987, %v8003
        %v8012 = vcombine.high %v7987, %v8003
        %v8013 = vcombine.low %v7994, %v8010
        %v8014 = vcombine.high %v7994, %v8010
        %v8015 = vcombine.low %v6351, %v6353
        %v8016 = vcombine.high %v6351, %v6353
        %v8018 = vunpack.c.l.s4 1983009808
        %v8019 = vunpack.c.0.s8 %v8018
        %v8020 = vlaneseq
        %v8021 = vshrl.u32 %v8020, 7
        %v8022 = vsub.s32 %v8019, %v8021
        %v8023 = vrot.slane %v8015, %v8022
        %v8025 = vunpack.c.l.s4 1983009808
        %v8026 = vunpack.c.0.s8 %v8025
        %v8027 = vlaneseq
        %v8028 = vshrl.u32 %v8027, 7
        %v8029 = vsub.s32 %v8026, %v8028
        %v8030 = vrot.slane %v8016, %v8029
        %v8031 = vcombine.low %v6352, %v6354
        %v8032 = vcombine.high %v6352, %v6354
        %v8034 = vunpack.c.l.s4 1983009808
        %v8035 = vunpack.c.0.s8 %v8034
        %v8036 = vlaneseq
        %v8037 = vshrl.u32 %v8036, 7
        %v8038 = vsub.s32 %v8035, %v8037
        %v8039 = vrot.slane %v8031, %v8038
        %v8041 = vunpack.c.l.s4 1983009808
        %v8042 = vunpack.c.0.s8 %v8041
        %v8043 = vlaneseq
        %v8044 = vshrl.u32 %v8043, 7
        %v8045 = vsub.s32 %v8042, %v8044
        %v8046 = vrot.slane %v8032, %v8045
        %v8047 = vcombine.low %v8023, %v8039
        %v8048 = vcombine.high %v8023, %v8039
        %v8050 = vunpack.c.l.s4 1934713408
        %v8051 = vunpack.c.0.s8 %v8050
        %v8052 = vlaneseq
        %v8053 = vshrl.u32 %v8052, 7
        %v8054 = vsub.s32 %v8051, %v8053
        %v8055 = vrot.slane %v8047, %v8054
        %v8057 = vunpack.c.l.s4 1934713408
        %v8058 = vunpack.c.0.s8 %v8057
        %v8059 = vlaneseq
        %v8060 = vshrl.u32 %v8059, 7
        %v8061 = vsub.s32 %v8058, %v8060
        %v8062 = vrot.slane %v8048, %v8061
        %v8063 = vcombine.low %v8030, %v8046
        %v8064 = vcombine.high %v8030, %v8046
        %v8066 = vunpack.c.l.s4 1934713408
        %v8067 = vunpack.c.0.s8 %v8066
        %v8068 = vlaneseq
        %v8069 = vshrl.u32 %v8068, 7
        %v8070 = vsub.s32 %v8067, %v8069
        %v8071 = vrot.slane %v8063, %v8070
        %v8073 = vunpack.c.l.s4 1934713408
        %v8074 = vunpack.c.0.s8 %v8073
        %v8075 = vlaneseq
        %v8076 = vshrl.u32 %v8075, 7
        %v8077 = vsub.s32 %v8074, %v8076
        %v8078 = vrot.slane %v8064, %v8077
        %v8079 = vcombine.low %v8055, %v8071
        %v8080 = vcombine.high %v8055, %v8071
        %v8081 = vcombine.low %v8062, %v8078
        %v8082 = vcombine.high %v8062, %v8078
        %v8083 = vcombine.low %v6355, %v6357
        %v8084 = vcombine.high %v6355, %v6357
        %v8086 = vunpack.c.l.s4 1983009808
        %v8087 = vunpack.c.0.s8 %v8086
        %v8088 = vlaneseq
        %v8089 = vshrl.u32 %v8088, 7
        %v8090 = vsub.s32 %v8087, %v8089
        %v8091 = vrot.slane %v8083, %v8090
        %v8093 = vunpack.c.l.s4 1983009808
        %v8094 = vunpack.c.0.s8 %v8093
        %v8095 = vlaneseq
        %v8096 = vshrl.u32 %v8095, 7
        %v8097 = vsub.s32 %v8094, %v8096
        %v8098 = vrot.slane %v8084, %v8097
        %v8099 = vcombine.low %v6356, %v6358
        %v8100 = vcombine.high %v6356, %v6358
        %v8102 = vunpack.c.l.s4 1983009808
        %v8103 = vunpack.c.0.s8 %v8102
        %v8104 = vlaneseq
        %v8105 = vshrl.u32 %v8104, 7
        %v8106 = vsub.s32 %v8103, %v8105
        %v8107 = vrot.slane %v8099, %v8106
        %v8109 = vunpack.c.l.s4 1983009808
        %v8110 = vunpack.c.0.s8 %v8109
        %v8111 = vlaneseq
        %v8112 = vshrl.u32 %v8111, 7
        %v8113 = vsub.s32 %v8110, %v8112
        %v8114 = vrot.slane %v8100, %v8113
        %v8115 = vcombine.low %v8091, %v8107
        %v8116 = vcombine.high %v8091, %v8107
        %v8118 = vunpack.c.l.s4 1934713408
        %v8119 = vunpack.c.0.s8 %v8118
        %v8120 = vlaneseq
        %v8121 = vshrl.u32 %v8120, 7
        %v8122 = vsub.s32 %v8119, %v8121
        %v8123 = vrot.slane %v8115, %v8122
        %v8125 = vunpack.c.l.s4 1934713408
        %v8126 = vunpack.c.0.s8 %v8125
        %v8127 = vlaneseq
        %v8128 = vshrl.u32 %v8127, 7
        %v8129 = vsub.s32 %v8126, %v8128
        %v8130 = vrot.slane %v8116, %v8129
        %v8131 = vcombine.low %v8098, %v8114
        %v8132 = vcombine.high %v8098, %v8114
        %v8134 = vunpack.c.l.s4 1934713408
        %v8135 = vunpack.c.0.s8 %v8134
        %v8136 = vlaneseq
        %v8137 = vshrl.u32 %v8136, 7
        %v8138 = vsub.s32 %v8135, %v8137
        %v8139 = vrot.slane %v8131, %v8138
        %v8141 = vunpack.c.l.s4 1934713408
        %v8142 = vunpack.c.0.s8 %v8141
        %v8143 = vlaneseq
        %v8144 = vshrl.u32 %v8143, 7
        %v8145 = vsub.s32 %v8142, %v8144
        %v8146 = vrot.slane %v8132, %v8145
        %v8147 = vcombine.low %v8123, %v8139
        %v8148 = vcombine.high %v8123, %v8139
        %v8149 = vcombine.low %v8130, %v8146
        %v8150 = vcombine.high %v8130, %v8146
        %v8151 = vcombine.low %v6359, %v6361
        %v8152 = vcombine.high %v6359, %v6361
        %v8154 = vunpack.c.l.s4 1983009808
        %v8155 = vunpack.c.0.s8 %v8154
        %v8156 = vlaneseq
        %v8157 = vshrl.u32 %v8156, 7
        %v8158 = vsub.s32 %v8155, %v8157
        %v8159 = vrot.slane %v8151, %v8158
        %v8161 = vunpack.c.l.s4 1983009808
        %v8162 = vunpack.c.0.s8 %v8161
        %v8163 = vlaneseq
        %v8164 = vshrl.u32 %v8163, 7
        %v8165 = vsub.s32 %v8162, %v8164
        %v8166 = vrot.slane %v8152, %v8165
        %v8167 = vcombine.low %v6360, %v6362
        %v8168 = vcombine.high %v6360, %v6362
        %v8170 = vunpack.c.l.s4 1983009808
        %v8171 = vunpack.c.0.s8 %v8170
        %v8172 = vlaneseq
        %v8173 = vshrl.u32 %v8172, 7
        %v8174 = vsub.s32 %v8171, %v8173
        %v8175 = vrot.slane %v8167, %v8174
        %v8177 = vunpack.c.l.s4 1983009808
        %v8178 = vunpack.c.0.s8 %v8177
        %v8179 = vlaneseq
        %v8180 = vshrl.u32 %v8179, 7
        %v8181 = vsub.s32 %v8178, %v8180
        %v8182 = vrot.slane %v8168, %v8181
        %v8183 = vcombine.low %v8159, %v8175
        %v8184 = vcombine.high %v8159, %v8175
        %v8186 = vunpack.c.l.s4 1934713408
        %v8187 = vunpack.c.0.s8 %v8186
        %v8188 = vlaneseq
        %v8189 = vshrl.u32 %v8188, 7
        %v8190 = vsub.s32 %v8187, %v8189
        %v8191 = vrot.slane %v8183, %v8190
        %v8193 = vunpack.c.l.s4 1934713408
        %v8194 = vunpack.c.0.s8 %v8193
        %v8195 = vlaneseq
        %v8196 = vshrl.u32 %v8195, 7
        %v8197 = vsub.s32 %v8194, %v8196
        %v8198 = vrot.slane %v8184, %v8197
        %v8199 = vcombine.low %v8166, %v8182
        %v8200 = vcombine.high %v8166, %v8182
        %v8202 = vunpack.c.l.s4 1934713408
        %v8203 = vunpack.c.0.s8 %v8202
        %v8204 = vlaneseq
        %v8205 = vshrl.u32 %v8204, 7
        %v8206 = vsub.s32 %v8203, %v8205
        %v8207 = vrot.slane %v8199, %v8206
        %v8209 = vunpack.c.l.s4 1934713408
        %v8210 = vunpack.c.0.s8 %v8209
        %v8211 = vlaneseq
        %v8212 = vshrl.u32 %v8211, 7
        %v8213 = vsub.s32 %v8210, %v8212
        %v8214 = vrot.slane %v8200, %v8213
        %v8215 = vcombine.low %v8191, %v8207
        %v8216 = vcombine.high %v8191, %v8207
        %v8217 = vcombine.low %v8198, %v8214
        %v8218 = vcombine.high %v8198, %v8214
        %v8219 = vcombine.low %v6363, %v6365
        %v8220 = vcombine.high %v6363, %v6365
        %v8222 = vunpack.c.l.s4 1983009808
        %v8223 = vunpack.c.0.s8 %v8222
        %v8224 = vlaneseq
        %v8225 = vshrl.u32 %v8224, 7
        %v8226 = vsub.s32 %v8223, %v8225
        %v8227 = vrot.slane %v8219, %v8226
        %v8229 = vunpack.c.l.s4 1983009808
        %v8230 = vunpack.c.0.s8 %v8229
        %v8231 = vlaneseq
        %v8232 = vshrl.u32 %v8231, 7
        %v8233 = vsub.s32 %v8230, %v8232
        %v8234 = vrot.slane %v8220, %v8233
        %v8235 = vcombine.low %v6364, %v6366
        %v8236 = vcombine.high %v6364, %v6366
        %v8238 = vunpack.c.l.s4 1983009808
        %v8239 = vunpack.c.0.s8 %v8238
        %v8240 = vlaneseq
        %v8241 = vshrl.u32 %v8240, 7
        %v8242 = vsub.s32 %v8239, %v8241
        %v8243 = vrot.slane %v8235, %v8242
        %v8245 = vunpack.c.l.s4 1983009808
        %v8246 = vunpack.c.0.s8 %v8245
        %v8247 = vlaneseq
        %v8248 = vshrl.u32 %v8247, 7
        %v8249 = vsub.s32 %v8246, %v8248
        %v8250 = vrot.slane %v8236, %v8249
        %v8251 = vcombine.low %v8227, %v8243
        %v8252 = vcombine.high %v8227, %v8243
        %v8254 = vunpack.c.l.s4 1934713408
        %v8255 = vunpack.c.0.s8 %v8254
        %v8256 = vlaneseq
        %v8257 = vshrl.u32 %v8256, 7
        %v8258 = vsub.s32 %v8255, %v8257
        %v8259 = vrot.slane %v8251, %v8258
        %v8261 = vunpack.c.l.s4 1934713408
        %v8262 = vunpack.c.0.s8 %v8261
        %v8263 = vlaneseq
        %v8264 = vshrl.u32 %v8263, 7
        %v8265 = vsub.s32 %v8262, %v8264
        %v8266 = vrot.slane %v8252, %v8265
        %v8267 = vcombine.low %v8234, %v8250
        %v8268 = vcombine.high %v8234, %v8250
        %v8270 = vunpack.c.l.s4 1934713408
        %v8271 = vunpack.c.0.s8 %v8270
        %v8272 = vlaneseq
        %v8273 = vshrl.u32 %v8272, 7
        %v8274 = vsub.s32 %v8271, %v8273
        %v8275 = vrot.slane %v8267, %v8274
        %v8277 = vunpack.c.l.s4 1934713408
        %v8278 = vunpack.c.0.s8 %v8277
        %v8279 = vlaneseq
        %v8280 = vshrl.u32 %v8279, 7
        %v8281 = vsub.s32 %v8278, %v8280
        %v8282 = vrot.slane %v8268, %v8281
        %v8283 = vcombine.low %v8259, %v8275
        %v8284 = vcombine.high %v8259, %v8275
        %v8285 = vcombine.low %v8266, %v8282
        %v8286 = vcombine.high %v8266, %v8282
        %v8287 = vcombine.low %v6367, %v6369
        %v8288 = vcombine.high %v6367, %v6369
        %v8290 = vunpack.c.l.s4 1983009808
        %v8291 = vunpack.c.0.s8 %v8290
        %v8292 = vlaneseq
        %v8293 = vshrl.u32 %v8292, 7
        %v8294 = vsub.s32 %v8291, %v8293
        %v8295 = vrot.slane %v8287, %v8294
        %v8297 = vunpack.c.l.s4 1983009808
        %v8298 = vunpack.c.0.s8 %v8297
        %v8299 = vlaneseq
        %v8300 = vshrl.u32 %v8299, 7
        %v8301 = vsub.s32 %v8298, %v8300
        %v8302 = vrot.slane %v8288, %v8301
        %v8303 = vcombine.low %v6368, %v6370
        %v8304 = vcombine.high %v6368, %v6370
        %v8306 = vunpack.c.l.s4 1983009808
        %v8307 = vunpack.c.0.s8 %v8306
        %v8308 = vlaneseq
        %v8309 = vshrl.u32 %v8308, 7
        %v8310 = vsub.s32 %v8307, %v8309
        %v8311 = vrot.slane %v8303, %v8310
        %v8313 = vunpack.c.l.s4 1983009808
        %v8314 = vunpack.c.0.s8 %v8313
        %v8315 = vlaneseq
        %v8316 = vshrl.u32 %v8315, 7
        %v8317 = vsub.s32 %v8314, %v8316
        %v8318 = vrot.slane %v8304, %v8317
        %v8319 = vcombine.low %v8295, %v8311
        %v8320 = vcombine.high %v8295, %v8311
        %v8322 = vunpack.c.l.s4 1934713408
        %v8323 = vunpack.c.0.s8 %v8322
        %v8324 = vlaneseq
        %v8325 = vshrl.u32 %v8324, 7
        %v8326 = vsub.s32 %v8323, %v8325
        %v8327 = vrot.slane %v8319, %v8326
        %v8329 = vunpack.c.l.s4 1934713408
        %v8330 = vunpack.c.0.s8 %v8329
        %v8331 = vlaneseq
        %v8332 = vshrl.u32 %v8331, 7
        %v8333 = vsub.s32 %v8330, %v8332
        %v8334 = vrot.slane %v8320, %v8333
        %v8335 = vcombine.low %v8302, %v8318
        %v8336 = vcombine.high %v8302, %v8318
        %v8338 = vunpack.c.l.s4 1934713408
        %v8339 = vunpack.c.0.s8 %v8338
        %v8340 = vlaneseq
        %v8341 = vshrl.u32 %v8340, 7
        %v8342 = vsub.s32 %v8339, %v8341
        %v8343 = vrot.slane %v8335, %v8342
        %v8345 = vunpack.c.l.s4 1934713408
        %v8346 = vunpack.c.0.s8 %v8345
        %v8347 = vlaneseq
        %v8348 = vshrl.u32 %v8347, 7
        %v8349 = vsub.s32 %v8346, %v8348
        %v8350 = vrot.slane %v8336, %v8349
        %v8351 = vcombine.low %v8327, %v8343
        %v8352 = vcombine.high %v8327, %v8343
        %v8353 = vcombine.low %v8334, %v8350
        %v8354 = vcombine.high %v8334, %v8350
        %v8355 = vcombine.low %v6371, %v6373
        %v8356 = vcombine.high %v6371, %v6373
        %v8358 = vunpack.c.l.s4 1983009808
        %v8359 = vunpack.c.0.s8 %v8358
        %v8360 = vlaneseq
        %v8361 = vshrl.u32 %v8360, 7
        %v8362 = vsub.s32 %v8359, %v8361
        %v8363 = vrot.slane %v8355, %v8362
        %v8365 = vunpack.c.l.s4 1983009808
        %v8366 = vunpack.c.0.s8 %v8365
        %v8367 = vlaneseq
        %v8368 = vshrl.u32 %v8367, 7
        %v8369 = vsub.s32 %v8366, %v8368
        %v8370 = vrot.slane %v8356, %v8369
        %v8371 = vcombine.low %v6372, %v6374
        %v8372 = vcombine.high %v6372, %v6374
        %v8374 = vunpack.c.l.s4 1983009808
        %v8375 = vunpack.c.0.s8 %v8374
        %v8376 = vlaneseq
        %v8377 = vshrl.u32 %v8376, 7
        %v8378 = vsub.s32 %v8375, %v8377
        %v8379 = vrot.slane %v8371, %v8378
        %v8381 = vunpack.c.l.s4 1983009808
        %v8382 = vunpack.c.0.s8 %v8381
        %v8383 = vlaneseq
        %v8384 = vshrl.u32 %v8383, 7
        %v8385 = vsub.s32 %v8382, %v8384
        %v8386 = vrot.slane %v8372, %v8385
        %v8387 = vcombine.low %v8363, %v8379
        %v8388 = vcombine.high %v8363, %v8379
        %v8390 = vunpack.c.l.s4 1934713408
        %v8391 = vunpack.c.0.s8 %v8390
        %v8392 = vlaneseq
        %v8393 = vshrl.u32 %v8392, 7
        %v8394 = vsub.s32 %v8391, %v8393
        %v8395 = vrot.slane %v8387, %v8394
        %v8397 = vunpack.c.l.s4 1934713408
        %v8398 = vunpack.c.0.s8 %v8397
        %v8399 = vlaneseq
        %v8400 = vshrl.u32 %v8399, 7
        %v8401 = vsub.s32 %v8398, %v8400
        %v8402 = vrot.slane %v8388, %v8401
        %v8403 = vcombine.low %v8370, %v8386
        %v8404 = vcombine.high %v8370, %v8386
        %v8406 = vunpack.c.l.s4 1934713408
        %v8407 = vunpack.c.0.s8 %v8406
        %v8408 = vlaneseq
        %v8409 = vshrl.u32 %v8408, 7
        %v8410 = vsub.s32 %v8407, %v8409
        %v8411 = vrot.slane %v8403, %v8410
        %v8413 = vunpack.c.l.s4 1934713408
        %v8414 = vunpack.c.0.s8 %v8413
        %v8415 = vlaneseq
        %v8416 = vshrl.u32 %v8415, 7
        %v8417 = vsub.s32 %v8414, %v8416
        %v8418 = vrot.slane %v8404, %v8417
        %v8419 = vcombine.low %v8395, %v8411
        %v8420 = vcombine.high %v8395, %v8411
        %v8421 = vcombine.low %v8402, %v8418
        %v8422 = vcombine.high %v8402, %v8418
        %v8423 = vcombine.low %v6375, %v6377
        %v8424 = vcombine.high %v6375, %v6377
        %v8426 = vunpack.c.l.s4 1983009808
        %v8427 = vunpack.c.0.s8 %v8426
        %v8428 = vlaneseq
        %v8429 = vshrl.u32 %v8428, 7
        %v8430 = vsub.s32 %v8427, %v8429
        %v8431 = vrot.slane %v8423, %v8430
        %v8433 = vunpack.c.l.s4 1983009808
        %v8434 = vunpack.c.0.s8 %v8433
        %v8435 = vlaneseq
        %v8436 = vshrl.u32 %v8435, 7
        %v8437 = vsub.s32 %v8434, %v8436
        %v8438 = vrot.slane %v8424, %v8437
        %v8439 = vcombine.low %v6376, %v6378
        %v8440 = vcombine.high %v6376, %v6378
        %v8442 = vunpack.c.l.s4 1983009808
        %v8443 = vunpack.c.0.s8 %v8442
        %v8444 = vlaneseq
        %v8445 = vshrl.u32 %v8444, 7
        %v8446 = vsub.s32 %v8443, %v8445
        %v8447 = vrot.slane %v8439, %v8446
        %v8449 = vunpack.c.l.s4 1983009808
        %v8450 = vunpack.c.0.s8 %v8449
        %v8451 = vlaneseq
        %v8452 = vshrl.u32 %v8451, 7
        %v8453 = vsub.s32 %v8450, %v8452
        %v8454 = vrot.slane %v8440, %v8453
        %v8455 = vcombine.low %v8431, %v8447
        %v8456 = vcombine.high %v8431, %v8447
        %v8458 = vunpack.c.l.s4 1934713408
        %v8459 = vunpack.c.0.s8 %v8458
        %v8460 = vlaneseq
        %v8461 = vshrl.u32 %v8460, 7
        %v8462 = vsub.s32 %v8459, %v8461
        %v8463 = vrot.slane %v8455, %v8462
        %v8465 = vunpack.c.l.s4 1934713408
        %v8466 = vunpack.c.0.s8 %v8465
        %v8467 = vlaneseq
        %v8468 = vshrl.u32 %v8467, 7
        %v8469 = vsub.s32 %v8466, %v8468
        %v8470 = vrot.slane %v8456, %v8469
        %v8471 = vcombine.low %v8438, %v8454
        %v8472 = vcombine.high %v8438, %v8454
        %v8474 = vunpack.c.l.s4 1934713408
        %v8475 = vunpack.c.0.s8 %v8474
        %v8476 = vlaneseq
        %v8477 = vshrl.u32 %v8476, 7
        %v8478 = vsub.s32 %v8475, %v8477
        %v8479 = vrot.slane %v8471, %v8478
        %v8481 = vunpack.c.l.s4 1934713408
        %v8482 = vunpack.c.0.s8 %v8481
        %v8483 = vlaneseq
        %v8484 = vshrl.u32 %v8483, 7
        %v8485 = vsub.s32 %v8482, %v8484
        %v8486 = vrot.slane %v8472, %v8485
        %v8487 = vcombine.low %v8463, %v8479
        %v8488 = vcombine.high %v8463, %v8479
        %v8489 = vcombine.low %v8470, %v8486
        %v8490 = vcombine.high %v8470, %v8486
        %v8491 = vcombine.low %v6379, %v6381
        %v8492 = vcombine.high %v6379, %v6381
        %v8494 = vunpack.c.l.s4 1983009808
        %v8495 = vunpack.c.0.s8 %v8494
        %v8496 = vlaneseq
        %v8497 = vshrl.u32 %v8496, 7
        %v8498 = vsub.s32 %v8495, %v8497
        %v8499 = vrot.slane %v8491, %v8498
        %v8501 = vunpack.c.l.s4 1983009808
        %v8502 = vunpack.c.0.s8 %v8501
        %v8503 = vlaneseq
        %v8504 = vshrl.u32 %v8503, 7
        %v8505 = vsub.s32 %v8502, %v8504
        %v8506 = vrot.slane %v8492, %v8505
        %v8507 = vcombine.low %v6380, %v6382
        %v8508 = vcombine.high %v6380, %v6382
        %v8510 = vunpack.c.l.s4 1983009808
        %v8511 = vunpack.c.0.s8 %v8510
        %v8512 = vlaneseq
        %v8513 = vshrl.u32 %v8512, 7
        %v8514 = vsub.s32 %v8511, %v8513
        %v8515 = vrot.slane %v8507, %v8514
        %v8517 = vunpack.c.l.s4 1983009808
        %v8518 = vunpack.c.0.s8 %v8517
        %v8519 = vlaneseq
        %v8520 = vshrl.u32 %v8519, 7
        %v8521 = vsub.s32 %v8518, %v8520
        %v8522 = vrot.slane %v8508, %v8521
        %v8523 = vcombine.low %v8499, %v8515
        %v8524 = vcombine.high %v8499, %v8515
        %v8526 = vunpack.c.l.s4 1934713408
        %v8527 = vunpack.c.0.s8 %v8526
        %v8528 = vlaneseq
        %v8529 = vshrl.u32 %v8528, 7
        %v8530 = vsub.s32 %v8527, %v8529
        %v8531 = vrot.slane %v8523, %v8530
        %v8533 = vunpack.c.l.s4 1934713408
        %v8534 = vunpack.c.0.s8 %v8533
        %v8535 = vlaneseq
        %v8536 = vshrl.u32 %v8535, 7
        %v8537 = vsub.s32 %v8534, %v8536
        %v8538 = vrot.slane %v8524, %v8537
        %v8539 = vcombine.low %v8506, %v8522
        %v8540 = vcombine.high %v8506, %v8522
        %v8542 = vunpack.c.l.s4 1934713408
        %v8543 = vunpack.c.0.s8 %v8542
        %v8544 = vlaneseq
        %v8545 = vshrl.u32 %v8544, 7
        %v8546 = vsub.s32 %v8543, %v8545
        %v8547 = vrot.slane %v8539, %v8546
        %v8549 = vunpack.c.l.s4 1934713408
        %v8550 = vunpack.c.0.s8 %v8549
        %v8551 = vlaneseq
        %v8552 = vshrl.u32 %v8551, 7
        %v8553 = vsub.s32 %v8550, %v8552
        %v8554 = vrot.slane %v8540, %v8553
        %v8555 = vcombine.low %v8531, %v8547
        %v8556 = vcombine.high %v8531, %v8547
        %v8557 = vcombine.low %v8538, %v8554
        %v8558 = vcombine.high %v8538, %v8554
        %v8591 = vcombine.low %v6447, %v6515
        %v8592 = vcombine.high %v6447, %v6515
        %v8593 = vcombine.low %v6583, %v6651
        %v8594 = vcombine.high %v6583, %v6651
        %v8595 = vcombine.low %v6719, %v6787
        %v8596 = vcombine.high %v6719, %v6787
        %v8597 = vcombine.low %v6855, %v6923
        %v8598 = vcombine.high %v6855, %v6923
        %v8599 = vcombine.low %v6991, %v7059
        %v8600 = vcombine.high %v6991, %v7059
        %v8601 = vcombine.low %v7127, %v7195
        %v8602 = vcombine.high %v7127, %v7195
        %v8603 = vcombine.low %v7263, %v7331
        %v8604 = vcombine.high %v7263, %v7331
        %v8605 = vcombine.low %v7399, %v7467
        %v8606 = vcombine.high %v7399, %v7467
        %v8607 = vcombine.low %v7535, %v7603
        %v8608 = vcombine.high %v7535, %v7603
        %v8609 = vcombine.low %v7671, %v7739
        %v8610 = vcombine.high %v7671, %v7739
        %v8611 = vcombine.low %v7807, %v7875
        %v8612 = vcombine.high %v7807, %v7875
        %v8613 = vcombine.low %v7943, %v8011
        %v8614 = vcombine.high %v7943, %v8011
        %v8615 = vcombine.low %v8079, %v8147
        %v8616 = vcombine.high %v8079, %v8147
        %v8617 = vcombine.low %v8215, %v8283
        %v8618 = vcombine.high %v8215, %v8283
        %v8619 = vcombine.low %v8351, %v8419
        %v8620 = vcombine.high %v8351, %v8419
        %v8621 = vcombine.low %v8487, %v8555
        %v8622 = vcombine.high %v8487, %v8555
        %v8687 = vcombine.low %v6448, %v6516
        %v8688 = vcombine.high %v6448, %v6516
        %v8689 = vcombine.low %v6584, %v6652
        %v8690 = vcombine.high %v6584, %v6652
        %v8691 = vcombine.low %v6720, %v6788
        %v8692 = vcombine.high %v6720, %v6788
        %v8693 = vcombine.low %v6856, %v6924
        %v8694 = vcombine.high %v6856, %v6924
        %v8695 = vcombine.low %v6992, %v7060
        %v8696 = vcombine.high %v6992, %v7060
        %v8697 = vcombine.low %v7128, %v7196
        %v8698 = vcombine.high %v7128, %v7196
        %v8699 = vcombine.low %v7264, %v7332
        %v8700 = vcombine.high %v7264, %v7332
        %v8701 = vcombine.low %v7400, %v7468
        %v8702 = vcombine.high %v7400, %v7468
        %v8703 = vcombine.low %v7536, %v7604
        %v8704 = vcombine.high %v7536, %v7604
        %v8705 = vcombine.low %v7672, %v7740
        %v8706 = vcombine.high %v7672, %v7740
        %v8707 = vcombine.low %v7808, %v7876
        %v8708 = vcombine.high %v7808, %v7876
        %v8709 = vcombine.low %v7944, %v8012
        %v8710 = vcombine.high %v7944, %v8012
        %v8711 = vcombine.low %v8080, %v8148
        %v8712 = vcombine.high %v8080, %v8148
        %v8713 = vcombine.low %v8216, %v8284
        %v8714 = vcombine.high %v8216, %v8284
        %v8715 = vcombine.low %v8352, %v8420
        %v8716 = vcombine.high %v8352, %v8420
        %v8717 = vcombine.low %v8488, %v8556
        %v8718 = vcombine.high %v8488, %v8556
        %v8783 = vcombine.low %v6449, %v6517
        %v8784 = vcombine.high %v6449, %v6517
        %v8785 = vcombine.low %v6585, %v6653
        %v8786 = vcombine.high %v6585, %v6653
        %v8787 = vcombine.low %v6721, %v6789
        %v8788 = vcombine.high %v6721, %v6789
        %v8789 = vcombine.low %v6857, %v6925
        %v8790 = vcombine.high %v6857, %v6925
        %v8791 = vcombine.low %v6993, %v7061
        %v8792 = vcombine.high %v6993, %v7061
        %v8793 = vcombine.low %v7129, %v7197
        %v8794 = vcombine.high %v7129, %v7197
        %v8795 = vcombine.low %v7265, %v7333
        %v8796 = vcombine.high %v7265, %v7333
        %v8797 = vcombine.low %v7401, %v7469
        %v8798 = vcombine.high %v7401, %v7469
        %v8799 = vcombine.low %v7537, %v7605
        %v8800 = vcombine.high %v7537, %v7605
        %v8801 = vcombine.low %v7673, %v7741
        %v8802 = vcombine.high %v7673, %v7741
        %v8803 = vcombine.low %v7809, %v7877
        %v8804 = vcombine.high %v7809, %v7877
        %v8805 = vcombine.low %v7945, %v8013
        %v8806 = vcombine.high %v7945, %v8013
        %v8807 = vcombine.low %v8081, %v8149
        %v8808 = vcombine.high %v8081, %v8149
        %v8809 = vcombine.low %v8217, %v8285
        %v8810 = vcombine.high %v8217, %v8285
        %v8811 = vcombine.low %v8353, %v8421
        %v8812 = vcombine.high %v8353, %v8421
        %v8813 = vcombine.low %v8489, %v8557
        %v8814 = vcombine.high %v8489, %v8557
        %v8879 = vcombine.low %v6450, %v6518
        %v8880 = vcombine.high %v6450, %v6518
        %v8881 = vcombine.low %v6586, %v6654
        %v8882 = vcombine.high %v6586, %v6654
        %v8883 = vcombine.low %v6722, %v6790
        %v8884 = vcombine.high %v6722, %v6790
        %v8885 = vcombine.low %v6858, %v6926
        %v8886 = vcombine.high %v6858, %v6926
        %v8887 = vcombine.low %v6994, %v7062
        %v8888 = vcombine.high %v6994, %v7062
        %v8889 = vcombine.low %v7130, %v7198
        %v8890 = vcombine.high %v7130, %v7198
        %v8891 = vcombine.low %v7266, %v7334
        %v8892 = vcombine.high %v7266, %v7334
        %v8893 = vcombine.low %v7402, %v7470
        %v8894 = vcombine.high %v7402, %v7470
        %v8895 = vcombine.low %v7538, %v7606
        %v8896 = vcombine.high %v7538, %v7606
        %v8897 = vcombine.low %v7674, %v7742
        %v8898 = vcombine.high %v7674, %v7742
        %v8899 = vcombine.low %v7810, %v7878
        %v8900 = vcombine.high %v7810, %v7878
        %v8901 = vcombine.low %v7946, %v8014
        %v8902 = vcombine.high %v7946, %v8014
        %v8903 = vcombine.low %v8082, %v8150
        %v8904 = vcombine.high %v8082, %v8150
        %v8905 = vcombine.low %v8218, %v8286
        %v8906 = vcombine.high %v8218, %v8286
        %v8907 = vcombine.low %v8354, %v8422
        %v8908 = vcombine.high %v8354, %v8422
        %v8909 = vcombine.low %v8490, %v8558
        %v8910 = vcombine.high %v8490, %v8558
        %v8943 = vpack.c.bf16 %v8593, %v8591
        %v8944 = vpack.c.bf16 %v8594, %v8592
        %v8945 = vpack.c.bf16 %v8689, %v8687
        %v8946 = vpack.c.bf16 %v8690, %v8688
        %v8947 = vpack.c.bf16 %v8785, %v8783
        %v8948 = vpack.c.bf16 %v8786, %v8784
        %v8949 = vpack.c.bf16 %v8881, %v8879
        %v8950 = vpack.c.bf16 %v8882, %v8880
        %v8951 = vpack.c.bf16 %v1504, %v1503
        %v8952 = vpack.c.bf16 %v8597, %v8595
        %v8953 = vpack.c.bf16 %v8598, %v8596
        %v8954 = vpack.c.bf16 %v8693, %v8691
        %v8955 = vpack.c.bf16 %v8694, %v8692
        %v8956 = vpack.c.bf16 %v8789, %v8787
        %v8957 = vpack.c.bf16 %v8790, %v8788
        %v8958 = vpack.c.bf16 %v8885, %v8883
        %v8959 = vpack.c.bf16 %v8886, %v8884
        %v8960 = vpack.c.bf16 %v1506, %v1505
        %v8961 = vpack.c.bf16 %v8601, %v8599
        %v8962 = vpack.c.bf16 %v8602, %v8600
        %v8963 = vpack.c.bf16 %v8697, %v8695
        %v8964 = vpack.c.bf16 %v8698, %v8696
        %v8965 = vpack.c.bf16 %v8793, %v8791
        %v8966 = vpack.c.bf16 %v8794, %v8792
        %v8967 = vpack.c.bf16 %v8889, %v8887
        %v8968 = vpack.c.bf16 %v8890, %v8888
        %v8969 = vpack.c.bf16 %v1508, %v1507
        %v8970 = vpack.c.bf16 %v8605, %v8603
        %v8971 = vpack.c.bf16 %v8606, %v8604
        %v8972 = vpack.c.bf16 %v8701, %v8699
        %v8973 = vpack.c.bf16 %v8702, %v8700
        %v8974 = vpack.c.bf16 %v8797, %v8795
        %v8975 = vpack.c.bf16 %v8798, %v8796
        %v8976 = vpack.c.bf16 %v8893, %v8891
        %v8977 = vpack.c.bf16 %v8894, %v8892
        %v8978 = vpack.c.bf16 %v1510, %v1509
        %v8979 = vpack.c.bf16 %v8609, %v8607
        %v8980 = vpack.c.bf16 %v8610, %v8608
        %v8981 = vpack.c.bf16 %v8705, %v8703
        %v8982 = vpack.c.bf16 %v8706, %v8704
        %v8983 = vpack.c.bf16 %v8801, %v8799
        %v8984 = vpack.c.bf16 %v8802, %v8800
        %v8985 = vpack.c.bf16 %v8897, %v8895
        %v8986 = vpack.c.bf16 %v8898, %v8896
        %v8987 = vpack.c.bf16 %v1512, %v1511
        %v8988 = vpack.c.bf16 %v8613, %v8611
        %v8989 = vpack.c.bf16 %v8614, %v8612
        %v8990 = vpack.c.bf16 %v8709, %v8707
        %v8991 = vpack.c.bf16 %v8710, %v8708
        %v8992 = vpack.c.bf16 %v8805, %v8803
        %v8993 = vpack.c.bf16 %v8806, %v8804
        %v8994 = vpack.c.bf16 %v8901, %v8899
        %v8995 = vpack.c.bf16 %v8902, %v8900
        %v8996 = vpack.c.bf16 %v1514, %v1513
        %v8997 = vpack.c.bf16 %v8617, %v8615
        %v8998 = vpack.c.bf16 %v8618, %v8616
        %v8999 = vpack.c.bf16 %v8713, %v8711
        %v9000 = vpack.c.bf16 %v8714, %v8712
        %v9001 = vpack.c.bf16 %v8809, %v8807
        %v9002 = vpack.c.bf16 %v8810, %v8808
        %v9003 = vpack.c.bf16 %v8905, %v8903
        %v9004 = vpack.c.bf16 %v8906, %v8904
        %v9005 = vpack.c.bf16 %v1516, %v1515
        %v9006 = vpack.c.bf16 %v8621, %v8619
        %v9007 = vpack.c.bf16 %v8622, %v8620
        %v9008 = vpack.c.bf16 %v8717, %v8715
        %v9009 = vpack.c.bf16 %v8718, %v8716
        %v9010 = vpack.c.bf16 %v8813, %v8811
        %v9011 = vpack.c.bf16 %v8814, %v8812
        %v9012 = vpack.c.bf16 %v8909, %v8907
        %v9013 = vpack.c.bf16 %v8910, %v8908
        %v9014 = vpack.c.bf16 %v1518, %v1517
        %v9015 = vld [vmem:[#allocation5] sm:$0xf]
        %v9016 = vld [vmem:[#allocation5 + $0x4] sm:$0xf]
        %v9017 = vld [vmem:[#allocation5 + $0x8] sm:$0xf]
        %v9018 = vld [vmem:[#allocation5 + $0xc] sm:$0xf]
        %v9019 = vld [vmem:[#allocation5 + $0x10] sm:$0xf]
        %v9020 = vld [vmem:[#allocation5 + $0x14] sm:$0xf]
        %v9021 = vld [vmem:[#allocation5 + $0x18] sm:$0xf]
        %v9022 = vld [vmem:[#allocation5 + $0x1c] sm:$0xf]
        %v9023 = vld [vmem:[#allocation5 + $0x20] sm:$0xf]
        %v9024 = vld [vmem:[#allocation5 + $0x24] sm:$0xf]
        %v9025 = vld [vmem:[#allocation5 + $0x28] sm:$0xf]
        %v9026 = vld [vmem:[#allocation5 + $0x2c] sm:$0xf]
        %v9027 = vld [vmem:[#allocation5 + $0x30] sm:$0xf]
        %v9028 = vld [vmem:[#allocation5 + $0x34] sm:$0xf]
        %v9029 = vld [vmem:[#allocation5 + $0x38] sm:$0xf]
        %v9030 = vld [vmem:[#allocation5 + $0x3c] sm:$0xf]
        %v9031 = vld [vmem:[#allocation5 + $0x40] sm:$0xf]
        %v9032 = vld [vmem:[#allocation5 + $0x44] sm:$0xf]
        %v9033 = vld [vmem:[#allocation5 + $0x48] sm:$0xf]
        %v9034 = vld [vmem:[#allocation5 + $0x4c] sm:$0xf]
        %v9035 = vld [vmem:[#allocation5 + $0x50] sm:$0xf]
        %v9036 = vld [vmem:[#allocation5 + $0x54] sm:$0xf]
        %v9037 = vld [vmem:[#allocation5 + $0x58] sm:$0xf]
        %v9038 = vld [vmem:[#allocation5 + $0x5c] sm:$0xf]
        %v9039 = vld [vmem:[#allocation5 + $0x60] sm:$0xf]
        %v9040 = vld [vmem:[#allocation5 + $0x64] sm:$0xf]
        %v9041 = vld [vmem:[#allocation5 + $0x68] sm:$0xf]
        %v9042 = vld [vmem:[#allocation5 + $0x6c] sm:$0xf]
        %v9043 = vld [vmem:[#allocation5 + $0x70] sm:$0xf]
        %v9044 = vld [vmem:[#allocation5 + $0x74] sm:$0xf]
        %v9045 = vld [vmem:[#allocation5 + $0x78] sm:$0xf]
        %v9046 = vld [vmem:[#allocation5 + $0x7c] sm:$0xf]
        %v9047 = vld [vmem:[#allocation5 + $0x80] sm:$0xf]
        %v9048 = vld [vmem:[#allocation5 + $0x84] sm:$0xf]
        %v9049 = vld [vmem:[#allocation5 + $0x88] sm:$0xf]
        %v9050 = vld [vmem:[#allocation5 + $0x8c] sm:$0xf]
        %v9051 = vld [vmem:[#allocation5 + $0x90] sm:$0xf]
        %v9052 = vld [vmem:[#allocation5 + $0x94] sm:$0xf]
        %v9053 = vld [vmem:[#allocation5 + $0x98] sm:$0xf]
        %v9054 = vld [vmem:[#allocation5 + $0x9c] sm:$0xf]
        %v9055 = vld [vmem:[#allocation5 + $0xa0] sm:$0xf]
        %v9056 = vld [vmem:[#allocation5 + $0xa4] sm:$0xf]
        %v9057 = vld [vmem:[#allocation5 + $0xa8] sm:$0xf]
        %v9058 = vld [vmem:[#allocation5 + $0xac] sm:$0xf]
        %v9059 = vld [vmem:[#allocation5 + $0xb0] sm:$0xf]
        %v9060 = vld [vmem:[#allocation5 + $0xb4] sm:$0xf]
        %v9061 = vld [vmem:[#allocation5 + $0xb8] sm:$0xf]
        %v9062 = vld [vmem:[#allocation5 + $0xbc] sm:$0xf]
        %v9063 = vld [vmem:[#allocation5 + $0xc0] sm:$0xf]
        %v9064 = vld [vmem:[#allocation5 + $0xc4] sm:$0xf]
        %v9065 = vld [vmem:[#allocation5 + $0xc8] sm:$0xf]
        %v9066 = vld [vmem:[#allocation5 + $0xcc] sm:$0xf]
        %v9067 = vld [vmem:[#allocation5 + $0xd0] sm:$0xf]
        %v9068 = vld [vmem:[#allocation5 + $0xd4] sm:$0xf]
        %v9069 = vld [vmem:[#allocation5 + $0xd8] sm:$0xf]
        %v9070 = vld [vmem:[#allocation5 + $0xdc] sm:$0xf]
        %v9071 = vld [vmem:[#allocation5 + $0xe0] sm:$0xf]
        %v9072 = vld [vmem:[#allocation5 + $0xe4] sm:$0xf]
        %v9073 = vld [vmem:[#allocation5 + $0xe8] sm:$0xf]
        %v9074 = vld [vmem:[#allocation5 + $0xec] sm:$0xf]
        %v9075 = vld [vmem:[#allocation5 + $0xf0] sm:$0xf]
        %v9076 = vld [vmem:[#allocation5 + $0xf4] sm:$0xf]
        %v9077 = vld [vmem:[#allocation5 + $0xf8] sm:$0xf]
        %v9078 = vld [vmem:[#allocation5 + $0xfc] sm:$0xf]
        %v9079 = vld [vmem:[#allocation5 + $0x100] sm:$0xf]
        %v9080 = vld [vmem:[#allocation5 + $0x104] sm:$0xf]
        %v9081 = vld [vmem:[#allocation5 + $0x108] sm:$0xf]
        %v9082 = vld [vmem:[#allocation5 + $0x10c] sm:$0xf]
        %v9083 = vld [vmem:[#allocation5 + $0x110] sm:$0xf]
        %v9084 = vld [vmem:[#allocation5 + $0x114] sm:$0xf]
        %v9085 = vld [vmem:[#allocation5 + $0x118] sm:$0xf]
        %v9086 = vld [vmem:[#allocation5 + $0x11c] sm:$0xf]
        %v9087 = vld [vmem:[#allocation5 + $0x120] sm:$0xf]
        %v9088 = vld [vmem:[#allocation5 + $0x124] sm:$0xf]
        %v9089 = vld [vmem:[#allocation5 + $0x128] sm:$0xf]
        %v9090 = vld [vmem:[#allocation5 + $0x12c] sm:$0xf]
        %v9091 = vld [vmem:[#allocation5 + $0x130] sm:$0xf]
        %v9092 = vld [vmem:[#allocation5 + $0x134] sm:$0xf]
        %v9093 = vld [vmem:[#allocation5 + $0x138] sm:$0xf]
        %v9094 = vld [vmem:[#allocation5 + $0x13c] sm:$0xf]
        %v9095 = vld [vmem:[#allocation5 + $0x140] sm:$0xf]
        %v9096 = vld [vmem:[#allocation5 + $0x144] sm:$0xf]
        %v9097 = vld [vmem:[#allocation5 + $0x148] sm:$0xf]
        %v9098 = vld [vmem:[#allocation5 + $0x14c] sm:$0xf]
        %v9099 = vld [vmem:[#allocation5 + $0x150] sm:$0xf]
        %v9100 = vld [vmem:[#allocation5 + $0x154] sm:$0xf]
        %v9101 = vld [vmem:[#allocation5 + $0x158] sm:$0xf]
        %v9102 = vld [vmem:[#allocation5 + $0x15c] sm:$0xf]
        %v9103 = vld [vmem:[#allocation5 + $0x160] sm:$0xf]
        %v9104 = vld [vmem:[#allocation5 + $0x164] sm:$0xf]
        %v9105 = vld [vmem:[#allocation5 + $0x168] sm:$0xf]
        %v9106 = vld [vmem:[#allocation5 + $0x16c] sm:$0xf]
        %v9107 = vld [vmem:[#allocation5 + $0x170] sm:$0xf]
        %v9108 = vld [vmem:[#allocation5 + $0x174] sm:$0xf]
        %v9109 = vld [vmem:[#allocation5 + $0x178] sm:$0xf]
        %v9110 = vld [vmem:[#allocation5 + $0x17c] sm:$0xf]
        %v9111 = vld [vmem:[#allocation5 + $0x180] sm:$0xf]
        %v9112 = vld [vmem:[#allocation5 + $0x184] sm:$0xf]
        %v9113 = vld [vmem:[#allocation5 + $0x188] sm:$0xf]
        %v9114 = vld [vmem:[#allocation5 + $0x18c] sm:$0xf]
        %v9115 = vld [vmem:[#allocation5 + $0x190] sm:$0xf]
        %v9116 = vld [vmem:[#allocation5 + $0x194] sm:$0xf]
        %v9117 = vld [vmem:[#allocation5 + $0x198] sm:$0xf]
        %v9118 = vld [vmem:[#allocation5 + $0x19c] sm:$0xf]
        %v9119 = vld [vmem:[#allocation5 + $0x1a0] sm:$0xf]
        %v9120 = vld [vmem:[#allocation5 + $0x1a4] sm:$0xf]
        %v9121 = vld [vmem:[#allocation5 + $0x1a8] sm:$0xf]
        %v9122 = vld [vmem:[#allocation5 + $0x1ac] sm:$0xf]
        %v9123 = vld [vmem:[#allocation5 + $0x1b0] sm:$0xf]
        %v9124 = vld [vmem:[#allocation5 + $0x1b4] sm:$0xf]
        %v9125 = vld [vmem:[#allocation5 + $0x1b8] sm:$0xf]
        %v9126 = vld [vmem:[#allocation5 + $0x1bc] sm:$0xf]
        %v9127 = vld [vmem:[#allocation5 + $0x1c0] sm:$0xf]
        %v9128 = vld [vmem:[#allocation5 + $0x1c4] sm:$0xf]
        %v9129 = vld [vmem:[#allocation5 + $0x1c8] sm:$0xf]
        %v9130 = vld [vmem:[#allocation5 + $0x1cc] sm:$0xf]
        %v9131 = vld [vmem:[#allocation5 + $0x1d0] sm:$0xf]
        %v9132 = vld [vmem:[#allocation5 + $0x1d4] sm:$0xf]
        %v9133 = vld [vmem:[#allocation5 + $0x1d8] sm:$0xf]
        %v9134 = vld [vmem:[#allocation5 + $0x1dc] sm:$0xf]
        %v9135 = vld [vmem:[#allocation5 + $0x1e0] sm:$0xf]
        %v9136 = vld [vmem:[#allocation5 + $0x1e4] sm:$0xf]
        %v9137 = vld [vmem:[#allocation5 + $0x1e8] sm:$0xf]
        %v9138 = vld [vmem:[#allocation5 + $0x1ec] sm:$0xf]
        %v9139 = vld [vmem:[#allocation5 + $0x1f0] sm:$0xf]
        %v9140 = vld [vmem:[#allocation5 + $0x1f4] sm:$0xf]
        %v9141 = vld [vmem:[#allocation5 + $0x1f8] sm:$0xf]
        %v9142 = vld [vmem:[#allocation5 + $0x1fc] sm:$0xf]
        %v9143 = vld [vmem:[#allocation5 + $0x200] sm:$0xf]
        %v9144 = vld [vmem:[#allocation5 + $0x204] sm:$0xf]
        %v9145 = vld [vmem:[#allocation5 + $0x208] sm:$0xf]
        %v9146 = vld [vmem:[#allocation5 + $0x20c] sm:$0xf]
        %v9147 = vld [vmem:[#allocation5 + $0x210] sm:$0xf]
        %v9148 = vld [vmem:[#allocation5 + $0x214] sm:$0xf]
        %v9149 = vld [vmem:[#allocation5 + $0x218] sm:$0xf]
        %v9150 = vld [vmem:[#allocation5 + $0x21c] sm:$0xf]
        %v9151 = vld [vmem:[#allocation5 + $0x220] sm:$0xf]
        %v9152 = vld [vmem:[#allocation5 + $0x224] sm:$0xf]
        %v9153 = vld [vmem:[#allocation5 + $0x228] sm:$0xf]
        %v9154 = vld [vmem:[#allocation5 + $0x22c] sm:$0xf]
        %v9155 = vld [vmem:[#allocation5 + $0x230] sm:$0xf]
        %v9156 = vld [vmem:[#allocation5 + $0x234] sm:$0xf]
        %v9157 = vld [vmem:[#allocation5 + $0x238] sm:$0xf]
        %v9158 = vld [vmem:[#allocation5 + $0x23c] sm:$0xf]
        %v9303 = vunpack.c.l.b16 %v9015
        %v9304 = vunpack.c.l.b16 %v9016
        %v9305 = vunpack.c.l.b16 %v9017
        %v9306 = vunpack.c.l.b16 %v9018
        %v9307 = vunpack.c.l.b16 %v9019
        %v9308 = vunpack.c.l.b16 %v9020
        %v9309 = vunpack.c.l.b16 %v9021
        %v9310 = vunpack.c.l.b16 %v9022
        %v9311 = vunpack.c.l.b16 %v9023
        %v9312 = vunpack.c.l.b16 %v9024
        %v9313 = vunpack.c.l.b16 %v9025
        %v9314 = vunpack.c.l.b16 %v9026
        %v9315 = vunpack.c.l.b16 %v9027
        %v9316 = vunpack.c.l.b16 %v9028
        %v9317 = vunpack.c.l.b16 %v9029
        %v9318 = vunpack.c.l.b16 %v9030
        %v9319 = vunpack.c.l.b16 %v9031
        %v9320 = vunpack.c.l.b16 %v9032
        %v9321 = vunpack.c.l.b16 %v9033
        %v9322 = vunpack.c.l.b16 %v9034
        %v9323 = vunpack.c.l.b16 %v9035
        %v9324 = vunpack.c.l.b16 %v9036
        %v9325 = vunpack.c.l.b16 %v9037
        %v9326 = vunpack.c.l.b16 %v9038
        %v9327 = vunpack.c.l.b16 %v9039
        %v9328 = vunpack.c.l.b16 %v9040
        %v9329 = vunpack.c.l.b16 %v9041
        %v9330 = vunpack.c.l.b16 %v9042
        %v9331 = vunpack.c.l.b16 %v9043
        %v9332 = vunpack.c.l.b16 %v9044
        %v9333 = vunpack.c.l.b16 %v9045
        %v9334 = vunpack.c.l.b16 %v9046
        %v9335 = vunpack.c.l.b16 %v9047
        %v9336 = vunpack.c.l.b16 %v9048
        %v9337 = vunpack.c.l.b16 %v9049
        %v9338 = vunpack.c.l.b16 %v9050
        %v9339 = vunpack.c.l.b16 %v9051
        %v9340 = vunpack.c.l.b16 %v9052
        %v9341 = vunpack.c.l.b16 %v9053
        %v9342 = vunpack.c.l.b16 %v9054
        %v9343 = vunpack.c.l.b16 %v9055
        %v9344 = vunpack.c.l.b16 %v9056
        %v9345 = vunpack.c.l.b16 %v9057
        %v9346 = vunpack.c.l.b16 %v9058
        %v9347 = vunpack.c.l.b16 %v9059
        %v9348 = vunpack.c.l.b16 %v9060
        %v9349 = vunpack.c.l.b16 %v9061
        %v9350 = vunpack.c.l.b16 %v9062
        %v9351 = vunpack.c.l.b16 %v9063
        %v9352 = vunpack.c.l.b16 %v9064
        %v9353 = vunpack.c.l.b16 %v9065
        %v9354 = vunpack.c.l.b16 %v9066
        %v9355 = vunpack.c.l.b16 %v9067
        %v9356 = vunpack.c.l.b16 %v9068
        %v9357 = vunpack.c.l.b16 %v9069
        %v9358 = vunpack.c.l.b16 %v9070
        %v9359 = vunpack.c.l.b16 %v9071
        %v9360 = vunpack.c.l.b16 %v9072
        %v9361 = vunpack.c.l.b16 %v9073
        %v9362 = vunpack.c.l.b16 %v9074
        %v9363 = vunpack.c.l.b16 %v9075
        %v9364 = vunpack.c.l.b16 %v9076
        %v9365 = vunpack.c.l.b16 %v9077
        %v9366 = vunpack.c.l.b16 %v9078
        %v9367 = vunpack.c.l.b16 %v9079
        %v9368 = vunpack.c.l.b16 %v9080
        %v9369 = vunpack.c.l.b16 %v9081
        %v9370 = vunpack.c.l.b16 %v9082
        %v9371 = vunpack.c.l.b16 %v9083
        %v9372 = vunpack.c.l.b16 %v9084
        %v9373 = vunpack.c.l.b16 %v9085
        %v9374 = vunpack.c.l.b16 %v9086
        %v9375 = vunpack.c.l.b16 %v9087
        %v9376 = vunpack.c.l.b16 %v9088
        %v9377 = vunpack.c.l.b16 %v9089
        %v9378 = vunpack.c.l.b16 %v9090
        %v9379 = vunpack.c.l.b16 %v9091
        %v9380 = vunpack.c.l.b16 %v9092
        %v9381 = vunpack.c.l.b16 %v9093
        %v9382 = vunpack.c.l.b16 %v9094
        %v9383 = vunpack.c.l.b16 %v9095
        %v9384 = vunpack.c.l.b16 %v9096
        %v9385 = vunpack.c.l.b16 %v9097
        %v9386 = vunpack.c.l.b16 %v9098
        %v9387 = vunpack.c.l.b16 %v9099
        %v9388 = vunpack.c.l.b16 %v9100
        %v9389 = vunpack.c.l.b16 %v9101
        %v9390 = vunpack.c.l.b16 %v9102
        %v9391 = vunpack.c.l.b16 %v9103
        %v9392 = vunpack.c.l.b16 %v9104
        %v9393 = vunpack.c.l.b16 %v9105
        %v9394 = vunpack.c.l.b16 %v9106
        %v9395 = vunpack.c.l.b16 %v9107
        %v9396 = vunpack.c.l.b16 %v9108
        %v9397 = vunpack.c.l.b16 %v9109
        %v9398 = vunpack.c.l.b16 %v9110
        %v9399 = vunpack.c.l.b16 %v9111
        %v9400 = vunpack.c.l.b16 %v9112
        %v9401 = vunpack.c.l.b16 %v9113
        %v9402 = vunpack.c.l.b16 %v9114
        %v9403 = vunpack.c.l.b16 %v9115
        %v9404 = vunpack.c.l.b16 %v9116
        %v9405 = vunpack.c.l.b16 %v9117
        %v9406 = vunpack.c.l.b16 %v9118
        %v9407 = vunpack.c.l.b16 %v9119
        %v9408 = vunpack.c.l.b16 %v9120
        %v9409 = vunpack.c.l.b16 %v9121
        %v9410 = vunpack.c.l.b16 %v9122
        %v9411 = vunpack.c.l.b16 %v9123
        %v9412 = vunpack.c.l.b16 %v9124
        %v9413 = vunpack.c.l.b16 %v9125
        %v9414 = vunpack.c.l.b16 %v9126
        %v9415 = vunpack.c.l.b16 %v9127
        %v9416 = vunpack.c.l.b16 %v9128
        %v9417 = vunpack.c.l.b16 %v9129
        %v9418 = vunpack.c.l.b16 %v9130
        %v9419 = vunpack.c.l.b16 %v9131
        %v9420 = vunpack.c.l.b16 %v9132
        %v9421 = vunpack.c.l.b16 %v9133
        %v9422 = vunpack.c.l.b16 %v9134
        %v9423 = vunpack.c.l.b16 %v9135
        %v9424 = vunpack.c.l.b16 %v9136
        %v9425 = vunpack.c.l.b16 %v9137
        %v9426 = vunpack.c.l.b16 %v9138
        %v9427 = vunpack.c.l.b16 %v9139
        %v9428 = vunpack.c.l.b16 %v9140
        %v9429 = vunpack.c.l.b16 %v9141
        %v9430 = vunpack.c.l.b16 %v9142
        %v9431 = vunpack.c.l.b16 %v9143
        %v9432 = vunpack.c.l.b16 %v9144
        %v9433 = vunpack.c.l.b16 %v9145
        %v9434 = vunpack.c.l.b16 %v9146
        %v9435 = vunpack.c.l.b16 %v9147
        %v9436 = vunpack.c.l.b16 %v9148
        %v9437 = vunpack.c.l.b16 %v9149
        %v9438 = vunpack.c.l.b16 %v9150
        %v9439 = vunpack.c.l.b16 %v9151
        %v9440 = vunpack.c.l.b16 %v9152
        %v9441 = vunpack.c.l.b16 %v9153
        %v9442 = vunpack.c.l.b16 %v9154
        %v9443 = vunpack.c.l.b16 %v9155
        %v9444 = vunpack.c.l.b16 %v9156
        %v9445 = vunpack.c.l.b16 %v9157
        %v9446 = vunpack.c.l.b16 %v9158
        %v9447 = vpack.c.b16 %v9304, %v9303
        %v9448 = vpack.c.b16 %v9306, %v9305
        %v9449 = vpack.c.b16 %v9308, %v9307
        %v9450 = vpack.c.b16 %v9310, %v9309
        %v9451 = vpack.c.b16 %v9312, %v9311
        %v9452 = vpack.c.b16 %v9314, %v9313
        %v9453 = vpack.c.b16 %v9316, %v9315
        %v9454 = vpack.c.b16 %v9318, %v9317
        %v9455 = vpack.c.b16 %v9320, %v9319
        %v9456 = vpack.c.b16 %v9322, %v9321
        %v9457 = vpack.c.b16 %v9324, %v9323
        %v9458 = vpack.c.b16 %v9326, %v9325
        %v9459 = vpack.c.b16 %v9328, %v9327
        %v9460 = vpack.c.b16 %v9330, %v9329
        %v9461 = vpack.c.b16 %v9332, %v9331
        %v9462 = vpack.c.b16 %v9334, %v9333
        %v9463 = vpack.c.b16 %v9336, %v9335
        %v9464 = vpack.c.b16 %v9338, %v9337
        %v9465 = vpack.c.b16 %v9340, %v9339
        %v9466 = vpack.c.b16 %v9342, %v9341
        %v9467 = vpack.c.b16 %v9344, %v9343
        %v9468 = vpack.c.b16 %v9346, %v9345
        %v9469 = vpack.c.b16 %v9348, %v9347
        %v9470 = vpack.c.b16 %v9350, %v9349
        %v9471 = vpack.c.b16 %v9352, %v9351
        %v9472 = vpack.c.b16 %v9354, %v9353
        %v9473 = vpack.c.b16 %v9356, %v9355
        %v9474 = vpack.c.b16 %v9358, %v9357
        %v9475 = vpack.c.b16 %v9360, %v9359
        %v9476 = vpack.c.b16 %v9362, %v9361
        %v9477 = vpack.c.b16 %v9364, %v9363
        %v9478 = vpack.c.b16 %v9366, %v9365
        %v9479 = vpack.c.b16 %v9368, %v9367
        %v9480 = vpack.c.b16 %v9370, %v9369
        %v9481 = vpack.c.b16 %v9372, %v9371
        %v9482 = vpack.c.b16 %v9374, %v9373
        %v9483 = vpack.c.b16 %v9376, %v9375
        %v9484 = vpack.c.b16 %v9378, %v9377
        %v9485 = vpack.c.b16 %v9380, %v9379
        %v9486 = vpack.c.b16 %v9382, %v9381
        %v9487 = vpack.c.b16 %v9384, %v9383
        %v9488 = vpack.c.b16 %v9386, %v9385
        %v9489 = vpack.c.b16 %v9388, %v9387
        %v9490 = vpack.c.b16 %v9390, %v9389
        %v9491 = vpack.c.b16 %v9392, %v9391
        %v9492 = vpack.c.b16 %v9394, %v9393
        %v9493 = vpack.c.b16 %v9396, %v9395
        %v9494 = vpack.c.b16 %v9398, %v9397
        %v9495 = vpack.c.b16 %v9400, %v9399
        %v9496 = vpack.c.b16 %v9402, %v9401
        %v9497 = vpack.c.b16 %v9404, %v9403
        %v9498 = vpack.c.b16 %v9406, %v9405
        %v9499 = vpack.c.b16 %v9408, %v9407
        %v9500 = vpack.c.b16 %v9410, %v9409
        %v9501 = vpack.c.b16 %v9412, %v9411
        %v9502 = vpack.c.b16 %v9414, %v9413
        %v9503 = vpack.c.b16 %v9416, %v9415
        %v9504 = vpack.c.b16 %v9418, %v9417
        %v9505 = vpack.c.b16 %v9420, %v9419
        %v9506 = vpack.c.b16 %v9422, %v9421
        %v9507 = vpack.c.b16 %v9424, %v9423
        %v9508 = vpack.c.b16 %v9426, %v9425
        %v9509 = vpack.c.b16 %v9428, %v9427
        %v9510 = vpack.c.b16 %v9430, %v9429
        %v9511 = vpack.c.b16 %v9432, %v9431
        %v9512 = vpack.c.b16 %v9434, %v9433
        %v9513 = vpack.c.b16 %v9436, %v9435
        %v9514 = vpack.c.b16 %v9438, %v9437
        %v9515 = vpack.c.b16 %v9440, %v9439
        %v9516 = vpack.c.b16 %v9442, %v9441
        %v9517 = vpack.c.b16 %v9444, %v9443
        %v9518 = vpack.c.b16 %v9446, %v9445
        %9591 = vmatprep.subr.bf16.mxu0 0
        %9592 = vmatpush1.bf16.msra.mxu0 %v9454
        %9593 = vmatprep.subr.bf16.mxu0 0
        %9594 = vmatpush1.bf16.msra.mxu0 %v9453
        %9595 = vmatprep.subr.bf16.mxu0 0
        %9596 = vmatpush1.bf16.msra.mxu0 %v9452
        %9597 = vmatprep.subr.bf16.mxu0 0
        %9598 = vmatpush1.bf16.msra.mxu0 %v9451
        %9599 = vmatprep.subr.bf16.mxu0 0
        %9600 = vmatpush1.bf16.msra.mxu0 %v9450
        %9601 = vmatprep.subr.bf16.mxu0 0
        %9602 = vmatpush1.bf16.msra.mxu0 %v9449
        %9603 = vmatprep.subr.bf16.mxu0 0
        %9604 = vmatpush1.bf16.msra.mxu0 %v9448
        %9605 = vmatprep.subr.bf16.mxu0 0
        %9606 = vmatpush1.bf16.msra.mxu0 %v9447
        %9607 = vmatprep.subr.bf16.mxu0 0
        %9608 = vmatpush2.bf16.msra.mxu0 %v9462
        %9609 = vmatprep.subr.bf16.mxu0 0
        %9610 = vmatpush2.bf16.msra.mxu0 %v9461
        %9611 = vmatprep.subr.bf16.mxu0 0
        %9612 = vmatpush2.bf16.msra.mxu0 %v9460
        %9613 = vmatprep.subr.bf16.mxu0 0
        %9614 = vmatpush2.bf16.msra.mxu0 %v9459
        %9615 = vmatprep.subr.bf16.mxu0 0
        %9616 = vmatpush2.bf16.msra.mxu0 %v9458
        %9617 = vmatprep.subr.bf16.mxu0 0
        %9618 = vmatpush2.bf16.msra.mxu0 %v9457
        %9619 = vmatprep.subr.bf16.mxu0 0
        %9620 = vmatpush2.bf16.msra.mxu0 %v9456
        %9621 = vmatprep.subr.bf16.mxu0 0
        %9622 = vmatpush2.bf16.msra.mxu0 %v9455
        %9623 = vmatprep.mubr.bf16.mxu0 %v8944
        %9624 = vmatmul.mubr.bf16.gmra.mxu0 %v8943
        %v9625 = vpop.f32.mrf.mxu0
        %v9626 = vadd.f32 0.0, %v9625
        %v9627 = vpop.f32.mrf.mxu0
        %v9628 = vpop.f32.mrf.mxu0
        %v9629 = vadd.f32 0.0, %v9628
        %v9630 = vpop.f32.mrf.mxu0
        %9631 = vmatprep.mubr.bf16.mxu0 %v8953
        %9632 = vmatmul.mubr.bf16.gmra.mxu0 %v8952
        %v9633 = vpop.f32.mrf.mxu0
        %v9634 = vadd.f32 0.0, %v9633
        %v9635 = vpop.f32.mrf.mxu0
        %v9636 = vpop.f32.mrf.mxu0
        %v9637 = vadd.f32 0.0, %v9636
        %v9638 = vpop.f32.mrf.mxu0
        %9639 = vmatprep.mubr.bf16.mxu0 %v8962
        %9640 = vmatmul.mubr.bf16.gmra.mxu0 %v8961
        %v9641 = vpop.f32.mrf.mxu0
        %v9642 = vadd.f32 0.0, %v9641
        %v9643 = vpop.f32.mrf.mxu0
        %v9644 = vpop.f32.mrf.mxu0
        %v9645 = vadd.f32 0.0, %v9644
        %v9646 = vpop.f32.mrf.mxu0
        %9647 = vmatprep.mubr.bf16.mxu0 %v8971
        %9648 = vmatmul.mubr.bf16.gmra.mxu0 %v8970
        %v9649 = vpop.f32.mrf.mxu0
        %v9650 = vadd.f32 0.0, %v9649
        %v9651 = vpop.f32.mrf.mxu0
        %v9652 = vpop.f32.mrf.mxu0
        %v9653 = vadd.f32 0.0, %v9652
        %v9654 = vpop.f32.mrf.mxu0
        %9655 = vmatprep.mubr.bf16.mxu0 %v8980
        %9656 = vmatmul.mubr.bf16.gmra.mxu0 %v8979
        %v9657 = vpop.f32.mrf.mxu0
        %v9658 = vadd.f32 0.0, %v9657
        %v9659 = vpop.f32.mrf.mxu0
        %v9660 = vpop.f32.mrf.mxu0
        %v9661 = vadd.f32 0.0, %v9660
        %v9662 = vpop.f32.mrf.mxu0
        %9663 = vmatprep.mubr.bf16.mxu0 %v8989
        %9664 = vmatmul.mubr.bf16.gmra.mxu0 %v8988
        %v9665 = vpop.f32.mrf.mxu0
        %v9666 = vadd.f32 0.0, %v9665
        %v9667 = vpop.f32.mrf.mxu0
        %v9668 = vpop.f32.mrf.mxu0
        %v9669 = vadd.f32 0.0, %v9668
        %v9670 = vpop.f32.mrf.mxu0
        %9671 = vmatprep.mubr.bf16.mxu0 %v8998
        %9672 = vmatmul.mubr.bf16.gmra.mxu0 %v8997
        %v9673 = vpop.f32.mrf.mxu0
        %v9674 = vadd.f32 0.0, %v9673
        %v9675 = vpop.f32.mrf.mxu0
        %v9676 = vpop.f32.mrf.mxu0
        %v9677 = vadd.f32 0.0, %v9676
        %v9678 = vpop.f32.mrf.mxu0
        %9679 = vmatprep.mubr.bf16.mxu0 %v9007
        %9680 = vmatmul.mubr.bf16.gmra.mxu0 %v9006
        %v9681 = vpop.f32.mrf.mxu0
        %v9682 = vadd.f32 0.0, %v9681
        %v9683 = vpop.f32.mrf.mxu0
        %v9684 = vpop.f32.mrf.mxu0
        %v9685 = vadd.f32 0.0, %v9684
        %v9686 = vpop.f32.mrf.mxu0
        %9687 = vdwg.mxu0
        %9688 = vmatprep.subr.bf16.mxu0 0
        %9689 = vmatpush1.bf16.msra.mxu0 %v9470
        %9690 = vmatprep.subr.bf16.mxu0 0
        %9691 = vmatpush1.bf16.msra.mxu0 %v9469
        %9692 = vmatprep.subr.bf16.mxu0 0
        %9693 = vmatpush1.bf16.msra.mxu0 %v9468
        %9694 = vmatprep.subr.bf16.mxu0 0
        %9695 = vmatpush1.bf16.msra.mxu0 %v9467
        %9696 = vmatprep.subr.bf16.mxu0 0
        %9697 = vmatpush1.bf16.msra.mxu0 %v9466
        %9698 = vmatprep.subr.bf16.mxu0 0
        %9699 = vmatpush1.bf16.msra.mxu0 %v9465
        %9700 = vmatprep.subr.bf16.mxu0 0
        %9701 = vmatpush1.bf16.msra.mxu0 %v9464
        %9702 = vmatprep.subr.bf16.mxu0 0
        %9703 = vmatpush1.bf16.msra.mxu0 %v9463
        %9704 = vmatprep.subr.bf16.mxu0 0
        %9705 = vmatpush2.bf16.msra.mxu0 %v9478
        %9706 = vmatprep.subr.bf16.mxu0 0
        %9707 = vmatpush2.bf16.msra.mxu0 %v9477
        %9708 = vmatprep.subr.bf16.mxu0 0
        %9709 = vmatpush2.bf16.msra.mxu0 %v9476
        %9710 = vmatprep.subr.bf16.mxu0 0
        %9711 = vmatpush2.bf16.msra.mxu0 %v9475
        %9712 = vmatprep.subr.bf16.mxu0 0
        %9713 = vmatpush2.bf16.msra.mxu0 %v9474
        %9714 = vmatprep.subr.bf16.mxu0 0
        %9715 = vmatpush2.bf16.msra.mxu0 %v9473
        %9716 = vmatprep.subr.bf16.mxu0 0
        %9717 = vmatpush2.bf16.msra.mxu0 %v9472
        %9718 = vmatprep.subr.bf16.mxu0 0
        %9719 = vmatpush2.bf16.msra.mxu0 %v9471
        %9720 = vmatprep.mubr.bf16.mxu0 %v8946
        %9721 = vmatmul.mubr.bf16.gmra.mxu0 %v8945
        %v9722 = vpop.f32.mrf.mxu0
        %v9723 = vadd.f32 %v9626, %v9722
        %v9724 = vpop.f32.mrf.mxu0
        %v9725 = vpop.f32.mrf.mxu0
        %v9726 = vadd.f32 %v9629, %v9725
        %v9727 = vpop.f32.mrf.mxu0
        %9728 = vmatprep.mubr.bf16.mxu0 %v8955
        %9729 = vmatmul.mubr.bf16.gmra.mxu0 %v8954
        %v9730 = vpop.f32.mrf.mxu0
        %v9731 = vadd.f32 %v9634, %v9730
        %v9732 = vpop.f32.mrf.mxu0
        %v9733 = vpop.f32.mrf.mxu0
        %v9734 = vadd.f32 %v9637, %v9733
        %v9735 = vpop.f32.mrf.mxu0
        %9736 = vmatprep.mubr.bf16.mxu0 %v8964
        %9737 = vmatmul.mubr.bf16.gmra.mxu0 %v8963
        %v9738 = vpop.f32.mrf.mxu0
        %v9739 = vadd.f32 %v9642, %v9738
        %v9740 = vpop.f32.mrf.mxu0
        %v9741 = vpop.f32.mrf.mxu0
        %v9742 = vadd.f32 %v9645, %v9741
        %v9743 = vpop.f32.mrf.mxu0
        %9744 = vmatprep.mubr.bf16.mxu0 %v8973
        %9745 = vmatmul.mubr.bf16.gmra.mxu0 %v8972
        %v9746 = vpop.f32.mrf.mxu0
        %v9747 = vadd.f32 %v9650, %v9746
        %v9748 = vpop.f32.mrf.mxu0
        %v9749 = vpop.f32.mrf.mxu0
        %v9750 = vadd.f32 %v9653, %v9749
        %v9751 = vpop.f32.mrf.mxu0
        %9752 = vmatprep.mubr.bf16.mxu0 %v8982
        %9753 = vmatmul.mubr.bf16.gmra.mxu0 %v8981
        %v9754 = vpop.f32.mrf.mxu0
        %v9755 = vadd.f32 %v9658, %v9754
        %v9756 = vpop.f32.mrf.mxu0
        %v9757 = vpop.f32.mrf.mxu0
        %v9758 = vadd.f32 %v9661, %v9757
        %v9759 = vpop.f32.mrf.mxu0
        %9760 = vmatprep.mubr.bf16.mxu0 %v8991
        %9761 = vmatmul.mubr.bf16.gmra.mxu0 %v8990
        %v9762 = vpop.f32.mrf.mxu0
        %v9763 = vadd.f32 %v9666, %v9762
        %v9764 = vpop.f32.mrf.mxu0
        %v9765 = vpop.f32.mrf.mxu0
        %v9766 = vadd.f32 %v9669, %v9765
        %v9767 = vpop.f32.mrf.mxu0
        %9768 = vmatprep.mubr.bf16.mxu0 %v9000
        %9769 = vmatmul.mubr.bf16.gmra.mxu0 %v8999
        %v9770 = vpop.f32.mrf.mxu0
        %v9771 = vadd.f32 %v9674, %v9770
        %v9772 = vpop.f32.mrf.mxu0
        %v9773 = vpop.f32.mrf.mxu0
        %v9774 = vadd.f32 %v9677, %v9773
        %v9775 = vpop.f32.mrf.mxu0
        %9776 = vmatprep.mubr.bf16.mxu0 %v9009
        %9777 = vmatmul.mubr.bf16.gmra.mxu0 %v9008
        %v9778 = vpop.f32.mrf.mxu0
        %v9779 = vadd.f32 %v9682, %v9778
        %v9780 = vpop.f32.mrf.mxu0
        %v9781 = vpop.f32.mrf.mxu0
        %v9782 = vadd.f32 %v9685, %v9781
        %v9783 = vpop.f32.mrf.mxu0
        %9784 = vdwg.mxu0
        %9785 = vmatprep.subr.bf16.mxu0 0
        %9786 = vmatpush1.bf16.msra.mxu0 %v9486
        %9787 = vmatprep.subr.bf16.mxu0 0
        %9788 = vmatpush1.bf16.msra.mxu0 %v9485
        %9789 = vmatprep.subr.bf16.mxu0 0
        %9790 = vmatpush1.bf16.msra.mxu0 %v9484
        %9791 = vmatprep.subr.bf16.mxu0 0
        %9792 = vmatpush1.bf16.msra.mxu0 %v9483
        %9793 = vmatprep.subr.bf16.mxu0 0
        %9794 = vmatpush1.bf16.msra.mxu0 %v9482
        %9795 = vmatprep.subr.bf16.mxu0 0
        %9796 = vmatpush1.bf16.msra.mxu0 %v9481
        %9797 = vmatprep.subr.bf16.mxu0 0
        %9798 = vmatpush1.bf16.msra.mxu0 %v9480
        %9799 = vmatprep.subr.bf16.mxu0 0
        %9800 = vmatpush1.bf16.msra.mxu0 %v9479
        %9801 = vmatprep.subr.bf16.mxu0 0
        %9802 = vmatpush2.bf16.msra.mxu0 %v9494
        %9803 = vmatprep.subr.bf16.mxu0 0
        %9804 = vmatpush2.bf16.msra.mxu0 %v9493
        %9805 = vmatprep.subr.bf16.mxu0 0
        %9806 = vmatpush2.bf16.msra.mxu0 %v9492
        %9807 = vmatprep.subr.bf16.mxu0 0
        %9808 = vmatpush2.bf16.msra.mxu0 %v9491
        %9809 = vmatprep.subr.bf16.mxu0 0
        %9810 = vmatpush2.bf16.msra.mxu0 %v9490
        %9811 = vmatprep.subr.bf16.mxu0 0
        %9812 = vmatpush2.bf16.msra.mxu0 %v9489
        %9813 = vmatprep.subr.bf16.mxu0 0
        %9814 = vmatpush2.bf16.msra.mxu0 %v9488
        %9815 = vmatprep.subr.bf16.mxu0 0
        %9816 = vmatpush2.bf16.msra.mxu0 %v9487
        %9817 = vmatprep.mubr.bf16.mxu0 %v8948
        %9818 = vmatmul.mubr.bf16.gmra.mxu0 %v8947
        %v9819 = vpop.f32.mrf.mxu0
        %v9820 = vadd.f32 %v9723, %v9819
        %v9821 = vpop.f32.mrf.mxu0
        %v9822 = vpop.f32.mrf.mxu0
        %v9823 = vadd.f32 %v9726, %v9822
        %v9824 = vpop.f32.mrf.mxu0
        %9825 = vmatprep.mubr.bf16.mxu0 %v8957
        %9826 = vmatmul.mubr.bf16.gmra.mxu0 %v8956
        %v9827 = vpop.f32.mrf.mxu0
        %v9828 = vadd.f32 %v9731, %v9827
        %v9829 = vpop.f32.mrf.mxu0
        %v9830 = vpop.f32.mrf.mxu0
        %v9831 = vadd.f32 %v9734, %v9830
        %v9832 = vpop.f32.mrf.mxu0
        %9833 = vmatprep.mubr.bf16.mxu0 %v8966
        %9834 = vmatmul.mubr.bf16.gmra.mxu0 %v8965
        %v9835 = vpop.f32.mrf.mxu0
        %v9836 = vadd.f32 %v9739, %v9835
        %v9837 = vpop.f32.mrf.mxu0
        %v9838 = vpop.f32.mrf.mxu0
        %v9839 = vadd.f32 %v9742, %v9838
        %v9840 = vpop.f32.mrf.mxu0
        %9841 = vmatprep.mubr.bf16.mxu0 %v8975
        %9842 = vmatmul.mubr.bf16.gmra.mxu0 %v8974
        %v9843 = vpop.f32.mrf.mxu0
        %v9844 = vadd.f32 %v9747, %v9843
        %v9845 = vpop.f32.mrf.mxu0
        %v9846 = vpop.f32.mrf.mxu0
        %v9847 = vadd.f32 %v9750, %v9846
        %v9848 = vpop.f32.mrf.mxu0
        %9849 = vmatprep.mubr.bf16.mxu0 %v8984
        %9850 = vmatmul.mubr.bf16.gmra.mxu0 %v8983
        %v9851 = vpop.f32.mrf.mxu0
        %v9852 = vadd.f32 %v9755, %v9851
        %v9853 = vpop.f32.mrf.mxu0
        %v9854 = vpop.f32.mrf.mxu0
        %v9855 = vadd.f32 %v9758, %v9854
        %v9856 = vpop.f32.mrf.mxu0
        %9857 = vmatprep.mubr.bf16.mxu0 %v8993
        %9858 = vmatmul.mubr.bf16.gmra.mxu0 %v8992
        %v9859 = vpop.f32.mrf.mxu0
        %v9860 = vadd.f32 %v9763, %v9859
        %v9861 = vpop.f32.mrf.mxu0
        %v9862 = vpop.f32.mrf.mxu0
        %v9863 = vadd.f32 %v9766, %v9862
        %v9864 = vpop.f32.mrf.mxu0
        %9865 = vmatprep.mubr.bf16.mxu0 %v9002
        %9866 = vmatmul.mubr.bf16.gmra.mxu0 %v9001
        %v9867 = vpop.f32.mrf.mxu0
        %v9868 = vadd.f32 %v9771, %v9867
        %v9869 = vpop.f32.mrf.mxu0
        %v9870 = vpop.f32.mrf.mxu0
        %v9871 = vadd.f32 %v9774, %v9870
        %v9872 = vpop.f32.mrf.mxu0
        %9873 = vmatprep.mubr.bf16.mxu0 %v9011
        %9874 = vmatmul.mubr.bf16.gmra.mxu0 %v9010
        %v9875 = vpop.f32.mrf.mxu0
        %v9876 = vadd.f32 %v9779, %v9875
        %v9877 = vpop.f32.mrf.mxu0
        %v9878 = vpop.f32.mrf.mxu0
        %v9879 = vadd.f32 %v9782, %v9878
        %v9880 = vpop.f32.mrf.mxu0
        %9881 = vdwg.mxu0
        %9882 = vmatprep.subr.bf16.mxu0 0
        %9883 = vmatpush1.bf16.msra.mxu0 %v9502
        %9884 = vmatprep.subr.bf16.mxu0 0
        %9885 = vmatpush1.bf16.msra.mxu0 %v9501
        %9886 = vmatprep.subr.bf16.mxu0 0
        %9887 = vmatpush1.bf16.msra.mxu0 %v9500
        %9888 = vmatprep.subr.bf16.mxu0 0
        %9889 = vmatpush1.bf16.msra.mxu0 %v9499
        %9890 = vmatprep.subr.bf16.mxu0 0
        %9891 = vmatpush1.bf16.msra.mxu0 %v9498
        %9892 = vmatprep.subr.bf16.mxu0 0
        %9893 = vmatpush1.bf16.msra.mxu0 %v9497
        %9894 = vmatprep.subr.bf16.mxu0 0
        %9895 = vmatpush1.bf16.msra.mxu0 %v9496
        %9896 = vmatprep.subr.bf16.mxu0 0
        %9897 = vmatpush1.bf16.msra.mxu0 %v9495
        %9898 = vmatprep.subr.bf16.mxu0 0
        %9899 = vmatpush2.bf16.msra.mxu0 %v9510
        %9900 = vmatprep.subr.bf16.mxu0 0
        %9901 = vmatpush2.bf16.msra.mxu0 %v9509
        %9902 = vmatprep.subr.bf16.mxu0 0
        %9903 = vmatpush2.bf16.msra.mxu0 %v9508
        %9904 = vmatprep.subr.bf16.mxu0 0
        %9905 = vmatpush2.bf16.msra.mxu0 %v9507
        %9906 = vmatprep.subr.bf16.mxu0 0
        %9907 = vmatpush2.bf16.msra.mxu0 %v9506
        %9908 = vmatprep.subr.bf16.mxu0 0
        %9909 = vmatpush2.bf16.msra.mxu0 %v9505
        %9910 = vmatprep.subr.bf16.mxu0 0
        %9911 = vmatpush2.bf16.msra.mxu0 %v9504
        %9912 = vmatprep.subr.bf16.mxu0 0
        %9913 = vmatpush2.bf16.msra.mxu0 %v9503
        %9914 = vmatprep.mubr.bf16.mxu0 %v8950
        %9915 = vmatmul.mubr.bf16.gmra.mxu0 %v8949
        %v9916 = vpop.f32.mrf.mxu0
        %v9917 = vadd.f32 %v9820, %v9916
        %v9918 = vpop.f32.mrf.mxu0
        %v9919 = vpop.f32.mrf.mxu0
        %v9920 = vadd.f32 %v9823, %v9919
        %v9921 = vpop.f32.mrf.mxu0
        %9922 = vmatprep.mubr.bf16.mxu0 %v8959
        %9923 = vmatmul.mubr.bf16.gmra.mxu0 %v8958
        %v9924 = vpop.f32.mrf.mxu0
        %v9925 = vadd.f32 %v9828, %v9924
        %v9926 = vpop.f32.mrf.mxu0
        %v9927 = vpop.f32.mrf.mxu0
        %v9928 = vadd.f32 %v9831, %v9927
        %v9929 = vpop.f32.mrf.mxu0
        %9930 = vmatprep.mubr.bf16.mxu0 %v8968
        %9931 = vmatmul.mubr.bf16.gmra.mxu0 %v8967
        %v9932 = vpop.f32.mrf.mxu0
        %v9933 = vadd.f32 %v9836, %v9932
        %v9934 = vpop.f32.mrf.mxu0
        %v9935 = vpop.f32.mrf.mxu0
        %v9936 = vadd.f32 %v9839, %v9935
        %v9937 = vpop.f32.mrf.mxu0
        %9938 = vmatprep.mubr.bf16.mxu0 %v8977
        %9939 = vmatmul.mubr.bf16.gmra.mxu0 %v8976
        %v9940 = vpop.f32.mrf.mxu0
        %v9941 = vadd.f32 %v9844, %v9940
        %v9942 = vpop.f32.mrf.mxu0
        %v9943 = vpop.f32.mrf.mxu0
        %v9944 = vadd.f32 %v9847, %v9943
        %v9945 = vpop.f32.mrf.mxu0
        %9946 = vmatprep.mubr.bf16.mxu0 %v8986
        %9947 = vmatmul.mubr.bf16.gmra.mxu0 %v8985
        %v9948 = vpop.f32.mrf.mxu0
        %v9949 = vadd.f32 %v9852, %v9948
        %v9950 = vpop.f32.mrf.mxu0
        %v9951 = vpop.f32.mrf.mxu0
        %v9952 = vadd.f32 %v9855, %v9951
        %v9953 = vpop.f32.mrf.mxu0
        %9954 = vmatprep.mubr.bf16.mxu0 %v8995
        %9955 = vmatmul.mubr.bf16.gmra.mxu0 %v8994
        %v9956 = vpop.f32.mrf.mxu0
        %v9957 = vadd.f32 %v9860, %v9956
        %v9958 = vpop.f32.mrf.mxu0
        %v9959 = vpop.f32.mrf.mxu0
        %v9960 = vadd.f32 %v9863, %v9959
        %v9961 = vpop.f32.mrf.mxu0
        %9962 = vmatprep.mubr.bf16.mxu0 %v9004
        %9963 = vmatmul.mubr.bf16.gmra.mxu0 %v9003
        %v9964 = vpop.f32.mrf.mxu0
        %v9965 = vadd.f32 %v9868, %v9964
        %v9966 = vpop.f32.mrf.mxu0
        %v9967 = vpop.f32.mrf.mxu0
        %v9968 = vadd.f32 %v9871, %v9967
        %v9969 = vpop.f32.mrf.mxu0
        %9970 = vmatprep.mubr.bf16.mxu0 %v9013
        %9971 = vmatmul.mubr.bf16.gmra.mxu0 %v9012
        %v9972 = vpop.f32.mrf.mxu0
        %v9973 = vadd.f32 %v9876, %v9972
        %v9974 = vpop.f32.mrf.mxu0
        %v9975 = vpop.f32.mrf.mxu0
        %v9976 = vadd.f32 %v9879, %v9975
        %v9977 = vpop.f32.mrf.mxu0
        %9978 = vdwg.mxu0
        %9979 = vmatprep.subr.bf16.mxu0 0
        %9980 = vmatpush1.bf16.msra.mxu0 %v9518
        %9981 = vmatprep.subr.bf16.mxu0 0
        %9982 = vmatpush1.bf16.msra.mxu0 %v9517
        %9983 = vmatprep.subr.bf16.mxu0 0
        %9984 = vmatpush1.bf16.msra.mxu0 %v9516
        %9985 = vmatprep.subr.bf16.mxu0 0
        %9986 = vmatpush1.bf16.msra.mxu0 %v9515
        %9987 = vmatprep.subr.bf16.mxu0 0
        %9988 = vmatpush1.bf16.msra.mxu0 %v9514
        %9989 = vmatprep.subr.bf16.mxu0 0
        %9990 = vmatpush1.bf16.msra.mxu0 %v9513
        %9991 = vmatprep.subr.bf16.mxu0 0
        %9992 = vmatpush1.bf16.msra.mxu0 %v9512
        %9993 = vmatprep.subr.bf16.mxu0 0
        %9994 = vmatpush1.bf16.msra.mxu0 %v9511
        %9995 = vmatprep.subr.bf16.mxu0 0
        %9996 = vmatpush2.bf16.msra.mxu0 0
        %9997 = vmatprep.subr.bf16.mxu0 0
        %9998 = vmatpush2.bf16.msra.mxu0 0
        %9999 = vmatprep.subr.bf16.mxu0 0
        %10000 = vmatpush2.bf16.msra.mxu0 0
        %10001 = vmatprep.subr.bf16.mxu0 0
        %10002 = vmatpush2.bf16.msra.mxu0 0
        %10003 = vmatprep.subr.bf16.mxu0 0
        %10004 = vmatpush2.bf16.msra.mxu0 0
        %10005 = vmatprep.subr.bf16.mxu0 0
        %10006 = vmatpush2.bf16.msra.mxu0 0
        %10007 = vmatprep.subr.bf16.mxu0 0
        %10008 = vmatpush2.bf16.msra.mxu0 0
        %10009 = vmatprep.subr.bf16.mxu0 0
        %10010 = vmatpush2.bf16.msra.mxu0 0
        %10011 = vmatprep.mubr.bf16.mxu0 0
        %10012 = vmatmul.mubr.bf16.gmra.mxu0 %v8951
        %v10013 = vpop.f32.mrf.mxu0
        %v10014 = vadd.f32 %v9917, %v10013
        %v10015 = vpop.f32.mrf.mxu0
        %v10016 = vpop.f32.mrf.mxu0
        %v10017 = vadd.f32 %v9920, %v10016
        %v10018 = vpop.f32.mrf.mxu0
        %10019 = vmatprep.mubr.bf16.mxu0 0
        %10020 = vmatmul.mubr.bf16.gmra.mxu0 %v8960
        %v10021 = vpop.f32.mrf.mxu0
        %v10022 = vadd.f32 %v9925, %v10021
        %v10023 = vpop.f32.mrf.mxu0
        %v10024 = vpop.f32.mrf.mxu0
        %v10025 = vadd.f32 %v9928, %v10024
        %v10026 = vpop.f32.mrf.mxu0
        %10027 = vmatprep.mubr.bf16.mxu0 0
        %10028 = vmatmul.mubr.bf16.gmra.mxu0 %v8969
        %v10029 = vpop.f32.mrf.mxu0
        %v10030 = vadd.f32 %v9933, %v10029
        %v10031 = vpop.f32.mrf.mxu0
        %v10032 = vpop.f32.mrf.mxu0
        %v10033 = vadd.f32 %v9936, %v10032
        %v10034 = vpop.f32.mrf.mxu0
        %10035 = vmatprep.mubr.bf16.mxu0 0
        %10036 = vmatmul.mubr.bf16.gmra.mxu0 %v8978
        %v10037 = vpop.f32.mrf.mxu0
        %v10038 = vadd.f32 %v9941, %v10037
        %v10039 = vpop.f32.mrf.mxu0
        %v10040 = vpop.f32.mrf.mxu0
        %v10041 = vadd.f32 %v9944, %v10040
        %v10042 = vpop.f32.mrf.mxu0
        %10043 = vmatprep.mubr.bf16.mxu0 0
        %10044 = vmatmul.mubr.bf16.gmra.mxu0 %v8987
        %v10045 = vpop.f32.mrf.mxu0
        %v10046 = vadd.f32 %v9949, %v10045
        %v10047 = vpop.f32.mrf.mxu0
        %v10048 = vpop.f32.mrf.mxu0
        %v10049 = vadd.f32 %v9952, %v10048
        %v10050 = vpop.f32.mrf.mxu0
        %10051 = vmatprep.mubr.bf16.mxu0 0
        %10052 = vmatmul.mubr.bf16.gmra.mxu0 %v8996
        %v10053 = vpop.f32.mrf.mxu0
        %v10054 = vadd.f32 %v9957, %v10053
        %v10055 = vpop.f32.mrf.mxu0
        %v10056 = vpop.f32.mrf.mxu0
        %v10057 = vadd.f32 %v9960, %v10056
        %v10058 = vpop.f32.mrf.mxu0
        %10059 = vmatprep.mubr.bf16.mxu0 0
        %10060 = vmatmul.mubr.bf16.gmra.mxu0 %v9005
        %v10061 = vpop.f32.mrf.mxu0
        %v10062 = vadd.f32 %v9965, %v10061
        %v10063 = vpop.f32.mrf.mxu0
        %v10064 = vpop.f32.mrf.mxu0
        %v10065 = vadd.f32 %v9968, %v10064
        %v10066 = vpop.f32.mrf.mxu0
        %10067 = vmatprep.mubr.bf16.mxu0 0
        %10068 = vmatmul.mubr.bf16.gmra.mxu0 %v9014
        %v10069 = vpop.f32.mrf.mxu0
        %v10070 = vadd.f32 %v9973, %v10069
        %v10071 = vpop.f32.mrf.mxu0
        %v10072 = vpop.f32.mrf.mxu0
        %v10073 = vadd.f32 %v9976, %v10072
        %v10074 = vpop.f32.mrf.mxu0
        %10075 = vdwg.mxu0
        %10076 = vst [vmem:[%s221] sm:$0xff] %v10014
        %10077 = vst [vmem:[%s221 + $0x8] sm:$0xff] %v10017
        %10078 = vst [vmem:[%s221 + $0x10] sm:$0xff] %v10022
        %10079 = vst [vmem:[%s221 + $0x18] sm:$0xff] %v10025
        %10080 = vst [vmem:[%s221 + $0x20] sm:$0xff] %v10030
        %10081 = vst [vmem:[%s221 + $0x28] sm:$0xff] %v10033
        %10082 = vst [vmem:[%s221 + $0x30] sm:$0xff] %v10038
        %10083 = vst [vmem:[%s221 + $0x38] sm:$0xff] %v10041
        %10084 = vst [vmem:[%s221 + $0x40] sm:$0xff] %v10046
        %10085 = vst [vmem:[%s221 + $0x48] sm:$0xff] %v10049
        %10086 = vst [vmem:[%s221 + $0x50] sm:$0xff] %v10054
        %10087 = vst [vmem:[%s221 + $0x58] sm:$0xff] %v10057
        %10088 = vst [vmem:[%s221 + $0x60] sm:$0xff] %v10062
        %10089 = vst [vmem:[%s221 + $0x68] sm:$0xff] %v10065
        %10090 = vst [vmem:[%s221 + $0x70] sm:$0xff] %v10070
        %10091 = vst [vmem:[%s221 + $0x78] sm:$0xff] %v10073
        %s10092 = sand.u32 %s117, 1
        %s10093 = scalar_lea.sflag [#allocation4], %s10092
        %s10094 = sand.u32 %s117, 1
        %s10095 = smul.addr %s10094, 128
        %s10096 = scalar_lea.vmem [#allocation7], %s10095
        // Predicated region
        $region45: #{moe_forward.1} parent=35 // pred_check
          %p10097 = pneg %p127
        $region46: #{moe_forward.1} parent=35 // pred_check_branch
          %10099 = sbr.rel (%p10097) target = $region48
        $region47: #{moe_forward.1} parent=35 // pred_region
          %s10100 = smul.u32 16, %s20
          %s10102 = ssub.s32 2048, 2048
          %10103 = vsyncadd %s10093, %s10102
          %s10104 = smul.addr %s10100, 128
          %s10105 = scalar_lea.hbm %s4, %s10104
          %s10106 = sshll.u32 %s10096, 4
          %s10107 = int_to_ptr.vmem [resolvable:$true] %s10106
          %10112 = dma.vmem_to_hbm [thread:$0]  %s10107, 2048, %s10105, %s10093, 128, 128, 8
        $region48: #{moe_forward.1} parent=35 // pred_fallthru
          _
      $region36: #{moe_forward.1} parent=5 // pred_fallthru
        _
      %p10113 = scmp.le.s32.totalorder 2, %s15
      // Predicated region
      $region49: #{moe_forward.1} parent=5 // pred_check
        %p10114 = pneg %p10113
      $region50: #{moe_forward.1} parent=5 // pred_check_branch
        %10116 = sbr.rel (%p10114) target = $region52
      $region51: #{moe_forward.1} parent=5 // pred_region
        %s10117 = ssub.s32 %s15, 2
        // Predicated region
        $region53: #{moe_forward.1} parent=51 // pred_check
          %p10118 = pneg %p133
        $region54: #{moe_forward.1} parent=51 // pred_check_branch
          %10120 = sbr.rel (%p10118) target = $region56
        $region55: #{moe_forward.1} parent=51 // pred_region
          %s10121 = sand.u32 %s118, 1
          %s10122 = scalar_lea.sflag [#allocation4], %s10121
          %s10123 = sand.u32 %s118, 1
          %s10124 = smul.addr %s10123, 128
          %s10125 = scalar_lea.vmem [#allocation7], %s10124
          %10126 = dma.done %s10122, 2048
        $region56: #{moe_forward.1} parent=51 // pred_fallthru
          _
      $region52: #{moe_forward.1} parent=5 // pred_fallthru
        _
    $region6: #{moe_forward.1} parent=1 // loop_footer
      %s19 = sadd.s32 1, %s15
    $region7: #{moe_forward.1} parent=1 // loop_footer_branch
      %14 = sbr.rel target = $region3
    $region8: #{moe_forward.1} parent=1 // loop_exit
      _
    %10127 = vsyncpa [#allocation3], 1
    %s10128 = scalar_lea.sflag [#allocation3], 1
    %10129 = vsyncpa %s10128, 1
    %10130 = vsyncpa [#allocation6], 1
    %10131 = vsyncpa [#allocation4], 1
    %s10132 = scalar_lea.sflag [#allocation4], 1
    %10133 = vsyncpa %s10132, 1

</llo_original>
